<compile_context>
chip_gen: v6e
topology: v6e:2x2x1
jax: 0.10.0
libtpu: 0.0.40
codegen_flags: <defaults>
</compile_context>

<pallas_src>
import numpy as np
import jax
import jax.numpy as jnp
from jax import lax
from jax.experimental import pallas as pl
from jax.experimental.pallas import tpu as pltpu

_MASK_NEG = -1e30  # large finite negative (robust vs exp(-inf - -inf) NaNs)


# --------------------------------------------------------------------------
# Static helpers (match the PyTorch buffers)
# --------------------------------------------------------------------------
def _get_indices(ws: int) -> np.ndarray:
    x = np.arange(ws)
    y1, x1, y2, x2 = np.meshgrid(x, x, x, x, indexing="ij")
    idx = (y1 - y2 + ws - 1) * (2 * ws - 1) + (x1 - x2 + ws - 1)
    return idx.reshape(-1)  # (ws**4,) == (S*S,)


def _generate_mask(shape, ws: int, ss: int) -> np.ndarray:
    H, W = shape
    region = np.zeros((H, W), dtype=np.int32)
    slices = [slice(0, -ws), slice(-ws, -ss), slice(-ss, None)]
    n = 0
    for i in slices:
        for j in slices:
            region[i, j] = n
            n += 1
    n_h, n_w = H // ws, W // ws
    r = region.reshape(n_h, ws, n_w, ws).transpose(0, 2, 1, 3)
    r = r.reshape(n_h * n_w, ws * ws)
    return (r[:, None, :] - r[:, :, None]) != 0  # (num_win, S, S) bool


def _to_windows(x, shape, ws, ss):
    B, _, C = x.shape
    H, W = shape
    x = x.reshape(B, H, W, C)
    if ss > 0:
        x = jnp.roll(x, (-ss, -ss), axis=(1, 2))
    n_h, n_w = H // ws, W // ws
    x = x.reshape(B, n_h, ws, n_w, ws, C).transpose(0, 1, 3, 2, 4, 5)
    return x.reshape(B * n_h * n_w, ws * ws, C)


def _from_windows(x, shape, ws, ss, B):
    H, W = shape
    n_h, n_w = H // ws, W // ws
    C = x.shape[-1]
    x = x.reshape(B, n_h, n_w, ws, ws, C).transpose(0, 1, 3, 2, 4, 5)
    x = x.reshape(B, H, W, C)
    if ss > 0:
        x = jnp.roll(x, (ss, ss), axis=(1, 2))
    return x.reshape(B, H * W, C)


# --------------------------------------------------------------------------
# Pallas kernel: attention for a batch of `wb` windows per grid step
# --------------------------------------------------------------------------
def _make_swin_kernel(*, heads, head_dim, dim, seq, wb, num_win, scale,
                      has_mask, matmul_dtype):
    nb = wb // num_win  # batch elements per block (mask repeats nb times)

    def kernel(*refs):
        if has_mask:
            (x_ref, rel_ref, mask_ref, wqkv_ref, bqkv_ref,
             wout_ref, bout_ref, out_ref) = refs
        else:
            (x_ref, rel_ref, wqkv_ref, bqkv_ref,
             wout_ref, bout_ref, out_ref) = refs

        S, hd = seq, head_dim

        # Fused QKV projection over the whole (wb*S, dim) slab (MXU, f32 acc).
        x = x_ref[...]                                        # (wb*S, dim)
        qkv = jnp.dot(x, wqkv_ref[...],
                      preferred_element_type=jnp.float32) + bqkv_ref[0]

        rel = rel_ref[...]                                    # (heads, S, S) f32
        if has_mask:
            # Additive shift mask, tiled once per block (hoisted out of loop).
            mask = jnp.broadcast_to(
                mask_ref[...][None], (nb, num_win, S, S)).reshape(wb, S, S)

        head_outs = []
        for h in range(heads):                                # static, small
            q = (qkv[:, h * hd:(h + 1) * hd] * scale).astype(matmul_dtype)
            k = qkv[:, dim + h * hd:dim + (h + 1) * hd].astype(matmul_dtype)
            v = qkv[:, 2 * dim + h * hd:2 * dim + (h + 1) * hd].astype(
                matmul_dtype)
            q = q.reshape(wb, S, hd)
            k = k.reshape(wb, S, hd)
            v = v.reshape(wb, S, hd)

            # Batched q @ k^T (contract on head_dim, batch over windows):
            # no explicit transpose / relayout.
            att = lax.dot_general(
                q, k, (((2,), (2,)), ((0,), (0,))),
                preferred_element_type=jnp.float32)           # (wb, S, S)
            att = att + rel[h][None]
            if has_mask:
                att = att + mask

            # softmax in f32
            att = att - jnp.max(att, axis=-1, keepdims=True)
            p = jnp.exp(att)
            p = p * pl.reciprocal(jnp.sum(p, axis=-1, keepdims=True),
                                  approx=True)

            oh = lax.dot_general(
                p.astype(matmul_dtype), v, (((2,), (1,)), ((0,), (0,))),
                preferred_element_type=jnp.float32)           # (wb, S, hd)
            head_outs.append(oh.reshape(wb * S, hd))

        # Concatenate heads once; single output projection (K = dim).
        o = jnp.concatenate(head_outs, axis=-1)               # (wb*S, dim)
        out = jnp.dot(o.astype(matmul_dtype), wout_ref[...],
                      preferred_element_type=jnp.float32) + bout_ref[0]
        out_ref[...] = out.astype(out_ref.dtype)

    return kernel


# --------------------------------------------------------------------------
# Wrapper
# --------------------------------------------------------------------------
def shifted_window_attention(x, params, *, shape, window_size, shift_size,
                             head_dim, matmul_dtype=jnp.float32):
    B, _, dim = x.shape
    out_dtype = x.dtype
    heads = dim // head_dim
    ws = window_size
    S = ws * ws
    H, W = shape
    num_win = (H // ws) * (W // ws)
    nW = B * num_win
    scale = head_dim ** (-0.5)
    has_mask = shift_size > 0

    # Window partition (+ cyclic shift) as plain-JAX glue; present a 2-D
    # (tokens, dim) slab to the kernel.
    xw = _to_windows(x, shape, ws, shift_size)            # (nW, S, dim)
    x2 = xw.reshape(nW * S, dim).astype(matmul_dtype)

    # Windows per block: a multiple of num_win (so the shift mask tiles
    # cleanly), targeting a few hundred rows per grid step.
    b_per_block = max(1, min(B, 512 // max(1, num_win * S)))
    while B % b_per_block:
        b_per_block -= 1
    wb = b_per_block * num_win
    grid = (B // b_per_block,)

    # Relative-position bias: one resident (heads, S, S) tensor.
    idx = _get_indices(ws)
    rel = params["pos_enc"][:, idx].reshape(heads, S, S).astype(jnp.float32)

    wqkv = params["wqkv"].astype(matmul_dtype)            # (dim, 3*dim)
    bqkv = params["bqkv"].reshape(1, -1).astype(jnp.float32)
    wout = params["wout"].astype(matmul_dtype)            # (dim, dim)
    bout = params["bout"].reshape(1, -1).astype(jnp.float32)

    inputs = [x2, rel]
    in_specs = [
        pl.BlockSpec((wb * S, dim), lambda g: (g, 0)),
        pl.BlockSpec((heads, S, S), lambda g: (0, 0, 0)),
    ]
    if has_mask:
        m = _generate_mask(shape, ws, shift_size)         # (num_win, S, S)
        maskadd = jnp.asarray(np.where(m, _MASK_NEG, 0.0).astype(np.float32))
        inputs.append(maskadd)
        in_specs.append(pl.BlockSpec((num_win, S, S), lambda g: (0, 0, 0)))
    inputs += [wqkv, bqkv, wout, bout]
    in_specs += [
        pl.BlockSpec((dim, 3 * dim), lambda g: (0, 0)),
        pl.BlockSpec((1, 3 * dim), lambda g: (0, 0)),
        pl.BlockSpec((dim, dim), lambda g: (0, 0)),
        pl.BlockSpec((1, dim), lambda g: (0, 0)),
    ]

    kernel = _make_swin_kernel(
        heads=heads, head_dim=head_dim, dim=dim, seq=S, wb=wb,
        num_win=num_win, scale=scale, has_mask=has_mask,
        matmul_dtype=matmul_dtype)

    out = pl.pallas_call(
        kernel,
        out_shape=jax.ShapeDtypeStruct((nW * S, dim), out_dtype),
        grid_spec=pltpu.PrefetchScalarGridSpec(
            num_scalar_prefetch=0,
            grid=grid,
            in_specs=in_specs,
            out_specs=pl.BlockSpec((wb * S, dim), lambda g: (g, 0)),
        ),
        compiler_params=pltpu.CompilerParams(
            dimension_semantics=("parallel",)),   # windows are independent
    )(*inputs)

    out = out.reshape(nW, S, dim)
    return _from_windows(out, shape, ws, shift_size, B)


# --------------------------------------------------------------------------
# Pure-JAX reference (mirrors the PyTorch forward exactly)
# --------------------------------------------------------------------------
def reference(x, params, *, shape, window_size, shift_size, head_dim):
    B, _, dim = x.shape
    heads = dim // head_dim
    ws = window_size
    S = ws * ws
    H, W = shape
    num_win = (H // ws) * (W // ws)
    scale = head_dim ** (-0.5)

    xw = _to_windows(x, shape, ws, shift_size)            # (nW, S, dim)
    nW = xw.shape[0]

    qkv = xw @ params["wqkv"] + params["bqkv"]            # (nW, S, 3*dim)
    qkv = qkv.reshape(nW, S, 3, heads, head_dim)
    qkv = jnp.swapaxes(qkv, 1, 3)                         # (nW, heads, 3, S, hd)
    q, k, v = qkv[:, :, 0], qkv[:, :, 1], qkv[:, :, 2]

    att = jnp.einsum("whqd,whkd->whqk", q, k) * scale
    idx = _get_indices(ws)
    rel = params["pos_enc"][:, idx].reshape(heads, S, S)
    att = att + rel[None]
    if shift_size > 0:
        mask = jnp.asarray(_generate_mask(shape, ws, shift_size))
        att = att.reshape(B, num_win, heads, S, S)
        att = jnp.where(mask[None, :, None], -jnp.inf, att)
        att = att.reshape(nW, heads, S, S)
    att = jax.nn.softmax(att, axis=-1)

    o = jnp.einsum("whqk,whkd->whqd", att, v)
    o = jnp.swapaxes(o, 1, 2).reshape(nW, S, dim)
    o = o @ params["wout"] + params["bout"]
    return _from_windows(o, shape, ws, shift_size, B)


# --------------------------------------------------------------------------
if __name__ == "__main__":
    # module config
    dim, head_dim = 32, 8
    heads = dim // head_dim
    shape = (8, 8)
    window_size, shift_size = 4, 2
    B = 2

    key = jax.random.PRNGKey(0)
    k1, k2, k3, k4, k5, kx = jax.random.split(key, 6)
    params = {
        "wqkv": jax.random.normal(k1, (dim, 3 * dim), jnp.float32) * 0.1,
        "bqkv": jax.random.normal(k2, (3 * dim,), jnp.float32) * 0.1,
        "wout": jax.random.normal(k3, (dim, dim), jnp.float32) * 0.1,
        "bout": jax.random.normal(k4, (dim,), jnp.float32) * 0.1,
        "pos_enc": jax.random.normal(
            k5, (heads, (2 * window_size - 1) ** 2), jnp.float32) * 0.1,
    }
    x = jax.random.normal(kx, (B, shape[0] * shape[1], dim), jnp.float32)

    # f32 matmul path (safe on every TPU generation)
    out = shifted_window_attention(
        x, params, shape=shape, window_size=window_size,
        shift_size=shift_size, head_dim=head_dim)
    out = jax.block_until_ready(out)

    ref = reference(x, params, shape=shape, window_size=window_size,
                    shift_size=shift_size, head_dim=head_dim)
    ref = jax.block_until_ready(ref)
    np.testing.assert_allclose(np.asarray(out), np.asarray(ref),
                               rtol=5e-3, atol=5e-3)

    # bf16 matmul path (v6e / v7x MXU-native); softmax math stays f32.
    out_bf16 = shifted_window_attention(
        x, params, shape=shape, window_size=window_size,
        shift_size=shift_size, head_dim=head_dim,
        matmul_dtype=jnp.bfloat16)
    out_bf16 = jax.block_until_ready(out_bf16)
    np.testing.assert_allclose(np.asarray(out_bf16), np.asarray(ref),
                               rtol=4e-2, atol=4e-2)

    # non-shifted branch (mask input skipped entirely)
    out_ns = shifted_window_attention(
        x, params, shape=shape, window_size=window_size,
        shift_size=0, head_dim=head_dim)
    out_ns = jax.block_until_ready(out_ns)
    ref_ns = reference(x, params, shape=shape, window_size=window_size,
                       shift_size=0, head_dim=head_dim)
    np.testing.assert_allclose(np.asarray(out_ns), np.asarray(ref_ns),
                               rtol=5e-3, atol=5e-3)

    print("KERNEL_OK")
</pallas_src>

<mosaic_0001>
module attributes {stable_mosaic.version = 11 : i64} {
  func.func @kernel(%arg0: i32, %arg1: memref<128x32xf32, #tpu.memory_space<vmem>>, %arg2: memref<4x16x16xf32, #tpu.memory_space<vmem>>, %arg3: memref<4x16x16xf32, #tpu.memory_space<vmem>>, %arg4: memref<32x96xf32, #tpu.memory_space<vmem>>, %arg5: memref<1x96xf32, #tpu.memory_space<vmem>>, %arg6: memref<32x32xf32, #tpu.memory_space<vmem>>, %arg7: memref<1x32xf32, #tpu.memory_space<vmem>>, %arg8: memref<128x32xf32, #tpu.memory_space<vmem>>) attributes {dimension_semantics = [#tpu.dimension_semantics<parallel>], iteration_bounds = array<i64: 1>, scalar_prefetch = 0 : i64, scratch_operands = 0 : i64, tpu.core_type = #tpu.core_type<tc>, window_params = [{transform_indices = @transform_0, window_bounds = array<i64: 128, 32>}, {pipeline_mode = #tpu.pipeline_mode<synchronous>, transform_indices = @transform_1, window_bounds = array<i64: 4, 16, 16>}, {pipeline_mode = #tpu.pipeline_mode<synchronous>, transform_indices = @transform_2, window_bounds = array<i64: 4, 16, 16>}, {pipeline_mode = #tpu.pipeline_mode<synchronous>, transform_indices = @transform_3, window_bounds = array<i64: 32, 96>}, {pipeline_mode = #tpu.pipeline_mode<synchronous>, transform_indices = @transform_4, window_bounds = array<i64: 1, 96>}, {pipeline_mode = #tpu.pipeline_mode<synchronous>, transform_indices = @transform_5, window_bounds = array<i64: 32, 32>}, {pipeline_mode = #tpu.pipeline_mode<synchronous>, transform_indices = @transform_6, window_bounds = array<i64: 1, 32>}, {transform_indices = @transform_7, window_bounds = array<i64: 128, 32>}]} {
    %c0 = arith.constant 0 : index
    %c0_0 = arith.constant 0 : index
    %0 = vector.load %arg1[%c0, %c0_0] : memref<128x32xf32, #tpu.memory_space<vmem>>, vector<128x32xf32>
    %c0_1 = arith.constant 0 : index
    %c0_2 = arith.constant 0 : index
    %1 = vector.load %arg4[%c0_1, %c0_2] : memref<32x96xf32, #tpu.memory_space<vmem>>, vector<32x96xf32>
    %cst = arith.constant dense<0.000000e+00> : vector<128x96xf32>
    %2 = tpu.matmul %0, %1, %cst {dimension_numbers = #tpu.dot_dimension_numbers<[1], [0], [0], [1], [0, 0, 1, 1], [], []>} : vector<128x32xf32>, vector<32x96xf32>, vector<128x96xf32> -> vector<128x96xf32>
    %c0_3 = arith.constant 0 : index
    %c0_4 = arith.constant 0 : index
    %3 = vector.load %arg5[%c0_3, %c0_4] : memref<1x96xf32, #tpu.memory_space<vmem>>, vector<1x96xf32>
    %4 = vector.shape_cast %3 : vector<1x96xf32> to vector<96xf32>
    %5 = vector.shape_cast %4 : vector<96xf32> to vector<1x96xf32>
    %6 = vector.broadcast %5 : vector<1x96xf32> to vector<128x96xf32>
    %7 = arith.addf %2, %6 : vector<128x96xf32>
    %c0_5 = arith.constant 0 : index
    %c0_6 = arith.constant 0 : index
    %c0_7 = arith.constant 0 : index
    %8 = vector.load %arg2[%c0_5, %c0_6, %c0_7] : memref<4x16x16xf32, #tpu.memory_space<vmem>>, vector<4x16x16xf32>
    %c0_8 = arith.constant 0 : index
    %c0_9 = arith.constant 0 : index
    %c0_10 = arith.constant 0 : index
    %9 = vector.load %arg3[%c0_8, %c0_9, %c0_10] : memref<4x16x16xf32, #tpu.memory_space<vmem>>, vector<4x16x16xf32>
    %10 = vector.shape_cast %9 : vector<4x16x16xf32> to vector<1x4x16x16xf32>
    %11 = vector.shape_cast %10 : vector<1x4x16x16xf32> to vector<1x4x16x16xf32>
    %12 = vector.broadcast %11 : vector<1x4x16x16xf32> to vector<2x4x16x16xf32>
    %13 = vector.shape_cast %12 : vector<2x4x16x16xf32> to vector<8x16x16xf32>
    %14 = vector.extract_strided_slice %7 {offsets = [0, 0], sizes = [128, 8], strides = [1, 1]} : vector<128x96xf32> to vector<128x8xf32>
    %cst_11 = arith.constant 0.353553385 : f32
    %15 = vector.broadcast %cst_11 : f32 to vector<128x8xf32>
    %16 = arith.mulf %14, %15 : vector<128x8xf32>
    %17 = vector.extract_strided_slice %7 {offsets = [0, 32], sizes = [128, 8], strides = [1, 1]} : vector<128x96xf32> to vector<128x8xf32>
    %18 = vector.extract_strided_slice %7 {offsets = [0, 64], sizes = [128, 8], strides = [1, 1]} : vector<128x96xf32> to vector<128x8xf32>
    %19 = vector.shape_cast %16 : vector<128x8xf32> to vector<8x16x8xf32>
    %20 = vector.shape_cast %17 : vector<128x8xf32> to vector<8x16x8xf32>
    %21 = vector.shape_cast %18 : vector<128x8xf32> to vector<8x16x8xf32>
    %cst_12 = arith.constant dense<0.000000e+00> : vector<8x16x16xf32>
    %22 = tpu.matmul %19, %20, %cst_12 {dimension_numbers = #tpu.dot_dimension_numbers<[2], [2], [1], [1], [0, 0, 0, 1, 1, 1], [0], [0]>} : vector<8x16x8xf32>, vector<8x16x8xf32>, vector<8x16x16xf32> -> vector<8x16x16xf32>
    %23 = vector.extract_strided_slice %8 {offsets = [0, 0, 0], sizes = [1, 16, 16], strides = [1, 1, 1]} : vector<4x16x16xf32> to vector<1x16x16xf32>
    %24 = vector.shape_cast %23 : vector<1x16x16xf32> to vector<16x16xf32>
    %25 = vector.shape_cast %24 : vector<16x16xf32> to vector<1x16x16xf32>
    %26 = vector.broadcast %25 : vector<1x16x16xf32> to vector<8x16x16xf32>
    %27 = arith.addf %22, %26 : vector<8x16x16xf32>
    %28 = arith.addf %27, %13 : vector<8x16x16xf32>
    %cst_13 = arith.constant dense<0xFF800000> : vector<8x16xf32>
    %29 = vector.multi_reduction <maximumf>, %28, %cst_13 [2] : vector<8x16x16xf32> to vector<8x16xf32>
    %30 = vector.shape_cast %29 : vector<8x16xf32> to vector<8x16x1xf32>
    %31 = vector.broadcast %30 : vector<8x16x1xf32> to vector<8x16x16xf32>
    %32 = arith.subf %28, %31 : vector<8x16x16xf32>
    %33 = math.exp %32 : vector<8x16x16xf32>
    %cst_14 = arith.constant dense<0.000000e+00> : vector<8x16xf32>
    %34 = vector.multi_reduction <add>, %33, %cst_14 [2] : vector<8x16x16xf32> to vector<8x16xf32>
    %35 = vector.shape_cast %34 : vector<8x16xf32> to vector<8x16x1xf32>
    %36 = tpu.reciprocal %35 {approx = true} : vector<8x16x1xf32> -> vector<8x16x1xf32>
    %37 = vector.broadcast %36 : vector<8x16x1xf32> to vector<8x16x16xf32>
    %38 = arith.mulf %33, %37 : vector<8x16x16xf32>
    %cst_15 = arith.constant dense<0.000000e+00> : vector<8x16x8xf32>
    %39 = tpu.matmul %38, %21, %cst_15 {dimension_numbers = #tpu.dot_dimension_numbers<[2], [1], [1], [2], [0, 0, 0, 1, 1, 2], [0], [0]>} : vector<8x16x16xf32>, vector<8x16x8xf32>, vector<8x16x8xf32> -> vector<8x16x8xf32>
    %40 = vector.shape_cast %39 : vector<8x16x8xf32> to vector<128x8xf32>
    %41 = vector.extract_strided_slice %7 {offsets = [0, 8], sizes = [128, 8], strides = [1, 1]} : vector<128x96xf32> to vector<128x8xf32>
    %cst_16 = arith.constant 0.353553385 : f32
    %42 = vector.broadcast %cst_16 : f32 to vector<128x8xf32>
    %43 = arith.mulf %41, %42 : vector<128x8xf32>
    %44 = vector.extract_strided_slice %7 {offsets = [0, 40], sizes = [128, 8], strides = [1, 1]} : vector<128x96xf32> to vector<128x8xf32>
    %45 = vector.extract_strided_slice %7 {offsets = [0, 72], sizes = [128, 8], strides = [1, 1]} : vector<128x96xf32> to vector<128x8xf32>
    %46 = vector.shape_cast %43 : vector<128x8xf32> to vector<8x16x8xf32>
    %47 = vector.shape_cast %44 : vector<128x8xf32> to vector<8x16x8xf32>
    %48 = vector.shape_cast %45 : vector<128x8xf32> to vector<8x16x8xf32>
    %cst_17 = arith.constant dense<0.000000e+00> : vector<8x16x16xf32>
    %49 = tpu.matmul %46, %47, %cst_17 {dimension_numbers = #tpu.dot_dimension_numbers<[2], [2], [1], [1], [0, 0, 0, 1, 1, 1], [0], [0]>} : vector<8x16x8xf32>, vector<8x16x8xf32>, vector<8x16x16xf32> -> vector<8x16x16xf32>
    %50 = vector.extract_strided_slice %8 {offsets = [1, 0, 0], sizes = [1, 16, 16], strides = [1, 1, 1]} : vector<4x16x16xf32> to vector<1x16x16xf32>
    %51 = vector.shape_cast %50 : vector<1x16x16xf32> to vector<16x16xf32>
    %52 = vector.shape_cast %51 : vector<16x16xf32> to vector<1x16x16xf32>
    %53 = vector.broadcast %52 : vector<1x16x16xf32> to vector<8x16x16xf32>
    %54 = arith.addf %49, %53 : vector<8x16x16xf32>
    %55 = arith.addf %54, %13 : vector<8x16x16xf32>
    %cst_18 = arith.constant dense<0xFF800000> : vector<8x16xf32>
    %56 = vector.multi_reduction <maximumf>, %55, %cst_18 [2] : vector<8x16x16xf32> to vector<8x16xf32>
    %57 = vector.shape_cast %56 : vector<8x16xf32> to vector<8x16x1xf32>
    %58 = vector.broadcast %57 : vector<8x16x1xf32> to vector<8x16x16xf32>
    %59 = arith.subf %55, %58 : vector<8x16x16xf32>
    %60 = math.exp %59 : vector<8x16x16xf32>
    %cst_19 = arith.constant dense<0.000000e+00> : vector<8x16xf32>
    %61 = vector.multi_reduction <add>, %60, %cst_19 [2] : vector<8x16x16xf32> to vector<8x16xf32>
    %62 = vector.shape_cast %61 : vector<8x16xf32> to vector<8x16x1xf32>
    %63 = tpu.reciprocal %62 {approx = true} : vector<8x16x1xf32> -> vector<8x16x1xf32>
    %64 = vector.broadcast %63 : vector<8x16x1xf32> to vector<8x16x16xf32>
    %65 = arith.mulf %60, %64 : vector<8x16x16xf32>
    %cst_20 = arith.constant dense<0.000000e+00> : vector<8x16x8xf32>
    %66 = tpu.matmul %65, %48, %cst_20 {dimension_numbers = #tpu.dot_dimension_numbers<[2], [1], [1], [2], [0, 0, 0, 1, 1, 2], [0], [0]>} : vector<8x16x16xf32>, vector<8x16x8xf32>, vector<8x16x8xf32> -> vector<8x16x8xf32>
    %67 = vector.shape_cast %66 : vector<8x16x8xf32> to vector<128x8xf32>
    %68 = vector.extract_strided_slice %7 {offsets = [0, 16], sizes = [128, 8], strides = [1, 1]} : vector<128x96xf32> to vector<128x8xf32>
    %cst_21 = arith.constant 0.353553385 : f32
    %69 = vector.broadcast %cst_21 : f32 to vector<128x8xf32>
    %70 = arith.mulf %68, %69 : vector<128x8xf32>
    %71 = vector.extract_strided_slice %7 {offsets = [0, 48], sizes = [128, 8], strides = [1, 1]} : vector<128x96xf32> to vector<128x8xf32>
    %72 = vector.extract_strided_slice %7 {offsets = [0, 80], sizes = [128, 8], strides = [1, 1]} : vector<128x96xf32> to vector<128x8xf32>
    %73 = vector.shape_cast %70 : vector<128x8xf32> to vector<8x16x8xf32>
    %74 = vector.shape_cast %71 : vector<128x8xf32> to vector<8x16x8xf32>
    %75 = vector.shape_cast %72 : vector<128x8xf32> to vector<8x16x8xf32>
    %cst_22 = arith.constant dense<0.000000e+00> : vector<8x16x16xf32>
    %76 = tpu.matmul %73, %74, %cst_22 {dimension_numbers = #tpu.dot_dimension_numbers<[2], [2], [1], [1], [0, 0, 0, 1, 1, 1], [0], [0]>} : vector<8x16x8xf32>, vector<8x16x8xf32>, vector<8x16x16xf32> -> vector<8x16x16xf32>
    %77 = vector.extract_strided_slice %8 {offsets = [2, 0, 0], sizes = [1, 16, 16], strides = [1, 1, 1]} : vector<4x16x16xf32> to vector<1x16x16xf32>
    %78 = vector.shape_cast %77 : vector<1x16x16xf32> to vector<16x16xf32>
    %79 = vector.shape_cast %78 : vector<16x16xf32> to vector<1x16x16xf32>
    %80 = vector.broadcast %79 : vector<1x16x16xf32> to vector<8x16x16xf32>
    %81 = arith.addf %76, %80 : vector<8x16x16xf32>
    %82 = arith.addf %81, %13 : vector<8x16x16xf32>
    %cst_23 = arith.constant dense<0xFF800000> : vector<8x16xf32>
    %83 = vector.multi_reduction <maximumf>, %82, %cst_23 [2] : vector<8x16x16xf32> to vector<8x16xf32>
    %84 = vector.shape_cast %83 : vector<8x16xf32> to vector<8x16x1xf32>
    %85 = vector.broadcast %84 : vector<8x16x1xf32> to vector<8x16x16xf32>
    %86 = arith.subf %82, %85 : vector<8x16x16xf32>
    %87 = math.exp %86 : vector<8x16x16xf32>
    %cst_24 = arith.constant dense<0.000000e+00> : vector<8x16xf32>
    %88 = vector.multi_reduction <add>, %87, %cst_24 [2] : vector<8x16x16xf32> to vector<8x16xf32>
    %89 = vector.shape_cast %88 : vector<8x16xf32> to vector<8x16x1xf32>
    %90 = tpu.reciprocal %89 {approx = true} : vector<8x16x1xf32> -> vector<8x16x1xf32>
    %91 = vector.broadcast %90 : vector<8x16x1xf32> to vector<8x16x16xf32>
    %92 = arith.mulf %87, %91 : vector<8x16x16xf32>
    %cst_25 = arith.constant dense<0.000000e+00> : vector<8x16x8xf32>
    %93 = tpu.matmul %92, %75, %cst_25 {dimension_numbers = #tpu.dot_dimension_numbers<[2], [1], [1], [2], [0, 0, 0, 1, 1, 2], [0], [0]>} : vector<8x16x16xf32>, vector<8x16x8xf32>, vector<8x16x8xf32> -> vector<8x16x8xf32>
    %94 = vector.shape_cast %93 : vector<8x16x8xf32> to vector<128x8xf32>
    %95 = vector.extract_strided_slice %7 {offsets = [0, 24], sizes = [128, 8], strides = [1, 1]} : vector<128x96xf32> to vector<128x8xf32>
    %cst_26 = arith.constant 0.353553385 : f32
    %96 = vector.broadcast %cst_26 : f32 to vector<128x8xf32>
    %97 = arith.mulf %95, %96 : vector<128x8xf32>
    %98 = vector.extract_strided_slice %7 {offsets = [0, 56], sizes = [128, 8], strides = [1, 1]} : vector<128x96xf32> to vector<128x8xf32>
    %99 = vector.extract_strided_slice %7 {offsets = [0, 88], sizes = [128, 8], strides = [1, 1]} : vector<128x96xf32> to vector<128x8xf32>
    %100 = vector.shape_cast %97 : vector<128x8xf32> to vector<8x16x8xf32>
    %101 = vector.shape_cast %98 : vector<128x8xf32> to vector<8x16x8xf32>
    %102 = vector.shape_cast %99 : vector<128x8xf32> to vector<8x16x8xf32>
    %cst_27 = arith.constant dense<0.000000e+00> : vector<8x16x16xf32>
    %103 = tpu.matmul %100, %101, %cst_27 {dimension_numbers = #tpu.dot_dimension_numbers<[2], [2], [1], [1], [0, 0, 0, 1, 1, 1], [0], [0]>} : vector<8x16x8xf32>, vector<8x16x8xf32>, vector<8x16x16xf32> -> vector<8x16x16xf32>
    %104 = vector.extract_strided_slice %8 {offsets = [3, 0, 0], sizes = [1, 16, 16], strides = [1, 1, 1]} : vector<4x16x16xf32> to vector<1x16x16xf32>
    %105 = vector.shape_cast %104 : vector<1x16x16xf32> to vector<16x16xf32>
    %106 = vector.shape_cast %105 : vector<16x16xf32> to vector<1x16x16xf32>
    %107 = vector.broadcast %106 : vector<1x16x16xf32> to vector<8x16x16xf32>
    %108 = arith.addf %103, %107 : vector<8x16x16xf32>
    %109 = arith.addf %108, %13 : vector<8x16x16xf32>
    %cst_28 = arith.constant dense<0xFF800000> : vector<8x16xf32>
    %110 = vector.multi_reduction <maximumf>, %109, %cst_28 [2] : vector<8x16x16xf32> to vector<8x16xf32>
    %111 = vector.shape_cast %110 : vector<8x16xf32> to vector<8x16x1xf32>
    %112 = vector.broadcast %111 : vector<8x16x1xf32> to vector<8x16x16xf32>
    %113 = arith.subf %109, %112 : vector<8x16x16xf32>
    %114 = math.exp %113 : vector<8x16x16xf32>
    %cst_29 = arith.constant dense<0.000000e+00> : vector<8x16xf32>
    %115 = vector.multi_reduction <add>, %114, %cst_29 [2] : vector<8x16x16xf32> to vector<8x16xf32>
    %116 = vector.shape_cast %115 : vector<8x16xf32> to vector<8x16x1xf32>
    %117 = tpu.reciprocal %116 {approx = true} : vector<8x16x1xf32> -> vector<8x16x1xf32>
    %118 = vector.broadcast %117 : vector<8x16x1xf32> to vector<8x16x16xf32>
    %119 = arith.mulf %114, %118 : vector<8x16x16xf32>
    %cst_30 = arith.constant dense<0.000000e+00> : vector<8x16x8xf32>
    %120 = tpu.matmul %119, %102, %cst_30 {dimension_numbers = #tpu.dot_dimension_numbers<[2], [1], [1], [2], [0, 0, 0, 1, 1, 2], [0], [0]>} : vector<8x16x16xf32>, vector<8x16x8xf32>, vector<8x16x8xf32> -> vector<8x16x8xf32>
    %121 = vector.shape_cast %120 : vector<8x16x8xf32> to vector<128x8xf32>
    %122 = tpu.concatenate %40, %67, %94, %121 in 1 : vector<128x8xf32>, vector<128x8xf32>, vector<128x8xf32>, vector<128x8xf32> -> vector<128x32xf32>
    %c0_31 = arith.constant 0 : index
    %c0_32 = arith.constant 0 : index
    %123 = vector.load %arg6[%c0_31, %c0_32] : memref<32x32xf32, #tpu.memory_space<vmem>>, vector<32x32xf32>
    %cst_33 = arith.constant dense<0.000000e+00> : vector<128x32xf32>
    %124 = tpu.matmul %122, %123, %cst_33 {dimension_numbers = #tpu.dot_dimension_numbers<[1], [0], [0], [1], [0, 0, 1, 1], [], []>} : vector<128x32xf32>, vector<32x32xf32>, vector<128x32xf32> -> vector<128x32xf32>
    %c0_34 = arith.constant 0 : index
    %c0_35 = arith.constant 0 : index
    %125 = vector.load %arg7[%c0_34, %c0_35] : memref<1x32xf32, #tpu.memory_space<vmem>>, vector<1x32xf32>
    %126 = vector.shape_cast %125 : vector<1x32xf32> to vector<32xf32>
    %127 = vector.shape_cast %126 : vector<32xf32> to vector<1x32xf32>
    %128 = vector.broadcast %127 : vector<1x32xf32> to vector<128x32xf32>
    %129 = arith.addf %124, %128 : vector<128x32xf32>
    %c0_36 = arith.constant 0 : index
    %c0_37 = arith.constant 0 : index
    %130 = vector.load %arg8[%c0_36, %c0_37] : memref<128x32xf32, #tpu.memory_space<vmem>>, vector<128x32xf32>
    tpu.vector_store %arg8[%c0_36, %c0_37], %129 {strides = array<i32>} : memref<128x32xf32, #tpu.memory_space<vmem>>, vector<128x32xf32>,
    return
  }
  func.func @transform_0(%arg0: i32) -> (i32, i32) {
    %c0_i32 = arith.constant 0 : i32
    %c0_i32_0 = arith.constant 0 : i32
    return %arg0, %c0_i32 : i32, i32
  }
  func.func @transform_1(%arg0: i32) -> (i32, i32, i32) {
    %c0_i32 = arith.constant 0 : i32
    %c0_i32_0 = arith.constant 0 : i32
    %c0_i32_1 = arith.constant 0 : i32
    %c0_i32_2 = arith.constant 0 : i32
    return %c0_i32, %c0_i32_0, %c0_i32_1 : i32, i32, i32
  }
  func.func @transform_2(%arg0: i32) -> (i32, i32, i32) {
    %c0_i32 = arith.constant 0 : i32
    %c0_i32_0 = arith.constant 0 : i32
    %c0_i32_1 = arith.constant 0 : i32
    %c0_i32_2 = arith.constant 0 : i32
    return %c0_i32, %c0_i32_0, %c0_i32_1 : i32, i32, i32
  }
  func.func @transform_3(%arg0: i32) -> (i32, i32) {
    %c0_i32 = arith.constant 0 : i32
    %c0_i32_0 = arith.constant 0 : i32
    %c0_i32_1 = arith.constant 0 : i32
    return %c0_i32, %c0_i32_0 : i32, i32
  }
  func.func @transform_4(%arg0: i32) -> (i32, i32) {
    %c0_i32 = arith.constant 0 : i32
    %c0_i32_0 = arith.constant 0 : i32
    %c0_i32_1 = arith.constant 0 : i32
    return %c0_i32, %c0_i32_0 : i32, i32
  }
  func.func @transform_5(%arg0: i32) -> (i32, i32) {
    %c0_i32 = arith.constant 0 : i32
    %c0_i32_0 = arith.constant 0 : i32
    %c0_i32_1 = arith.constant 0 : i32
    return %c0_i32, %c0_i32_0 : i32, i32
  }
  func.func @transform_6(%arg0: i32) -> (i32, i32) {
    %c0_i32 = arith.constant 0 : i32
    %c0_i32_0 = arith.constant 0 : i32
    %c0_i32_1 = arith.constant 0 : i32
    return %c0_i32, %c0_i32_0 : i32, i32
  }
  func.func @transform_7(%arg0: i32) -> (i32, i32) {
    %c0_i32 = arith.constant 0 : i32
    %c0_i32_0 = arith.constant 0 : i32
    return %arg0, %c0_i32 : i32, i32
  }
}

</mosaic_0001>

<llo_original>
// kernel: tpu_custom_call.1
$region0: #{tpu_custom_call.1}
  #allocation0 [shape = 'u32[]', space=smem, size = 0x4, offset = 0x4, fixed_abs, tag = 'smem constant byte address 0x4 - core index']
  #allocation1 [shape = 'u32[144,128]{1,0:T(1,128)}', space=vmem, size = 0x12000, scoped, tag = 'internal scratch']
  %s0 = inlined_call_operand.vmem [shape: f32[128,32], index: 0, kind: input, shape index: {}]
  %s1 = inlined_call_operand.vmem [shape: f32[4,16,16], index: 1, kind: input, shape index: {}]
  %s2 = inlined_call_operand.vmem [shape: f32[4,16,16], index: 2, kind: input, shape index: {}]
  %s3 = inlined_call_operand.vmem [shape: f32[32,96], index: 3, kind: input, shape index: {}]
  %s4 = inlined_call_operand.vmem [shape: f32[1,96], index: 4, kind: input, shape index: {}]
  %s5 = inlined_call_operand.hbm [shape: f32[32,32], index: 5, kind: input, shape index: {}]
  %s6 = inlined_call_operand.vmem [shape: f32[1,32], index: 6, kind: input, shape index: {}]
  %s7 = inlined_call_operand.vmem [shape: f32[128,32], index: 7, kind: output, shape index: {}]
  %s8 = sld [smem:[#allocation0]]
  $region42: #{tpu_custom_call.1} parent=0
    _
  %s10 = ssub.s32 1, %s8
  %s11 = scalar_select 0, %s10, %s8
  $region1: #{tpu_custom_call.1} parent=0
    #allocation2 [shape = 'u8[16384]{0}', space=vmem, size = 0x4000, scoped, tag = 'input window, operand 5, single buffered']
    #allocation3 [shape = 's32[1]{0}', space=sflag, size = 0x4, scoped, tag = 'scoped memory for tpu_custom_call.1']
    %12 = vsyncpa [#allocation3], 0
    // Predicated region
    $region2: #{tpu_custom_call.1} parent=1 // pred_check
      _
    $region3: #{tpu_custom_call.1} parent=1 // pred_check_branch
      %14 = sbr.rel (0) target = $region5
    $region4: #{tpu_custom_call.1} parent=1 // pred_region
      _
    $region5: #{tpu_custom_call.1} parent=1 // pred_fallthru
      _
    // Predicated region
    $region6: #{tpu_custom_call.1} parent=1 // pred_check
      _
    $region7: #{tpu_custom_call.1} parent=1 // pred_check_branch
      %16 = sbr.rel (0) target = $region9
    $region8: #{tpu_custom_call.1} parent=1 // pred_region
      _
    $region9: #{tpu_custom_call.1} parent=1 // pred_fallthru
      _
    // Predicated region
    $region10: #{tpu_custom_call.1} parent=1 // pred_check
      _
    $region11: #{tpu_custom_call.1} parent=1 // pred_check_branch
      %18 = sbr.rel (0) target = $region13
    $region12: #{tpu_custom_call.1} parent=1 // pred_region
      _
    $region13: #{tpu_custom_call.1} parent=1 // pred_fallthru
      _
    // Predicated region
    $region14: #{tpu_custom_call.1} parent=1 // pred_check
      _
    $region15: #{tpu_custom_call.1} parent=1 // pred_check_branch
      %20 = sbr.rel (0) target = $region17
    $region16: #{tpu_custom_call.1} parent=1 // pred_region
      _
    $region17: #{tpu_custom_call.1} parent=1 // pred_fallthru
      _
    // Predicated region
    $region18: #{tpu_custom_call.1} parent=1 // pred_check
      _
    $region19: #{tpu_custom_call.1} parent=1 // pred_check_branch
      %22 = sbr.rel (0) target = $region21
    $region20: #{tpu_custom_call.1} parent=1 // pred_region
      _
    $region21: #{tpu_custom_call.1} parent=1 // pred_fallthru
      _
    // Predicated region
    $region22: #{tpu_custom_call.1} parent=1 // pred_check
      _
    $region23: #{tpu_custom_call.1} parent=1 // pred_check_branch
      %24 = sbr.rel (0) target = $region25
    $region24: #{tpu_custom_call.1} parent=1 // pred_region
      %s26 = ssub.s32 512, 512
      %27 = vsyncadd [#allocation3], %s26
      %s28 = sshll.u32 [#allocation2], 4
      %s29 = int_to_ptr.vmem [resolvable:$true] %s28
      %34 = dma.hbm_to_vmem [thread:$0]  %s5, 512, %s29, [#allocation3], 128, 128, 8
    $region25: #{tpu_custom_call.1} parent=1 // pred_fallthru
      _
    // Predicated region
    $region26: #{tpu_custom_call.1} parent=1 // pred_check
      _
    $region27: #{tpu_custom_call.1} parent=1 // pred_check_branch
      %36 = sbr.rel (0) target = $region29
    $region28: #{tpu_custom_call.1} parent=1 // pred_region
      _
    $region29: #{tpu_custom_call.1} parent=1 // pred_fallthru
      _
    // Predicated region
    $region30: #{tpu_custom_call.1} parent=1 // pred_check
      _
    $region31: #{tpu_custom_call.1} parent=1 // pred_check_branch
      %38 = sbr.rel (0) target = $region33
    $region32: #{tpu_custom_call.1} parent=1 // pred_region
      %39 = dma.done [#allocation3], 512
    $region33: #{tpu_custom_call.1} parent=1 // pred_fallthru
      _
    %v40 = vld [vmem:[%s0] sm:$0xff]
    %v41 = vld [vmem:[%s0 + $0x8] sm:$0xff]
    %v42 = vld [vmem:[%s0 + $0x10] sm:$0xff]
    %v43 = vld [vmem:[%s0 + $0x18] sm:$0xff]
    %v44 = vld [vmem:[%s0 + $0x20] sm:$0xff]
    %v45 = vld [vmem:[%s0 + $0x28] sm:$0xff]
    %v46 = vld [vmem:[%s0 + $0x30] sm:$0xff]
    %v47 = vld [vmem:[%s0 + $0x38] sm:$0xff]
    %v48 = vld [vmem:[%s0 + $0x40] sm:$0xff]
    %v49 = vld [vmem:[%s0 + $0x48] sm:$0xff]
    %v50 = vld [vmem:[%s0 + $0x50] sm:$0xff]
    %v51 = vld [vmem:[%s0 + $0x58] sm:$0xff]
    %v52 = vld [vmem:[%s0 + $0x60] sm:$0xff]
    %v53 = vld [vmem:[%s0 + $0x68] sm:$0xff]
    %v54 = vld [vmem:[%s0 + $0x70] sm:$0xff]
    %v55 = vld [vmem:[%s0 + $0x78] sm:$0xff]
    %v56 = vld [vmem:[%s3] sm:$0xff]
    %v57 = vld [vmem:[%s3 + $0x8] sm:$0xff]
    %v58 = vld [vmem:[%s3 + $0x10] sm:$0xff]
    %v59 = vld [vmem:[%s3 + $0x18] sm:$0xff]
    %v60 = vld [vmem:[%s4] sm:$0x1]
    %v62 = vlaneseq
    %v63 = vshrl.u32 %v62, 7
    %v64 = vsub.s32 0, %v63
    %v65 = vrot.slane %v60, %v64
    %vm67 = vcmask 261120
    %v69 = vsel %vm67, %v40, 0
    %v72 = vsel %vm67, %v41, 0
    %v75 = vsel %vm67, %v42, 0
    %v78 = vsel %vm67, %v43, 0
    %v81 = vsel %vm67, %v44, 0
    %v84 = vsel %vm67, %v45, 0
    %v87 = vsel %vm67, %v46, 0
    %v90 = vsel %vm67, %v47, 0
    %v93 = vsel %vm67, %v48, 0
    %v96 = vsel %vm67, %v49, 0
    %v99 = vsel %vm67, %v50, 0
    %v102 = vsel %vm67, %v51, 0
    %v105 = vsel %vm67, %v52, 0
    %v108 = vsel %vm67, %v53, 0
    %v111 = vsel %vm67, %v54, 0
    %v114 = vsel %vm67, %v55, 0
    %116 = vmatprep.subr.mxu0 0.0
    %117 = vmatpush1.msra.mxu0 0.0
    %118 = vmatprep.subr.mxu0 0.0
    %119 = vmatpush1.msra.mxu0 0.0
    %120 = vmatprep.subr.mxu0 0.0
    %121 = vmatpush1.msra.mxu0 0.0
    %122 = vmatprep.subr.mxu0 0.0
    %123 = vmatpush1.msra.mxu0 0.0
    %124 = vmatprep.subr.mxu0 0.0
    %125 = vmatpush1.msra.mxu0 0.0
    %126 = vmatprep.subr.mxu0 0.0
    %127 = vmatpush1.msra.mxu0 0.0
    %128 = vmatprep.subr.mxu0 0.0
    %129 = vmatpush1.msra.mxu0 0.0
    %130 = vmatprep.subr.mxu0 0.0
    %131 = vmatpush1.msra.mxu0 0.0
    %132 = vmatprep.subr.mxu0 0.0
    %133 = vmatpush1.msra.mxu0 0.0
    %134 = vmatprep.subr.mxu0 0.0
    %135 = vmatpush1.msra.mxu0 0.0
    %136 = vmatprep.subr.mxu0 0.0
    %137 = vmatpush1.msra.mxu0 0.0
    %138 = vmatprep.subr.mxu0 0.0
    %139 = vmatpush1.msra.mxu0 0.0
    %140 = vmatprep.subr.mxu0 0.0
    %141 = vmatpush1.msra.mxu0 %v59
    %142 = vmatprep.subr.mxu0 0.0
    %143 = vmatpush1.msra.mxu0 %v58
    %144 = vmatprep.subr.mxu0 0.0
    %145 = vmatpush1.msra.mxu0 %v57
    %146 = vmatprep.subr.mxu0 0.0
    %147 = vmatpush1.msra.mxu0 %v56
    %148 = vmatprep.subr.mxu0 0.0
    %149 = vmatpush2.msra.mxu0 0.0
    %150 = vmatprep.subr.mxu0 0.0
    %151 = vmatpush2.msra.mxu0 0.0
    %152 = vmatprep.subr.mxu0 0.0
    %153 = vmatpush2.msra.mxu0 0.0
    %154 = vmatprep.subr.mxu0 0.0
    %155 = vmatpush2.msra.mxu0 0.0
    %156 = vmatprep.subr.mxu0 0.0
    %157 = vmatpush2.msra.mxu0 0.0
    %158 = vmatprep.subr.mxu0 0.0
    %159 = vmatpush2.msra.mxu0 0.0
    %160 = vmatprep.subr.mxu0 0.0
    %161 = vmatpush2.msra.mxu0 0.0
    %162 = vmatprep.subr.mxu0 0.0
    %163 = vmatpush2.msra.mxu0 0.0
    %164 = vmatprep.subr.mxu0 0.0
    %165 = vmatpush2.msra.mxu0 0.0
    %166 = vmatprep.subr.mxu0 0.0
    %167 = vmatpush2.msra.mxu0 0.0
    %168 = vmatprep.subr.mxu0 0.0
    %169 = vmatpush2.msra.mxu0 0.0
    %170 = vmatprep.subr.mxu0 0.0
    %171 = vmatpush2.msra.mxu0 0.0
    %172 = vmatprep.subr.mxu0 0.0
    %173 = vmatpush2.msra.mxu0 0.0
    %174 = vmatprep.subr.mxu0 0.0
    %175 = vmatpush2.msra.mxu0 0.0
    %176 = vmatprep.subr.mxu0 0.0
    %177 = vmatpush2.msra.mxu0 0.0
    %178 = vmatprep.subr.mxu0 0.0
    %179 = vmatpush2.msra.mxu0 0.0
    %180 = vmatprep.mubr.f32.mxu0 0.0
    %181 = vmatmul.mubr.f32.gmra.mxu0 %v69
    %v182 = vpop.f32.mrf.mxu0
    %v183 = vadd.f32 %v65, %v182
    %v184 = vpop.f32.mrf.mxu0
    %185 = vmatprep.mubr.f32.mxu0 0.0
    %186 = vmatmul.mubr.f32.gmra.mxu0 %v72
    %v187 = vpop.f32.mrf.mxu0
    %v188 = vadd.f32 %v65, %v187
    %v189 = vpop.f32.mrf.mxu0
    %190 = vmatprep.mubr.f32.mxu0 0.0
    %191 = vmatmul.mubr.f32.gmra.mxu0 %v75
    %v192 = vpop.f32.mrf.mxu0
    %v193 = vadd.f32 %v65, %v192
    %v194 = vpop.f32.mrf.mxu0
    %195 = vmatprep.mubr.f32.mxu0 0.0
    %196 = vmatmul.mubr.f32.gmra.mxu0 %v78
    %v197 = vpop.f32.mrf.mxu0
    %v198 = vadd.f32 %v65, %v197
    %v199 = vpop.f32.mrf.mxu0
    %200 = vmatprep.mubr.f32.mxu0 0.0
    %201 = vmatmul.mubr.f32.gmra.mxu0 %v81
    %v202 = vpop.f32.mrf.mxu0
    %v203 = vadd.f32 %v65, %v202
    %v204 = vpop.f32.mrf.mxu0
    %205 = vmatprep.mubr.f32.mxu0 0.0
    %206 = vmatmul.mubr.f32.gmra.mxu0 %v84
    %v207 = vpop.f32.mrf.mxu0
    %v208 = vadd.f32 %v65, %v207
    %v209 = vpop.f32.mrf.mxu0
    %210 = vmatprep.mubr.f32.mxu0 0.0
    %211 = vmatmul.mubr.f32.gmra.mxu0 %v87
    %v212 = vpop.f32.mrf.mxu0
    %v213 = vadd.f32 %v65, %v212
    %v214 = vpop.f32.mrf.mxu0
    %215 = vmatprep.mubr.f32.mxu0 0.0
    %216 = vmatmul.mubr.f32.gmra.mxu0 %v90
    %v217 = vpop.f32.mrf.mxu0
    %v218 = vadd.f32 %v65, %v217
    %v219 = vpop.f32.mrf.mxu0
    %220 = vmatprep.mubr.f32.mxu0 0.0
    %221 = vmatmul.mubr.f32.gmra.mxu0 %v93
    %v222 = vpop.f32.mrf.mxu0
    %v223 = vadd.f32 %v65, %v222
    %v224 = vpop.f32.mrf.mxu0
    %225 = vmatprep.mubr.f32.mxu0 0.0
    %226 = vmatmul.mubr.f32.gmra.mxu0 %v96
    %v227 = vpop.f32.mrf.mxu0
    %v228 = vadd.f32 %v65, %v227
    %v229 = vpop.f32.mrf.mxu0
    %230 = vmatprep.mubr.f32.mxu0 0.0
    %231 = vmatmul.mubr.f32.gmra.mxu0 %v99
    %v232 = vpop.f32.mrf.mxu0
    %v233 = vadd.f32 %v65, %v232
    %v234 = vpop.f32.mrf.mxu0
    %235 = vmatprep.mubr.f32.mxu0 0.0
    %236 = vmatmul.mubr.f32.gmra.mxu0 %v102
    %v237 = vpop.f32.mrf.mxu0
    %v238 = vadd.f32 %v65, %v237
    %v239 = vpop.f32.mrf.mxu0
    %240 = vmatprep.mubr.f32.mxu0 0.0
    %241 = vmatmul.mubr.f32.gmra.mxu0 %v105
    %v242 = vpop.f32.mrf.mxu0
    %v243 = vadd.f32 %v65, %v242
    %v244 = vpop.f32.mrf.mxu0
    %245 = vmatprep.mubr.f32.mxu0 0.0
    %246 = vmatmul.mubr.f32.gmra.mxu0 %v108
    %v247 = vpop.f32.mrf.mxu0
    %v248 = vadd.f32 %v65, %v247
    %v249 = vpop.f32.mrf.mxu0
    %250 = vmatprep.mubr.f32.mxu0 0.0
    %251 = vmatmul.mubr.f32.gmra.mxu0 %v111
    %v252 = vpop.f32.mrf.mxu0
    %v253 = vadd.f32 %v65, %v252
    %v254 = vpop.f32.mrf.mxu0
    %255 = vmatprep.mubr.f32.mxu0 0.0
    %256 = vmatmul.mubr.f32.gmra.mxu0 %v114
    %v257 = vpop.f32.mrf.mxu0
    %v258 = vadd.f32 %v65, %v257
    %v259 = vpop.f32.mrf.mxu0
    %260 = vdwg.mxu0
    %v261 = vld [vmem:[%s1] sm:$0xff]
    %v262 = vld [vmem:[%s1 + $0x8] sm:$0xff]
    %v263 = vld [vmem:[%s1 + $0x10] sm:$0xff]
    %v264 = vld [vmem:[%s1 + $0x18] sm:$0xff]
    %v265 = vld [vmem:[%s1 + $0x20] sm:$0xff]
    %v266 = vld [vmem:[%s1 + $0x28] sm:$0xff]
    %v267 = vld [vmem:[%s1 + $0x30] sm:$0xff]
    %v268 = vld [vmem:[%s1 + $0x38] sm:$0xff]
    %v269 = vld [vmem:[%s2] sm:$0xff]
    %v270 = vld [vmem:[%s2 + $0x8] sm:$0xff]
    %v271 = vld [vmem:[%s2 + $0x10] sm:$0xff]
    %v272 = vld [vmem:[%s2 + $0x18] sm:$0xff]
    %v273 = vld [vmem:[%s2 + $0x20] sm:$0xff]
    %v274 = vld [vmem:[%s2 + $0x28] sm:$0xff]
    %v275 = vld [vmem:[%s2 + $0x30] sm:$0xff]
    %v276 = vld [vmem:[%s2 + $0x38] sm:$0xff]
    %v277 = vmul.f32 %v183, 0.35355338
    %v278 = vmul.f32 %v188, 0.35355338
    %v279 = vmul.f32 %v193, 0.35355338
    %v280 = vmul.f32 %v198, 0.35355338
    %v281 = vmul.f32 %v203, 0.35355338
    %v282 = vmul.f32 %v208, 0.35355338
    %v283 = vmul.f32 %v213, 0.35355338
    %v284 = vmul.f32 %v218, 0.35355338
    %v285 = vmul.f32 %v223, 0.35355338
    %v286 = vmul.f32 %v228, 0.35355338
    %v287 = vmul.f32 %v233, 0.35355338
    %v288 = vmul.f32 %v238, 0.35355338
    %v289 = vmul.f32 %v243, 0.35355338
    %v290 = vmul.f32 %v248, 0.35355338
    %v291 = vmul.f32 %v253, 0.35355338
    %v292 = vmul.f32 %v258, 0.35355338
    %295 = vrot.lane.b32.xlu0 %v183, 96
    %v296 = vpop.permute.xlu0 %295
    %297 = vrot.lane.b32.xlu0 %v188, 96
    %v298 = vpop.permute.xlu0 %297
    %vm299 = vcmask 64512
    %v301 = vsel %vm299, %v277, 0
    %v304 = vsel %vm299, %v278, 0
    %v306 = vsel %vm299, %v296, 0
    %v308 = vsel %vm299, %v298, 0
    %310 = vmatprep.subr.mxu0 0.0
    %311 = vmatpush1.xpose.msra.mxu0 0.0
    %312 = vmatprep.subr.mxu0 0.0
    %313 = vmatpush1.xpose.msra.mxu0 0.0
    %314 = vmatprep.subr.mxu0 0.0
    %315 = vmatpush1.xpose.msra.mxu0 0.0
    %316 = vmatprep.subr.mxu0 0.0
    %317 = vmatpush1.xpose.msra.mxu0 0.0
    %318 = vmatprep.subr.mxu0 0.0
    %319 = vmatpush1.xpose.msra.mxu0 0.0
    %320 = vmatprep.subr.mxu0 0.0
    %321 = vmatpush1.xpose.msra.mxu0 0.0
    %322 = vmatprep.subr.mxu0 0.0
    %323 = vmatpush1.xpose.msra.mxu0 0.0
    %324 = vmatprep.subr.mxu0 0.0
    %325 = vmatpush1.xpose.msra.mxu0 0.0
    %326 = vmatprep.subr.mxu0 0.0
    %327 = vmatpush1.xpose.msra.mxu0 0.0
    %328 = vmatprep.subr.mxu0 0.0
    %329 = vmatpush1.xpose.msra.mxu0 0.0
    %330 = vmatprep.subr.mxu0 0.0
    %331 = vmatpush1.xpose.msra.mxu0 0.0
    %332 = vmatprep.subr.mxu0 0.0
    %333 = vmatpush1.xpose.msra.mxu0 0.0
    %334 = vmatprep.subr.mxu0 0.0
    %335 = vmatpush1.xpose.msra.mxu0 0.0
    %336 = vmatprep.subr.mxu0 0.0
    %337 = vmatpush1.xpose.msra.mxu0 0.0
    %338 = vmatprep.subr.mxu0 0.0
    %339 = vmatpush1.xpose.msra.mxu0 %v308
    %340 = vmatprep.subr.mxu0 0.0
    %341 = vmatpush1.xpose.msra.mxu0 %v306
    %342 = vmatprep.subr.mxu0 0.0
    %343 = vmatpush2.xpose.msra.mxu0 0.0
    %344 = vmatprep.subr.mxu0 0.0
    %345 = vmatpush2.xpose.msra.mxu0 0.0
    %346 = vmatprep.subr.mxu0 0.0
    %347 = vmatpush2.xpose.msra.mxu0 0.0
    %348 = vmatprep.subr.mxu0 0.0
    %349 = vmatpush2.xpose.msra.mxu0 0.0
    %350 = vmatprep.subr.mxu0 0.0
    %351 = vmatpush2.xpose.msra.mxu0 0.0
    %352 = vmatprep.subr.mxu0 0.0
    %353 = vmatpush2.xpose.msra.mxu0 0.0
    %354 = vmatprep.subr.mxu0 0.0
    %355 = vmatpush2.xpose.msra.mxu0 0.0
    %356 = vmatprep.subr.mxu0 0.0
    %357 = vmatpush2.xpose.msra.mxu0 0.0
    %358 = vmatprep.subr.mxu0 0.0
    %359 = vmatpush2.xpose.msra.mxu0 0.0
    %360 = vmatprep.subr.mxu0 0.0
    %361 = vmatpush2.xpose.msra.mxu0 0.0
    %362 = vmatprep.subr.mxu0 0.0
    %363 = vmatpush2.xpose.msra.mxu0 0.0
    %364 = vmatprep.subr.mxu0 0.0
    %365 = vmatpush2.xpose.msra.mxu0 0.0
    %366 = vmatprep.subr.mxu0 0.0
    %367 = vmatpush2.xpose.msra.mxu0 0.0
    %368 = vmatprep.subr.mxu0 0.0
    %369 = vmatpush2.xpose.msra.mxu0 0.0
    %370 = vmatprep.subr.mxu0 0.0
    %371 = vmatpush2.xpose.msra.mxu0 0.0
    %372 = vmatprep.subr.mxu0 0.0
    %373 = vmatpush2.xpose.msra.mxu0 0.0
    %374 = vmatprep.mubr.f32.mxu0 0.0
    %375 = vmatmul.mubr.f32.gmra.mxu0 %v301
    %v376 = vpop.f32.mrf.mxu0
    %v377 = vadd.f32 %v261, %v376
    %v378 = vpop.f32.mrf.mxu0
    %379 = vmatprep.mubr.f32.mxu0 0.0
    %380 = vmatmul.mubr.f32.gmra.mxu0 %v304
    %v381 = vpop.f32.mrf.mxu0
    %v382 = vadd.f32 %v262, %v381
    %v383 = vpop.f32.mrf.mxu0
    %384 = vdwg.mxu0
    %387 = vrot.lane.b32.xlu0 %v193, 96
    %v388 = vpop.permute.xlu0 %387
    %389 = vrot.lane.b32.xlu0 %v198, 96
    %v390 = vpop.permute.xlu0 %389
    %v392 = vsel %vm299, %v279, 0
    %v395 = vsel %vm299, %v280, 0
    %v397 = vsel %vm299, %v388, 0
    %v399 = vsel %vm299, %v390, 0
    %401 = vmatprep.subr.mxu0 0.0
    %402 = vmatpush1.xpose.msra.mxu0 0.0
    %403 = vmatprep.subr.mxu0 0.0
    %404 = vmatpush1.xpose.msra.mxu0 0.0
    %405 = vmatprep.subr.mxu0 0.0
    %406 = vmatpush1.xpose.msra.mxu0 0.0
    %407 = vmatprep.subr.mxu0 0.0
    %408 = vmatpush1.xpose.msra.mxu0 0.0
    %409 = vmatprep.subr.mxu0 0.0
    %410 = vmatpush1.xpose.msra.mxu0 0.0
    %411 = vmatprep.subr.mxu0 0.0
    %412 = vmatpush1.xpose.msra.mxu0 0.0
    %413 = vmatprep.subr.mxu0 0.0
    %414 = vmatpush1.xpose.msra.mxu0 0.0
    %415 = vmatprep.subr.mxu0 0.0
    %416 = vmatpush1.xpose.msra.mxu0 0.0
    %417 = vmatprep.subr.mxu0 0.0
    %418 = vmatpush1.xpose.msra.mxu0 0.0
    %419 = vmatprep.subr.mxu0 0.0
    %420 = vmatpush1.xpose.msra.mxu0 0.0
    %421 = vmatprep.subr.mxu0 0.0
    %422 = vmatpush1.xpose.msra.mxu0 0.0
    %423 = vmatprep.subr.mxu0 0.0
    %424 = vmatpush1.xpose.msra.mxu0 0.0
    %425 = vmatprep.subr.mxu0 0.0
    %426 = vmatpush1.xpose.msra.mxu0 0.0
    %427 = vmatprep.subr.mxu0 0.0
    %428 = vmatpush1.xpose.msra.mxu0 0.0
    %429 = vmatprep.subr.mxu0 0.0
    %430 = vmatpush1.xpose.msra.mxu0 %v399
    %431 = vmatprep.subr.mxu0 0.0
    %432 = vmatpush1.xpose.msra.mxu0 %v397
    %433 = vmatprep.subr.mxu0 0.0
    %434 = vmatpush2.xpose.msra.mxu0 0.0
    %435 = vmatprep.subr.mxu0 0.0
    %436 = vmatpush2.xpose.msra.mxu0 0.0
    %437 = vmatprep.subr.mxu0 0.0
    %438 = vmatpush2.xpose.msra.mxu0 0.0
    %439 = vmatprep.subr.mxu0 0.0
    %440 = vmatpush2.xpose.msra.mxu0 0.0
    %441 = vmatprep.subr.mxu0 0.0
    %442 = vmatpush2.xpose.msra.mxu0 0.0
    %443 = vmatprep.subr.mxu0 0.0
    %444 = vmatpush2.xpose.msra.mxu0 0.0
    %445 = vmatprep.subr.mxu0 0.0
    %446 = vmatpush2.xpose.msra.mxu0 0.0
    %447 = vmatprep.subr.mxu0 0.0
    %448 = vmatpush2.xpose.msra.mxu0 0.0
    %449 = vmatprep.subr.mxu0 0.0
    %450 = vmatpush2.xpose.msra.mxu0 0.0
    %451 = vmatprep.subr.mxu0 0.0
    %452 = vmatpush2.xpose.msra.mxu0 0.0
    %453 = vmatprep.subr.mxu0 0.0
    %454 = vmatpush2.xpose.msra.mxu0 0.0
    %455 = vmatprep.subr.mxu0 0.0
    %456 = vmatpush2.xpose.msra.mxu0 0.0
    %457 = vmatprep.subr.mxu0 0.0
    %458 = vmatpush2.xpose.msra.mxu0 0.0
    %459 = vmatprep.subr.mxu0 0.0
    %460 = vmatpush2.xpose.msra.mxu0 0.0
    %461 = vmatprep.subr.mxu0 0.0
    %462 = vmatpush2.xpose.msra.mxu0 0.0
    %463 = vmatprep.subr.mxu0 0.0
    %464 = vmatpush2.xpose.msra.mxu0 0.0
    %465 = vmatprep.mubr.f32.mxu0 0.0
    %466 = vmatmul.mubr.f32.gmra.mxu0 %v392
    %v467 = vpop.f32.mrf.mxu0
    %v468 = vadd.f32 %v261, %v467
    %v469 = vpop.f32.mrf.mxu0
    %470 = vmatprep.mubr.f32.mxu0 0.0
    %471 = vmatmul.mubr.f32.gmra.mxu0 %v395
    %v472 = vpop.f32.mrf.mxu0
    %v473 = vadd.f32 %v262, %v472
    %v474 = vpop.f32.mrf.mxu0
    %475 = vdwg.mxu0
    %478 = vrot.lane.b32.xlu0 %v203, 96
    %v479 = vpop.permute.xlu0 %478
    %480 = vrot.lane.b32.xlu0 %v208, 96
    %v481 = vpop.permute.xlu0 %480
    %v483 = vsel %vm299, %v281, 0
    %v486 = vsel %vm299, %v282, 0
    %v488 = vsel %vm299, %v479, 0
    %v490 = vsel %vm299, %v481, 0
    %492 = vmatprep.subr.mxu0 0.0
    %493 = vmatpush1.xpose.msra.mxu0 0.0
    %494 = vmatprep.subr.mxu0 0.0
    %495 = vmatpush1.xpose.msra.mxu0 0.0
    %496 = vmatprep.subr.mxu0 0.0
    %497 = vmatpush1.xpose.msra.mxu0 0.0
    %498 = vmatprep.subr.mxu0 0.0
    %499 = vmatpush1.xpose.msra.mxu0 0.0
    %500 = vmatprep.subr.mxu0 0.0
    %501 = vmatpush1.xpose.msra.mxu0 0.0
    %502 = vmatprep.subr.mxu0 0.0
    %503 = vmatpush1.xpose.msra.mxu0 0.0
    %504 = vmatprep.subr.mxu0 0.0
    %505 = vmatpush1.xpose.msra.mxu0 0.0
    %506 = vmatprep.subr.mxu0 0.0
    %507 = vmatpush1.xpose.msra.mxu0 0.0
    %508 = vmatprep.subr.mxu0 0.0
    %509 = vmatpush1.xpose.msra.mxu0 0.0
    %510 = vmatprep.subr.mxu0 0.0
    %511 = vmatpush1.xpose.msra.mxu0 0.0
    %512 = vmatprep.subr.mxu0 0.0
    %513 = vmatpush1.xpose.msra.mxu0 0.0
    %514 = vmatprep.subr.mxu0 0.0
    %515 = vmatpush1.xpose.msra.mxu0 0.0
    %516 = vmatprep.subr.mxu0 0.0
    %517 = vmatpush1.xpose.msra.mxu0 0.0
    %518 = vmatprep.subr.mxu0 0.0
    %519 = vmatpush1.xpose.msra.mxu0 0.0
    %520 = vmatprep.subr.mxu0 0.0
    %521 = vmatpush1.xpose.msra.mxu0 %v490
    %522 = vmatprep.subr.mxu0 0.0
    %523 = vmatpush1.xpose.msra.mxu0 %v488
    %524 = vmatprep.subr.mxu0 0.0
    %525 = vmatpush2.xpose.msra.mxu0 0.0
    %526 = vmatprep.subr.mxu0 0.0
    %527 = vmatpush2.xpose.msra.mxu0 0.0
    %528 = vmatprep.subr.mxu0 0.0
    %529 = vmatpush2.xpose.msra.mxu0 0.0
    %530 = vmatprep.subr.mxu0 0.0
    %531 = vmatpush2.xpose.msra.mxu0 0.0
    %532 = vmatprep.subr.mxu0 0.0
    %533 = vmatpush2.xpose.msra.mxu0 0.0
    %534 = vmatprep.subr.mxu0 0.0
    %535 = vmatpush2.xpose.msra.mxu0 0.0
    %536 = vmatprep.subr.mxu0 0.0
    %537 = vmatpush2.xpose.msra.mxu0 0.0
    %538 = vmatprep.subr.mxu0 0.0
    %539 = vmatpush2.xpose.msra.mxu0 0.0
    %540 = vmatprep.subr.mxu0 0.0
    %541 = vmatpush2.xpose.msra.mxu0 0.0
    %542 = vmatprep.subr.mxu0 0.0
    %543 = vmatpush2.xpose.msra.mxu0 0.0
    %544 = vmatprep.subr.mxu0 0.0
    %545 = vmatpush2.xpose.msra.mxu0 0.0
    %546 = vmatprep.subr.mxu0 0.0
    %547 = vmatpush2.xpose.msra.mxu0 0.0
    %548 = vmatprep.subr.mxu0 0.0
    %549 = vmatpush2.xpose.msra.mxu0 0.0
    %550 = vmatprep.subr.mxu0 0.0
    %551 = vmatpush2.xpose.msra.mxu0 0.0
    %552 = vmatprep.subr.mxu0 0.0
    %553 = vmatpush2.xpose.msra.mxu0 0.0
    %554 = vmatprep.subr.mxu0 0.0
    %555 = vmatpush2.xpose.msra.mxu0 0.0
    %556 = vmatprep.mubr.f32.mxu0 0.0
    %557 = vmatmul.mubr.f32.gmra.mxu0 %v483
    %v558 = vpop.f32.mrf.mxu0
    %v559 = vadd.f32 %v261, %v558
    %v560 = vpop.f32.mrf.mxu0
    %561 = vmatprep.mubr.f32.mxu0 0.0
    %562 = vmatmul.mubr.f32.gmra.mxu0 %v486
    %v563 = vpop.f32.mrf.mxu0
    %v564 = vadd.f32 %v262, %v563
    %v565 = vpop.f32.mrf.mxu0
    %566 = vdwg.mxu0
    %569 = vrot.lane.b32.xlu0 %v213, 96
    %v570 = vpop.permute.xlu0 %569
    %571 = vrot.lane.b32.xlu0 %v218, 96
    %v572 = vpop.permute.xlu0 %571
    %v574 = vsel %vm299, %v283, 0
    %v577 = vsel %vm299, %v284, 0
    %v579 = vsel %vm299, %v570, 0
    %v581 = vsel %vm299, %v572, 0
    %583 = vmatprep.subr.mxu0 0.0
    %584 = vmatpush1.xpose.msra.mxu0 0.0
    %585 = vmatprep.subr.mxu0 0.0
    %586 = vmatpush1.xpose.msra.mxu0 0.0
    %587 = vmatprep.subr.mxu0 0.0
    %588 = vmatpush1.xpose.msra.mxu0 0.0
    %589 = vmatprep.subr.mxu0 0.0
    %590 = vmatpush1.xpose.msra.mxu0 0.0
    %591 = vmatprep.subr.mxu0 0.0
    %592 = vmatpush1.xpose.msra.mxu0 0.0
    %593 = vmatprep.subr.mxu0 0.0
    %594 = vmatpush1.xpose.msra.mxu0 0.0
    %595 = vmatprep.subr.mxu0 0.0
    %596 = vmatpush1.xpose.msra.mxu0 0.0
    %597 = vmatprep.subr.mxu0 0.0
    %598 = vmatpush1.xpose.msra.mxu0 0.0
    %599 = vmatprep.subr.mxu0 0.0
    %600 = vmatpush1.xpose.msra.mxu0 0.0
    %601 = vmatprep.subr.mxu0 0.0
    %602 = vmatpush1.xpose.msra.mxu0 0.0
    %603 = vmatprep.subr.mxu0 0.0
    %604 = vmatpush1.xpose.msra.mxu0 0.0
    %605 = vmatprep.subr.mxu0 0.0
    %606 = vmatpush1.xpose.msra.mxu0 0.0
    %607 = vmatprep.subr.mxu0 0.0
    %608 = vmatpush1.xpose.msra.mxu0 0.0
    %609 = vmatprep.subr.mxu0 0.0
    %610 = vmatpush1.xpose.msra.mxu0 0.0
    %611 = vmatprep.subr.mxu0 0.0
    %612 = vmatpush1.xpose.msra.mxu0 %v581
    %613 = vmatprep.subr.mxu0 0.0
    %614 = vmatpush1.xpose.msra.mxu0 %v579
    %615 = vmatprep.subr.mxu0 0.0
    %616 = vmatpush2.xpose.msra.mxu0 0.0
    %617 = vmatprep.subr.mxu0 0.0
    %618 = vmatpush2.xpose.msra.mxu0 0.0
    %619 = vmatprep.subr.mxu0 0.0
    %620 = vmatpush2.xpose.msra.mxu0 0.0
    %621 = vmatprep.subr.mxu0 0.0
    %622 = vmatpush2.xpose.msra.mxu0 0.0
    %623 = vmatprep.subr.mxu0 0.0
    %624 = vmatpush2.xpose.msra.mxu0 0.0
    %625 = vmatprep.subr.mxu0 0.0
    %626 = vmatpush2.xpose.msra.mxu0 0.0
    %627 = vmatprep.subr.mxu0 0.0
    %628 = vmatpush2.xpose.msra.mxu0 0.0
    %629 = vmatprep.subr.mxu0 0.0
    %630 = vmatpush2.xpose.msra.mxu0 0.0
    %631 = vmatprep.subr.mxu0 0.0
    %632 = vmatpush2.xpose.msra.mxu0 0.0
    %633 = vmatprep.subr.mxu0 0.0
    %634 = vmatpush2.xpose.msra.mxu0 0.0
    %635 = vmatprep.subr.mxu0 0.0
    %636 = vmatpush2.xpose.msra.mxu0 0.0
    %637 = vmatprep.subr.mxu0 0.0
    %638 = vmatpush2.xpose.msra.mxu0 0.0
    %639 = vmatprep.subr.mxu0 0.0
    %640 = vmatpush2.xpose.msra.mxu0 0.0
    %641 = vmatprep.subr.mxu0 0.0
    %642 = vmatpush2.xpose.msra.mxu0 0.0
    %643 = vmatprep.subr.mxu0 0.0
    %644 = vmatpush2.xpose.msra.mxu0 0.0
    %645 = vmatprep.subr.mxu0 0.0
    %646 = vmatpush2.xpose.msra.mxu0 0.0
    %647 = vmatprep.mubr.f32.mxu0 0.0
    %648 = vmatmul.mubr.f32.gmra.mxu0 %v574
    %v649 = vpop.f32.mrf.mxu0
    %v650 = vadd.f32 %v261, %v649
    %v651 = vpop.f32.mrf.mxu0
    %652 = vmatprep.mubr.f32.mxu0 0.0
    %653 = vmatmul.mubr.f32.gmra.mxu0 %v577
    %v654 = vpop.f32.mrf.mxu0
    %v655 = vadd.f32 %v262, %v654
    %v656 = vpop.f32.mrf.mxu0
    %657 = vdwg.mxu0
    %660 = vrot.lane.b32.xlu0 %v223, 96
    %v661 = vpop.permute.xlu0 %660
    %662 = vrot.lane.b32.xlu0 %v228, 96
    %v663 = vpop.permute.xlu0 %662
    %v665 = vsel %vm299, %v285, 0
    %v668 = vsel %vm299, %v286, 0
    %v670 = vsel %vm299, %v661, 0
    %v672 = vsel %vm299, %v663, 0
    %674 = vmatprep.subr.mxu0 0.0
    %675 = vmatpush1.xpose.msra.mxu0 0.0
    %676 = vmatprep.subr.mxu0 0.0
    %677 = vmatpush1.xpose.msra.mxu0 0.0
    %678 = vmatprep.subr.mxu0 0.0
    %679 = vmatpush1.xpose.msra.mxu0 0.0
    %680 = vmatprep.subr.mxu0 0.0
    %681 = vmatpush1.xpose.msra.mxu0 0.0
    %682 = vmatprep.subr.mxu0 0.0
    %683 = vmatpush1.xpose.msra.mxu0 0.0
    %684 = vmatprep.subr.mxu0 0.0
    %685 = vmatpush1.xpose.msra.mxu0 0.0
    %686 = vmatprep.subr.mxu0 0.0
    %687 = vmatpush1.xpose.msra.mxu0 0.0
    %688 = vmatprep.subr.mxu0 0.0
    %689 = vmatpush1.xpose.msra.mxu0 0.0
    %690 = vmatprep.subr.mxu0 0.0
    %691 = vmatpush1.xpose.msra.mxu0 0.0
    %692 = vmatprep.subr.mxu0 0.0
    %693 = vmatpush1.xpose.msra.mxu0 0.0
    %694 = vmatprep.subr.mxu0 0.0
    %695 = vmatpush1.xpose.msra.mxu0 0.0
    %696 = vmatprep.subr.mxu0 0.0
    %697 = vmatpush1.xpose.msra.mxu0 0.0
    %698 = vmatprep.subr.mxu0 0.0
    %699 = vmatpush1.xpose.msra.mxu0 0.0
    %700 = vmatprep.subr.mxu0 0.0
    %701 = vmatpush1.xpose.msra.mxu0 0.0
    %702 = vmatprep.subr.mxu0 0.0
    %703 = vmatpush1.xpose.msra.mxu0 %v672
    %704 = vmatprep.subr.mxu0 0.0
    %705 = vmatpush1.xpose.msra.mxu0 %v670
    %706 = vmatprep.subr.mxu0 0.0
    %707 = vmatpush2.xpose.msra.mxu0 0.0
    %708 = vmatprep.subr.mxu0 0.0
    %709 = vmatpush2.xpose.msra.mxu0 0.0
    %710 = vmatprep.subr.mxu0 0.0
    %711 = vmatpush2.xpose.msra.mxu0 0.0
    %712 = vmatprep.subr.mxu0 0.0
    %713 = vmatpush2.xpose.msra.mxu0 0.0
    %714 = vmatprep.subr.mxu0 0.0
    %715 = vmatpush2.xpose.msra.mxu0 0.0
    %716 = vmatprep.subr.mxu0 0.0
    %717 = vmatpush2.xpose.msra.mxu0 0.0
    %718 = vmatprep.subr.mxu0 0.0
    %719 = vmatpush2.xpose.msra.mxu0 0.0
    %720 = vmatprep.subr.mxu0 0.0
    %721 = vmatpush2.xpose.msra.mxu0 0.0
    %722 = vmatprep.subr.mxu0 0.0
    %723 = vmatpush2.xpose.msra.mxu0 0.0
    %724 = vmatprep.subr.mxu0 0.0
    %725 = vmatpush2.xpose.msra.mxu0 0.0
    %726 = vmatprep.subr.mxu0 0.0
    %727 = vmatpush2.xpose.msra.mxu0 0.0
    %728 = vmatprep.subr.mxu0 0.0
    %729 = vmatpush2.xpose.msra.mxu0 0.0
    %730 = vmatprep.subr.mxu0 0.0
    %731 = vmatpush2.xpose.msra.mxu0 0.0
    %732 = vmatprep.subr.mxu0 0.0
    %733 = vmatpush2.xpose.msra.mxu0 0.0
    %734 = vmatprep.subr.mxu0 0.0
    %735 = vmatpush2.xpose.msra.mxu0 0.0
    %736 = vmatprep.subr.mxu0 0.0
    %737 = vmatpush2.xpose.msra.mxu0 0.0
    %738 = vmatprep.mubr.f32.mxu0 0.0
    %739 = vmatmul.mubr.f32.gmra.mxu0 %v665
    %v740 = vpop.f32.mrf.mxu0
    %v741 = vadd.f32 %v261, %v740
    %v742 = vpop.f32.mrf.mxu0
    %743 = vmatprep.mubr.f32.mxu0 0.0
    %744 = vmatmul.mubr.f32.gmra.mxu0 %v668
    %v745 = vpop.f32.mrf.mxu0
    %v746 = vadd.f32 %v262, %v745
    %v747 = vpop.f32.mrf.mxu0
    %748 = vdwg.mxu0
    %751 = vrot.lane.b32.xlu0 %v233, 96
    %v752 = vpop.permute.xlu0 %751
    %753 = vrot.lane.b32.xlu0 %v238, 96
    %v754 = vpop.permute.xlu0 %753
    %v756 = vsel %vm299, %v287, 0
    %v759 = vsel %vm299, %v288, 0
    %v761 = vsel %vm299, %v752, 0
    %v763 = vsel %vm299, %v754, 0
    %765 = vmatprep.subr.mxu0 0.0
    %766 = vmatpush1.xpose.msra.mxu0 0.0
    %767 = vmatprep.subr.mxu0 0.0
    %768 = vmatpush1.xpose.msra.mxu0 0.0
    %769 = vmatprep.subr.mxu0 0.0
    %770 = vmatpush1.xpose.msra.mxu0 0.0
    %771 = vmatprep.subr.mxu0 0.0
    %772 = vmatpush1.xpose.msra.mxu0 0.0
    %773 = vmatprep.subr.mxu0 0.0
    %774 = vmatpush1.xpose.msra.mxu0 0.0
    %775 = vmatprep.subr.mxu0 0.0
    %776 = vmatpush1.xpose.msra.mxu0 0.0
    %777 = vmatprep.subr.mxu0 0.0
    %778 = vmatpush1.xpose.msra.mxu0 0.0
    %779 = vmatprep.subr.mxu0 0.0
    %780 = vmatpush1.xpose.msra.mxu0 0.0
    %781 = vmatprep.subr.mxu0 0.0
    %782 = vmatpush1.xpose.msra.mxu0 0.0
    %783 = vmatprep.subr.mxu0 0.0
    %784 = vmatpush1.xpose.msra.mxu0 0.0
    %785 = vmatprep.subr.mxu0 0.0
    %786 = vmatpush1.xpose.msra.mxu0 0.0
    %787 = vmatprep.subr.mxu0 0.0
    %788 = vmatpush1.xpose.msra.mxu0 0.0
    %789 = vmatprep.subr.mxu0 0.0
    %790 = vmatpush1.xpose.msra.mxu0 0.0
    %791 = vmatprep.subr.mxu0 0.0
    %792 = vmatpush1.xpose.msra.mxu0 0.0
    %793 = vmatprep.subr.mxu0 0.0
    %794 = vmatpush1.xpose.msra.mxu0 %v763
    %795 = vmatprep.subr.mxu0 0.0
    %796 = vmatpush1.xpose.msra.mxu0 %v761
    %797 = vmatprep.subr.mxu0 0.0
    %798 = vmatpush2.xpose.msra.mxu0 0.0
    %799 = vmatprep.subr.mxu0 0.0
    %800 = vmatpush2.xpose.msra.mxu0 0.0
    %801 = vmatprep.subr.mxu0 0.0
    %802 = vmatpush2.xpose.msra.mxu0 0.0
    %803 = vmatprep.subr.mxu0 0.0
    %804 = vmatpush2.xpose.msra.mxu0 0.0
    %805 = vmatprep.subr.mxu0 0.0
    %806 = vmatpush2.xpose.msra.mxu0 0.0
    %807 = vmatprep.subr.mxu0 0.0
    %808 = vmatpush2.xpose.msra.mxu0 0.0
    %809 = vmatprep.subr.mxu0 0.0
    %810 = vmatpush2.xpose.msra.mxu0 0.0
    %811 = vmatprep.subr.mxu0 0.0
    %812 = vmatpush2.xpose.msra.mxu0 0.0
    %813 = vmatprep.subr.mxu0 0.0
    %814 = vmatpush2.xpose.msra.mxu0 0.0
    %815 = vmatprep.subr.mxu0 0.0
    %816 = vmatpush2.xpose.msra.mxu0 0.0
    %817 = vmatprep.subr.mxu0 0.0
    %818 = vmatpush2.xpose.msra.mxu0 0.0
    %819 = vmatprep.subr.mxu0 0.0
    %820 = vmatpush2.xpose.msra.mxu0 0.0
    %821 = vmatprep.subr.mxu0 0.0
    %822 = vmatpush2.xpose.msra.mxu0 0.0
    %823 = vmatprep.subr.mxu0 0.0
    %824 = vmatpush2.xpose.msra.mxu0 0.0
    %825 = vmatprep.subr.mxu0 0.0
    %826 = vmatpush2.xpose.msra.mxu0 0.0
    %827 = vmatprep.subr.mxu0 0.0
    %828 = vmatpush2.xpose.msra.mxu0 0.0
    %829 = vmatprep.mubr.f32.mxu0 0.0
    %830 = vmatmul.mubr.f32.gmra.mxu0 %v756
    %v831 = vpop.f32.mrf.mxu0
    %v832 = vadd.f32 %v261, %v831
    %v833 = vpop.f32.mrf.mxu0
    %834 = vmatprep.mubr.f32.mxu0 0.0
    %835 = vmatmul.mubr.f32.gmra.mxu0 %v759
    %v836 = vpop.f32.mrf.mxu0
    %v837 = vadd.f32 %v262, %v836
    %v838 = vpop.f32.mrf.mxu0
    %839 = vdwg.mxu0
    %842 = vrot.lane.b32.xlu0 %v243, 96
    %v843 = vpop.permute.xlu0 %842
    %844 = vrot.lane.b32.xlu0 %v248, 96
    %v845 = vpop.permute.xlu0 %844
    %v847 = vsel %vm299, %v289, 0
    %v850 = vsel %vm299, %v290, 0
    %v852 = vsel %vm299, %v843, 0
    %v854 = vsel %vm299, %v845, 0
    %856 = vmatprep.subr.mxu0 0.0
    %857 = vmatpush1.xpose.msra.mxu0 0.0
    %858 = vmatprep.subr.mxu0 0.0
    %859 = vmatpush1.xpose.msra.mxu0 0.0
    %860 = vmatprep.subr.mxu0 0.0
    %861 = vmatpush1.xpose.msra.mxu0 0.0
    %862 = vmatprep.subr.mxu0 0.0
    %863 = vmatpush1.xpose.msra.mxu0 0.0
    %864 = vmatprep.subr.mxu0 0.0
    %865 = vmatpush1.xpose.msra.mxu0 0.0
    %866 = vmatprep.subr.mxu0 0.0
    %867 = vmatpush1.xpose.msra.mxu0 0.0
    %868 = vmatprep.subr.mxu0 0.0
    %869 = vmatpush1.xpose.msra.mxu0 0.0
    %870 = vmatprep.subr.mxu0 0.0
    %871 = vmatpush1.xpose.msra.mxu0 0.0
    %872 = vmatprep.subr.mxu0 0.0
    %873 = vmatpush1.xpose.msra.mxu0 0.0
    %874 = vmatprep.subr.mxu0 0.0
    %875 = vmatpush1.xpose.msra.mxu0 0.0
    %876 = vmatprep.subr.mxu0 0.0
    %877 = vmatpush1.xpose.msra.mxu0 0.0
    %878 = vmatprep.subr.mxu0 0.0
    %879 = vmatpush1.xpose.msra.mxu0 0.0
    %880 = vmatprep.subr.mxu0 0.0
    %881 = vmatpush1.xpose.msra.mxu0 0.0
    %882 = vmatprep.subr.mxu0 0.0
    %883 = vmatpush1.xpose.msra.mxu0 0.0
    %884 = vmatprep.subr.mxu0 0.0
    %885 = vmatpush1.xpose.msra.mxu0 %v854
    %886 = vmatprep.subr.mxu0 0.0
    %887 = vmatpush1.xpose.msra.mxu0 %v852
    %888 = vmatprep.subr.mxu0 0.0
    %889 = vmatpush2.xpose.msra.mxu0 0.0
    %890 = vmatprep.subr.mxu0 0.0
    %891 = vmatpush2.xpose.msra.mxu0 0.0
    %892 = vmatprep.subr.mxu0 0.0
    %893 = vmatpush2.xpose.msra.mxu0 0.0
    %894 = vmatprep.subr.mxu0 0.0
    %895 = vmatpush2.xpose.msra.mxu0 0.0
    %896 = vmatprep.subr.mxu0 0.0
    %897 = vmatpush2.xpose.msra.mxu0 0.0
    %898 = vmatprep.subr.mxu0 0.0
    %899 = vmatpush2.xpose.msra.mxu0 0.0
    %900 = vmatprep.subr.mxu0 0.0
    %901 = vmatpush2.xpose.msra.mxu0 0.0
    %902 = vmatprep.subr.mxu0 0.0
    %903 = vmatpush2.xpose.msra.mxu0 0.0
    %904 = vmatprep.subr.mxu0 0.0
    %905 = vmatpush2.xpose.msra.mxu0 0.0
    %906 = vmatprep.subr.mxu0 0.0
    %907 = vmatpush2.xpose.msra.mxu0 0.0
    %908 = vmatprep.subr.mxu0 0.0
    %909 = vmatpush2.xpose.msra.mxu0 0.0
    %910 = vmatprep.subr.mxu0 0.0
    %911 = vmatpush2.xpose.msra.mxu0 0.0
    %912 = vmatprep.subr.mxu0 0.0
    %913 = vmatpush2.xpose.msra.mxu0 0.0
    %914 = vmatprep.subr.mxu0 0.0
    %915 = vmatpush2.xpose.msra.mxu0 0.0
    %916 = vmatprep.subr.mxu0 0.0
    %917 = vmatpush2.xpose.msra.mxu0 0.0
    %918 = vmatprep.subr.mxu0 0.0
    %919 = vmatpush2.xpose.msra.mxu0 0.0
    %920 = vmatprep.mubr.f32.mxu0 0.0
    %921 = vmatmul.mubr.f32.gmra.mxu0 %v847
    %v922 = vpop.f32.mrf.mxu0
    %v923 = vadd.f32 %v261, %v922
    %v924 = vpop.f32.mrf.mxu0
    %925 = vmatprep.mubr.f32.mxu0 0.0
    %926 = vmatmul.mubr.f32.gmra.mxu0 %v850
    %v927 = vpop.f32.mrf.mxu0
    %v928 = vadd.f32 %v262, %v927
    %v929 = vpop.f32.mrf.mxu0
    %930 = vdwg.mxu0
    %933 = vrot.lane.b32.xlu0 %v253, 96
    %v934 = vpop.permute.xlu0 %933
    %935 = vrot.lane.b32.xlu0 %v258, 96
    %v936 = vpop.permute.xlu0 %935
    %v938 = vsel %vm299, %v291, 0
    %v941 = vsel %vm299, %v292, 0
    %v943 = vsel %vm299, %v934, 0
    %v945 = vsel %vm299, %v936, 0
    %947 = vmatprep.subr.mxu0 0.0
    %948 = vmatpush1.xpose.msra.mxu0 0.0
    %949 = vmatprep.subr.mxu0 0.0
    %950 = vmatpush1.xpose.msra.mxu0 0.0
    %951 = vmatprep.subr.mxu0 0.0
    %952 = vmatpush1.xpose.msra.mxu0 0.0
    %953 = vmatprep.subr.mxu0 0.0
    %954 = vmatpush1.xpose.msra.mxu0 0.0
    %955 = vmatprep.subr.mxu0 0.0
    %956 = vmatpush1.xpose.msra.mxu0 0.0
    %957 = vmatprep.subr.mxu0 0.0
    %958 = vmatpush1.xpose.msra.mxu0 0.0
    %959 = vmatprep.subr.mxu0 0.0
    %960 = vmatpush1.xpose.msra.mxu0 0.0
    %961 = vmatprep.subr.mxu0 0.0
    %962 = vmatpush1.xpose.msra.mxu0 0.0
    %963 = vmatprep.subr.mxu0 0.0
    %964 = vmatpush1.xpose.msra.mxu0 0.0
    %965 = vmatprep.subr.mxu0 0.0
    %966 = vmatpush1.xpose.msra.mxu0 0.0
    %967 = vmatprep.subr.mxu0 0.0
    %968 = vmatpush1.xpose.msra.mxu0 0.0
    %969 = vmatprep.subr.mxu0 0.0
    %970 = vmatpush1.xpose.msra.mxu0 0.0
    %971 = vmatprep.subr.mxu0 0.0
    %972 = vmatpush1.xpose.msra.mxu0 0.0
    %973 = vmatprep.subr.mxu0 0.0
    %974 = vmatpush1.xpose.msra.mxu0 0.0
    %975 = vmatprep.subr.mxu0 0.0
    %976 = vmatpush1.xpose.msra.mxu0 %v945
    %977 = vmatprep.subr.mxu0 0.0
    %978 = vmatpush1.xpose.msra.mxu0 %v943
    %979 = vmatprep.subr.mxu0 0.0
    %980 = vmatpush2.xpose.msra.mxu0 0.0
    %981 = vmatprep.subr.mxu0 0.0
    %982 = vmatpush2.xpose.msra.mxu0 0.0
    %983 = vmatprep.subr.mxu0 0.0
    %984 = vmatpush2.xpose.msra.mxu0 0.0
    %985 = vmatprep.subr.mxu0 0.0
    %986 = vmatpush2.xpose.msra.mxu0 0.0
    %987 = vmatprep.subr.mxu0 0.0
    %988 = vmatpush2.xpose.msra.mxu0 0.0
    %989 = vmatprep.subr.mxu0 0.0
    %990 = vmatpush2.xpose.msra.mxu0 0.0
    %991 = vmatprep.subr.mxu0 0.0
    %992 = vmatpush2.xpose.msra.mxu0 0.0
    %993 = vmatprep.subr.mxu0 0.0
    %994 = vmatpush2.xpose.msra.mxu0 0.0
    %995 = vmatprep.subr.mxu0 0.0
    %996 = vmatpush2.xpose.msra.mxu0 0.0
    %997 = vmatprep.subr.mxu0 0.0
    %998 = vmatpush2.xpose.msra.mxu0 0.0
    %999 = vmatprep.subr.mxu0 0.0
    %1000 = vmatpush2.xpose.msra.mxu0 0.0
    %1001 = vmatprep.subr.mxu0 0.0
    %1002 = vmatpush2.xpose.msra.mxu0 0.0
    %1003 = vmatprep.subr.mxu0 0.0
    %1004 = vmatpush2.xpose.msra.mxu0 0.0
    %1005 = vmatprep.subr.mxu0 0.0
    %1006 = vmatpush2.xpose.msra.mxu0 0.0
    %1007 = vmatprep.subr.mxu0 0.0
    %1008 = vmatpush2.xpose.msra.mxu0 0.0
    %1009 = vmatprep.subr.mxu0 0.0
    %1010 = vmatpush2.xpose.msra.mxu0 0.0
    %1011 = vmatprep.mubr.f32.mxu0 0.0
    %1012 = vmatmul.mubr.f32.gmra.mxu0 %v938
    %v1013 = vpop.f32.mrf.mxu0
    %v1014 = vadd.f32 %v261, %v1013
    %v1015 = vpop.f32.mrf.mxu0
    %1016 = vmatprep.mubr.f32.mxu0 0.0
    %1017 = vmatmul.mubr.f32.gmra.mxu0 %v941
    %v1018 = vpop.f32.mrf.mxu0
    %v1019 = vadd.f32 %v262, %v1018
    %v1020 = vpop.f32.mrf.mxu0
    %1021 = vdwg.mxu0
    %v1022 = vadd.f32 %v377, %v269
    %v1023 = vadd.f32 %v382, %v270
    %v1024 = vadd.f32 %v468, %v271
    %v1025 = vadd.f32 %v473, %v272
    %v1026 = vadd.f32 %v559, %v273
    %v1027 = vadd.f32 %v564, %v274
    %v1028 = vadd.f32 %v650, %v275
    %v1029 = vadd.f32 %v655, %v276
    %v1030 = vadd.f32 %v741, %v269
    %v1031 = vadd.f32 %v746, %v270
    %v1032 = vadd.f32 %v832, %v271
    %v1033 = vadd.f32 %v837, %v272
    %v1034 = vadd.f32 %v923, %v273
    %v1035 = vadd.f32 %v928, %v274
    %v1036 = vadd.f32 %v1014, %v275
    %v1037 = vadd.f32 %v1019, %v276
    %vm1038 = vcmask 130048
    %v1039 = vsel %vm1038, %v1022, -inf
    %1040 = vmax.xlane.f32.xlu0 %v1039
    %v1041 = vpop.xlane.xlu0 %1040
    %v1042 = vsel %vm1038, %v1023, -inf
    %1043 = vmax.xlane.f32.xlu0 %v1042
    %v1044 = vpop.xlane.xlu0 %1043
    %v1045 = vsel %vm1038, %v1024, -inf
    %1046 = vmax.xlane.f32.xlu0 %v1045
    %v1047 = vpop.xlane.xlu0 %1046
    %v1048 = vsel %vm1038, %v1025, -inf
    %1049 = vmax.xlane.f32.xlu0 %v1048
    %v1050 = vpop.xlane.xlu0 %1049
    %v1051 = vsel %vm1038, %v1026, -inf
    %1052 = vmax.xlane.f32.xlu0 %v1051
    %v1053 = vpop.xlane.xlu0 %1052
    %v1054 = vsel %vm1038, %v1027, -inf
    %1055 = vmax.xlane.f32.xlu0 %v1054
    %v1056 = vpop.xlane.xlu0 %1055
    %v1057 = vsel %vm1038, %v1028, -inf
    %1058 = vmax.xlane.f32.xlu0 %v1057
    %v1059 = vpop.xlane.xlu0 %1058
    %v1060 = vsel %vm1038, %v1029, -inf
    %1061 = vmax.xlane.f32.xlu0 %v1060
    %v1062 = vpop.xlane.xlu0 %1061
    %v1063 = vsel %vm1038, %v1030, -inf
    %1064 = vmax.xlane.f32.xlu0 %v1063
    %v1065 = vpop.xlane.xlu0 %1064
    %v1066 = vsel %vm1038, %v1031, -inf
    %1067 = vmax.xlane.f32.xlu0 %v1066
    %v1068 = vpop.xlane.xlu0 %1067
    %v1069 = vsel %vm1038, %v1032, -inf
    %1070 = vmax.xlane.f32.xlu0 %v1069
    %v1071 = vpop.xlane.xlu0 %1070
    %v1072 = vsel %vm1038, %v1033, -inf
    %1073 = vmax.xlane.f32.xlu0 %v1072
    %v1074 = vpop.xlane.xlu0 %1073
    %v1075 = vsel %vm1038, %v1034, -inf
    %1076 = vmax.xlane.f32.xlu0 %v1075
    %v1077 = vpop.xlane.xlu0 %1076
    %v1078 = vsel %vm1038, %v1035, -inf
    %1079 = vmax.xlane.f32.xlu0 %v1078
    %v1080 = vpop.xlane.xlu0 %1079
    %v1081 = vsel %vm1038, %v1036, -inf
    %1082 = vmax.xlane.f32.xlu0 %v1081
    %v1083 = vpop.xlane.xlu0 %1082
    %v1084 = vsel %vm1038, %v1037, -inf
    %1085 = vmax.xlane.f32.xlu0 %v1084
    %v1086 = vpop.xlane.xlu0 %1085
    %v1087 = vsub.f32 %v1022, %v1041
    %v1088 = vsub.f32 %v1023, %v1044
    %v1089 = vsub.f32 %v1024, %v1047
    %v1090 = vsub.f32 %v1025, %v1050
    %v1091 = vsub.f32 %v1026, %v1053
    %v1092 = vsub.f32 %v1027, %v1056
    %v1093 = vsub.f32 %v1028, %v1059
    %v1094 = vsub.f32 %v1029, %v1062
    %v1095 = vsub.f32 %v1030, %v1065
    %v1096 = vsub.f32 %v1031, %v1068
    %v1097 = vsub.f32 %v1032, %v1071
    %v1098 = vsub.f32 %v1033, %v1074
    %v1099 = vsub.f32 %v1034, %v1077
    %v1100 = vsub.f32 %v1035, %v1080
    %v1101 = vsub.f32 %v1036, %v1083
    %v1102 = vsub.f32 %v1037, %v1086
    %v1103 = vmul.f32 %v1087, 1.442695
    %v1104 = vpow.pop %v1103
    %v1105 = vmul.f32 %v1088, 1.442695
    %v1106 = vpow.pop %v1105
    %v1107 = vmul.f32 %v1089, 1.442695
    %v1108 = vpow.pop %v1107
    %v1109 = vmul.f32 %v1090, 1.442695
    %v1110 = vpow.pop %v1109
    %v1111 = vmul.f32 %v1091, 1.442695
    %v1112 = vpow.pop %v1111
    %v1113 = vmul.f32 %v1092, 1.442695
    %v1114 = vpow.pop %v1113
    %v1115 = vmul.f32 %v1093, 1.442695
    %v1116 = vpow.pop %v1115
    %v1117 = vmul.f32 %v1094, 1.442695
    %v1118 = vpow.pop %v1117
    %v1119 = vmul.f32 %v1095, 1.442695
    %v1120 = vpow.pop %v1119
    %v1121 = vmul.f32 %v1096, 1.442695
    %v1122 = vpow.pop %v1121
    %v1123 = vmul.f32 %v1097, 1.442695
    %v1124 = vpow.pop %v1123
    %v1125 = vmul.f32 %v1098, 1.442695
    %v1126 = vpow.pop %v1125
    %v1127 = vmul.f32 %v1099, 1.442695
    %v1128 = vpow.pop %v1127
    %v1129 = vmul.f32 %v1100, 1.442695
    %v1130 = vpow.pop %v1129
    %v1131 = vmul.f32 %v1101, 1.442695
    %v1132 = vpow.pop %v1131
    %v1133 = vmul.f32 %v1102, 1.442695
    %v1134 = vpow.pop %v1133
    %v1135 = vsel %vm1038, %v1104, 0.0
    %1136 = vadd.xlane.f32.xlu0 %v1135
    %v1137 = vpop.xlane.xlu0 %1136
    %v1138 = vsel %vm1038, %v1106, 0.0
    %1139 = vadd.xlane.f32.xlu0 %v1138
    %v1140 = vpop.xlane.xlu0 %1139
    %v1141 = vsel %vm1038, %v1108, 0.0
    %1142 = vadd.xlane.f32.xlu0 %v1141
    %v1143 = vpop.xlane.xlu0 %1142
    %v1144 = vsel %vm1038, %v1110, 0.0
    %1145 = vadd.xlane.f32.xlu0 %v1144
    %v1146 = vpop.xlane.xlu0 %1145
    %v1147 = vsel %vm1038, %v1112, 0.0
    %1148 = vadd.xlane.f32.xlu0 %v1147
    %v1149 = vpop.xlane.xlu0 %1148
    %v1150 = vsel %vm1038, %v1114, 0.0
    %1151 = vadd.xlane.f32.xlu0 %v1150
    %v1152 = vpop.xlane.xlu0 %1151
    %v1153 = vsel %vm1038, %v1116, 0.0
    %1154 = vadd.xlane.f32.xlu0 %v1153
    %v1155 = vpop.xlane.xlu0 %1154
    %v1156 = vsel %vm1038, %v1118, 0.0
    %1157 = vadd.xlane.f32.xlu0 %v1156
    %v1158 = vpop.xlane.xlu0 %1157
    %v1159 = vsel %vm1038, %v1120, 0.0
    %1160 = vadd.xlane.f32.xlu0 %v1159
    %v1161 = vpop.xlane.xlu0 %1160
    %v1162 = vsel %vm1038, %v1122, 0.0
    %1163 = vadd.xlane.f32.xlu0 %v1162
    %v1164 = vpop.xlane.xlu0 %1163
    %v1165 = vsel %vm1038, %v1124, 0.0
    %1166 = vadd.xlane.f32.xlu0 %v1165
    %v1167 = vpop.xlane.xlu0 %1166
    %v1168 = vsel %vm1038, %v1126, 0.0
    %1169 = vadd.xlane.f32.xlu0 %v1168
    %v1170 = vpop.xlane.xlu0 %1169
    %v1171 = vsel %vm1038, %v1128, 0.0
    %1172 = vadd.xlane.f32.xlu0 %v1171
    %v1173 = vpop.xlane.xlu0 %1172
    %v1174 = vsel %vm1038, %v1130, 0.0
    %1175 = vadd.xlane.f32.xlu0 %v1174
    %v1176 = vpop.xlane.xlu0 %1175
    %v1177 = vsel %vm1038, %v1132, 0.0
    %1178 = vadd.xlane.f32.xlu0 %v1177
    %v1179 = vpop.xlane.xlu0 %1178
    %v1180 = vsel %vm1038, %v1134, 0.0
    %1181 = vadd.xlane.f32.xlu0 %v1180
    %v1182 = vpop.xlane.xlu0 %1181
    %v1183 = vrcp.pop %v1137
    %v1184 = vrcp.pop %v1140
    %v1185 = vrcp.pop %v1143
    %v1186 = vrcp.pop %v1146
    %v1187 = vrcp.pop %v1149
    %v1188 = vrcp.pop %v1152
    %v1189 = vrcp.pop %v1155
    %v1190 = vrcp.pop %v1158
    %v1191 = vrcp.pop %v1161
    %v1192 = vrcp.pop %v1164
    %v1193 = vrcp.pop %v1167
    %v1194 = vrcp.pop %v1170
    %v1195 = vrcp.pop %v1173
    %v1196 = vrcp.pop %v1176
    %v1197 = vrcp.pop %v1179
    %v1198 = vrcp.pop %v1182
    %v1199 = vmul.f32 %v1104, %v1183
    %v1200 = vmul.f32 %v1106, %v1184
    %v1201 = vmul.f32 %v1108, %v1185
    %v1202 = vmul.f32 %v1110, %v1186
    %v1203 = vmul.f32 %v1112, %v1187
    %v1204 = vmul.f32 %v1114, %v1188
    %v1205 = vmul.f32 %v1116, %v1189
    %v1206 = vmul.f32 %v1118, %v1190
    %v1207 = vmul.f32 %v1120, %v1191
    %v1208 = vmul.f32 %v1122, %v1192
    %v1209 = vmul.f32 %v1124, %v1193
    %v1210 = vmul.f32 %v1126, %v1194
    %v1211 = vmul.f32 %v1128, %v1195
    %v1212 = vmul.f32 %v1130, %v1196
    %v1213 = vmul.f32 %v1132, %v1197
    %v1214 = vmul.f32 %v1134, %v1198
    %1215 = vrot.lane.b32.xlu0 %v183, 64
    %v1216 = vpop.permute.xlu0 %1215
    %1217 = vrot.lane.b32.xlu0 %v188, 64
    %v1218 = vpop.permute.xlu0 %1217
    %v1222 = vsel %vm1038, %v1199, 0
    %v1225 = vsel %vm1038, %v1200, 0
    %1227 = vmatprep.subr.mxu0 0.0
    %1228 = vmatpush1.msra.mxu0 0.0
    %1229 = vmatprep.subr.mxu0 0.0
    %1230 = vmatpush1.msra.mxu0 0.0
    %1231 = vmatprep.subr.mxu0 0.0
    %1232 = vmatpush1.msra.mxu0 0.0
    %1233 = vmatprep.subr.mxu0 0.0
    %1234 = vmatpush1.msra.mxu0 0.0
    %1235 = vmatprep.subr.mxu0 0.0
    %1236 = vmatpush1.msra.mxu0 0.0
    %1237 = vmatprep.subr.mxu0 0.0
    %1238 = vmatpush1.msra.mxu0 0.0
    %1239 = vmatprep.subr.mxu0 0.0
    %1240 = vmatpush1.msra.mxu0 0.0
    %1241 = vmatprep.subr.mxu0 0.0
    %1242 = vmatpush1.msra.mxu0 0.0
    %1243 = vmatprep.subr.mxu0 0.0
    %1244 = vmatpush1.msra.mxu0 0.0
    %1245 = vmatprep.subr.mxu0 0.0
    %1246 = vmatpush1.msra.mxu0 0.0
    %1247 = vmatprep.subr.mxu0 0.0
    %1248 = vmatpush1.msra.mxu0 0.0
    %1249 = vmatprep.subr.mxu0 0.0
    %1250 = vmatpush1.msra.mxu0 0.0
    %1251 = vmatprep.subr.mxu0 0.0
    %1252 = vmatpush1.msra.mxu0 0.0
    %1253 = vmatprep.subr.mxu0 0.0
    %1254 = vmatpush1.msra.mxu0 0.0
    %1255 = vmatprep.subr.mxu0 0.0
    %1256 = vmatpush1.msra.mxu0 %v1218
    %1257 = vmatprep.subr.mxu0 0.0
    %1258 = vmatpush1.msra.mxu0 %v1216
    %1259 = vmatprep.subr.mxu0 0.0
    %1260 = vmatpush2.msra.mxu0 0.0
    %1261 = vmatprep.subr.mxu0 0.0
    %1262 = vmatpush2.msra.mxu0 0.0
    %1263 = vmatprep.subr.mxu0 0.0
    %1264 = vmatpush2.msra.mxu0 0.0
    %1265 = vmatprep.subr.mxu0 0.0
    %1266 = vmatpush2.msra.mxu0 0.0
    %1267 = vmatprep.subr.mxu0 0.0
    %1268 = vmatpush2.msra.mxu0 0.0
    %1269 = vmatprep.subr.mxu0 0.0
    %1270 = vmatpush2.msra.mxu0 0.0
    %1271 = vmatprep.subr.mxu0 0.0
    %1272 = vmatpush2.msra.mxu0 0.0
    %1273 = vmatprep.subr.mxu0 0.0
    %1274 = vmatpush2.msra.mxu0 0.0
    %1275 = vmatprep.subr.mxu0 0.0
    %1276 = vmatpush2.msra.mxu0 0.0
    %1277 = vmatprep.subr.mxu0 0.0
    %1278 = vmatpush2.msra.mxu0 0.0
    %1279 = vmatprep.subr.mxu0 0.0
    %1280 = vmatpush2.msra.mxu0 0.0
    %1281 = vmatprep.subr.mxu0 0.0
    %1282 = vmatpush2.msra.mxu0 0.0
    %1283 = vmatprep.subr.mxu0 0.0
    %1284 = vmatpush2.msra.mxu0 0.0
    %1285 = vmatprep.subr.mxu0 0.0
    %1286 = vmatpush2.msra.mxu0 0.0
    %1287 = vmatprep.subr.mxu0 0.0
    %1288 = vmatpush2.msra.mxu0 0.0
    %1289 = vmatprep.subr.mxu0 0.0
    %1290 = vmatpush2.msra.mxu0 0.0
    %1291 = vmatprep.mubr.f32.mxu0 0.0
    %1292 = vmatmul.mubr.f32.gmra.mxu0 %v1222
    %v1293 = vpop.f32.mrf.mxu0
    %v1294 = vadd.f32 0.0, %v1293
    %v1295 = vpop.f32.mrf.mxu0
    %1296 = vmatprep.mubr.f32.mxu0 0.0
    %1297 = vmatmul.mubr.f32.gmra.mxu0 %v1225
    %v1298 = vpop.f32.mrf.mxu0
    %v1299 = vadd.f32 0.0, %v1298
    %v1300 = vpop.f32.mrf.mxu0
    %1301 = vdwg.mxu0
    %1302 = vrot.lane.b32.xlu0 %v193, 64
    %v1303 = vpop.permute.xlu0 %1302
    %1304 = vrot.lane.b32.xlu0 %v198, 64
    %v1305 = vpop.permute.xlu0 %1304
    %v1309 = vsel %vm1038, %v1201, 0
    %v1312 = vsel %vm1038, %v1202, 0
    %1314 = vmatprep.subr.mxu0 0.0
    %1315 = vmatpush1.msra.mxu0 0.0
    %1316 = vmatprep.subr.mxu0 0.0
    %1317 = vmatpush1.msra.mxu0 0.0
    %1318 = vmatprep.subr.mxu0 0.0
    %1319 = vmatpush1.msra.mxu0 0.0
    %1320 = vmatprep.subr.mxu0 0.0
    %1321 = vmatpush1.msra.mxu0 0.0
    %1322 = vmatprep.subr.mxu0 0.0
    %1323 = vmatpush1.msra.mxu0 0.0
    %1324 = vmatprep.subr.mxu0 0.0
    %1325 = vmatpush1.msra.mxu0 0.0
    %1326 = vmatprep.subr.mxu0 0.0
    %1327 = vmatpush1.msra.mxu0 0.0
    %1328 = vmatprep.subr.mxu0 0.0
    %1329 = vmatpush1.msra.mxu0 0.0
    %1330 = vmatprep.subr.mxu0 0.0
    %1331 = vmatpush1.msra.mxu0 0.0
    %1332 = vmatprep.subr.mxu0 0.0
    %1333 = vmatpush1.msra.mxu0 0.0
    %1334 = vmatprep.subr.mxu0 0.0
    %1335 = vmatpush1.msra.mxu0 0.0
    %1336 = vmatprep.subr.mxu0 0.0
    %1337 = vmatpush1.msra.mxu0 0.0
    %1338 = vmatprep.subr.mxu0 0.0
    %1339 = vmatpush1.msra.mxu0 0.0
    %1340 = vmatprep.subr.mxu0 0.0
    %1341 = vmatpush1.msra.mxu0 0.0
    %1342 = vmatprep.subr.mxu0 0.0
    %1343 = vmatpush1.msra.mxu0 %v1305
    %1344 = vmatprep.subr.mxu0 0.0
    %1345 = vmatpush1.msra.mxu0 %v1303
    %1346 = vmatprep.subr.mxu0 0.0
    %1347 = vmatpush2.msra.mxu0 0.0
    %1348 = vmatprep.subr.mxu0 0.0
    %1349 = vmatpush2.msra.mxu0 0.0
    %1350 = vmatprep.subr.mxu0 0.0
    %1351 = vmatpush2.msra.mxu0 0.0
    %1352 = vmatprep.subr.mxu0 0.0
    %1353 = vmatpush2.msra.mxu0 0.0
    %1354 = vmatprep.subr.mxu0 0.0
    %1355 = vmatpush2.msra.mxu0 0.0
    %1356 = vmatprep.subr.mxu0 0.0
    %1357 = vmatpush2.msra.mxu0 0.0
    %1358 = vmatprep.subr.mxu0 0.0
    %1359 = vmatpush2.msra.mxu0 0.0
    %1360 = vmatprep.subr.mxu0 0.0
    %1361 = vmatpush2.msra.mxu0 0.0
    %1362 = vmatprep.subr.mxu0 0.0
    %1363 = vmatpush2.msra.mxu0 0.0
    %1364 = vmatprep.subr.mxu0 0.0
    %1365 = vmatpush2.msra.mxu0 0.0
    %1366 = vmatprep.subr.mxu0 0.0
    %1367 = vmatpush2.msra.mxu0 0.0
    %1368 = vmatprep.subr.mxu0 0.0
    %1369 = vmatpush2.msra.mxu0 0.0
    %1370 = vmatprep.subr.mxu0 0.0
    %1371 = vmatpush2.msra.mxu0 0.0
    %1372 = vmatprep.subr.mxu0 0.0
    %1373 = vmatpush2.msra.mxu0 0.0
    %1374 = vmatprep.subr.mxu0 0.0
    %1375 = vmatpush2.msra.mxu0 0.0
    %1376 = vmatprep.subr.mxu0 0.0
    %1377 = vmatpush2.msra.mxu0 0.0
    %1378 = vmatprep.mubr.f32.mxu0 0.0
    %1379 = vmatmul.mubr.f32.gmra.mxu0 %v1309
    %v1380 = vpop.f32.mrf.mxu0
    %v1381 = vadd.f32 0.0, %v1380
    %v1382 = vpop.f32.mrf.mxu0
    %1383 = vmatprep.mubr.f32.mxu0 0.0
    %1384 = vmatmul.mubr.f32.gmra.mxu0 %v1312
    %v1385 = vpop.f32.mrf.mxu0
    %v1386 = vadd.f32 0.0, %v1385
    %v1387 = vpop.f32.mrf.mxu0
    %1388 = vdwg.mxu0
    %1389 = vrot.lane.b32.xlu0 %v203, 64
    %v1390 = vpop.permute.xlu0 %1389
    %1391 = vrot.lane.b32.xlu0 %v208, 64
    %v1392 = vpop.permute.xlu0 %1391
    %v1396 = vsel %vm1038, %v1203, 0
    %v1399 = vsel %vm1038, %v1204, 0
    %1401 = vmatprep.subr.mxu0 0.0
    %1402 = vmatpush1.msra.mxu0 0.0
    %1403 = vmatprep.subr.mxu0 0.0
    %1404 = vmatpush1.msra.mxu0 0.0
    %1405 = vmatprep.subr.mxu0 0.0
    %1406 = vmatpush1.msra.mxu0 0.0
    %1407 = vmatprep.subr.mxu0 0.0
    %1408 = vmatpush1.msra.mxu0 0.0
    %1409 = vmatprep.subr.mxu0 0.0
    %1410 = vmatpush1.msra.mxu0 0.0
    %1411 = vmatprep.subr.mxu0 0.0
    %1412 = vmatpush1.msra.mxu0 0.0
    %1413 = vmatprep.subr.mxu0 0.0
    %1414 = vmatpush1.msra.mxu0 0.0
    %1415 = vmatprep.subr.mxu0 0.0
    %1416 = vmatpush1.msra.mxu0 0.0
    %1417 = vmatprep.subr.mxu0 0.0
    %1418 = vmatpush1.msra.mxu0 0.0
    %1419 = vmatprep.subr.mxu0 0.0
    %1420 = vmatpush1.msra.mxu0 0.0
    %1421 = vmatprep.subr.mxu0 0.0
    %1422 = vmatpush1.msra.mxu0 0.0
    %1423 = vmatprep.subr.mxu0 0.0
    %1424 = vmatpush1.msra.mxu0 0.0
    %1425 = vmatprep.subr.mxu0 0.0
    %1426 = vmatpush1.msra.mxu0 0.0
    %1427 = vmatprep.subr.mxu0 0.0
    %1428 = vmatpush1.msra.mxu0 0.0
    %1429 = vmatprep.subr.mxu0 0.0
    %1430 = vmatpush1.msra.mxu0 %v1392
    %1431 = vmatprep.subr.mxu0 0.0
    %1432 = vmatpush1.msra.mxu0 %v1390
    %1433 = vmatprep.subr.mxu0 0.0
    %1434 = vmatpush2.msra.mxu0 0.0
    %1435 = vmatprep.subr.mxu0 0.0
    %1436 = vmatpush2.msra.mxu0 0.0
    %1437 = vmatprep.subr.mxu0 0.0
    %1438 = vmatpush2.msra.mxu0 0.0
    %1439 = vmatprep.subr.mxu0 0.0
    %1440 = vmatpush2.msra.mxu0 0.0
    %1441 = vmatprep.subr.mxu0 0.0
    %1442 = vmatpush2.msra.mxu0 0.0
    %1443 = vmatprep.subr.mxu0 0.0
    %1444 = vmatpush2.msra.mxu0 0.0
    %1445 = vmatprep.subr.mxu0 0.0
    %1446 = vmatpush2.msra.mxu0 0.0
    %1447 = vmatprep.subr.mxu0 0.0
    %1448 = vmatpush2.msra.mxu0 0.0
    %1449 = vmatprep.subr.mxu0 0.0
    %1450 = vmatpush2.msra.mxu0 0.0
    %1451 = vmatprep.subr.mxu0 0.0
    %1452 = vmatpush2.msra.mxu0 0.0
    %1453 = vmatprep.subr.mxu0 0.0
    %1454 = vmatpush2.msra.mxu0 0.0
    %1455 = vmatprep.subr.mxu0 0.0
    %1456 = vmatpush2.msra.mxu0 0.0
    %1457 = vmatprep.subr.mxu0 0.0
    %1458 = vmatpush2.msra.mxu0 0.0
    %1459 = vmatprep.subr.mxu0 0.0
    %1460 = vmatpush2.msra.mxu0 0.0
    %1461 = vmatprep.subr.mxu0 0.0
    %1462 = vmatpush2.msra.mxu0 0.0
    %1463 = vmatprep.subr.mxu0 0.0
    %1464 = vmatpush2.msra.mxu0 0.0
    %1465 = vmatprep.mubr.f32.mxu0 0.0
    %1466 = vmatmul.mubr.f32.gmra.mxu0 %v1396
    %v1467 = vpop.f32.mrf.mxu0
    %v1468 = vadd.f32 0.0, %v1467
    %v1469 = vpop.f32.mrf.mxu0
    %1470 = vmatprep.mubr.f32.mxu0 0.0
    %1471 = vmatmul.mubr.f32.gmra.mxu0 %v1399
    %v1472 = vpop.f32.mrf.mxu0
    %v1473 = vadd.f32 0.0, %v1472
    %v1474 = vpop.f32.mrf.mxu0
    %1475 = vdwg.mxu0
    %1476 = vrot.lane.b32.xlu0 %v213, 64
    %v1477 = vpop.permute.xlu0 %1476
    %1478 = vrot.lane.b32.xlu0 %v218, 64
    %v1479 = vpop.permute.xlu0 %1478
    %v1483 = vsel %vm1038, %v1205, 0
    %v1486 = vsel %vm1038, %v1206, 0
    %1488 = vmatprep.subr.mxu0 0.0
    %1489 = vmatpush1.msra.mxu0 0.0
    %1490 = vmatprep.subr.mxu0 0.0
    %1491 = vmatpush1.msra.mxu0 0.0
    %1492 = vmatprep.subr.mxu0 0.0
    %1493 = vmatpush1.msra.mxu0 0.0
    %1494 = vmatprep.subr.mxu0 0.0
    %1495 = vmatpush1.msra.mxu0 0.0
    %1496 = vmatprep.subr.mxu0 0.0
    %1497 = vmatpush1.msra.mxu0 0.0
    %1498 = vmatprep.subr.mxu0 0.0
    %1499 = vmatpush1.msra.mxu0 0.0
    %1500 = vmatprep.subr.mxu0 0.0
    %1501 = vmatpush1.msra.mxu0 0.0
    %1502 = vmatprep.subr.mxu0 0.0
    %1503 = vmatpush1.msra.mxu0 0.0
    %1504 = vmatprep.subr.mxu0 0.0
    %1505 = vmatpush1.msra.mxu0 0.0
    %1506 = vmatprep.subr.mxu0 0.0
    %1507 = vmatpush1.msra.mxu0 0.0
    %1508 = vmatprep.subr.mxu0 0.0
    %1509 = vmatpush1.msra.mxu0 0.0
    %1510 = vmatprep.subr.mxu0 0.0
    %1511 = vmatpush1.msra.mxu0 0.0
    %1512 = vmatprep.subr.mxu0 0.0
    %1513 = vmatpush1.msra.mxu0 0.0
    %1514 = vmatprep.subr.mxu0 0.0
    %1515 = vmatpush1.msra.mxu0 0.0
    %1516 = vmatprep.subr.mxu0 0.0
    %1517 = vmatpush1.msra.mxu0 %v1479
    %1518 = vmatprep.subr.mxu0 0.0
    %1519 = vmatpush1.msra.mxu0 %v1477
    %1520 = vmatprep.subr.mxu0 0.0
    %1521 = vmatpush2.msra.mxu0 0.0
    %1522 = vmatprep.subr.mxu0 0.0
    %1523 = vmatpush2.msra.mxu0 0.0
    %1524 = vmatprep.subr.mxu0 0.0
    %1525 = vmatpush2.msra.mxu0 0.0
    %1526 = vmatprep.subr.mxu0 0.0
    %1527 = vmatpush2.msra.mxu0 0.0
    %1528 = vmatprep.subr.mxu0 0.0
    %1529 = vmatpush2.msra.mxu0 0.0
    %1530 = vmatprep.subr.mxu0 0.0
    %1531 = vmatpush2.msra.mxu0 0.0
    %1532 = vmatprep.subr.mxu0 0.0
    %1533 = vmatpush2.msra.mxu0 0.0
    %1534 = vmatprep.subr.mxu0 0.0
    %1535 = vmatpush2.msra.mxu0 0.0
    %1536 = vmatprep.subr.mxu0 0.0
    %1537 = vmatpush2.msra.mxu0 0.0
    %1538 = vmatprep.subr.mxu0 0.0
    %1539 = vmatpush2.msra.mxu0 0.0
    %1540 = vmatprep.subr.mxu0 0.0
    %1541 = vmatpush2.msra.mxu0 0.0
    %1542 = vmatprep.subr.mxu0 0.0
    %1543 = vmatpush2.msra.mxu0 0.0
    %1544 = vmatprep.subr.mxu0 0.0
    %1545 = vmatpush2.msra.mxu0 0.0
    %1546 = vmatprep.subr.mxu0 0.0
    %1547 = vmatpush2.msra.mxu0 0.0
    %1548 = vmatprep.subr.mxu0 0.0
    %1549 = vmatpush2.msra.mxu0 0.0
    %1550 = vmatprep.subr.mxu0 0.0
    %1551 = vmatpush2.msra.mxu0 0.0
    %1552 = vmatprep.mubr.f32.mxu0 0.0
    %1553 = vmatmul.mubr.f32.gmra.mxu0 %v1483
    %v1554 = vpop.f32.mrf.mxu0
    %v1555 = vadd.f32 0.0, %v1554
    %v1556 = vpop.f32.mrf.mxu0
    %1557 = vmatprep.mubr.f32.mxu0 0.0
    %1558 = vmatmul.mubr.f32.gmra.mxu0 %v1486
    %v1559 = vpop.f32.mrf.mxu0
    %v1560 = vadd.f32 0.0, %v1559
    %v1561 = vpop.f32.mrf.mxu0
    %1562 = vdwg.mxu0
    %1563 = vrot.lane.b32.xlu0 %v223, 64
    %v1564 = vpop.permute.xlu0 %1563
    %1565 = vrot.lane.b32.xlu0 %v228, 64
    %v1566 = vpop.permute.xlu0 %1565
    %v1570 = vsel %vm1038, %v1207, 0
    %v1573 = vsel %vm1038, %v1208, 0
    %1575 = vmatprep.subr.mxu0 0.0
    %1576 = vmatpush1.msra.mxu0 0.0
    %1577 = vmatprep.subr.mxu0 0.0
    %1578 = vmatpush1.msra.mxu0 0.0
    %1579 = vmatprep.subr.mxu0 0.0
    %1580 = vmatpush1.msra.mxu0 0.0
    %1581 = vmatprep.subr.mxu0 0.0
    %1582 = vmatpush1.msra.mxu0 0.0
    %1583 = vmatprep.subr.mxu0 0.0
    %1584 = vmatpush1.msra.mxu0 0.0
    %1585 = vmatprep.subr.mxu0 0.0
    %1586 = vmatpush1.msra.mxu0 0.0
    %1587 = vmatprep.subr.mxu0 0.0
    %1588 = vmatpush1.msra.mxu0 0.0
    %1589 = vmatprep.subr.mxu0 0.0
    %1590 = vmatpush1.msra.mxu0 0.0
    %1591 = vmatprep.subr.mxu0 0.0
    %1592 = vmatpush1.msra.mxu0 0.0
    %1593 = vmatprep.subr.mxu0 0.0
    %1594 = vmatpush1.msra.mxu0 0.0
    %1595 = vmatprep.subr.mxu0 0.0
    %1596 = vmatpush1.msra.mxu0 0.0
    %1597 = vmatprep.subr.mxu0 0.0
    %1598 = vmatpush1.msra.mxu0 0.0
    %1599 = vmatprep.subr.mxu0 0.0
    %1600 = vmatpush1.msra.mxu0 0.0
    %1601 = vmatprep.subr.mxu0 0.0
    %1602 = vmatpush1.msra.mxu0 0.0
    %1603 = vmatprep.subr.mxu0 0.0
    %1604 = vmatpush1.msra.mxu0 %v1566
    %1605 = vmatprep.subr.mxu0 0.0
    %1606 = vmatpush1.msra.mxu0 %v1564
    %1607 = vmatprep.subr.mxu0 0.0
    %1608 = vmatpush2.msra.mxu0 0.0
    %1609 = vmatprep.subr.mxu0 0.0
    %1610 = vmatpush2.msra.mxu0 0.0
    %1611 = vmatprep.subr.mxu0 0.0
    %1612 = vmatpush2.msra.mxu0 0.0
    %1613 = vmatprep.subr.mxu0 0.0
    %1614 = vmatpush2.msra.mxu0 0.0
    %1615 = vmatprep.subr.mxu0 0.0
    %1616 = vmatpush2.msra.mxu0 0.0
    %1617 = vmatprep.subr.mxu0 0.0
    %1618 = vmatpush2.msra.mxu0 0.0
    %1619 = vmatprep.subr.mxu0 0.0
    %1620 = vmatpush2.msra.mxu0 0.0
    %1621 = vmatprep.subr.mxu0 0.0
    %1622 = vmatpush2.msra.mxu0 0.0
    %1623 = vmatprep.subr.mxu0 0.0
    %1624 = vmatpush2.msra.mxu0 0.0
    %1625 = vmatprep.subr.mxu0 0.0
    %1626 = vmatpush2.msra.mxu0 0.0
    %1627 = vmatprep.subr.mxu0 0.0
    %1628 = vmatpush2.msra.mxu0 0.0
    %1629 = vmatprep.subr.mxu0 0.0
    %1630 = vmatpush2.msra.mxu0 0.0
    %1631 = vmatprep.subr.mxu0 0.0
    %1632 = vmatpush2.msra.mxu0 0.0
    %1633 = vmatprep.subr.mxu0 0.0
    %1634 = vmatpush2.msra.mxu0 0.0
    %1635 = vmatprep.subr.mxu0 0.0
    %1636 = vmatpush2.msra.mxu0 0.0
    %1637 = vmatprep.subr.mxu0 0.0
    %1638 = vmatpush2.msra.mxu0 0.0
    %1639 = vmatprep.mubr.f32.mxu0 0.0
    %1640 = vmatmul.mubr.f32.gmra.mxu0 %v1570
    %v1641 = vpop.f32.mrf.mxu0
    %v1642 = vadd.f32 0.0, %v1641
    %v1643 = vpop.f32.mrf.mxu0
    %1644 = vmatprep.mubr.f32.mxu0 0.0
    %1645 = vmatmul.mubr.f32.gmra.mxu0 %v1573
    %v1646 = vpop.f32.mrf.mxu0
    %v1647 = vadd.f32 0.0, %v1646
    %v1648 = vpop.f32.mrf.mxu0
    %1649 = vdwg.mxu0
    %1650 = vrot.lane.b32.xlu0 %v233, 64
    %v1651 = vpop.permute.xlu0 %1650
    %1652 = vrot.lane.b32.xlu0 %v238, 64
    %v1653 = vpop.permute.xlu0 %1652
    %v1657 = vsel %vm1038, %v1209, 0
    %v1660 = vsel %vm1038, %v1210, 0
    %1662 = vmatprep.subr.mxu0 0.0
    %1663 = vmatpush1.msra.mxu0 0.0
    %1664 = vmatprep.subr.mxu0 0.0
    %1665 = vmatpush1.msra.mxu0 0.0
    %1666 = vmatprep.subr.mxu0 0.0
    %1667 = vmatpush1.msra.mxu0 0.0
    %1668 = vmatprep.subr.mxu0 0.0
    %1669 = vmatpush1.msra.mxu0 0.0
    %1670 = vmatprep.subr.mxu0 0.0
    %1671 = vmatpush1.msra.mxu0 0.0
    %1672 = vmatprep.subr.mxu0 0.0
    %1673 = vmatpush1.msra.mxu0 0.0
    %1674 = vmatprep.subr.mxu0 0.0
    %1675 = vmatpush1.msra.mxu0 0.0
    %1676 = vmatprep.subr.mxu0 0.0
    %1677 = vmatpush1.msra.mxu0 0.0
    %1678 = vmatprep.subr.mxu0 0.0
    %1679 = vmatpush1.msra.mxu0 0.0
    %1680 = vmatprep.subr.mxu0 0.0
    %1681 = vmatpush1.msra.mxu0 0.0
    %1682 = vmatprep.subr.mxu0 0.0
    %1683 = vmatpush1.msra.mxu0 0.0
    %1684 = vmatprep.subr.mxu0 0.0
    %1685 = vmatpush1.msra.mxu0 0.0
    %1686 = vmatprep.subr.mxu0 0.0
    %1687 = vmatpush1.msra.mxu0 0.0
    %1688 = vmatprep.subr.mxu0 0.0
    %1689 = vmatpush1.msra.mxu0 0.0
    %1690 = vmatprep.subr.mxu0 0.0
    %1691 = vmatpush1.msra.mxu0 %v1653
    %1692 = vmatprep.subr.mxu0 0.0
    %1693 = vmatpush1.msra.mxu0 %v1651
    %1694 = vmatprep.subr.mxu0 0.0
    %1695 = vmatpush2.msra.mxu0 0.0
    %1696 = vmatprep.subr.mxu0 0.0
    %1697 = vmatpush2.msra.mxu0 0.0
    %1698 = vmatprep.subr.mxu0 0.0
    %1699 = vmatpush2.msra.mxu0 0.0
    %1700 = vmatprep.subr.mxu0 0.0
    %1701 = vmatpush2.msra.mxu0 0.0
    %1702 = vmatprep.subr.mxu0 0.0
    %1703 = vmatpush2.msra.mxu0 0.0
    %1704 = vmatprep.subr.mxu0 0.0
    %1705 = vmatpush2.msra.mxu0 0.0
    %1706 = vmatprep.subr.mxu0 0.0
    %1707 = vmatpush2.msra.mxu0 0.0
    %1708 = vmatprep.subr.mxu0 0.0
    %1709 = vmatpush2.msra.mxu0 0.0
    %1710 = vmatprep.subr.mxu0 0.0
    %1711 = vmatpush2.msra.mxu0 0.0
    %1712 = vmatprep.subr.mxu0 0.0
    %1713 = vmatpush2.msra.mxu0 0.0
    %1714 = vmatprep.subr.mxu0 0.0
    %1715 = vmatpush2.msra.mxu0 0.0
    %1716 = vmatprep.subr.mxu0 0.0
    %1717 = vmatpush2.msra.mxu0 0.0
    %1718 = vmatprep.subr.mxu0 0.0
    %1719 = vmatpush2.msra.mxu0 0.0
    %1720 = vmatprep.subr.mxu0 0.0
    %1721 = vmatpush2.msra.mxu0 0.0
    %1722 = vmatprep.subr.mxu0 0.0
    %1723 = vmatpush2.msra.mxu0 0.0
    %1724 = vmatprep.subr.mxu0 0.0
    %1725 = vmatpush2.msra.mxu0 0.0
    %1726 = vmatprep.mubr.f32.mxu0 0.0
    %1727 = vmatmul.mubr.f32.gmra.mxu0 %v1657
    %v1728 = vpop.f32.mrf.mxu0
    %v1729 = vadd.f32 0.0, %v1728
    %v1730 = vpop.f32.mrf.mxu0
    %1731 = vmatprep.mubr.f32.mxu0 0.0
    %1732 = vmatmul.mubr.f32.gmra.mxu0 %v1660
    %v1733 = vpop.f32.mrf.mxu0
    %v1734 = vadd.f32 0.0, %v1733
    %v1735 = vpop.f32.mrf.mxu0
    %1736 = vdwg.mxu0
    %1737 = vrot.lane.b32.xlu0 %v243, 64
    %v1738 = vpop.permute.xlu0 %1737
    %1739 = vrot.lane.b32.xlu0 %v248, 64
    %v1740 = vpop.permute.xlu0 %1739
    %v1744 = vsel %vm1038, %v1211, 0
    %v1747 = vsel %vm1038, %v1212, 0
    %1749 = vmatprep.subr.mxu0 0.0
    %1750 = vmatpush1.msra.mxu0 0.0
    %1751 = vmatprep.subr.mxu0 0.0
    %1752 = vmatpush1.msra.mxu0 0.0
    %1753 = vmatprep.subr.mxu0 0.0
    %1754 = vmatpush1.msra.mxu0 0.0
    %1755 = vmatprep.subr.mxu0 0.0
    %1756 = vmatpush1.msra.mxu0 0.0
    %1757 = vmatprep.subr.mxu0 0.0
    %1758 = vmatpush1.msra.mxu0 0.0
    %1759 = vmatprep.subr.mxu0 0.0
    %1760 = vmatpush1.msra.mxu0 0.0
    %1761 = vmatprep.subr.mxu0 0.0
    %1762 = vmatpush1.msra.mxu0 0.0
    %1763 = vmatprep.subr.mxu0 0.0
    %1764 = vmatpush1.msra.mxu0 0.0
    %1765 = vmatprep.subr.mxu0 0.0
    %1766 = vmatpush1.msra.mxu0 0.0
    %1767 = vmatprep.subr.mxu0 0.0
    %1768 = vmatpush1.msra.mxu0 0.0
    %1769 = vmatprep.subr.mxu0 0.0
    %1770 = vmatpush1.msra.mxu0 0.0
    %1771 = vmatprep.subr.mxu0 0.0
    %1772 = vmatpush1.msra.mxu0 0.0
    %1773 = vmatprep.subr.mxu0 0.0
    %1774 = vmatpush1.msra.mxu0 0.0
    %1775 = vmatprep.subr.mxu0 0.0
    %1776 = vmatpush1.msra.mxu0 0.0
    %1777 = vmatprep.subr.mxu0 0.0
    %1778 = vmatpush1.msra.mxu0 %v1740
    %1779 = vmatprep.subr.mxu0 0.0
    %1780 = vmatpush1.msra.mxu0 %v1738
    %1781 = vmatprep.subr.mxu0 0.0
    %1782 = vmatpush2.msra.mxu0 0.0
    %1783 = vmatprep.subr.mxu0 0.0
    %1784 = vmatpush2.msra.mxu0 0.0
    %1785 = vmatprep.subr.mxu0 0.0
    %1786 = vmatpush2.msra.mxu0 0.0
    %1787 = vmatprep.subr.mxu0 0.0
    %1788 = vmatpush2.msra.mxu0 0.0
    %1789 = vmatprep.subr.mxu0 0.0
    %1790 = vmatpush2.msra.mxu0 0.0
    %1791 = vmatprep.subr.mxu0 0.0
    %1792 = vmatpush2.msra.mxu0 0.0
    %1793 = vmatprep.subr.mxu0 0.0
    %1794 = vmatpush2.msra.mxu0 0.0
    %1795 = vmatprep.subr.mxu0 0.0
    %1796 = vmatpush2.msra.mxu0 0.0
    %1797 = vmatprep.subr.mxu0 0.0
    %1798 = vmatpush2.msra.mxu0 0.0
    %1799 = vmatprep.subr.mxu0 0.0
    %1800 = vmatpush2.msra.mxu0 0.0
    %1801 = vmatprep.subr.mxu0 0.0
    %1802 = vmatpush2.msra.mxu0 0.0
    %1803 = vmatprep.subr.mxu0 0.0
    %1804 = vmatpush2.msra.mxu0 0.0
    %1805 = vmatprep.subr.mxu0 0.0
    %1806 = vmatpush2.msra.mxu0 0.0
    %1807 = vmatprep.subr.mxu0 0.0
    %1808 = vmatpush2.msra.mxu0 0.0
    %1809 = vmatprep.subr.mxu0 0.0
    %1810 = vmatpush2.msra.mxu0 0.0
    %1811 = vmatprep.subr.mxu0 0.0
    %1812 = vmatpush2.msra.mxu0 0.0
    %1813 = vmatprep.mubr.f32.mxu0 0.0
    %1814 = vmatmul.mubr.f32.gmra.mxu0 %v1744
    %v1815 = vpop.f32.mrf.mxu0
    %v1816 = vadd.f32 0.0, %v1815
    %v1817 = vpop.f32.mrf.mxu0
    %1818 = vmatprep.mubr.f32.mxu0 0.0
    %1819 = vmatmul.mubr.f32.gmra.mxu0 %v1747
    %v1820 = vpop.f32.mrf.mxu0
    %v1821 = vadd.f32 0.0, %v1820
    %v1822 = vpop.f32.mrf.mxu0
    %1823 = vdwg.mxu0
    %1824 = vrot.lane.b32.xlu0 %v253, 64
    %v1825 = vpop.permute.xlu0 %1824
    %1826 = vrot.lane.b32.xlu0 %v258, 64
    %v1827 = vpop.permute.xlu0 %1826
    %v1831 = vsel %vm1038, %v1213, 0
    %v1834 = vsel %vm1038, %v1214, 0
    %1836 = vmatprep.subr.mxu0 0.0
    %1837 = vmatpush1.msra.mxu0 0.0
    %1838 = vmatprep.subr.mxu0 0.0
    %1839 = vmatpush1.msra.mxu0 0.0
    %1840 = vmatprep.subr.mxu0 0.0
    %1841 = vmatpush1.msra.mxu0 0.0
    %1842 = vmatprep.subr.mxu0 0.0
    %1843 = vmatpush1.msra.mxu0 0.0
    %1844 = vmatprep.subr.mxu0 0.0
    %1845 = vmatpush1.msra.mxu0 0.0
    %1846 = vmatprep.subr.mxu0 0.0
    %1847 = vmatpush1.msra.mxu0 0.0
    %1848 = vmatprep.subr.mxu0 0.0
    %1849 = vmatpush1.msra.mxu0 0.0
    %1850 = vmatprep.subr.mxu0 0.0
    %1851 = vmatpush1.msra.mxu0 0.0
    %1852 = vmatprep.subr.mxu0 0.0
    %1853 = vmatpush1.msra.mxu0 0.0
    %1854 = vmatprep.subr.mxu0 0.0
    %1855 = vmatpush1.msra.mxu0 0.0
    %1856 = vmatprep.subr.mxu0 0.0
    %1857 = vmatpush1.msra.mxu0 0.0
    %1858 = vmatprep.subr.mxu0 0.0
    %1859 = vmatpush1.msra.mxu0 0.0
    %1860 = vmatprep.subr.mxu0 0.0
    %1861 = vmatpush1.msra.mxu0 0.0
    %1862 = vmatprep.subr.mxu0 0.0
    %1863 = vmatpush1.msra.mxu0 0.0
    %1864 = vmatprep.subr.mxu0 0.0
    %1865 = vmatpush1.msra.mxu0 %v1827
    %1866 = vmatprep.subr.mxu0 0.0
    %1867 = vmatpush1.msra.mxu0 %v1825
    %1868 = vmatprep.subr.mxu0 0.0
    %1869 = vmatpush2.msra.mxu0 0.0
    %1870 = vmatprep.subr.mxu0 0.0
    %1871 = vmatpush2.msra.mxu0 0.0
    %1872 = vmatprep.subr.mxu0 0.0
    %1873 = vmatpush2.msra.mxu0 0.0
    %1874 = vmatprep.subr.mxu0 0.0
    %1875 = vmatpush2.msra.mxu0 0.0
    %1876 = vmatprep.subr.mxu0 0.0
    %1877 = vmatpush2.msra.mxu0 0.0
    %1878 = vmatprep.subr.mxu0 0.0
    %1879 = vmatpush2.msra.mxu0 0.0
    %1880 = vmatprep.subr.mxu0 0.0
    %1881 = vmatpush2.msra.mxu0 0.0
    %1882 = vmatprep.subr.mxu0 0.0
    %1883 = vmatpush2.msra.mxu0 0.0
    %1884 = vmatprep.subr.mxu0 0.0
    %1885 = vmatpush2.msra.mxu0 0.0
    %1886 = vmatprep.subr.mxu0 0.0
    %1887 = vmatpush2.msra.mxu0 0.0
    %1888 = vmatprep.subr.mxu0 0.0
    %1889 = vmatpush2.msra.mxu0 0.0
    %1890 = vmatprep.subr.mxu0 0.0
    %1891 = vmatpush2.msra.mxu0 0.0
    %1892 = vmatprep.subr.mxu0 0.0
    %1893 = vmatpush2.msra.mxu0 0.0
    %1894 = vmatprep.subr.mxu0 0.0
    %1895 = vmatpush2.msra.mxu0 0.0
    %1896 = vmatprep.subr.mxu0 0.0
    %1897 = vmatpush2.msra.mxu0 0.0
    %1898 = vmatprep.subr.mxu0 0.0
    %1899 = vmatpush2.msra.mxu0 0.0
    %1900 = vmatprep.mubr.f32.mxu0 0.0
    %1901 = vmatmul.mubr.f32.gmra.mxu0 %v1831
    %v1902 = vpop.f32.mrf.mxu0
    %v1903 = vadd.f32 0.0, %v1902
    %v1904 = vpop.f32.mrf.mxu0
    %1905 = vmatprep.mubr.f32.mxu0 0.0
    %1906 = vmatmul.mubr.f32.gmra.mxu0 %v1834
    %v1907 = vpop.f32.mrf.mxu0
    %v1908 = vadd.f32 0.0, %v1907
    %v1909 = vpop.f32.mrf.mxu0
    %1910 = vdwg.mxu0
    %1911 = vrot.lane.b32.xlu0 %v277, 120
    %v1912 = vpop.permute.xlu0 %1911
    %1913 = vrot.lane.b32.xlu0 %v278, 120
    %v1914 = vpop.permute.xlu0 %1913
    %1915 = vrot.lane.b32.xlu0 %v183, 88
    %v1916 = vpop.permute.xlu0 %1915
    %1917 = vrot.lane.b32.xlu0 %v188, 88
    %v1918 = vpop.permute.xlu0 %1917
    %v1919 = vsel %vm299, %v1912, 0
    %v1921 = vsel %vm299, %v1914, 0
    %v1923 = vsel %vm299, %v1916, 0
    %v1925 = vsel %vm299, %v1918, 0
    %1927 = vmatprep.subr.mxu0 0.0
    %1928 = vmatpush1.xpose.msra.mxu0 0.0
    %1929 = vmatprep.subr.mxu0 0.0
    %1930 = vmatpush1.xpose.msra.mxu0 0.0
    %1931 = vmatprep.subr.mxu0 0.0
    %1932 = vmatpush1.xpose.msra.mxu0 0.0
    %1933 = vmatprep.subr.mxu0 0.0
    %1934 = vmatpush1.xpose.msra.mxu0 0.0
    %1935 = vmatprep.subr.mxu0 0.0
    %1936 = vmatpush1.xpose.msra.mxu0 0.0
    %1937 = vmatprep.subr.mxu0 0.0
    %1938 = vmatpush1.xpose.msra.mxu0 0.0
    %1939 = vmatprep.subr.mxu0 0.0
    %1940 = vmatpush1.xpose.msra.mxu0 0.0
    %1941 = vmatprep.subr.mxu0 0.0
    %1942 = vmatpush1.xpose.msra.mxu0 0.0
    %1943 = vmatprep.subr.mxu0 0.0
    %1944 = vmatpush1.xpose.msra.mxu0 0.0
    %1945 = vmatprep.subr.mxu0 0.0
    %1946 = vmatpush1.xpose.msra.mxu0 0.0
    %1947 = vmatprep.subr.mxu0 0.0
    %1948 = vmatpush1.xpose.msra.mxu0 0.0
    %1949 = vmatprep.subr.mxu0 0.0
    %1950 = vmatpush1.xpose.msra.mxu0 0.0
    %1951 = vmatprep.subr.mxu0 0.0
    %1952 = vmatpush1.xpose.msra.mxu0 0.0
    %1953 = vmatprep.subr.mxu0 0.0
    %1954 = vmatpush1.xpose.msra.mxu0 0.0
    %1955 = vmatprep.subr.mxu0 0.0
    %1956 = vmatpush1.xpose.msra.mxu0 %v1925
    %1957 = vmatprep.subr.mxu0 0.0
    %1958 = vmatpush1.xpose.msra.mxu0 %v1923
    %1959 = vmatprep.subr.mxu0 0.0
    %1960 = vmatpush2.xpose.msra.mxu0 0.0
    %1961 = vmatprep.subr.mxu0 0.0
    %1962 = vmatpush2.xpose.msra.mxu0 0.0
    %1963 = vmatprep.subr.mxu0 0.0
    %1964 = vmatpush2.xpose.msra.mxu0 0.0
    %1965 = vmatprep.subr.mxu0 0.0
    %1966 = vmatpush2.xpose.msra.mxu0 0.0
    %1967 = vmatprep.subr.mxu0 0.0
    %1968 = vmatpush2.xpose.msra.mxu0 0.0
    %1969 = vmatprep.subr.mxu0 0.0
    %1970 = vmatpush2.xpose.msra.mxu0 0.0
    %1971 = vmatprep.subr.mxu0 0.0
    %1972 = vmatpush2.xpose.msra.mxu0 0.0
    %1973 = vmatprep.subr.mxu0 0.0
    %1974 = vmatpush2.xpose.msra.mxu0 0.0
    %1975 = vmatprep.subr.mxu0 0.0
    %1976 = vmatpush2.xpose.msra.mxu0 0.0
    %1977 = vmatprep.subr.mxu0 0.0
    %1978 = vmatpush2.xpose.msra.mxu0 0.0
    %1979 = vmatprep.subr.mxu0 0.0
    %1980 = vmatpush2.xpose.msra.mxu0 0.0
    %1981 = vmatprep.subr.mxu0 0.0
    %1982 = vmatpush2.xpose.msra.mxu0 0.0
    %1983 = vmatprep.subr.mxu0 0.0
    %1984 = vmatpush2.xpose.msra.mxu0 0.0
    %1985 = vmatprep.subr.mxu0 0.0
    %1986 = vmatpush2.xpose.msra.mxu0 0.0
    %1987 = vmatprep.subr.mxu0 0.0
    %1988 = vmatpush2.xpose.msra.mxu0 0.0
    %1989 = vmatprep.subr.mxu0 0.0
    %1990 = vmatpush2.xpose.msra.mxu0 0.0
    %1991 = vmatprep.mubr.f32.mxu0 0.0
    %1992 = vmatmul.mubr.f32.gmra.mxu0 %v1919
    %v1993 = vpop.f32.mrf.mxu0
    %v1994 = vadd.f32 %v263, %v1993
    %v1995 = vpop.f32.mrf.mxu0
    %1996 = vmatprep.mubr.f32.mxu0 0.0
    %1997 = vmatmul.mubr.f32.gmra.mxu0 %v1921
    %v1998 = vpop.f32.mrf.mxu0
    %v1999 = vadd.f32 %v264, %v1998
    %v2000 = vpop.f32.mrf.mxu0
    %2001 = vdwg.mxu0
    %2002 = vrot.lane.b32.xlu0 %v279, 120
    %v2003 = vpop.permute.xlu0 %2002
    %2004 = vrot.lane.b32.xlu0 %v280, 120
    %v2005 = vpop.permute.xlu0 %2004
    %2006 = vrot.lane.b32.xlu0 %v193, 88
    %v2007 = vpop.permute.xlu0 %2006
    %2008 = vrot.lane.b32.xlu0 %v198, 88
    %v2009 = vpop.permute.xlu0 %2008
    %v2010 = vsel %vm299, %v2003, 0
    %v2012 = vsel %vm299, %v2005, 0
    %v2014 = vsel %vm299, %v2007, 0
    %v2016 = vsel %vm299, %v2009, 0
    %2018 = vmatprep.subr.mxu0 0.0
    %2019 = vmatpush1.xpose.msra.mxu0 0.0
    %2020 = vmatprep.subr.mxu0 0.0
    %2021 = vmatpush1.xpose.msra.mxu0 0.0
    %2022 = vmatprep.subr.mxu0 0.0
    %2023 = vmatpush1.xpose.msra.mxu0 0.0
    %2024 = vmatprep.subr.mxu0 0.0
    %2025 = vmatpush1.xpose.msra.mxu0 0.0
    %2026 = vmatprep.subr.mxu0 0.0
    %2027 = vmatpush1.xpose.msra.mxu0 0.0
    %2028 = vmatprep.subr.mxu0 0.0
    %2029 = vmatpush1.xpose.msra.mxu0 0.0
    %2030 = vmatprep.subr.mxu0 0.0
    %2031 = vmatpush1.xpose.msra.mxu0 0.0
    %2032 = vmatprep.subr.mxu0 0.0
    %2033 = vmatpush1.xpose.msra.mxu0 0.0
    %2034 = vmatprep.subr.mxu0 0.0
    %2035 = vmatpush1.xpose.msra.mxu0 0.0
    %2036 = vmatprep.subr.mxu0 0.0
    %2037 = vmatpush1.xpose.msra.mxu0 0.0
    %2038 = vmatprep.subr.mxu0 0.0
    %2039 = vmatpush1.xpose.msra.mxu0 0.0
    %2040 = vmatprep.subr.mxu0 0.0
    %2041 = vmatpush1.xpose.msra.mxu0 0.0
    %2042 = vmatprep.subr.mxu0 0.0
    %2043 = vmatpush1.xpose.msra.mxu0 0.0
    %2044 = vmatprep.subr.mxu0 0.0
    %2045 = vmatpush1.xpose.msra.mxu0 0.0
    %2046 = vmatprep.subr.mxu0 0.0
    %2047 = vmatpush1.xpose.msra.mxu0 %v2016
    %2048 = vmatprep.subr.mxu0 0.0
    %2049 = vmatpush1.xpose.msra.mxu0 %v2014
    %2050 = vmatprep.subr.mxu0 0.0
    %2051 = vmatpush2.xpose.msra.mxu0 0.0
    %2052 = vmatprep.subr.mxu0 0.0
    %2053 = vmatpush2.xpose.msra.mxu0 0.0
    %2054 = vmatprep.subr.mxu0 0.0
    %2055 = vmatpush2.xpose.msra.mxu0 0.0
    %2056 = vmatprep.subr.mxu0 0.0
    %2057 = vmatpush2.xpose.msra.mxu0 0.0
    %2058 = vmatprep.subr.mxu0 0.0
    %2059 = vmatpush2.xpose.msra.mxu0 0.0
    %2060 = vmatprep.subr.mxu0 0.0
    %2061 = vmatpush2.xpose.msra.mxu0 0.0
    %2062 = vmatprep.subr.mxu0 0.0
    %2063 = vmatpush2.xpose.msra.mxu0 0.0
    %2064 = vmatprep.subr.mxu0 0.0
    %2065 = vmatpush2.xpose.msra.mxu0 0.0
    %2066 = vmatprep.subr.mxu0 0.0
    %2067 = vmatpush2.xpose.msra.mxu0 0.0
    %2068 = vmatprep.subr.mxu0 0.0
    %2069 = vmatpush2.xpose.msra.mxu0 0.0
    %2070 = vmatprep.subr.mxu0 0.0
    %2071 = vmatpush2.xpose.msra.mxu0 0.0
    %2072 = vmatprep.subr.mxu0 0.0
    %2073 = vmatpush2.xpose.msra.mxu0 0.0
    %2074 = vmatprep.subr.mxu0 0.0
    %2075 = vmatpush2.xpose.msra.mxu0 0.0
    %2076 = vmatprep.subr.mxu0 0.0
    %2077 = vmatpush2.xpose.msra.mxu0 0.0
    %2078 = vmatprep.subr.mxu0 0.0
    %2079 = vmatpush2.xpose.msra.mxu0 0.0
    %2080 = vmatprep.subr.mxu0 0.0
    %2081 = vmatpush2.xpose.msra.mxu0 0.0
    %2082 = vmatprep.mubr.f32.mxu0 0.0
    %2083 = vmatmul.mubr.f32.gmra.mxu0 %v2010
    %v2084 = vpop.f32.mrf.mxu0
    %v2085 = vadd.f32 %v263, %v2084
    %v2086 = vpop.f32.mrf.mxu0
    %2087 = vmatprep.mubr.f32.mxu0 0.0
    %2088 = vmatmul.mubr.f32.gmra.mxu0 %v2012
    %v2089 = vpop.f32.mrf.mxu0
    %v2090 = vadd.f32 %v264, %v2089
    %v2091 = vpop.f32.mrf.mxu0
    %2092 = vdwg.mxu0
    %2093 = vrot.lane.b32.xlu0 %v281, 120
    %v2094 = vpop.permute.xlu0 %2093
    %2095 = vrot.lane.b32.xlu0 %v282, 120
    %v2096 = vpop.permute.xlu0 %2095
    %2097 = vrot.lane.b32.xlu0 %v203, 88
    %v2098 = vpop.permute.xlu0 %2097
    %2099 = vrot.lane.b32.xlu0 %v208, 88
    %v2100 = vpop.permute.xlu0 %2099
    %v2101 = vsel %vm299, %v2094, 0
    %v2103 = vsel %vm299, %v2096, 0
    %v2105 = vsel %vm299, %v2098, 0
    %v2107 = vsel %vm299, %v2100, 0
    %2109 = vmatprep.subr.mxu0 0.0
    %2110 = vmatpush1.xpose.msra.mxu0 0.0
    %2111 = vmatprep.subr.mxu0 0.0
    %2112 = vmatpush1.xpose.msra.mxu0 0.0
    %2113 = vmatprep.subr.mxu0 0.0
    %2114 = vmatpush1.xpose.msra.mxu0 0.0
    %2115 = vmatprep.subr.mxu0 0.0
    %2116 = vmatpush1.xpose.msra.mxu0 0.0
    %2117 = vmatprep.subr.mxu0 0.0
    %2118 = vmatpush1.xpose.msra.mxu0 0.0
    %2119 = vmatprep.subr.mxu0 0.0
    %2120 = vmatpush1.xpose.msra.mxu0 0.0
    %2121 = vmatprep.subr.mxu0 0.0
    %2122 = vmatpush1.xpose.msra.mxu0 0.0
    %2123 = vmatprep.subr.mxu0 0.0
    %2124 = vmatpush1.xpose.msra.mxu0 0.0
    %2125 = vmatprep.subr.mxu0 0.0
    %2126 = vmatpush1.xpose.msra.mxu0 0.0
    %2127 = vmatprep.subr.mxu0 0.0
    %2128 = vmatpush1.xpose.msra.mxu0 0.0
    %2129 = vmatprep.subr.mxu0 0.0
    %2130 = vmatpush1.xpose.msra.mxu0 0.0
    %2131 = vmatprep.subr.mxu0 0.0
    %2132 = vmatpush1.xpose.msra.mxu0 0.0
    %2133 = vmatprep.subr.mxu0 0.0
    %2134 = vmatpush1.xpose.msra.mxu0 0.0
    %2135 = vmatprep.subr.mxu0 0.0
    %2136 = vmatpush1.xpose.msra.mxu0 0.0
    %2137 = vmatprep.subr.mxu0 0.0
    %2138 = vmatpush1.xpose.msra.mxu0 %v2107
    %2139 = vmatprep.subr.mxu0 0.0
    %2140 = vmatpush1.xpose.msra.mxu0 %v2105
    %2141 = vmatprep.subr.mxu0 0.0
    %2142 = vmatpush2.xpose.msra.mxu0 0.0
    %2143 = vmatprep.subr.mxu0 0.0
    %2144 = vmatpush2.xpose.msra.mxu0 0.0
    %2145 = vmatprep.subr.mxu0 0.0
    %2146 = vmatpush2.xpose.msra.mxu0 0.0
    %2147 = vmatprep.subr.mxu0 0.0
    %2148 = vmatpush2.xpose.msra.mxu0 0.0
    %2149 = vmatprep.subr.mxu0 0.0
    %2150 = vmatpush2.xpose.msra.mxu0 0.0
    %2151 = vmatprep.subr.mxu0 0.0
    %2152 = vmatpush2.xpose.msra.mxu0 0.0
    %2153 = vmatprep.subr.mxu0 0.0
    %2154 = vmatpush2.xpose.msra.mxu0 0.0
    %2155 = vmatprep.subr.mxu0 0.0
    %2156 = vmatpush2.xpose.msra.mxu0 0.0
    %2157 = vmatprep.subr.mxu0 0.0
    %2158 = vmatpush2.xpose.msra.mxu0 0.0
    %2159 = vmatprep.subr.mxu0 0.0
    %2160 = vmatpush2.xpose.msra.mxu0 0.0
    %2161 = vmatprep.subr.mxu0 0.0
    %2162 = vmatpush2.xpose.msra.mxu0 0.0
    %2163 = vmatprep.subr.mxu0 0.0
    %2164 = vmatpush2.xpose.msra.mxu0 0.0
    %2165 = vmatprep.subr.mxu0 0.0
    %2166 = vmatpush2.xpose.msra.mxu0 0.0
    %2167 = vmatprep.subr.mxu0 0.0
    %2168 = vmatpush2.xpose.msra.mxu0 0.0
    %2169 = vmatprep.subr.mxu0 0.0
    %2170 = vmatpush2.xpose.msra.mxu0 0.0
    %2171 = vmatprep.subr.mxu0 0.0
    %2172 = vmatpush2.xpose.msra.mxu0 0.0
    %2173 = vmatprep.mubr.f32.mxu0 0.0
    %2174 = vmatmul.mubr.f32.gmra.mxu0 %v2101
    %v2175 = vpop.f32.mrf.mxu0
    %v2176 = vadd.f32 %v263, %v2175
    %v2177 = vpop.f32.mrf.mxu0
    %2178 = vmatprep.mubr.f32.mxu0 0.0
    %2179 = vmatmul.mubr.f32.gmra.mxu0 %v2103
    %v2180 = vpop.f32.mrf.mxu0
    %v2181 = vadd.f32 %v264, %v2180
    %v2182 = vpop.f32.mrf.mxu0
    %2183 = vdwg.mxu0
    %2184 = vrot.lane.b32.xlu0 %v283, 120
    %v2185 = vpop.permute.xlu0 %2184
    %2186 = vrot.lane.b32.xlu0 %v284, 120
    %v2187 = vpop.permute.xlu0 %2186
    %2188 = vrot.lane.b32.xlu0 %v213, 88
    %v2189 = vpop.permute.xlu0 %2188
    %2190 = vrot.lane.b32.xlu0 %v218, 88
    %v2191 = vpop.permute.xlu0 %2190
    %v2192 = vsel %vm299, %v2185, 0
    %v2194 = vsel %vm299, %v2187, 0
    %v2196 = vsel %vm299, %v2189, 0
    %v2198 = vsel %vm299, %v2191, 0
    %2200 = vmatprep.subr.mxu0 0.0
    %2201 = vmatpush1.xpose.msra.mxu0 0.0
    %2202 = vmatprep.subr.mxu0 0.0
    %2203 = vmatpush1.xpose.msra.mxu0 0.0
    %2204 = vmatprep.subr.mxu0 0.0
    %2205 = vmatpush1.xpose.msra.mxu0 0.0
    %2206 = vmatprep.subr.mxu0 0.0
    %2207 = vmatpush1.xpose.msra.mxu0 0.0
    %2208 = vmatprep.subr.mxu0 0.0
    %2209 = vmatpush1.xpose.msra.mxu0 0.0
    %2210 = vmatprep.subr.mxu0 0.0
    %2211 = vmatpush1.xpose.msra.mxu0 0.0
    %2212 = vmatprep.subr.mxu0 0.0
    %2213 = vmatpush1.xpose.msra.mxu0 0.0
    %2214 = vmatprep.subr.mxu0 0.0
    %2215 = vmatpush1.xpose.msra.mxu0 0.0
    %2216 = vmatprep.subr.mxu0 0.0
    %2217 = vmatpush1.xpose.msra.mxu0 0.0
    %2218 = vmatprep.subr.mxu0 0.0
    %2219 = vmatpush1.xpose.msra.mxu0 0.0
    %2220 = vmatprep.subr.mxu0 0.0
    %2221 = vmatpush1.xpose.msra.mxu0 0.0
    %2222 = vmatprep.subr.mxu0 0.0
    %2223 = vmatpush1.xpose.msra.mxu0 0.0
    %2224 = vmatprep.subr.mxu0 0.0
    %2225 = vmatpush1.xpose.msra.mxu0 0.0
    %2226 = vmatprep.subr.mxu0 0.0
    %2227 = vmatpush1.xpose.msra.mxu0 0.0
    %2228 = vmatprep.subr.mxu0 0.0
    %2229 = vmatpush1.xpose.msra.mxu0 %v2198
    %2230 = vmatprep.subr.mxu0 0.0
    %2231 = vmatpush1.xpose.msra.mxu0 %v2196
    %2232 = vmatprep.subr.mxu0 0.0
    %2233 = vmatpush2.xpose.msra.mxu0 0.0
    %2234 = vmatprep.subr.mxu0 0.0
    %2235 = vmatpush2.xpose.msra.mxu0 0.0
    %2236 = vmatprep.subr.mxu0 0.0
    %2237 = vmatpush2.xpose.msra.mxu0 0.0
    %2238 = vmatprep.subr.mxu0 0.0
    %2239 = vmatpush2.xpose.msra.mxu0 0.0
    %2240 = vmatprep.subr.mxu0 0.0
    %2241 = vmatpush2.xpose.msra.mxu0 0.0
    %2242 = vmatprep.subr.mxu0 0.0
    %2243 = vmatpush2.xpose.msra.mxu0 0.0
    %2244 = vmatprep.subr.mxu0 0.0
    %2245 = vmatpush2.xpose.msra.mxu0 0.0
    %2246 = vmatprep.subr.mxu0 0.0
    %2247 = vmatpush2.xpose.msra.mxu0 0.0
    %2248 = vmatprep.subr.mxu0 0.0
    %2249 = vmatpush2.xpose.msra.mxu0 0.0
    %2250 = vmatprep.subr.mxu0 0.0
    %2251 = vmatpush2.xpose.msra.mxu0 0.0
    %2252 = vmatprep.subr.mxu0 0.0
    %2253 = vmatpush2.xpose.msra.mxu0 0.0
    %2254 = vmatprep.subr.mxu0 0.0
    %2255 = vmatpush2.xpose.msra.mxu0 0.0
    %2256 = vmatprep.subr.mxu0 0.0
    %2257 = vmatpush2.xpose.msra.mxu0 0.0
    %2258 = vmatprep.subr.mxu0 0.0
    %2259 = vmatpush2.xpose.msra.mxu0 0.0
    %2260 = vmatprep.subr.mxu0 0.0
    %2261 = vmatpush2.xpose.msra.mxu0 0.0
    %2262 = vmatprep.subr.mxu0 0.0
    %2263 = vmatpush2.xpose.msra.mxu0 0.0
    %2264 = vmatprep.mubr.f32.mxu0 0.0
    %2265 = vmatmul.mubr.f32.gmra.mxu0 %v2192
    %v2266 = vpop.f32.mrf.mxu0
    %v2267 = vadd.f32 %v263, %v2266
    %v2268 = vpop.f32.mrf.mxu0
    %2269 = vmatprep.mubr.f32.mxu0 0.0
    %2270 = vmatmul.mubr.f32.gmra.mxu0 %v2194
    %v2271 = vpop.f32.mrf.mxu0
    %v2272 = vadd.f32 %v264, %v2271
    %v2273 = vpop.f32.mrf.mxu0
    %2274 = vdwg.mxu0
    %2275 = vrot.lane.b32.xlu0 %v285, 120
    %v2276 = vpop.permute.xlu0 %2275
    %2277 = vrot.lane.b32.xlu0 %v286, 120
    %v2278 = vpop.permute.xlu0 %2277
    %2279 = vrot.lane.b32.xlu0 %v223, 88
    %v2280 = vpop.permute.xlu0 %2279
    %2281 = vrot.lane.b32.xlu0 %v228, 88
    %v2282 = vpop.permute.xlu0 %2281
    %v2283 = vsel %vm299, %v2276, 0
    %v2285 = vsel %vm299, %v2278, 0
    %v2287 = vsel %vm299, %v2280, 0
    %v2289 = vsel %vm299, %v2282, 0
    %2291 = vmatprep.subr.mxu0 0.0
    %2292 = vmatpush1.xpose.msra.mxu0 0.0
    %2293 = vmatprep.subr.mxu0 0.0
    %2294 = vmatpush1.xpose.msra.mxu0 0.0
    %2295 = vmatprep.subr.mxu0 0.0
    %2296 = vmatpush1.xpose.msra.mxu0 0.0
    %2297 = vmatprep.subr.mxu0 0.0
    %2298 = vmatpush1.xpose.msra.mxu0 0.0
    %2299 = vmatprep.subr.mxu0 0.0
    %2300 = vmatpush1.xpose.msra.mxu0 0.0
    %2301 = vmatprep.subr.mxu0 0.0
    %2302 = vmatpush1.xpose.msra.mxu0 0.0
    %2303 = vmatprep.subr.mxu0 0.0
    %2304 = vmatpush1.xpose.msra.mxu0 0.0
    %2305 = vmatprep.subr.mxu0 0.0
    %2306 = vmatpush1.xpose.msra.mxu0 0.0
    %2307 = vmatprep.subr.mxu0 0.0
    %2308 = vmatpush1.xpose.msra.mxu0 0.0
    %2309 = vmatprep.subr.mxu0 0.0
    %2310 = vmatpush1.xpose.msra.mxu0 0.0
    %2311 = vmatprep.subr.mxu0 0.0
    %2312 = vmatpush1.xpose.msra.mxu0 0.0
    %2313 = vmatprep.subr.mxu0 0.0
    %2314 = vmatpush1.xpose.msra.mxu0 0.0
    %2315 = vmatprep.subr.mxu0 0.0
    %2316 = vmatpush1.xpose.msra.mxu0 0.0
    %2317 = vmatprep.subr.mxu0 0.0
    %2318 = vmatpush1.xpose.msra.mxu0 0.0
    %2319 = vmatprep.subr.mxu0 0.0
    %2320 = vmatpush1.xpose.msra.mxu0 %v2289
    %2321 = vmatprep.subr.mxu0 0.0
    %2322 = vmatpush1.xpose.msra.mxu0 %v2287
    %2323 = vmatprep.subr.mxu0 0.0
    %2324 = vmatpush2.xpose.msra.mxu0 0.0
    %2325 = vmatprep.subr.mxu0 0.0
    %2326 = vmatpush2.xpose.msra.mxu0 0.0
    %2327 = vmatprep.subr.mxu0 0.0
    %2328 = vmatpush2.xpose.msra.mxu0 0.0
    %2329 = vmatprep.subr.mxu0 0.0
    %2330 = vmatpush2.xpose.msra.mxu0 0.0
    %2331 = vmatprep.subr.mxu0 0.0
    %2332 = vmatpush2.xpose.msra.mxu0 0.0
    %2333 = vmatprep.subr.mxu0 0.0
    %2334 = vmatpush2.xpose.msra.mxu0 0.0
    %2335 = vmatprep.subr.mxu0 0.0
    %2336 = vmatpush2.xpose.msra.mxu0 0.0
    %2337 = vmatprep.subr.mxu0 0.0
    %2338 = vmatpush2.xpose.msra.mxu0 0.0
    %2339 = vmatprep.subr.mxu0 0.0
    %2340 = vmatpush2.xpose.msra.mxu0 0.0
    %2341 = vmatprep.subr.mxu0 0.0
    %2342 = vmatpush2.xpose.msra.mxu0 0.0
    %2343 = vmatprep.subr.mxu0 0.0
    %2344 = vmatpush2.xpose.msra.mxu0 0.0
    %2345 = vmatprep.subr.mxu0 0.0
    %2346 = vmatpush2.xpose.msra.mxu0 0.0
    %2347 = vmatprep.subr.mxu0 0.0
    %2348 = vmatpush2.xpose.msra.mxu0 0.0
    %2349 = vmatprep.subr.mxu0 0.0
    %2350 = vmatpush2.xpose.msra.mxu0 0.0
    %2351 = vmatprep.subr.mxu0 0.0
    %2352 = vmatpush2.xpose.msra.mxu0 0.0
    %2353 = vmatprep.subr.mxu0 0.0
    %2354 = vmatpush2.xpose.msra.mxu0 0.0
    %2355 = vmatprep.mubr.f32.mxu0 0.0
    %2356 = vmatmul.mubr.f32.gmra.mxu0 %v2283
    %v2357 = vpop.f32.mrf.mxu0
    %v2358 = vadd.f32 %v263, %v2357
    %v2359 = vpop.f32.mrf.mxu0
    %2360 = vmatprep.mubr.f32.mxu0 0.0
    %2361 = vmatmul.mubr.f32.gmra.mxu0 %v2285
    %v2362 = vpop.f32.mrf.mxu0
    %v2363 = vadd.f32 %v264, %v2362
    %v2364 = vpop.f32.mrf.mxu0
    %2365 = vdwg.mxu0
    %2366 = vrot.lane.b32.xlu0 %v287, 120
    %v2367 = vpop.permute.xlu0 %2366
    %2368 = vrot.lane.b32.xlu0 %v288, 120
    %v2369 = vpop.permute.xlu0 %2368
    %2370 = vrot.lane.b32.xlu0 %v233, 88
    %v2371 = vpop.permute.xlu0 %2370
    %2372 = vrot.lane.b32.xlu0 %v238, 88
    %v2373 = vpop.permute.xlu0 %2372
    %v2374 = vsel %vm299, %v2367, 0
    %v2376 = vsel %vm299, %v2369, 0
    %v2378 = vsel %vm299, %v2371, 0
    %v2380 = vsel %vm299, %v2373, 0
    %2382 = vmatprep.subr.mxu0 0.0
    %2383 = vmatpush1.xpose.msra.mxu0 0.0
    %2384 = vmatprep.subr.mxu0 0.0
    %2385 = vmatpush1.xpose.msra.mxu0 0.0
    %2386 = vmatprep.subr.mxu0 0.0
    %2387 = vmatpush1.xpose.msra.mxu0 0.0
    %2388 = vmatprep.subr.mxu0 0.0
    %2389 = vmatpush1.xpose.msra.mxu0 0.0
    %2390 = vmatprep.subr.mxu0 0.0
    %2391 = vmatpush1.xpose.msra.mxu0 0.0
    %2392 = vmatprep.subr.mxu0 0.0
    %2393 = vmatpush1.xpose.msra.mxu0 0.0
    %2394 = vmatprep.subr.mxu0 0.0
    %2395 = vmatpush1.xpose.msra.mxu0 0.0
    %2396 = vmatprep.subr.mxu0 0.0
    %2397 = vmatpush1.xpose.msra.mxu0 0.0
    %2398 = vmatprep.subr.mxu0 0.0
    %2399 = vmatpush1.xpose.msra.mxu0 0.0
    %2400 = vmatprep.subr.mxu0 0.0
    %2401 = vmatpush1.xpose.msra.mxu0 0.0
    %2402 = vmatprep.subr.mxu0 0.0
    %2403 = vmatpush1.xpose.msra.mxu0 0.0
    %2404 = vmatprep.subr.mxu0 0.0
    %2405 = vmatpush1.xpose.msra.mxu0 0.0
    %2406 = vmatprep.subr.mxu0 0.0
    %2407 = vmatpush1.xpose.msra.mxu0 0.0
    %2408 = vmatprep.subr.mxu0 0.0
    %2409 = vmatpush1.xpose.msra.mxu0 0.0
    %2410 = vmatprep.subr.mxu0 0.0
    %2411 = vmatpush1.xpose.msra.mxu0 %v2380
    %2412 = vmatprep.subr.mxu0 0.0
    %2413 = vmatpush1.xpose.msra.mxu0 %v2378
    %2414 = vmatprep.subr.mxu0 0.0
    %2415 = vmatpush2.xpose.msra.mxu0 0.0
    %2416 = vmatprep.subr.mxu0 0.0
    %2417 = vmatpush2.xpose.msra.mxu0 0.0
    %2418 = vmatprep.subr.mxu0 0.0
    %2419 = vmatpush2.xpose.msra.mxu0 0.0
    %2420 = vmatprep.subr.mxu0 0.0
    %2421 = vmatpush2.xpose.msra.mxu0 0.0
    %2422 = vmatprep.subr.mxu0 0.0
    %2423 = vmatpush2.xpose.msra.mxu0 0.0
    %2424 = vmatprep.subr.mxu0 0.0
    %2425 = vmatpush2.xpose.msra.mxu0 0.0
    %2426 = vmatprep.subr.mxu0 0.0
    %2427 = vmatpush2.xpose.msra.mxu0 0.0
    %2428 = vmatprep.subr.mxu0 0.0
    %2429 = vmatpush2.xpose.msra.mxu0 0.0
    %2430 = vmatprep.subr.mxu0 0.0
    %2431 = vmatpush2.xpose.msra.mxu0 0.0
    %2432 = vmatprep.subr.mxu0 0.0
    %2433 = vmatpush2.xpose.msra.mxu0 0.0
    %2434 = vmatprep.subr.mxu0 0.0
    %2435 = vmatpush2.xpose.msra.mxu0 0.0
    %2436 = vmatprep.subr.mxu0 0.0
    %2437 = vmatpush2.xpose.msra.mxu0 0.0
    %2438 = vmatprep.subr.mxu0 0.0
    %2439 = vmatpush2.xpose.msra.mxu0 0.0
    %2440 = vmatprep.subr.mxu0 0.0
    %2441 = vmatpush2.xpose.msra.mxu0 0.0
    %2442 = vmatprep.subr.mxu0 0.0
    %2443 = vmatpush2.xpose.msra.mxu0 0.0
    %2444 = vmatprep.subr.mxu0 0.0
    %2445 = vmatpush2.xpose.msra.mxu0 0.0
    %2446 = vmatprep.mubr.f32.mxu0 0.0
    %2447 = vmatmul.mubr.f32.gmra.mxu0 %v2374
    %v2448 = vpop.f32.mrf.mxu0
    %v2449 = vadd.f32 %v263, %v2448
    %v2450 = vpop.f32.mrf.mxu0
    %2451 = vmatprep.mubr.f32.mxu0 0.0
    %2452 = vmatmul.mubr.f32.gmra.mxu0 %v2376
    %v2453 = vpop.f32.mrf.mxu0
    %v2454 = vadd.f32 %v264, %v2453
    %v2455 = vpop.f32.mrf.mxu0
    %2456 = vdwg.mxu0
    %2457 = vrot.lane.b32.xlu0 %v289, 120
    %v2458 = vpop.permute.xlu0 %2457
    %2459 = vrot.lane.b32.xlu0 %v290, 120
    %v2460 = vpop.permute.xlu0 %2459
    %2461 = vrot.lane.b32.xlu0 %v243, 88
    %v2462 = vpop.permute.xlu0 %2461
    %2463 = vrot.lane.b32.xlu0 %v248, 88
    %v2464 = vpop.permute.xlu0 %2463
    %v2465 = vsel %vm299, %v2458, 0
    %v2467 = vsel %vm299, %v2460, 0
    %v2469 = vsel %vm299, %v2462, 0
    %v2471 = vsel %vm299, %v2464, 0
    %2473 = vmatprep.subr.mxu0 0.0
    %2474 = vmatpush1.xpose.msra.mxu0 0.0
    %2475 = vmatprep.subr.mxu0 0.0
    %2476 = vmatpush1.xpose.msra.mxu0 0.0
    %2477 = vmatprep.subr.mxu0 0.0
    %2478 = vmatpush1.xpose.msra.mxu0 0.0
    %2479 = vmatprep.subr.mxu0 0.0
    %2480 = vmatpush1.xpose.msra.mxu0 0.0
    %2481 = vmatprep.subr.mxu0 0.0
    %2482 = vmatpush1.xpose.msra.mxu0 0.0
    %2483 = vmatprep.subr.mxu0 0.0
    %2484 = vmatpush1.xpose.msra.mxu0 0.0
    %2485 = vmatprep.subr.mxu0 0.0
    %2486 = vmatpush1.xpose.msra.mxu0 0.0
    %2487 = vmatprep.subr.mxu0 0.0
    %2488 = vmatpush1.xpose.msra.mxu0 0.0
    %2489 = vmatprep.subr.mxu0 0.0
    %2490 = vmatpush1.xpose.msra.mxu0 0.0
    %2491 = vmatprep.subr.mxu0 0.0
    %2492 = vmatpush1.xpose.msra.mxu0 0.0
    %2493 = vmatprep.subr.mxu0 0.0
    %2494 = vmatpush1.xpose.msra.mxu0 0.0
    %2495 = vmatprep.subr.mxu0 0.0
    %2496 = vmatpush1.xpose.msra.mxu0 0.0
    %2497 = vmatprep.subr.mxu0 0.0
    %2498 = vmatpush1.xpose.msra.mxu0 0.0
    %2499 = vmatprep.subr.mxu0 0.0
    %2500 = vmatpush1.xpose.msra.mxu0 0.0
    %2501 = vmatprep.subr.mxu0 0.0
    %2502 = vmatpush1.xpose.msra.mxu0 %v2471
    %2503 = vmatprep.subr.mxu0 0.0
    %2504 = vmatpush1.xpose.msra.mxu0 %v2469
    %2505 = vmatprep.subr.mxu0 0.0
    %2506 = vmatpush2.xpose.msra.mxu0 0.0
    %2507 = vmatprep.subr.mxu0 0.0
    %2508 = vmatpush2.xpose.msra.mxu0 0.0
    %2509 = vmatprep.subr.mxu0 0.0
    %2510 = vmatpush2.xpose.msra.mxu0 0.0
    %2511 = vmatprep.subr.mxu0 0.0
    %2512 = vmatpush2.xpose.msra.mxu0 0.0
    %2513 = vmatprep.subr.mxu0 0.0
    %2514 = vmatpush2.xpose.msra.mxu0 0.0
    %2515 = vmatprep.subr.mxu0 0.0
    %2516 = vmatpush2.xpose.msra.mxu0 0.0
    %2517 = vmatprep.subr.mxu0 0.0
    %2518 = vmatpush2.xpose.msra.mxu0 0.0
    %2519 = vmatprep.subr.mxu0 0.0
    %2520 = vmatpush2.xpose.msra.mxu0 0.0
    %2521 = vmatprep.subr.mxu0 0.0
    %2522 = vmatpush2.xpose.msra.mxu0 0.0
    %2523 = vmatprep.subr.mxu0 0.0
    %2524 = vmatpush2.xpose.msra.mxu0 0.0
    %2525 = vmatprep.subr.mxu0 0.0
    %2526 = vmatpush2.xpose.msra.mxu0 0.0
    %2527 = vmatprep.subr.mxu0 0.0
    %2528 = vmatpush2.xpose.msra.mxu0 0.0
    %2529 = vmatprep.subr.mxu0 0.0
    %2530 = vmatpush2.xpose.msra.mxu0 0.0
    %2531 = vmatprep.subr.mxu0 0.0
    %2532 = vmatpush2.xpose.msra.mxu0 0.0
    %2533 = vmatprep.subr.mxu0 0.0
    %2534 = vmatpush2.xpose.msra.mxu0 0.0
    %2535 = vmatprep.subr.mxu0 0.0
    %2536 = vmatpush2.xpose.msra.mxu0 0.0
    %2537 = vmatprep.mubr.f32.mxu0 0.0
    %2538 = vmatmul.mubr.f32.gmra.mxu0 %v2465
    %v2539 = vpop.f32.mrf.mxu0
    %v2540 = vadd.f32 %v263, %v2539
    %v2541 = vpop.f32.mrf.mxu0
    %2542 = vmatprep.mubr.f32.mxu0 0.0
    %2543 = vmatmul.mubr.f32.gmra.mxu0 %v2467
    %v2544 = vpop.f32.mrf.mxu0
    %v2545 = vadd.f32 %v264, %v2544
    %v2546 = vpop.f32.mrf.mxu0
    %2547 = vdwg.mxu0
    %2548 = vrot.lane.b32.xlu0 %v291, 120
    %v2549 = vpop.permute.xlu0 %2548
    %2550 = vrot.lane.b32.xlu0 %v292, 120
    %v2551 = vpop.permute.xlu0 %2550
    %2552 = vrot.lane.b32.xlu0 %v253, 88
    %v2553 = vpop.permute.xlu0 %2552
    %2554 = vrot.lane.b32.xlu0 %v258, 88
    %v2555 = vpop.permute.xlu0 %2554
    %v2556 = vsel %vm299, %v2549, 0
    %v2558 = vsel %vm299, %v2551, 0
    %v2560 = vsel %vm299, %v2553, 0
    %v2562 = vsel %vm299, %v2555, 0
    %2564 = vmatprep.subr.mxu0 0.0
    %2565 = vmatpush1.xpose.msra.mxu0 0.0
    %2566 = vmatprep.subr.mxu0 0.0
    %2567 = vmatpush1.xpose.msra.mxu0 0.0
    %2568 = vmatprep.subr.mxu0 0.0
    %2569 = vmatpush1.xpose.msra.mxu0 0.0
    %2570 = vmatprep.subr.mxu0 0.0
    %2571 = vmatpush1.xpose.msra.mxu0 0.0
    %2572 = vmatprep.subr.mxu0 0.0
    %2573 = vmatpush1.xpose.msra.mxu0 0.0
    %2574 = vmatprep.subr.mxu0 0.0
    %2575 = vmatpush1.xpose.msra.mxu0 0.0
    %2576 = vmatprep.subr.mxu0 0.0
    %2577 = vmatpush1.xpose.msra.mxu0 0.0
    %2578 = vmatprep.subr.mxu0 0.0
    %2579 = vmatpush1.xpose.msra.mxu0 0.0
    %2580 = vmatprep.subr.mxu0 0.0
    %2581 = vmatpush1.xpose.msra.mxu0 0.0
    %2582 = vmatprep.subr.mxu0 0.0
    %2583 = vmatpush1.xpose.msra.mxu0 0.0
    %2584 = vmatprep.subr.mxu0 0.0
    %2585 = vmatpush1.xpose.msra.mxu0 0.0
    %2586 = vmatprep.subr.mxu0 0.0
    %2587 = vmatpush1.xpose.msra.mxu0 0.0
    %2588 = vmatprep.subr.mxu0 0.0
    %2589 = vmatpush1.xpose.msra.mxu0 0.0
    %2590 = vmatprep.subr.mxu0 0.0
    %2591 = vmatpush1.xpose.msra.mxu0 0.0
    %2592 = vmatprep.subr.mxu0 0.0
    %2593 = vmatpush1.xpose.msra.mxu0 %v2562
    %2594 = vmatprep.subr.mxu0 0.0
    %2595 = vmatpush1.xpose.msra.mxu0 %v2560
    %2596 = vmatprep.subr.mxu0 0.0
    %2597 = vmatpush2.xpose.msra.mxu0 0.0
    %2598 = vmatprep.subr.mxu0 0.0
    %2599 = vmatpush2.xpose.msra.mxu0 0.0
    %2600 = vmatprep.subr.mxu0 0.0
    %2601 = vmatpush2.xpose.msra.mxu0 0.0
    %2602 = vmatprep.subr.mxu0 0.0
    %2603 = vmatpush2.xpose.msra.mxu0 0.0
    %2604 = vmatprep.subr.mxu0 0.0
    %2605 = vmatpush2.xpose.msra.mxu0 0.0
    %2606 = vmatprep.subr.mxu0 0.0
    %2607 = vmatpush2.xpose.msra.mxu0 0.0
    %2608 = vmatprep.subr.mxu0 0.0
    %2609 = vmatpush2.xpose.msra.mxu0 0.0
    %2610 = vmatprep.subr.mxu0 0.0
    %2611 = vmatpush2.xpose.msra.mxu0 0.0
    %2612 = vmatprep.subr.mxu0 0.0
    %2613 = vmatpush2.xpose.msra.mxu0 0.0
    %2614 = vmatprep.subr.mxu0 0.0
    %2615 = vmatpush2.xpose.msra.mxu0 0.0
    %2616 = vmatprep.subr.mxu0 0.0
    %2617 = vmatpush2.xpose.msra.mxu0 0.0
    %2618 = vmatprep.subr.mxu0 0.0
    %2619 = vmatpush2.xpose.msra.mxu0 0.0
    %2620 = vmatprep.subr.mxu0 0.0
    %2621 = vmatpush2.xpose.msra.mxu0 0.0
    %2622 = vmatprep.subr.mxu0 0.0
    %2623 = vmatpush2.xpose.msra.mxu0 0.0
    %2624 = vmatprep.subr.mxu0 0.0
    %2625 = vmatpush2.xpose.msra.mxu0 0.0
    %2626 = vmatprep.subr.mxu0 0.0
    %2627 = vmatpush2.xpose.msra.mxu0 0.0
    %2628 = vmatprep.mubr.f32.mxu0 0.0
    %2629 = vmatmul.mubr.f32.gmra.mxu0 %v2556
    %v2630 = vpop.f32.mrf.mxu0
    %v2631 = vadd.f32 %v263, %v2630
    %v2632 = vpop.f32.mrf.mxu0
    %2633 = vmatprep.mubr.f32.mxu0 0.0
    %2634 = vmatmul.mubr.f32.gmra.mxu0 %v2558
    %v2635 = vpop.f32.mrf.mxu0
    %v2636 = vadd.f32 %v264, %v2635
    %v2637 = vpop.f32.mrf.mxu0
    %2638 = vdwg.mxu0
    %v2639 = vadd.f32 %v1994, %v269
    %v2640 = vadd.f32 %v1999, %v270
    %v2641 = vadd.f32 %v2085, %v271
    %v2642 = vadd.f32 %v2090, %v272
    %v2643 = vadd.f32 %v2176, %v273
    %v2644 = vadd.f32 %v2181, %v274
    %v2645 = vadd.f32 %v2267, %v275
    %v2646 = vadd.f32 %v2272, %v276
    %v2647 = vadd.f32 %v2358, %v269
    %v2648 = vadd.f32 %v2363, %v270
    %v2649 = vadd.f32 %v2449, %v271
    %v2650 = vadd.f32 %v2454, %v272
    %v2651 = vadd.f32 %v2540, %v273
    %v2652 = vadd.f32 %v2545, %v274
    %v2653 = vadd.f32 %v2631, %v275
    %v2654 = vadd.f32 %v2636, %v276
    %v2655 = vsel %vm1038, %v2639, -inf
    %2656 = vmax.xlane.f32.xlu0 %v2655
    %v2657 = vpop.xlane.xlu0 %2656
    %v2658 = vsel %vm1038, %v2640, -inf
    %2659 = vmax.xlane.f32.xlu0 %v2658
    %v2660 = vpop.xlane.xlu0 %2659
    %v2661 = vsel %vm1038, %v2641, -inf
    %2662 = vmax.xlane.f32.xlu0 %v2661
    %v2663 = vpop.xlane.xlu0 %2662
    %v2664 = vsel %vm1038, %v2642, -inf
    %2665 = vmax.xlane.f32.xlu0 %v2664
    %v2666 = vpop.xlane.xlu0 %2665
    %v2667 = vsel %vm1038, %v2643, -inf
    %2668 = vmax.xlane.f32.xlu0 %v2667
    %v2669 = vpop.xlane.xlu0 %2668
    %v2670 = vsel %vm1038, %v2644, -inf
    %2671 = vmax.xlane.f32.xlu0 %v2670
    %v2672 = vpop.xlane.xlu0 %2671
    %v2673 = vsel %vm1038, %v2645, -inf
    %2674 = vmax.xlane.f32.xlu0 %v2673
    %v2675 = vpop.xlane.xlu0 %2674
    %v2676 = vsel %vm1038, %v2646, -inf
    %2677 = vmax.xlane.f32.xlu0 %v2676
    %v2678 = vpop.xlane.xlu0 %2677
    %v2679 = vsel %vm1038, %v2647, -inf
    %2680 = vmax.xlane.f32.xlu0 %v2679
    %v2681 = vpop.xlane.xlu0 %2680
    %v2682 = vsel %vm1038, %v2648, -inf
    %2683 = vmax.xlane.f32.xlu0 %v2682
    %v2684 = vpop.xlane.xlu0 %2683
    %v2685 = vsel %vm1038, %v2649, -inf
    %2686 = vmax.xlane.f32.xlu0 %v2685
    %v2687 = vpop.xlane.xlu0 %2686
    %v2688 = vsel %vm1038, %v2650, -inf
    %2689 = vmax.xlane.f32.xlu0 %v2688
    %v2690 = vpop.xlane.xlu0 %2689
    %v2691 = vsel %vm1038, %v2651, -inf
    %2692 = vmax.xlane.f32.xlu0 %v2691
    %v2693 = vpop.xlane.xlu0 %2692
    %v2694 = vsel %vm1038, %v2652, -inf
    %2695 = vmax.xlane.f32.xlu0 %v2694
    %v2696 = vpop.xlane.xlu0 %2695
    %v2697 = vsel %vm1038, %v2653, -inf
    %2698 = vmax.xlane.f32.xlu0 %v2697
    %v2699 = vpop.xlane.xlu0 %2698
    %v2700 = vsel %vm1038, %v2654, -inf
    %2701 = vmax.xlane.f32.xlu0 %v2700
    %v2702 = vpop.xlane.xlu0 %2701
    %v2703 = vsub.f32 %v2639, %v2657
    %v2704 = vsub.f32 %v2640, %v2660
    %v2705 = vsub.f32 %v2641, %v2663
    %v2706 = vsub.f32 %v2642, %v2666
    %v2707 = vsub.f32 %v2643, %v2669
    %v2708 = vsub.f32 %v2644, %v2672
    %v2709 = vsub.f32 %v2645, %v2675
    %v2710 = vsub.f32 %v2646, %v2678
    %v2711 = vsub.f32 %v2647, %v2681
    %v2712 = vsub.f32 %v2648, %v2684
    %v2713 = vsub.f32 %v2649, %v2687
    %v2714 = vsub.f32 %v2650, %v2690
    %v2715 = vsub.f32 %v2651, %v2693
    %v2716 = vsub.f32 %v2652, %v2696
    %v2717 = vsub.f32 %v2653, %v2699
    %v2718 = vsub.f32 %v2654, %v2702
    %v2719 = vmul.f32 %v2703, 1.442695
    %v2720 = vpow.pop %v2719
    %v2721 = vmul.f32 %v2704, 1.442695
    %v2722 = vpow.pop %v2721
    %v2723 = vmul.f32 %v2705, 1.442695
    %v2724 = vpow.pop %v2723
    %v2725 = vmul.f32 %v2706, 1.442695
    %v2726 = vpow.pop %v2725
    %v2727 = vmul.f32 %v2707, 1.442695
    %v2728 = vpow.pop %v2727
    %v2729 = vmul.f32 %v2708, 1.442695
    %v2730 = vpow.pop %v2729
    %v2731 = vmul.f32 %v2709, 1.442695
    %v2732 = vpow.pop %v2731
    %v2733 = vmul.f32 %v2710, 1.442695
    %v2734 = vpow.pop %v2733
    %v2735 = vmul.f32 %v2711, 1.442695
    %v2736 = vpow.pop %v2735
    %v2737 = vmul.f32 %v2712, 1.442695
    %v2738 = vpow.pop %v2737
    %v2739 = vmul.f32 %v2713, 1.442695
    %v2740 = vpow.pop %v2739
    %v2741 = vmul.f32 %v2714, 1.442695
    %v2742 = vpow.pop %v2741
    %v2743 = vmul.f32 %v2715, 1.442695
    %v2744 = vpow.pop %v2743
    %v2745 = vmul.f32 %v2716, 1.442695
    %v2746 = vpow.pop %v2745
    %v2747 = vmul.f32 %v2717, 1.442695
    %v2748 = vpow.pop %v2747
    %v2749 = vmul.f32 %v2718, 1.442695
    %v2750 = vpow.pop %v2749
    %v2751 = vsel %vm1038, %v2720, 0.0
    %2752 = vadd.xlane.f32.xlu0 %v2751
    %v2753 = vpop.xlane.xlu0 %2752
    %v2754 = vsel %vm1038, %v2722, 0.0
    %2755 = vadd.xlane.f32.xlu0 %v2754
    %v2756 = vpop.xlane.xlu0 %2755
    %v2757 = vsel %vm1038, %v2724, 0.0
    %2758 = vadd.xlane.f32.xlu0 %v2757
    %v2759 = vpop.xlane.xlu0 %2758
    %v2760 = vsel %vm1038, %v2726, 0.0
    %2761 = vadd.xlane.f32.xlu0 %v2760
    %v2762 = vpop.xlane.xlu0 %2761
    %v2763 = vsel %vm1038, %v2728, 0.0
    %2764 = vadd.xlane.f32.xlu0 %v2763
    %v2765 = vpop.xlane.xlu0 %2764
    %v2766 = vsel %vm1038, %v2730, 0.0
    %2767 = vadd.xlane.f32.xlu0 %v2766
    %v2768 = vpop.xlane.xlu0 %2767
    %v2769 = vsel %vm1038, %v2732, 0.0
    %2770 = vadd.xlane.f32.xlu0 %v2769
    %v2771 = vpop.xlane.xlu0 %2770
    %v2772 = vsel %vm1038, %v2734, 0.0
    %2773 = vadd.xlane.f32.xlu0 %v2772
    %v2774 = vpop.xlane.xlu0 %2773
    %v2775 = vsel %vm1038, %v2736, 0.0
    %2776 = vadd.xlane.f32.xlu0 %v2775
    %v2777 = vpop.xlane.xlu0 %2776
    %v2778 = vsel %vm1038, %v2738, 0.0
    %2779 = vadd.xlane.f32.xlu0 %v2778
    %v2780 = vpop.xlane.xlu0 %2779
    %v2781 = vsel %vm1038, %v2740, 0.0
    %2782 = vadd.xlane.f32.xlu0 %v2781
    %v2783 = vpop.xlane.xlu0 %2782
    %v2784 = vsel %vm1038, %v2742, 0.0
    %2785 = vadd.xlane.f32.xlu0 %v2784
    %v2786 = vpop.xlane.xlu0 %2785
    %v2787 = vsel %vm1038, %v2744, 0.0
    %2788 = vadd.xlane.f32.xlu0 %v2787
    %v2789 = vpop.xlane.xlu0 %2788
    %v2790 = vsel %vm1038, %v2746, 0.0
    %2791 = vadd.xlane.f32.xlu0 %v2790
    %v2792 = vpop.xlane.xlu0 %2791
    %v2793 = vsel %vm1038, %v2748, 0.0
    %2794 = vadd.xlane.f32.xlu0 %v2793
    %v2795 = vpop.xlane.xlu0 %2794
    %v2796 = vsel %vm1038, %v2750, 0.0
    %2797 = vadd.xlane.f32.xlu0 %v2796
    %v2798 = vpop.xlane.xlu0 %2797
    %v2799 = vrcp.pop %v2753
    %v2800 = vrcp.pop %v2756
    %v2801 = vrcp.pop %v2759
    %v2802 = vrcp.pop %v2762
    %v2803 = vrcp.pop %v2765
    %v2804 = vrcp.pop %v2768
    %v2805 = vrcp.pop %v2771
    %v2806 = vrcp.pop %v2774
    %v2807 = vrcp.pop %v2777
    %v2808 = vrcp.pop %v2780
    %v2809 = vrcp.pop %v2783
    %v2810 = vrcp.pop %v2786
    %v2811 = vrcp.pop %v2789
    %v2812 = vrcp.pop %v2792
    %v2813 = vrcp.pop %v2795
    %v2814 = vrcp.pop %v2798
    %v2815 = vmul.f32 %v2720, %v2799
    %v2816 = vmul.f32 %v2722, %v2800
    %v2817 = vmul.f32 %v2724, %v2801
    %v2818 = vmul.f32 %v2726, %v2802
    %v2819 = vmul.f32 %v2728, %v2803
    %v2820 = vmul.f32 %v2730, %v2804
    %v2821 = vmul.f32 %v2732, %v2805
    %v2822 = vmul.f32 %v2734, %v2806
    %v2823 = vmul.f32 %v2736, %v2807
    %v2824 = vmul.f32 %v2738, %v2808
    %v2825 = vmul.f32 %v2740, %v2809
    %v2826 = vmul.f32 %v2742, %v2810
    %v2827 = vmul.f32 %v2744, %v2811
    %v2828 = vmul.f32 %v2746, %v2812
    %v2829 = vmul.f32 %v2748, %v2813
    %v2830 = vmul.f32 %v2750, %v2814
    %2831 = vrot.lane.b32.xlu0 %v183, 56
    %v2832 = vpop.permute.xlu0 %2831
    %2833 = vrot.lane.b32.xlu0 %v188, 56
    %v2834 = vpop.permute.xlu0 %2833
    %v2838 = vsel %vm1038, %v2815, 0
    %v2841 = vsel %vm1038, %v2816, 0
    %2843 = vmatprep.subr.mxu0 0.0
    %2844 = vmatpush1.msra.mxu0 0.0
    %2845 = vmatprep.subr.mxu0 0.0
    %2846 = vmatpush1.msra.mxu0 0.0
    %2847 = vmatprep.subr.mxu0 0.0
    %2848 = vmatpush1.msra.mxu0 0.0
    %2849 = vmatprep.subr.mxu0 0.0
    %2850 = vmatpush1.msra.mxu0 0.0
    %2851 = vmatprep.subr.mxu0 0.0
    %2852 = vmatpush1.msra.mxu0 0.0
    %2853 = vmatprep.subr.mxu0 0.0
    %2854 = vmatpush1.msra.mxu0 0.0
    %2855 = vmatprep.subr.mxu0 0.0
    %2856 = vmatpush1.msra.mxu0 0.0
    %2857 = vmatprep.subr.mxu0 0.0
    %2858 = vmatpush1.msra.mxu0 0.0
    %2859 = vmatprep.subr.mxu0 0.0
    %2860 = vmatpush1.msra.mxu0 0.0
    %2861 = vmatprep.subr.mxu0 0.0
    %2862 = vmatpush1.msra.mxu0 0.0
    %2863 = vmatprep.subr.mxu0 0.0
    %2864 = vmatpush1.msra.mxu0 0.0
    %2865 = vmatprep.subr.mxu0 0.0
    %2866 = vmatpush1.msra.mxu0 0.0
    %2867 = vmatprep.subr.mxu0 0.0
    %2868 = vmatpush1.msra.mxu0 0.0
    %2869 = vmatprep.subr.mxu0 0.0
    %2870 = vmatpush1.msra.mxu0 0.0
    %2871 = vmatprep.subr.mxu0 0.0
    %2872 = vmatpush1.msra.mxu0 %v2834
    %2873 = vmatprep.subr.mxu0 0.0
    %2874 = vmatpush1.msra.mxu0 %v2832
    %2875 = vmatprep.subr.mxu0 0.0
    %2876 = vmatpush2.msra.mxu0 0.0
    %2877 = vmatprep.subr.mxu0 0.0
    %2878 = vmatpush2.msra.mxu0 0.0
    %2879 = vmatprep.subr.mxu0 0.0
    %2880 = vmatpush2.msra.mxu0 0.0
    %2881 = vmatprep.subr.mxu0 0.0
    %2882 = vmatpush2.msra.mxu0 0.0
    %2883 = vmatprep.subr.mxu0 0.0
    %2884 = vmatpush2.msra.mxu0 0.0
    %2885 = vmatprep.subr.mxu0 0.0
    %2886 = vmatpush2.msra.mxu0 0.0
    %2887 = vmatprep.subr.mxu0 0.0
    %2888 = vmatpush2.msra.mxu0 0.0
    %2889 = vmatprep.subr.mxu0 0.0
    %2890 = vmatpush2.msra.mxu0 0.0
    %2891 = vmatprep.subr.mxu0 0.0
    %2892 = vmatpush2.msra.mxu0 0.0
    %2893 = vmatprep.subr.mxu0 0.0
    %2894 = vmatpush2.msra.mxu0 0.0
    %2895 = vmatprep.subr.mxu0 0.0
    %2896 = vmatpush2.msra.mxu0 0.0
    %2897 = vmatprep.subr.mxu0 0.0
    %2898 = vmatpush2.msra.mxu0 0.0
    %2899 = vmatprep.subr.mxu0 0.0
    %2900 = vmatpush2.msra.mxu0 0.0
    %2901 = vmatprep.subr.mxu0 0.0
    %2902 = vmatpush2.msra.mxu0 0.0
    %2903 = vmatprep.subr.mxu0 0.0
    %2904 = vmatpush2.msra.mxu0 0.0
    %2905 = vmatprep.subr.mxu0 0.0
    %2906 = vmatpush2.msra.mxu0 0.0
    %2907 = vmatprep.mubr.f32.mxu0 0.0
    %2908 = vmatmul.mubr.f32.gmra.mxu0 %v2838
    %v2909 = vpop.f32.mrf.mxu0
    %v2910 = vadd.f32 0.0, %v2909
    %v2911 = vpop.f32.mrf.mxu0
    %2912 = vmatprep.mubr.f32.mxu0 0.0
    %2913 = vmatmul.mubr.f32.gmra.mxu0 %v2841
    %v2914 = vpop.f32.mrf.mxu0
    %v2915 = vadd.f32 0.0, %v2914
    %v2916 = vpop.f32.mrf.mxu0
    %2917 = vdwg.mxu0
    %2918 = vrot.lane.b32.xlu0 %v193, 56
    %v2919 = vpop.permute.xlu0 %2918
    %2920 = vrot.lane.b32.xlu0 %v198, 56
    %v2921 = vpop.permute.xlu0 %2920
    %v2925 = vsel %vm1038, %v2817, 0
    %v2928 = vsel %vm1038, %v2818, 0
    %2930 = vmatprep.subr.mxu0 0.0
    %2931 = vmatpush1.msra.mxu0 0.0
    %2932 = vmatprep.subr.mxu0 0.0
    %2933 = vmatpush1.msra.mxu0 0.0
    %2934 = vmatprep.subr.mxu0 0.0
    %2935 = vmatpush1.msra.mxu0 0.0
    %2936 = vmatprep.subr.mxu0 0.0
    %2937 = vmatpush1.msra.mxu0 0.0
    %2938 = vmatprep.subr.mxu0 0.0
    %2939 = vmatpush1.msra.mxu0 0.0
    %2940 = vmatprep.subr.mxu0 0.0
    %2941 = vmatpush1.msra.mxu0 0.0
    %2942 = vmatprep.subr.mxu0 0.0
    %2943 = vmatpush1.msra.mxu0 0.0
    %2944 = vmatprep.subr.mxu0 0.0
    %2945 = vmatpush1.msra.mxu0 0.0
    %2946 = vmatprep.subr.mxu0 0.0
    %2947 = vmatpush1.msra.mxu0 0.0
    %2948 = vmatprep.subr.mxu0 0.0
    %2949 = vmatpush1.msra.mxu0 0.0
    %2950 = vmatprep.subr.mxu0 0.0
    %2951 = vmatpush1.msra.mxu0 0.0
    %2952 = vmatprep.subr.mxu0 0.0
    %2953 = vmatpush1.msra.mxu0 0.0
    %2954 = vmatprep.subr.mxu0 0.0
    %2955 = vmatpush1.msra.mxu0 0.0
    %2956 = vmatprep.subr.mxu0 0.0
    %2957 = vmatpush1.msra.mxu0 0.0
    %2958 = vmatprep.subr.mxu0 0.0
    %2959 = vmatpush1.msra.mxu0 %v2921
    %2960 = vmatprep.subr.mxu0 0.0
    %2961 = vmatpush1.msra.mxu0 %v2919
    %2962 = vmatprep.subr.mxu0 0.0
    %2963 = vmatpush2.msra.mxu0 0.0
    %2964 = vmatprep.subr.mxu0 0.0
    %2965 = vmatpush2.msra.mxu0 0.0
    %2966 = vmatprep.subr.mxu0 0.0
    %2967 = vmatpush2.msra.mxu0 0.0
    %2968 = vmatprep.subr.mxu0 0.0
    %2969 = vmatpush2.msra.mxu0 0.0
    %2970 = vmatprep.subr.mxu0 0.0
    %2971 = vmatpush2.msra.mxu0 0.0
    %2972 = vmatprep.subr.mxu0 0.0
    %2973 = vmatpush2.msra.mxu0 0.0
    %2974 = vmatprep.subr.mxu0 0.0
    %2975 = vmatpush2.msra.mxu0 0.0
    %2976 = vmatprep.subr.mxu0 0.0
    %2977 = vmatpush2.msra.mxu0 0.0
    %2978 = vmatprep.subr.mxu0 0.0
    %2979 = vmatpush2.msra.mxu0 0.0
    %2980 = vmatprep.subr.mxu0 0.0
    %2981 = vmatpush2.msra.mxu0 0.0
    %2982 = vmatprep.subr.mxu0 0.0
    %2983 = vmatpush2.msra.mxu0 0.0
    %2984 = vmatprep.subr.mxu0 0.0
    %2985 = vmatpush2.msra.mxu0 0.0
    %2986 = vmatprep.subr.mxu0 0.0
    %2987 = vmatpush2.msra.mxu0 0.0
    %2988 = vmatprep.subr.mxu0 0.0
    %2989 = vmatpush2.msra.mxu0 0.0
    %2990 = vmatprep.subr.mxu0 0.0
    %2991 = vmatpush2.msra.mxu0 0.0
    %2992 = vmatprep.subr.mxu0 0.0
    %2993 = vmatpush2.msra.mxu0 0.0
    %2994 = vmatprep.mubr.f32.mxu0 0.0
    %2995 = vmatmul.mubr.f32.gmra.mxu0 %v2925
    %v2996 = vpop.f32.mrf.mxu0
    %v2997 = vadd.f32 0.0, %v2996
    %v2998 = vpop.f32.mrf.mxu0
    %2999 = vmatprep.mubr.f32.mxu0 0.0
    %3000 = vmatmul.mubr.f32.gmra.mxu0 %v2928
    %v3001 = vpop.f32.mrf.mxu0
    %v3002 = vadd.f32 0.0, %v3001
    %v3003 = vpop.f32.mrf.mxu0
    %3004 = vdwg.mxu0
    %3005 = vrot.lane.b32.xlu0 %v203, 56
    %v3006 = vpop.permute.xlu0 %3005
    %3007 = vrot.lane.b32.xlu0 %v208, 56
    %v3008 = vpop.permute.xlu0 %3007
    %v3012 = vsel %vm1038, %v2819, 0
    %v3015 = vsel %vm1038, %v2820, 0
    %3017 = vmatprep.subr.mxu0 0.0
    %3018 = vmatpush1.msra.mxu0 0.0
    %3019 = vmatprep.subr.mxu0 0.0
    %3020 = vmatpush1.msra.mxu0 0.0
    %3021 = vmatprep.subr.mxu0 0.0
    %3022 = vmatpush1.msra.mxu0 0.0
    %3023 = vmatprep.subr.mxu0 0.0
    %3024 = vmatpush1.msra.mxu0 0.0
    %3025 = vmatprep.subr.mxu0 0.0
    %3026 = vmatpush1.msra.mxu0 0.0
    %3027 = vmatprep.subr.mxu0 0.0
    %3028 = vmatpush1.msra.mxu0 0.0
    %3029 = vmatprep.subr.mxu0 0.0
    %3030 = vmatpush1.msra.mxu0 0.0
    %3031 = vmatprep.subr.mxu0 0.0
    %3032 = vmatpush1.msra.mxu0 0.0
    %3033 = vmatprep.subr.mxu0 0.0
    %3034 = vmatpush1.msra.mxu0 0.0
    %3035 = vmatprep.subr.mxu0 0.0
    %3036 = vmatpush1.msra.mxu0 0.0
    %3037 = vmatprep.subr.mxu0 0.0
    %3038 = vmatpush1.msra.mxu0 0.0
    %3039 = vmatprep.subr.mxu0 0.0
    %3040 = vmatpush1.msra.mxu0 0.0
    %3041 = vmatprep.subr.mxu0 0.0
    %3042 = vmatpush1.msra.mxu0 0.0
    %3043 = vmatprep.subr.mxu0 0.0
    %3044 = vmatpush1.msra.mxu0 0.0
    %3045 = vmatprep.subr.mxu0 0.0
    %3046 = vmatpush1.msra.mxu0 %v3008
    %3047 = vmatprep.subr.mxu0 0.0
    %3048 = vmatpush1.msra.mxu0 %v3006
    %3049 = vmatprep.subr.mxu0 0.0
    %3050 = vmatpush2.msra.mxu0 0.0
    %3051 = vmatprep.subr.mxu0 0.0
    %3052 = vmatpush2.msra.mxu0 0.0
    %3053 = vmatprep.subr.mxu0 0.0
    %3054 = vmatpush2.msra.mxu0 0.0
    %3055 = vmatprep.subr.mxu0 0.0
    %3056 = vmatpush2.msra.mxu0 0.0
    %3057 = vmatprep.subr.mxu0 0.0
    %3058 = vmatpush2.msra.mxu0 0.0
    %3059 = vmatprep.subr.mxu0 0.0
    %3060 = vmatpush2.msra.mxu0 0.0
    %3061 = vmatprep.subr.mxu0 0.0
    %3062 = vmatpush2.msra.mxu0 0.0
    %3063 = vmatprep.subr.mxu0 0.0
    %3064 = vmatpush2.msra.mxu0 0.0
    %3065 = vmatprep.subr.mxu0 0.0
    %3066 = vmatpush2.msra.mxu0 0.0
    %3067 = vmatprep.subr.mxu0 0.0
    %3068 = vmatpush2.msra.mxu0 0.0
    %3069 = vmatprep.subr.mxu0 0.0
    %3070 = vmatpush2.msra.mxu0 0.0
    %3071 = vmatprep.subr.mxu0 0.0
    %3072 = vmatpush2.msra.mxu0 0.0
    %3073 = vmatprep.subr.mxu0 0.0
    %3074 = vmatpush2.msra.mxu0 0.0
    %3075 = vmatprep.subr.mxu0 0.0
    %3076 = vmatpush2.msra.mxu0 0.0
    %3077 = vmatprep.subr.mxu0 0.0
    %3078 = vmatpush2.msra.mxu0 0.0
    %3079 = vmatprep.subr.mxu0 0.0
    %3080 = vmatpush2.msra.mxu0 0.0
    %3081 = vmatprep.mubr.f32.mxu0 0.0
    %3082 = vmatmul.mubr.f32.gmra.mxu0 %v3012
    %v3083 = vpop.f32.mrf.mxu0
    %v3084 = vadd.f32 0.0, %v3083
    %v3085 = vpop.f32.mrf.mxu0
    %3086 = vmatprep.mubr.f32.mxu0 0.0
    %3087 = vmatmul.mubr.f32.gmra.mxu0 %v3015
    %v3088 = vpop.f32.mrf.mxu0
    %v3089 = vadd.f32 0.0, %v3088
    %v3090 = vpop.f32.mrf.mxu0
    %3091 = vdwg.mxu0
    %3092 = vrot.lane.b32.xlu0 %v213, 56
    %v3093 = vpop.permute.xlu0 %3092
    %3094 = vrot.lane.b32.xlu0 %v218, 56
    %v3095 = vpop.permute.xlu0 %3094
    %v3099 = vsel %vm1038, %v2821, 0
    %v3102 = vsel %vm1038, %v2822, 0
    %3104 = vmatprep.subr.mxu0 0.0
    %3105 = vmatpush1.msra.mxu0 0.0
    %3106 = vmatprep.subr.mxu0 0.0
    %3107 = vmatpush1.msra.mxu0 0.0
    %3108 = vmatprep.subr.mxu0 0.0
    %3109 = vmatpush1.msra.mxu0 0.0
    %3110 = vmatprep.subr.mxu0 0.0
    %3111 = vmatpush1.msra.mxu0 0.0
    %3112 = vmatprep.subr.mxu0 0.0
    %3113 = vmatpush1.msra.mxu0 0.0
    %3114 = vmatprep.subr.mxu0 0.0
    %3115 = vmatpush1.msra.mxu0 0.0
    %3116 = vmatprep.subr.mxu0 0.0
    %3117 = vmatpush1.msra.mxu0 0.0
    %3118 = vmatprep.subr.mxu0 0.0
    %3119 = vmatpush1.msra.mxu0 0.0
    %3120 = vmatprep.subr.mxu0 0.0
    %3121 = vmatpush1.msra.mxu0 0.0
    %3122 = vmatprep.subr.mxu0 0.0
    %3123 = vmatpush1.msra.mxu0 0.0
    %3124 = vmatprep.subr.mxu0 0.0
    %3125 = vmatpush1.msra.mxu0 0.0
    %3126 = vmatprep.subr.mxu0 0.0
    %3127 = vmatpush1.msra.mxu0 0.0
    %3128 = vmatprep.subr.mxu0 0.0
    %3129 = vmatpush1.msra.mxu0 0.0
    %3130 = vmatprep.subr.mxu0 0.0
    %3131 = vmatpush1.msra.mxu0 0.0
    %3132 = vmatprep.subr.mxu0 0.0
    %3133 = vmatpush1.msra.mxu0 %v3095
    %3134 = vmatprep.subr.mxu0 0.0
    %3135 = vmatpush1.msra.mxu0 %v3093
    %3136 = vmatprep.subr.mxu0 0.0
    %3137 = vmatpush2.msra.mxu0 0.0
    %3138 = vmatprep.subr.mxu0 0.0
    %3139 = vmatpush2.msra.mxu0 0.0
    %3140 = vmatprep.subr.mxu0 0.0
    %3141 = vmatpush2.msra.mxu0 0.0
    %3142 = vmatprep.subr.mxu0 0.0
    %3143 = vmatpush2.msra.mxu0 0.0
    %3144 = vmatprep.subr.mxu0 0.0
    %3145 = vmatpush2.msra.mxu0 0.0
    %3146 = vmatprep.subr.mxu0 0.0
    %3147 = vmatpush2.msra.mxu0 0.0
    %3148 = vmatprep.subr.mxu0 0.0
    %3149 = vmatpush2.msra.mxu0 0.0
    %3150 = vmatprep.subr.mxu0 0.0
    %3151 = vmatpush2.msra.mxu0 0.0
    %3152 = vmatprep.subr.mxu0 0.0
    %3153 = vmatpush2.msra.mxu0 0.0
    %3154 = vmatprep.subr.mxu0 0.0
    %3155 = vmatpush2.msra.mxu0 0.0
    %3156 = vmatprep.subr.mxu0 0.0
    %3157 = vmatpush2.msra.mxu0 0.0
    %3158 = vmatprep.subr.mxu0 0.0
    %3159 = vmatpush2.msra.mxu0 0.0
    %3160 = vmatprep.subr.mxu0 0.0
    %3161 = vmatpush2.msra.mxu0 0.0
    %3162 = vmatprep.subr.mxu0 0.0
    %3163 = vmatpush2.msra.mxu0 0.0
    %3164 = vmatprep.subr.mxu0 0.0
    %3165 = vmatpush2.msra.mxu0 0.0
    %3166 = vmatprep.subr.mxu0 0.0
    %3167 = vmatpush2.msra.mxu0 0.0
    %3168 = vmatprep.mubr.f32.mxu0 0.0
    %3169 = vmatmul.mubr.f32.gmra.mxu0 %v3099
    %v3170 = vpop.f32.mrf.mxu0
    %v3171 = vadd.f32 0.0, %v3170
    %v3172 = vpop.f32.mrf.mxu0
    %3173 = vmatprep.mubr.f32.mxu0 0.0
    %3174 = vmatmul.mubr.f32.gmra.mxu0 %v3102
    %v3175 = vpop.f32.mrf.mxu0
    %v3176 = vadd.f32 0.0, %v3175
    %v3177 = vpop.f32.mrf.mxu0
    %3178 = vdwg.mxu0
    %3179 = vrot.lane.b32.xlu0 %v223, 56
    %v3180 = vpop.permute.xlu0 %3179
    %3181 = vrot.lane.b32.xlu0 %v228, 56
    %v3182 = vpop.permute.xlu0 %3181
    %v3186 = vsel %vm1038, %v2823, 0
    %v3189 = vsel %vm1038, %v2824, 0
    %3191 = vmatprep.subr.mxu0 0.0
    %3192 = vmatpush1.msra.mxu0 0.0
    %3193 = vmatprep.subr.mxu0 0.0
    %3194 = vmatpush1.msra.mxu0 0.0
    %3195 = vmatprep.subr.mxu0 0.0
    %3196 = vmatpush1.msra.mxu0 0.0
    %3197 = vmatprep.subr.mxu0 0.0
    %3198 = vmatpush1.msra.mxu0 0.0
    %3199 = vmatprep.subr.mxu0 0.0
    %3200 = vmatpush1.msra.mxu0 0.0
    %3201 = vmatprep.subr.mxu0 0.0
    %3202 = vmatpush1.msra.mxu0 0.0
    %3203 = vmatprep.subr.mxu0 0.0
    %3204 = vmatpush1.msra.mxu0 0.0
    %3205 = vmatprep.subr.mxu0 0.0
    %3206 = vmatpush1.msra.mxu0 0.0
    %3207 = vmatprep.subr.mxu0 0.0
    %3208 = vmatpush1.msra.mxu0 0.0
    %3209 = vmatprep.subr.mxu0 0.0
    %3210 = vmatpush1.msra.mxu0 0.0
    %3211 = vmatprep.subr.mxu0 0.0
    %3212 = vmatpush1.msra.mxu0 0.0
    %3213 = vmatprep.subr.mxu0 0.0
    %3214 = vmatpush1.msra.mxu0 0.0
    %3215 = vmatprep.subr.mxu0 0.0
    %3216 = vmatpush1.msra.mxu0 0.0
    %3217 = vmatprep.subr.mxu0 0.0
    %3218 = vmatpush1.msra.mxu0 0.0
    %3219 = vmatprep.subr.mxu0 0.0
    %3220 = vmatpush1.msra.mxu0 %v3182
    %3221 = vmatprep.subr.mxu0 0.0
    %3222 = vmatpush1.msra.mxu0 %v3180
    %3223 = vmatprep.subr.mxu0 0.0
    %3224 = vmatpush2.msra.mxu0 0.0
    %3225 = vmatprep.subr.mxu0 0.0
    %3226 = vmatpush2.msra.mxu0 0.0
    %3227 = vmatprep.subr.mxu0 0.0
    %3228 = vmatpush2.msra.mxu0 0.0
    %3229 = vmatprep.subr.mxu0 0.0
    %3230 = vmatpush2.msra.mxu0 0.0
    %3231 = vmatprep.subr.mxu0 0.0
    %3232 = vmatpush2.msra.mxu0 0.0
    %3233 = vmatprep.subr.mxu0 0.0
    %3234 = vmatpush2.msra.mxu0 0.0
    %3235 = vmatprep.subr.mxu0 0.0
    %3236 = vmatpush2.msra.mxu0 0.0
    %3237 = vmatprep.subr.mxu0 0.0
    %3238 = vmatpush2.msra.mxu0 0.0
    %3239 = vmatprep.subr.mxu0 0.0
    %3240 = vmatpush2.msra.mxu0 0.0
    %3241 = vmatprep.subr.mxu0 0.0
    %3242 = vmatpush2.msra.mxu0 0.0
    %3243 = vmatprep.subr.mxu0 0.0
    %3244 = vmatpush2.msra.mxu0 0.0
    %3245 = vmatprep.subr.mxu0 0.0
    %3246 = vmatpush2.msra.mxu0 0.0
    %3247 = vmatprep.subr.mxu0 0.0
    %3248 = vmatpush2.msra.mxu0 0.0
    %3249 = vmatprep.subr.mxu0 0.0
    %3250 = vmatpush2.msra.mxu0 0.0
    %3251 = vmatprep.subr.mxu0 0.0
    %3252 = vmatpush2.msra.mxu0 0.0
    %3253 = vmatprep.subr.mxu0 0.0
    %3254 = vmatpush2.msra.mxu0 0.0
    %3255 = vmatprep.mubr.f32.mxu0 0.0
    %3256 = vmatmul.mubr.f32.gmra.mxu0 %v3186
    %v3257 = vpop.f32.mrf.mxu0
    %v3258 = vadd.f32 0.0, %v3257
    %v3259 = vpop.f32.mrf.mxu0
    %3260 = vmatprep.mubr.f32.mxu0 0.0
    %3261 = vmatmul.mubr.f32.gmra.mxu0 %v3189
    %v3262 = vpop.f32.mrf.mxu0
    %v3263 = vadd.f32 0.0, %v3262
    %v3264 = vpop.f32.mrf.mxu0
    %3265 = vdwg.mxu0
    %3266 = vrot.lane.b32.xlu0 %v233, 56
    %v3267 = vpop.permute.xlu0 %3266
    %3268 = vrot.lane.b32.xlu0 %v238, 56
    %v3269 = vpop.permute.xlu0 %3268
    %v3273 = vsel %vm1038, %v2825, 0
    %v3276 = vsel %vm1038, %v2826, 0
    %3278 = vmatprep.subr.mxu0 0.0
    %3279 = vmatpush1.msra.mxu0 0.0
    %3280 = vmatprep.subr.mxu0 0.0
    %3281 = vmatpush1.msra.mxu0 0.0
    %3282 = vmatprep.subr.mxu0 0.0
    %3283 = vmatpush1.msra.mxu0 0.0
    %3284 = vmatprep.subr.mxu0 0.0
    %3285 = vmatpush1.msra.mxu0 0.0
    %3286 = vmatprep.subr.mxu0 0.0
    %3287 = vmatpush1.msra.mxu0 0.0
    %3288 = vmatprep.subr.mxu0 0.0
    %3289 = vmatpush1.msra.mxu0 0.0
    %3290 = vmatprep.subr.mxu0 0.0
    %3291 = vmatpush1.msra.mxu0 0.0
    %3292 = vmatprep.subr.mxu0 0.0
    %3293 = vmatpush1.msra.mxu0 0.0
    %3294 = vmatprep.subr.mxu0 0.0
    %3295 = vmatpush1.msra.mxu0 0.0
    %3296 = vmatprep.subr.mxu0 0.0
    %3297 = vmatpush1.msra.mxu0 0.0
    %3298 = vmatprep.subr.mxu0 0.0
    %3299 = vmatpush1.msra.mxu0 0.0
    %3300 = vmatprep.subr.mxu0 0.0
    %3301 = vmatpush1.msra.mxu0 0.0
    %3302 = vmatprep.subr.mxu0 0.0
    %3303 = vmatpush1.msra.mxu0 0.0
    %3304 = vmatprep.subr.mxu0 0.0
    %3305 = vmatpush1.msra.mxu0 0.0
    %3306 = vmatprep.subr.mxu0 0.0
    %3307 = vmatpush1.msra.mxu0 %v3269
    %3308 = vmatprep.subr.mxu0 0.0
    %3309 = vmatpush1.msra.mxu0 %v3267
    %3310 = vmatprep.subr.mxu0 0.0
    %3311 = vmatpush2.msra.mxu0 0.0
    %3312 = vmatprep.subr.mxu0 0.0
    %3313 = vmatpush2.msra.mxu0 0.0
    %3314 = vmatprep.subr.mxu0 0.0
    %3315 = vmatpush2.msra.mxu0 0.0
    %3316 = vmatprep.subr.mxu0 0.0
    %3317 = vmatpush2.msra.mxu0 0.0
    %3318 = vmatprep.subr.mxu0 0.0
    %3319 = vmatpush2.msra.mxu0 0.0
    %3320 = vmatprep.subr.mxu0 0.0
    %3321 = vmatpush2.msra.mxu0 0.0
    %3322 = vmatprep.subr.mxu0 0.0
    %3323 = vmatpush2.msra.mxu0 0.0
    %3324 = vmatprep.subr.mxu0 0.0
    %3325 = vmatpush2.msra.mxu0 0.0
    %3326 = vmatprep.subr.mxu0 0.0
    %3327 = vmatpush2.msra.mxu0 0.0
    %3328 = vmatprep.subr.mxu0 0.0
    %3329 = vmatpush2.msra.mxu0 0.0
    %3330 = vmatprep.subr.mxu0 0.0
    %3331 = vmatpush2.msra.mxu0 0.0
    %3332 = vmatprep.subr.mxu0 0.0
    %3333 = vmatpush2.msra.mxu0 0.0
    %3334 = vmatprep.subr.mxu0 0.0
    %3335 = vmatpush2.msra.mxu0 0.0
    %3336 = vmatprep.subr.mxu0 0.0
    %3337 = vmatpush2.msra.mxu0 0.0
    %3338 = vmatprep.subr.mxu0 0.0
    %3339 = vmatpush2.msra.mxu0 0.0
    %3340 = vmatprep.subr.mxu0 0.0
    %3341 = vmatpush2.msra.mxu0 0.0
    %3342 = vmatprep.mubr.f32.mxu0 0.0
    %3343 = vmatmul.mubr.f32.gmra.mxu0 %v3273
    %v3344 = vpop.f32.mrf.mxu0
    %v3345 = vadd.f32 0.0, %v3344
    %v3346 = vpop.f32.mrf.mxu0
    %3347 = vmatprep.mubr.f32.mxu0 0.0
    %3348 = vmatmul.mubr.f32.gmra.mxu0 %v3276
    %v3349 = vpop.f32.mrf.mxu0
    %v3350 = vadd.f32 0.0, %v3349
    %v3351 = vpop.f32.mrf.mxu0
    %3352 = vdwg.mxu0
    %3353 = vrot.lane.b32.xlu0 %v243, 56
    %v3354 = vpop.permute.xlu0 %3353
    %3355 = vrot.lane.b32.xlu0 %v248, 56
    %v3356 = vpop.permute.xlu0 %3355
    %v3360 = vsel %vm1038, %v2827, 0
    %v3363 = vsel %vm1038, %v2828, 0
    %3365 = vmatprep.subr.mxu0 0.0
    %3366 = vmatpush1.msra.mxu0 0.0
    %3367 = vmatprep.subr.mxu0 0.0
    %3368 = vmatpush1.msra.mxu0 0.0
    %3369 = vmatprep.subr.mxu0 0.0
    %3370 = vmatpush1.msra.mxu0 0.0
    %3371 = vmatprep.subr.mxu0 0.0
    %3372 = vmatpush1.msra.mxu0 0.0
    %3373 = vmatprep.subr.mxu0 0.0
    %3374 = vmatpush1.msra.mxu0 0.0
    %3375 = vmatprep.subr.mxu0 0.0
    %3376 = vmatpush1.msra.mxu0 0.0
    %3377 = vmatprep.subr.mxu0 0.0
    %3378 = vmatpush1.msra.mxu0 0.0
    %3379 = vmatprep.subr.mxu0 0.0
    %3380 = vmatpush1.msra.mxu0 0.0
    %3381 = vmatprep.subr.mxu0 0.0
    %3382 = vmatpush1.msra.mxu0 0.0
    %3383 = vmatprep.subr.mxu0 0.0
    %3384 = vmatpush1.msra.mxu0 0.0
    %3385 = vmatprep.subr.mxu0 0.0
    %3386 = vmatpush1.msra.mxu0 0.0
    %3387 = vmatprep.subr.mxu0 0.0
    %3388 = vmatpush1.msra.mxu0 0.0
    %3389 = vmatprep.subr.mxu0 0.0
    %3390 = vmatpush1.msra.mxu0 0.0
    %3391 = vmatprep.subr.mxu0 0.0
    %3392 = vmatpush1.msra.mxu0 0.0
    %3393 = vmatprep.subr.mxu0 0.0
    %3394 = vmatpush1.msra.mxu0 %v3356
    %3395 = vmatprep.subr.mxu0 0.0
    %3396 = vmatpush1.msra.mxu0 %v3354
    %3397 = vmatprep.subr.mxu0 0.0
    %3398 = vmatpush2.msra.mxu0 0.0
    %3399 = vmatprep.subr.mxu0 0.0
    %3400 = vmatpush2.msra.mxu0 0.0
    %3401 = vmatprep.subr.mxu0 0.0
    %3402 = vmatpush2.msra.mxu0 0.0
    %3403 = vmatprep.subr.mxu0 0.0
    %3404 = vmatpush2.msra.mxu0 0.0
    %3405 = vmatprep.subr.mxu0 0.0
    %3406 = vmatpush2.msra.mxu0 0.0
    %3407 = vmatprep.subr.mxu0 0.0
    %3408 = vmatpush2.msra.mxu0 0.0
    %3409 = vmatprep.subr.mxu0 0.0
    %3410 = vmatpush2.msra.mxu0 0.0
    %3411 = vmatprep.subr.mxu0 0.0
    %3412 = vmatpush2.msra.mxu0 0.0
    %3413 = vmatprep.subr.mxu0 0.0
    %3414 = vmatpush2.msra.mxu0 0.0
    %3415 = vmatprep.subr.mxu0 0.0
    %3416 = vmatpush2.msra.mxu0 0.0
    %3417 = vmatprep.subr.mxu0 0.0
    %3418 = vmatpush2.msra.mxu0 0.0
    %3419 = vmatprep.subr.mxu0 0.0
    %3420 = vmatpush2.msra.mxu0 0.0
    %3421 = vmatprep.subr.mxu0 0.0
    %3422 = vmatpush2.msra.mxu0 0.0
    %3423 = vmatprep.subr.mxu0 0.0
    %3424 = vmatpush2.msra.mxu0 0.0
    %3425 = vmatprep.subr.mxu0 0.0
    %3426 = vmatpush2.msra.mxu0 0.0
    %3427 = vmatprep.subr.mxu0 0.0
    %3428 = vmatpush2.msra.mxu0 0.0
    %3429 = vmatprep.mubr.f32.mxu0 0.0
    %3430 = vmatmul.mubr.f32.gmra.mxu0 %v3360
    %v3431 = vpop.f32.mrf.mxu0
    %v3432 = vadd.f32 0.0, %v3431
    %v3433 = vpop.f32.mrf.mxu0
    %3434 = vmatprep.mubr.f32.mxu0 0.0
    %3435 = vmatmul.mubr.f32.gmra.mxu0 %v3363
    %v3436 = vpop.f32.mrf.mxu0
    %v3437 = vadd.f32 0.0, %v3436
    %v3438 = vpop.f32.mrf.mxu0
    %3439 = vdwg.mxu0
    %3440 = vrot.lane.b32.xlu0 %v253, 56
    %v3441 = vpop.permute.xlu0 %3440
    %3442 = vrot.lane.b32.xlu0 %v258, 56
    %v3443 = vpop.permute.xlu0 %3442
    %v3447 = vsel %vm1038, %v2829, 0
    %v3450 = vsel %vm1038, %v2830, 0
    %3452 = vmatprep.subr.mxu0 0.0
    %3453 = vmatpush1.msra.mxu0 0.0
    %3454 = vmatprep.subr.mxu0 0.0
    %3455 = vmatpush1.msra.mxu0 0.0
    %3456 = vmatprep.subr.mxu0 0.0
    %3457 = vmatpush1.msra.mxu0 0.0
    %3458 = vmatprep.subr.mxu0 0.0
    %3459 = vmatpush1.msra.mxu0 0.0
    %3460 = vmatprep.subr.mxu0 0.0
    %3461 = vmatpush1.msra.mxu0 0.0
    %3462 = vmatprep.subr.mxu0 0.0
    %3463 = vmatpush1.msra.mxu0 0.0
    %3464 = vmatprep.subr.mxu0 0.0
    %3465 = vmatpush1.msra.mxu0 0.0
    %3466 = vmatprep.subr.mxu0 0.0
    %3467 = vmatpush1.msra.mxu0 0.0
    %3468 = vmatprep.subr.mxu0 0.0
    %3469 = vmatpush1.msra.mxu0 0.0
    %3470 = vmatprep.subr.mxu0 0.0
    %3471 = vmatpush1.msra.mxu0 0.0
    %3472 = vmatprep.subr.mxu0 0.0
    %3473 = vmatpush1.msra.mxu0 0.0
    %3474 = vmatprep.subr.mxu0 0.0
    %3475 = vmatpush1.msra.mxu0 0.0
    %3476 = vmatprep.subr.mxu0 0.0
    %3477 = vmatpush1.msra.mxu0 0.0
    %3478 = vmatprep.subr.mxu0 0.0
    %3479 = vmatpush1.msra.mxu0 0.0
    %3480 = vmatprep.subr.mxu0 0.0
    %3481 = vmatpush1.msra.mxu0 %v3443
    %3482 = vmatprep.subr.mxu0 0.0
    %3483 = vmatpush1.msra.mxu0 %v3441
    %3484 = vmatprep.subr.mxu0 0.0
    %3485 = vmatpush2.msra.mxu0 0.0
    %3486 = vmatprep.subr.mxu0 0.0
    %3487 = vmatpush2.msra.mxu0 0.0
    %3488 = vmatprep.subr.mxu0 0.0
    %3489 = vmatpush2.msra.mxu0 0.0
    %3490 = vmatprep.subr.mxu0 0.0
    %3491 = vmatpush2.msra.mxu0 0.0
    %3492 = vmatprep.subr.mxu0 0.0
    %3493 = vmatpush2.msra.mxu0 0.0
    %3494 = vmatprep.subr.mxu0 0.0
    %3495 = vmatpush2.msra.mxu0 0.0
    %3496 = vmatprep.subr.mxu0 0.0
    %3497 = vmatpush2.msra.mxu0 0.0
    %3498 = vmatprep.subr.mxu0 0.0
    %3499 = vmatpush2.msra.mxu0 0.0
    %3500 = vmatprep.subr.mxu0 0.0
    %3501 = vmatpush2.msra.mxu0 0.0
    %3502 = vmatprep.subr.mxu0 0.0
    %3503 = vmatpush2.msra.mxu0 0.0
    %3504 = vmatprep.subr.mxu0 0.0
    %3505 = vmatpush2.msra.mxu0 0.0
    %3506 = vmatprep.subr.mxu0 0.0
    %3507 = vmatpush2.msra.mxu0 0.0
    %3508 = vmatprep.subr.mxu0 0.0
    %3509 = vmatpush2.msra.mxu0 0.0
    %3510 = vmatprep.subr.mxu0 0.0
    %3511 = vmatpush2.msra.mxu0 0.0
    %3512 = vmatprep.subr.mxu0 0.0
    %3513 = vmatpush2.msra.mxu0 0.0
    %3514 = vmatprep.subr.mxu0 0.0
    %3515 = vmatpush2.msra.mxu0 0.0
    %3516 = vmatprep.mubr.f32.mxu0 0.0
    %3517 = vmatmul.mubr.f32.gmra.mxu0 %v3447
    %v3518 = vpop.f32.mrf.mxu0
    %v3519 = vadd.f32 0.0, %v3518
    %v3520 = vpop.f32.mrf.mxu0
    %3521 = vmatprep.mubr.f32.mxu0 0.0
    %3522 = vmatmul.mubr.f32.gmra.mxu0 %v3450
    %v3523 = vpop.f32.mrf.mxu0
    %v3524 = vadd.f32 0.0, %v3523
    %v3525 = vpop.f32.mrf.mxu0
    %3526 = vdwg.mxu0
    %3527 = vrot.lane.b32.xlu0 %v277, 112
    %v3528 = vpop.permute.xlu0 %3527
    %3529 = vrot.lane.b32.xlu0 %v278, 112
    %v3530 = vpop.permute.xlu0 %3529
    %3531 = vrot.lane.b32.xlu0 %v183, 80
    %v3532 = vpop.permute.xlu0 %3531
    %3533 = vrot.lane.b32.xlu0 %v188, 80
    %v3534 = vpop.permute.xlu0 %3533
    %v3535 = vsel %vm299, %v3528, 0
    %v3537 = vsel %vm299, %v3530, 0
    %v3539 = vsel %vm299, %v3532, 0
    %v3541 = vsel %vm299, %v3534, 0
    %3543 = vmatprep.subr.mxu0 0.0
    %3544 = vmatpush1.xpose.msra.mxu0 0.0
    %3545 = vmatprep.subr.mxu0 0.0
    %3546 = vmatpush1.xpose.msra.mxu0 0.0
    %3547 = vmatprep.subr.mxu0 0.0
    %3548 = vmatpush1.xpose.msra.mxu0 0.0
    %3549 = vmatprep.subr.mxu0 0.0
    %3550 = vmatpush1.xpose.msra.mxu0 0.0
    %3551 = vmatprep.subr.mxu0 0.0
    %3552 = vmatpush1.xpose.msra.mxu0 0.0
    %3553 = vmatprep.subr.mxu0 0.0
    %3554 = vmatpush1.xpose.msra.mxu0 0.0
    %3555 = vmatprep.subr.mxu0 0.0
    %3556 = vmatpush1.xpose.msra.mxu0 0.0
    %3557 = vmatprep.subr.mxu0 0.0
    %3558 = vmatpush1.xpose.msra.mxu0 0.0
    %3559 = vmatprep.subr.mxu0 0.0
    %3560 = vmatpush1.xpose.msra.mxu0 0.0
    %3561 = vmatprep.subr.mxu0 0.0
    %3562 = vmatpush1.xpose.msra.mxu0 0.0
    %3563 = vmatprep.subr.mxu0 0.0
    %3564 = vmatpush1.xpose.msra.mxu0 0.0
    %3565 = vmatprep.subr.mxu0 0.0
    %3566 = vmatpush1.xpose.msra.mxu0 0.0
    %3567 = vmatprep.subr.mxu0 0.0
    %3568 = vmatpush1.xpose.msra.mxu0 0.0
    %3569 = vmatprep.subr.mxu0 0.0
    %3570 = vmatpush1.xpose.msra.mxu0 0.0
    %3571 = vmatprep.subr.mxu0 0.0
    %3572 = vmatpush1.xpose.msra.mxu0 %v3541
    %3573 = vmatprep.subr.mxu0 0.0
    %3574 = vmatpush1.xpose.msra.mxu0 %v3539
    %3575 = vmatprep.subr.mxu0 0.0
    %3576 = vmatpush2.xpose.msra.mxu0 0.0
    %3577 = vmatprep.subr.mxu0 0.0
    %3578 = vmatpush2.xpose.msra.mxu0 0.0
    %3579 = vmatprep.subr.mxu0 0.0
    %3580 = vmatpush2.xpose.msra.mxu0 0.0
    %3581 = vmatprep.subr.mxu0 0.0
    %3582 = vmatpush2.xpose.msra.mxu0 0.0
    %3583 = vmatprep.subr.mxu0 0.0
    %3584 = vmatpush2.xpose.msra.mxu0 0.0
    %3585 = vmatprep.subr.mxu0 0.0
    %3586 = vmatpush2.xpose.msra.mxu0 0.0
    %3587 = vmatprep.subr.mxu0 0.0
    %3588 = vmatpush2.xpose.msra.mxu0 0.0
    %3589 = vmatprep.subr.mxu0 0.0
    %3590 = vmatpush2.xpose.msra.mxu0 0.0
    %3591 = vmatprep.subr.mxu0 0.0
    %3592 = vmatpush2.xpose.msra.mxu0 0.0
    %3593 = vmatprep.subr.mxu0 0.0
    %3594 = vmatpush2.xpose.msra.mxu0 0.0
    %3595 = vmatprep.subr.mxu0 0.0
    %3596 = vmatpush2.xpose.msra.mxu0 0.0
    %3597 = vmatprep.subr.mxu0 0.0
    %3598 = vmatpush2.xpose.msra.mxu0 0.0
    %3599 = vmatprep.subr.mxu0 0.0
    %3600 = vmatpush2.xpose.msra.mxu0 0.0
    %3601 = vmatprep.subr.mxu0 0.0
    %3602 = vmatpush2.xpose.msra.mxu0 0.0
    %3603 = vmatprep.subr.mxu0 0.0
    %3604 = vmatpush2.xpose.msra.mxu0 0.0
    %3605 = vmatprep.subr.mxu0 0.0
    %3606 = vmatpush2.xpose.msra.mxu0 0.0
    %3607 = vmatprep.mubr.f32.mxu0 0.0
    %3608 = vmatmul.mubr.f32.gmra.mxu0 %v3535
    %v3609 = vpop.f32.mrf.mxu0
    %v3610 = vadd.f32 %v265, %v3609
    %v3611 = vpop.f32.mrf.mxu0
    %3612 = vmatprep.mubr.f32.mxu0 0.0
    %3613 = vmatmul.mubr.f32.gmra.mxu0 %v3537
    %v3614 = vpop.f32.mrf.mxu0
    %v3615 = vadd.f32 %v266, %v3614
    %v3616 = vpop.f32.mrf.mxu0
    %3617 = vdwg.mxu0
    %3618 = vrot.lane.b32.xlu0 %v279, 112
    %v3619 = vpop.permute.xlu0 %3618
    %3620 = vrot.lane.b32.xlu0 %v280, 112
    %v3621 = vpop.permute.xlu0 %3620
    %3622 = vrot.lane.b32.xlu0 %v193, 80
    %v3623 = vpop.permute.xlu0 %3622
    %3624 = vrot.lane.b32.xlu0 %v198, 80
    %v3625 = vpop.permute.xlu0 %3624
    %v3626 = vsel %vm299, %v3619, 0
    %v3628 = vsel %vm299, %v3621, 0
    %v3630 = vsel %vm299, %v3623, 0
    %v3632 = vsel %vm299, %v3625, 0
    %3634 = vmatprep.subr.mxu0 0.0
    %3635 = vmatpush1.xpose.msra.mxu0 0.0
    %3636 = vmatprep.subr.mxu0 0.0
    %3637 = vmatpush1.xpose.msra.mxu0 0.0
    %3638 = vmatprep.subr.mxu0 0.0
    %3639 = vmatpush1.xpose.msra.mxu0 0.0
    %3640 = vmatprep.subr.mxu0 0.0
    %3641 = vmatpush1.xpose.msra.mxu0 0.0
    %3642 = vmatprep.subr.mxu0 0.0
    %3643 = vmatpush1.xpose.msra.mxu0 0.0
    %3644 = vmatprep.subr.mxu0 0.0
    %3645 = vmatpush1.xpose.msra.mxu0 0.0
    %3646 = vmatprep.subr.mxu0 0.0
    %3647 = vmatpush1.xpose.msra.mxu0 0.0
    %3648 = vmatprep.subr.mxu0 0.0
    %3649 = vmatpush1.xpose.msra.mxu0 0.0
    %3650 = vmatprep.subr.mxu0 0.0
    %3651 = vmatpush1.xpose.msra.mxu0 0.0
    %3652 = vmatprep.subr.mxu0 0.0
    %3653 = vmatpush1.xpose.msra.mxu0 0.0
    %3654 = vmatprep.subr.mxu0 0.0
    %3655 = vmatpush1.xpose.msra.mxu0 0.0
    %3656 = vmatprep.subr.mxu0 0.0
    %3657 = vmatpush1.xpose.msra.mxu0 0.0
    %3658 = vmatprep.subr.mxu0 0.0
    %3659 = vmatpush1.xpose.msra.mxu0 0.0
    %3660 = vmatprep.subr.mxu0 0.0
    %3661 = vmatpush1.xpose.msra.mxu0 0.0
    %3662 = vmatprep.subr.mxu0 0.0
    %3663 = vmatpush1.xpose.msra.mxu0 %v3632
    %3664 = vmatprep.subr.mxu0 0.0
    %3665 = vmatpush1.xpose.msra.mxu0 %v3630
    %3666 = vmatprep.subr.mxu0 0.0
    %3667 = vmatpush2.xpose.msra.mxu0 0.0
    %3668 = vmatprep.subr.mxu0 0.0
    %3669 = vmatpush2.xpose.msra.mxu0 0.0
    %3670 = vmatprep.subr.mxu0 0.0
    %3671 = vmatpush2.xpose.msra.mxu0 0.0
    %3672 = vmatprep.subr.mxu0 0.0
    %3673 = vmatpush2.xpose.msra.mxu0 0.0
    %3674 = vmatprep.subr.mxu0 0.0
    %3675 = vmatpush2.xpose.msra.mxu0 0.0
    %3676 = vmatprep.subr.mxu0 0.0
    %3677 = vmatpush2.xpose.msra.mxu0 0.0
    %3678 = vmatprep.subr.mxu0 0.0
    %3679 = vmatpush2.xpose.msra.mxu0 0.0
    %3680 = vmatprep.subr.mxu0 0.0
    %3681 = vmatpush2.xpose.msra.mxu0 0.0
    %3682 = vmatprep.subr.mxu0 0.0
    %3683 = vmatpush2.xpose.msra.mxu0 0.0
    %3684 = vmatprep.subr.mxu0 0.0
    %3685 = vmatpush2.xpose.msra.mxu0 0.0
    %3686 = vmatprep.subr.mxu0 0.0
    %3687 = vmatpush2.xpose.msra.mxu0 0.0
    %3688 = vmatprep.subr.mxu0 0.0
    %3689 = vmatpush2.xpose.msra.mxu0 0.0
    %3690 = vmatprep.subr.mxu0 0.0
    %3691 = vmatpush2.xpose.msra.mxu0 0.0
    %3692 = vmatprep.subr.mxu0 0.0
    %3693 = vmatpush2.xpose.msra.mxu0 0.0
    %3694 = vmatprep.subr.mxu0 0.0
    %3695 = vmatpush2.xpose.msra.mxu0 0.0
    %3696 = vmatprep.subr.mxu0 0.0
    %3697 = vmatpush2.xpose.msra.mxu0 0.0
    %3698 = vmatprep.mubr.f32.mxu0 0.0
    %3699 = vmatmul.mubr.f32.gmra.mxu0 %v3626
    %v3700 = vpop.f32.mrf.mxu0
    %v3701 = vadd.f32 %v265, %v3700
    %v3702 = vpop.f32.mrf.mxu0
    %3703 = vmatprep.mubr.f32.mxu0 0.0
    %3704 = vmatmul.mubr.f32.gmra.mxu0 %v3628
    %v3705 = vpop.f32.mrf.mxu0
    %v3706 = vadd.f32 %v266, %v3705
    %v3707 = vpop.f32.mrf.mxu0
    %3708 = vdwg.mxu0
    %3709 = vrot.lane.b32.xlu0 %v281, 112
    %v3710 = vpop.permute.xlu0 %3709
    %3711 = vrot.lane.b32.xlu0 %v282, 112
    %v3712 = vpop.permute.xlu0 %3711
    %3713 = vrot.lane.b32.xlu0 %v203, 80
    %v3714 = vpop.permute.xlu0 %3713
    %3715 = vrot.lane.b32.xlu0 %v208, 80
    %v3716 = vpop.permute.xlu0 %3715
    %v3717 = vsel %vm299, %v3710, 0
    %v3719 = vsel %vm299, %v3712, 0
    %v3721 = vsel %vm299, %v3714, 0
    %v3723 = vsel %vm299, %v3716, 0
    %3725 = vmatprep.subr.mxu0 0.0
    %3726 = vmatpush1.xpose.msra.mxu0 0.0
    %3727 = vmatprep.subr.mxu0 0.0
    %3728 = vmatpush1.xpose.msra.mxu0 0.0
    %3729 = vmatprep.subr.mxu0 0.0
    %3730 = vmatpush1.xpose.msra.mxu0 0.0
    %3731 = vmatprep.subr.mxu0 0.0
    %3732 = vmatpush1.xpose.msra.mxu0 0.0
    %3733 = vmatprep.subr.mxu0 0.0
    %3734 = vmatpush1.xpose.msra.mxu0 0.0
    %3735 = vmatprep.subr.mxu0 0.0
    %3736 = vmatpush1.xpose.msra.mxu0 0.0
    %3737 = vmatprep.subr.mxu0 0.0
    %3738 = vmatpush1.xpose.msra.mxu0 0.0
    %3739 = vmatprep.subr.mxu0 0.0
    %3740 = vmatpush1.xpose.msra.mxu0 0.0
    %3741 = vmatprep.subr.mxu0 0.0
    %3742 = vmatpush1.xpose.msra.mxu0 0.0
    %3743 = vmatprep.subr.mxu0 0.0
    %3744 = vmatpush1.xpose.msra.mxu0 0.0
    %3745 = vmatprep.subr.mxu0 0.0
    %3746 = vmatpush1.xpose.msra.mxu0 0.0
    %3747 = vmatprep.subr.mxu0 0.0
    %3748 = vmatpush1.xpose.msra.mxu0 0.0
    %3749 = vmatprep.subr.mxu0 0.0
    %3750 = vmatpush1.xpose.msra.mxu0 0.0
    %3751 = vmatprep.subr.mxu0 0.0
    %3752 = vmatpush1.xpose.msra.mxu0 0.0
    %3753 = vmatprep.subr.mxu0 0.0
    %3754 = vmatpush1.xpose.msra.mxu0 %v3723
    %3755 = vmatprep.subr.mxu0 0.0
    %3756 = vmatpush1.xpose.msra.mxu0 %v3721
    %3757 = vmatprep.subr.mxu0 0.0
    %3758 = vmatpush2.xpose.msra.mxu0 0.0
    %3759 = vmatprep.subr.mxu0 0.0
    %3760 = vmatpush2.xpose.msra.mxu0 0.0
    %3761 = vmatprep.subr.mxu0 0.0
    %3762 = vmatpush2.xpose.msra.mxu0 0.0
    %3763 = vmatprep.subr.mxu0 0.0
    %3764 = vmatpush2.xpose.msra.mxu0 0.0
    %3765 = vmatprep.subr.mxu0 0.0
    %3766 = vmatpush2.xpose.msra.mxu0 0.0
    %3767 = vmatprep.subr.mxu0 0.0
    %3768 = vmatpush2.xpose.msra.mxu0 0.0
    %3769 = vmatprep.subr.mxu0 0.0
    %3770 = vmatpush2.xpose.msra.mxu0 0.0
    %3771 = vmatprep.subr.mxu0 0.0
    %3772 = vmatpush2.xpose.msra.mxu0 0.0
    %3773 = vmatprep.subr.mxu0 0.0
    %3774 = vmatpush2.xpose.msra.mxu0 0.0
    %3775 = vmatprep.subr.mxu0 0.0
    %3776 = vmatpush2.xpose.msra.mxu0 0.0
    %3777 = vmatprep.subr.mxu0 0.0
    %3778 = vmatpush2.xpose.msra.mxu0 0.0
    %3779 = vmatprep.subr.mxu0 0.0
    %3780 = vmatpush2.xpose.msra.mxu0 0.0
    %3781 = vmatprep.subr.mxu0 0.0
    %3782 = vmatpush2.xpose.msra.mxu0 0.0
    %3783 = vmatprep.subr.mxu0 0.0
    %3784 = vmatpush2.xpose.msra.mxu0 0.0
    %3785 = vmatprep.subr.mxu0 0.0
    %3786 = vmatpush2.xpose.msra.mxu0 0.0
    %3787 = vmatprep.subr.mxu0 0.0
    %3788 = vmatpush2.xpose.msra.mxu0 0.0
    %3789 = vmatprep.mubr.f32.mxu0 0.0
    %3790 = vmatmul.mubr.f32.gmra.mxu0 %v3717
    %v3791 = vpop.f32.mrf.mxu0
    %v3792 = vadd.f32 %v265, %v3791
    %v3793 = vpop.f32.mrf.mxu0
    %3794 = vmatprep.mubr.f32.mxu0 0.0
    %3795 = vmatmul.mubr.f32.gmra.mxu0 %v3719
    %v3796 = vpop.f32.mrf.mxu0
    %v3797 = vadd.f32 %v266, %v3796
    %v3798 = vpop.f32.mrf.mxu0
    %3799 = vdwg.mxu0
    %3800 = vrot.lane.b32.xlu0 %v283, 112
    %v3801 = vpop.permute.xlu0 %3800
    %3802 = vrot.lane.b32.xlu0 %v284, 112
    %v3803 = vpop.permute.xlu0 %3802
    %3804 = vrot.lane.b32.xlu0 %v213, 80
    %v3805 = vpop.permute.xlu0 %3804
    %3806 = vrot.lane.b32.xlu0 %v218, 80
    %v3807 = vpop.permute.xlu0 %3806
    %v3808 = vsel %vm299, %v3801, 0
    %v3810 = vsel %vm299, %v3803, 0
    %v3812 = vsel %vm299, %v3805, 0
    %v3814 = vsel %vm299, %v3807, 0
    %3816 = vmatprep.subr.mxu0 0.0
    %3817 = vmatpush1.xpose.msra.mxu0 0.0
    %3818 = vmatprep.subr.mxu0 0.0
    %3819 = vmatpush1.xpose.msra.mxu0 0.0
    %3820 = vmatprep.subr.mxu0 0.0
    %3821 = vmatpush1.xpose.msra.mxu0 0.0
    %3822 = vmatprep.subr.mxu0 0.0
    %3823 = vmatpush1.xpose.msra.mxu0 0.0
    %3824 = vmatprep.subr.mxu0 0.0
    %3825 = vmatpush1.xpose.msra.mxu0 0.0
    %3826 = vmatprep.subr.mxu0 0.0
    %3827 = vmatpush1.xpose.msra.mxu0 0.0
    %3828 = vmatprep.subr.mxu0 0.0
    %3829 = vmatpush1.xpose.msra.mxu0 0.0
    %3830 = vmatprep.subr.mxu0 0.0
    %3831 = vmatpush1.xpose.msra.mxu0 0.0
    %3832 = vmatprep.subr.mxu0 0.0
    %3833 = vmatpush1.xpose.msra.mxu0 0.0
    %3834 = vmatprep.subr.mxu0 0.0
    %3835 = vmatpush1.xpose.msra.mxu0 0.0
    %3836 = vmatprep.subr.mxu0 0.0
    %3837 = vmatpush1.xpose.msra.mxu0 0.0
    %3838 = vmatprep.subr.mxu0 0.0
    %3839 = vmatpush1.xpose.msra.mxu0 0.0
    %3840 = vmatprep.subr.mxu0 0.0
    %3841 = vmatpush1.xpose.msra.mxu0 0.0
    %3842 = vmatprep.subr.mxu0 0.0
    %3843 = vmatpush1.xpose.msra.mxu0 0.0
    %3844 = vmatprep.subr.mxu0 0.0
    %3845 = vmatpush1.xpose.msra.mxu0 %v3814
    %3846 = vmatprep.subr.mxu0 0.0
    %3847 = vmatpush1.xpose.msra.mxu0 %v3812
    %3848 = vmatprep.subr.mxu0 0.0
    %3849 = vmatpush2.xpose.msra.mxu0 0.0
    %3850 = vmatprep.subr.mxu0 0.0
    %3851 = vmatpush2.xpose.msra.mxu0 0.0
    %3852 = vmatprep.subr.mxu0 0.0
    %3853 = vmatpush2.xpose.msra.mxu0 0.0
    %3854 = vmatprep.subr.mxu0 0.0
    %3855 = vmatpush2.xpose.msra.mxu0 0.0
    %3856 = vmatprep.subr.mxu0 0.0
    %3857 = vmatpush2.xpose.msra.mxu0 0.0
    %3858 = vmatprep.subr.mxu0 0.0
    %3859 = vmatpush2.xpose.msra.mxu0 0.0
    %3860 = vmatprep.subr.mxu0 0.0
    %3861 = vmatpush2.xpose.msra.mxu0 0.0
    %3862 = vmatprep.subr.mxu0 0.0
    %3863 = vmatpush2.xpose.msra.mxu0 0.0
    %3864 = vmatprep.subr.mxu0 0.0
    %3865 = vmatpush2.xpose.msra.mxu0 0.0
    %3866 = vmatprep.subr.mxu0 0.0
    %3867 = vmatpush2.xpose.msra.mxu0 0.0
    %3868 = vmatprep.subr.mxu0 0.0
    %3869 = vmatpush2.xpose.msra.mxu0 0.0
    %3870 = vmatprep.subr.mxu0 0.0
    %3871 = vmatpush2.xpose.msra.mxu0 0.0
    %3872 = vmatprep.subr.mxu0 0.0
    %3873 = vmatpush2.xpose.msra.mxu0 0.0
    %3874 = vmatprep.subr.mxu0 0.0
    %3875 = vmatpush2.xpose.msra.mxu0 0.0
    %3876 = vmatprep.subr.mxu0 0.0
    %3877 = vmatpush2.xpose.msra.mxu0 0.0
    %3878 = vmatprep.subr.mxu0 0.0
    %3879 = vmatpush2.xpose.msra.mxu0 0.0
    %3880 = vmatprep.mubr.f32.mxu0 0.0
    %3881 = vmatmul.mubr.f32.gmra.mxu0 %v3808
    %v3882 = vpop.f32.mrf.mxu0
    %v3883 = vadd.f32 %v265, %v3882
    %v3884 = vpop.f32.mrf.mxu0
    %3885 = vmatprep.mubr.f32.mxu0 0.0
    %3886 = vmatmul.mubr.f32.gmra.mxu0 %v3810
    %v3887 = vpop.f32.mrf.mxu0
    %v3888 = vadd.f32 %v266, %v3887
    %v3889 = vpop.f32.mrf.mxu0
    %3890 = vdwg.mxu0
    %3891 = vrot.lane.b32.xlu0 %v285, 112
    %v3892 = vpop.permute.xlu0 %3891
    %3893 = vrot.lane.b32.xlu0 %v286, 112
    %v3894 = vpop.permute.xlu0 %3893
    %3895 = vrot.lane.b32.xlu0 %v223, 80
    %v3896 = vpop.permute.xlu0 %3895
    %3897 = vrot.lane.b32.xlu0 %v228, 80
    %v3898 = vpop.permute.xlu0 %3897
    %v3899 = vsel %vm299, %v3892, 0
    %v3901 = vsel %vm299, %v3894, 0
    %v3903 = vsel %vm299, %v3896, 0
    %v3905 = vsel %vm299, %v3898, 0
    %3907 = vmatprep.subr.mxu0 0.0
    %3908 = vmatpush1.xpose.msra.mxu0 0.0
    %3909 = vmatprep.subr.mxu0 0.0
    %3910 = vmatpush1.xpose.msra.mxu0 0.0
    %3911 = vmatprep.subr.mxu0 0.0
    %3912 = vmatpush1.xpose.msra.mxu0 0.0
    %3913 = vmatprep.subr.mxu0 0.0
    %3914 = vmatpush1.xpose.msra.mxu0 0.0
    %3915 = vmatprep.subr.mxu0 0.0
    %3916 = vmatpush1.xpose.msra.mxu0 0.0
    %3917 = vmatprep.subr.mxu0 0.0
    %3918 = vmatpush1.xpose.msra.mxu0 0.0
    %3919 = vmatprep.subr.mxu0 0.0
    %3920 = vmatpush1.xpose.msra.mxu0 0.0
    %3921 = vmatprep.subr.mxu0 0.0
    %3922 = vmatpush1.xpose.msra.mxu0 0.0
    %3923 = vmatprep.subr.mxu0 0.0
    %3924 = vmatpush1.xpose.msra.mxu0 0.0
    %3925 = vmatprep.subr.mxu0 0.0
    %3926 = vmatpush1.xpose.msra.mxu0 0.0
    %3927 = vmatprep.subr.mxu0 0.0
    %3928 = vmatpush1.xpose.msra.mxu0 0.0
    %3929 = vmatprep.subr.mxu0 0.0
    %3930 = vmatpush1.xpose.msra.mxu0 0.0
    %3931 = vmatprep.subr.mxu0 0.0
    %3932 = vmatpush1.xpose.msra.mxu0 0.0
    %3933 = vmatprep.subr.mxu0 0.0
    %3934 = vmatpush1.xpose.msra.mxu0 0.0
    %3935 = vmatprep.subr.mxu0 0.0
    %3936 = vmatpush1.xpose.msra.mxu0 %v3905
    %3937 = vmatprep.subr.mxu0 0.0
    %3938 = vmatpush1.xpose.msra.mxu0 %v3903
    %3939 = vmatprep.subr.mxu0 0.0
    %3940 = vmatpush2.xpose.msra.mxu0 0.0
    %3941 = vmatprep.subr.mxu0 0.0
    %3942 = vmatpush2.xpose.msra.mxu0 0.0
    %3943 = vmatprep.subr.mxu0 0.0
    %3944 = vmatpush2.xpose.msra.mxu0 0.0
    %3945 = vmatprep.subr.mxu0 0.0
    %3946 = vmatpush2.xpose.msra.mxu0 0.0
    %3947 = vmatprep.subr.mxu0 0.0
    %3948 = vmatpush2.xpose.msra.mxu0 0.0
    %3949 = vmatprep.subr.mxu0 0.0
    %3950 = vmatpush2.xpose.msra.mxu0 0.0
    %3951 = vmatprep.subr.mxu0 0.0
    %3952 = vmatpush2.xpose.msra.mxu0 0.0
    %3953 = vmatprep.subr.mxu0 0.0
    %3954 = vmatpush2.xpose.msra.mxu0 0.0
    %3955 = vmatprep.subr.mxu0 0.0
    %3956 = vmatpush2.xpose.msra.mxu0 0.0
    %3957 = vmatprep.subr.mxu0 0.0
    %3958 = vmatpush2.xpose.msra.mxu0 0.0
    %3959 = vmatprep.subr.mxu0 0.0
    %3960 = vmatpush2.xpose.msra.mxu0 0.0
    %3961 = vmatprep.subr.mxu0 0.0
    %3962 = vmatpush2.xpose.msra.mxu0 0.0
    %3963 = vmatprep.subr.mxu0 0.0
    %3964 = vmatpush2.xpose.msra.mxu0 0.0
    %3965 = vmatprep.subr.mxu0 0.0
    %3966 = vmatpush2.xpose.msra.mxu0 0.0
    %3967 = vmatprep.subr.mxu0 0.0
    %3968 = vmatpush2.xpose.msra.mxu0 0.0
    %3969 = vmatprep.subr.mxu0 0.0
    %3970 = vmatpush2.xpose.msra.mxu0 0.0
    %3971 = vmatprep.mubr.f32.mxu0 0.0
    %3972 = vmatmul.mubr.f32.gmra.mxu0 %v3899
    %v3973 = vpop.f32.mrf.mxu0
    %v3974 = vadd.f32 %v265, %v3973
    %v3975 = vpop.f32.mrf.mxu0
    %3976 = vmatprep.mubr.f32.mxu0 0.0
    %3977 = vmatmul.mubr.f32.gmra.mxu0 %v3901
    %v3978 = vpop.f32.mrf.mxu0
    %v3979 = vadd.f32 %v266, %v3978
    %v3980 = vpop.f32.mrf.mxu0
    %3981 = vdwg.mxu0
    %3982 = vrot.lane.b32.xlu0 %v287, 112
    %v3983 = vpop.permute.xlu0 %3982
    %3984 = vrot.lane.b32.xlu0 %v288, 112
    %v3985 = vpop.permute.xlu0 %3984
    %3986 = vrot.lane.b32.xlu0 %v233, 80
    %v3987 = vpop.permute.xlu0 %3986
    %3988 = vrot.lane.b32.xlu0 %v238, 80
    %v3989 = vpop.permute.xlu0 %3988
    %v3990 = vsel %vm299, %v3983, 0
    %v3992 = vsel %vm299, %v3985, 0
    %v3994 = vsel %vm299, %v3987, 0
    %v3996 = vsel %vm299, %v3989, 0
    %3998 = vmatprep.subr.mxu0 0.0
    %3999 = vmatpush1.xpose.msra.mxu0 0.0
    %4000 = vmatprep.subr.mxu0 0.0
    %4001 = vmatpush1.xpose.msra.mxu0 0.0
    %4002 = vmatprep.subr.mxu0 0.0
    %4003 = vmatpush1.xpose.msra.mxu0 0.0
    %4004 = vmatprep.subr.mxu0 0.0
    %4005 = vmatpush1.xpose.msra.mxu0 0.0
    %4006 = vmatprep.subr.mxu0 0.0
    %4007 = vmatpush1.xpose.msra.mxu0 0.0
    %4008 = vmatprep.subr.mxu0 0.0
    %4009 = vmatpush1.xpose.msra.mxu0 0.0
    %4010 = vmatprep.subr.mxu0 0.0
    %4011 = vmatpush1.xpose.msra.mxu0 0.0
    %4012 = vmatprep.subr.mxu0 0.0
    %4013 = vmatpush1.xpose.msra.mxu0 0.0
    %4014 = vmatprep.subr.mxu0 0.0
    %4015 = vmatpush1.xpose.msra.mxu0 0.0
    %4016 = vmatprep.subr.mxu0 0.0
    %4017 = vmatpush1.xpose.msra.mxu0 0.0
    %4018 = vmatprep.subr.mxu0 0.0
    %4019 = vmatpush1.xpose.msra.mxu0 0.0
    %4020 = vmatprep.subr.mxu0 0.0
    %4021 = vmatpush1.xpose.msra.mxu0 0.0
    %4022 = vmatprep.subr.mxu0 0.0
    %4023 = vmatpush1.xpose.msra.mxu0 0.0
    %4024 = vmatprep.subr.mxu0 0.0
    %4025 = vmatpush1.xpose.msra.mxu0 0.0
    %4026 = vmatprep.subr.mxu0 0.0
    %4027 = vmatpush1.xpose.msra.mxu0 %v3996
    %4028 = vmatprep.subr.mxu0 0.0
    %4029 = vmatpush1.xpose.msra.mxu0 %v3994
    %4030 = vmatprep.subr.mxu0 0.0
    %4031 = vmatpush2.xpose.msra.mxu0 0.0
    %4032 = vmatprep.subr.mxu0 0.0
    %4033 = vmatpush2.xpose.msra.mxu0 0.0
    %4034 = vmatprep.subr.mxu0 0.0
    %4035 = vmatpush2.xpose.msra.mxu0 0.0
    %4036 = vmatprep.subr.mxu0 0.0
    %4037 = vmatpush2.xpose.msra.mxu0 0.0
    %4038 = vmatprep.subr.mxu0 0.0
    %4039 = vmatpush2.xpose.msra.mxu0 0.0
    %4040 = vmatprep.subr.mxu0 0.0
    %4041 = vmatpush2.xpose.msra.mxu0 0.0
    %4042 = vmatprep.subr.mxu0 0.0
    %4043 = vmatpush2.xpose.msra.mxu0 0.0
    %4044 = vmatprep.subr.mxu0 0.0
    %4045 = vmatpush2.xpose.msra.mxu0 0.0
    %4046 = vmatprep.subr.mxu0 0.0
    %4047 = vmatpush2.xpose.msra.mxu0 0.0
    %4048 = vmatprep.subr.mxu0 0.0
    %4049 = vmatpush2.xpose.msra.mxu0 0.0
    %4050 = vmatprep.subr.mxu0 0.0
    %4051 = vmatpush2.xpose.msra.mxu0 0.0
    %4052 = vmatprep.subr.mxu0 0.0
    %4053 = vmatpush2.xpose.msra.mxu0 0.0
    %4054 = vmatprep.subr.mxu0 0.0
    %4055 = vmatpush2.xpose.msra.mxu0 0.0
    %4056 = vmatprep.subr.mxu0 0.0
    %4057 = vmatpush2.xpose.msra.mxu0 0.0
    %4058 = vmatprep.subr.mxu0 0.0
    %4059 = vmatpush2.xpose.msra.mxu0 0.0
    %4060 = vmatprep.subr.mxu0 0.0
    %4061 = vmatpush2.xpose.msra.mxu0 0.0
    %4062 = vmatprep.mubr.f32.mxu0 0.0
    %4063 = vmatmul.mubr.f32.gmra.mxu0 %v3990
    %v4064 = vpop.f32.mrf.mxu0
    %v4065 = vadd.f32 %v265, %v4064
    %v4066 = vpop.f32.mrf.mxu0
    %4067 = vmatprep.mubr.f32.mxu0 0.0
    %4068 = vmatmul.mubr.f32.gmra.mxu0 %v3992
    %v4069 = vpop.f32.mrf.mxu0
    %v4070 = vadd.f32 %v266, %v4069
    %v4071 = vpop.f32.mrf.mxu0
    %4072 = vdwg.mxu0
    %4073 = vrot.lane.b32.xlu0 %v289, 112
    %v4074 = vpop.permute.xlu0 %4073
    %4075 = vrot.lane.b32.xlu0 %v290, 112
    %v4076 = vpop.permute.xlu0 %4075
    %4077 = vrot.lane.b32.xlu0 %v243, 80
    %v4078 = vpop.permute.xlu0 %4077
    %4079 = vrot.lane.b32.xlu0 %v248, 80
    %v4080 = vpop.permute.xlu0 %4079
    %v4081 = vsel %vm299, %v4074, 0
    %v4083 = vsel %vm299, %v4076, 0
    %v4085 = vsel %vm299, %v4078, 0
    %v4087 = vsel %vm299, %v4080, 0
    %4089 = vmatprep.subr.mxu0 0.0
    %4090 = vmatpush1.xpose.msra.mxu0 0.0
    %4091 = vmatprep.subr.mxu0 0.0
    %4092 = vmatpush1.xpose.msra.mxu0 0.0
    %4093 = vmatprep.subr.mxu0 0.0
    %4094 = vmatpush1.xpose.msra.mxu0 0.0
    %4095 = vmatprep.subr.mxu0 0.0
    %4096 = vmatpush1.xpose.msra.mxu0 0.0
    %4097 = vmatprep.subr.mxu0 0.0
    %4098 = vmatpush1.xpose.msra.mxu0 0.0
    %4099 = vmatprep.subr.mxu0 0.0
    %4100 = vmatpush1.xpose.msra.mxu0 0.0
    %4101 = vmatprep.subr.mxu0 0.0
    %4102 = vmatpush1.xpose.msra.mxu0 0.0
    %4103 = vmatprep.subr.mxu0 0.0
    %4104 = vmatpush1.xpose.msra.mxu0 0.0
    %4105 = vmatprep.subr.mxu0 0.0
    %4106 = vmatpush1.xpose.msra.mxu0 0.0
    %4107 = vmatprep.subr.mxu0 0.0
    %4108 = vmatpush1.xpose.msra.mxu0 0.0
    %4109 = vmatprep.subr.mxu0 0.0
    %4110 = vmatpush1.xpose.msra.mxu0 0.0
    %4111 = vmatprep.subr.mxu0 0.0
    %4112 = vmatpush1.xpose.msra.mxu0 0.0
    %4113 = vmatprep.subr.mxu0 0.0
    %4114 = vmatpush1.xpose.msra.mxu0 0.0
    %4115 = vmatprep.subr.mxu0 0.0
    %4116 = vmatpush1.xpose.msra.mxu0 0.0
    %4117 = vmatprep.subr.mxu0 0.0
    %4118 = vmatpush1.xpose.msra.mxu0 %v4087
    %4119 = vmatprep.subr.mxu0 0.0
    %4120 = vmatpush1.xpose.msra.mxu0 %v4085
    %4121 = vmatprep.subr.mxu0 0.0
    %4122 = vmatpush2.xpose.msra.mxu0 0.0
    %4123 = vmatprep.subr.mxu0 0.0
    %4124 = vmatpush2.xpose.msra.mxu0 0.0
    %4125 = vmatprep.subr.mxu0 0.0
    %4126 = vmatpush2.xpose.msra.mxu0 0.0
    %4127 = vmatprep.subr.mxu0 0.0
    %4128 = vmatpush2.xpose.msra.mxu0 0.0
    %4129 = vmatprep.subr.mxu0 0.0
    %4130 = vmatpush2.xpose.msra.mxu0 0.0
    %4131 = vmatprep.subr.mxu0 0.0
    %4132 = vmatpush2.xpose.msra.mxu0 0.0
    %4133 = vmatprep.subr.mxu0 0.0
    %4134 = vmatpush2.xpose.msra.mxu0 0.0
    %4135 = vmatprep.subr.mxu0 0.0
    %4136 = vmatpush2.xpose.msra.mxu0 0.0
    %4137 = vmatprep.subr.mxu0 0.0
    %4138 = vmatpush2.xpose.msra.mxu0 0.0
    %4139 = vmatprep.subr.mxu0 0.0
    %4140 = vmatpush2.xpose.msra.mxu0 0.0
    %4141 = vmatprep.subr.mxu0 0.0
    %4142 = vmatpush2.xpose.msra.mxu0 0.0
    %4143 = vmatprep.subr.mxu0 0.0
    %4144 = vmatpush2.xpose.msra.mxu0 0.0
    %4145 = vmatprep.subr.mxu0 0.0
    %4146 = vmatpush2.xpose.msra.mxu0 0.0
    %4147 = vmatprep.subr.mxu0 0.0
    %4148 = vmatpush2.xpose.msra.mxu0 0.0
    %4149 = vmatprep.subr.mxu0 0.0
    %4150 = vmatpush2.xpose.msra.mxu0 0.0
    %4151 = vmatprep.subr.mxu0 0.0
    %4152 = vmatpush2.xpose.msra.mxu0 0.0
    %4153 = vmatprep.mubr.f32.mxu0 0.0
    %4154 = vmatmul.mubr.f32.gmra.mxu0 %v4081
    %v4155 = vpop.f32.mrf.mxu0
    %v4156 = vadd.f32 %v265, %v4155
    %v4157 = vpop.f32.mrf.mxu0
    %4158 = vmatprep.mubr.f32.mxu0 0.0
    %4159 = vmatmul.mubr.f32.gmra.mxu0 %v4083
    %v4160 = vpop.f32.mrf.mxu0
    %v4161 = vadd.f32 %v266, %v4160
    %v4162 = vpop.f32.mrf.mxu0
    %4163 = vdwg.mxu0
    %4164 = vrot.lane.b32.xlu0 %v291, 112
    %v4165 = vpop.permute.xlu0 %4164
    %4166 = vrot.lane.b32.xlu0 %v292, 112
    %v4167 = vpop.permute.xlu0 %4166
    %4168 = vrot.lane.b32.xlu0 %v253, 80
    %v4169 = vpop.permute.xlu0 %4168
    %4170 = vrot.lane.b32.xlu0 %v258, 80
    %v4171 = vpop.permute.xlu0 %4170
    %v4172 = vsel %vm299, %v4165, 0
    %v4174 = vsel %vm299, %v4167, 0
    %v4176 = vsel %vm299, %v4169, 0
    %v4178 = vsel %vm299, %v4171, 0
    %4180 = vmatprep.subr.mxu0 0.0
    %4181 = vmatpush1.xpose.msra.mxu0 0.0
    %4182 = vmatprep.subr.mxu0 0.0
    %4183 = vmatpush1.xpose.msra.mxu0 0.0
    %4184 = vmatprep.subr.mxu0 0.0
    %4185 = vmatpush1.xpose.msra.mxu0 0.0
    %4186 = vmatprep.subr.mxu0 0.0
    %4187 = vmatpush1.xpose.msra.mxu0 0.0
    %4188 = vmatprep.subr.mxu0 0.0
    %4189 = vmatpush1.xpose.msra.mxu0 0.0
    %4190 = vmatprep.subr.mxu0 0.0
    %4191 = vmatpush1.xpose.msra.mxu0 0.0
    %4192 = vmatprep.subr.mxu0 0.0
    %4193 = vmatpush1.xpose.msra.mxu0 0.0
    %4194 = vmatprep.subr.mxu0 0.0
    %4195 = vmatpush1.xpose.msra.mxu0 0.0
    %4196 = vmatprep.subr.mxu0 0.0
    %4197 = vmatpush1.xpose.msra.mxu0 0.0
    %4198 = vmatprep.subr.mxu0 0.0
    %4199 = vmatpush1.xpose.msra.mxu0 0.0
    %4200 = vmatprep.subr.mxu0 0.0
    %4201 = vmatpush1.xpose.msra.mxu0 0.0
    %4202 = vmatprep.subr.mxu0 0.0
    %4203 = vmatpush1.xpose.msra.mxu0 0.0
    %4204 = vmatprep.subr.mxu0 0.0
    %4205 = vmatpush1.xpose.msra.mxu0 0.0
    %4206 = vmatprep.subr.mxu0 0.0
    %4207 = vmatpush1.xpose.msra.mxu0 0.0
    %4208 = vmatprep.subr.mxu0 0.0
    %4209 = vmatpush1.xpose.msra.mxu0 %v4178
    %4210 = vmatprep.subr.mxu0 0.0
    %4211 = vmatpush1.xpose.msra.mxu0 %v4176
    %4212 = vmatprep.subr.mxu0 0.0
    %4213 = vmatpush2.xpose.msra.mxu0 0.0
    %4214 = vmatprep.subr.mxu0 0.0
    %4215 = vmatpush2.xpose.msra.mxu0 0.0
    %4216 = vmatprep.subr.mxu0 0.0
    %4217 = vmatpush2.xpose.msra.mxu0 0.0
    %4218 = vmatprep.subr.mxu0 0.0
    %4219 = vmatpush2.xpose.msra.mxu0 0.0
    %4220 = vmatprep.subr.mxu0 0.0
    %4221 = vmatpush2.xpose.msra.mxu0 0.0
    %4222 = vmatprep.subr.mxu0 0.0
    %4223 = vmatpush2.xpose.msra.mxu0 0.0
    %4224 = vmatprep.subr.mxu0 0.0
    %4225 = vmatpush2.xpose.msra.mxu0 0.0
    %4226 = vmatprep.subr.mxu0 0.0
    %4227 = vmatpush2.xpose.msra.mxu0 0.0
    %4228 = vmatprep.subr.mxu0 0.0
    %4229 = vmatpush2.xpose.msra.mxu0 0.0
    %4230 = vmatprep.subr.mxu0 0.0
    %4231 = vmatpush2.xpose.msra.mxu0 0.0
    %4232 = vmatprep.subr.mxu0 0.0
    %4233 = vmatpush2.xpose.msra.mxu0 0.0
    %4234 = vmatprep.subr.mxu0 0.0
    %4235 = vmatpush2.xpose.msra.mxu0 0.0
    %4236 = vmatprep.subr.mxu0 0.0
    %4237 = vmatpush2.xpose.msra.mxu0 0.0
    %4238 = vmatprep.subr.mxu0 0.0
    %4239 = vmatpush2.xpose.msra.mxu0 0.0
    %4240 = vmatprep.subr.mxu0 0.0
    %4241 = vmatpush2.xpose.msra.mxu0 0.0
    %4242 = vmatprep.subr.mxu0 0.0
    %4243 = vmatpush2.xpose.msra.mxu0 0.0
    %4244 = vmatprep.mubr.f32.mxu0 0.0
    %4245 = vmatmul.mubr.f32.gmra.mxu0 %v4172
    %v4246 = vpop.f32.mrf.mxu0
    %v4247 = vadd.f32 %v265, %v4246
    %v4248 = vpop.f32.mrf.mxu0
    %4249 = vmatprep.mubr.f32.mxu0 0.0
    %4250 = vmatmul.mubr.f32.gmra.mxu0 %v4174
    %v4251 = vpop.f32.mrf.mxu0
    %v4252 = vadd.f32 %v266, %v4251
    %v4253 = vpop.f32.mrf.mxu0
    %4254 = vdwg.mxu0
    %v4255 = vadd.f32 %v3610, %v269
    %v4256 = vadd.f32 %v3615, %v270
    %v4257 = vadd.f32 %v3701, %v271
    %v4258 = vadd.f32 %v3706, %v272
    %v4259 = vadd.f32 %v3792, %v273
    %v4260 = vadd.f32 %v3797, %v274
    %v4261 = vadd.f32 %v3883, %v275
    %v4262 = vadd.f32 %v3888, %v276
    %v4263 = vadd.f32 %v3974, %v269
    %v4264 = vadd.f32 %v3979, %v270
    %v4265 = vadd.f32 %v4065, %v271
    %v4266 = vadd.f32 %v4070, %v272
    %v4267 = vadd.f32 %v4156, %v273
    %v4268 = vadd.f32 %v4161, %v274
    %v4269 = vadd.f32 %v4247, %v275
    %v4270 = vadd.f32 %v4252, %v276
    %v4271 = vsel %vm1038, %v4255, -inf
    %4272 = vmax.xlane.f32.xlu0 %v4271
    %v4273 = vpop.xlane.xlu0 %4272
    %v4274 = vsel %vm1038, %v4256, -inf
    %4275 = vmax.xlane.f32.xlu0 %v4274
    %v4276 = vpop.xlane.xlu0 %4275
    %v4277 = vsel %vm1038, %v4257, -inf
    %4278 = vmax.xlane.f32.xlu0 %v4277
    %v4279 = vpop.xlane.xlu0 %4278
    %v4280 = vsel %vm1038, %v4258, -inf
    %4281 = vmax.xlane.f32.xlu0 %v4280
    %v4282 = vpop.xlane.xlu0 %4281
    %v4283 = vsel %vm1038, %v4259, -inf
    %4284 = vmax.xlane.f32.xlu0 %v4283
    %v4285 = vpop.xlane.xlu0 %4284
    %v4286 = vsel %vm1038, %v4260, -inf
    %4287 = vmax.xlane.f32.xlu0 %v4286
    %v4288 = vpop.xlane.xlu0 %4287
    %v4289 = vsel %vm1038, %v4261, -inf
    %4290 = vmax.xlane.f32.xlu0 %v4289
    %v4291 = vpop.xlane.xlu0 %4290
    %v4292 = vsel %vm1038, %v4262, -inf
    %4293 = vmax.xlane.f32.xlu0 %v4292
    %v4294 = vpop.xlane.xlu0 %4293
    %v4295 = vsel %vm1038, %v4263, -inf
    %4296 = vmax.xlane.f32.xlu0 %v4295
    %v4297 = vpop.xlane.xlu0 %4296
    %v4298 = vsel %vm1038, %v4264, -inf
    %4299 = vmax.xlane.f32.xlu0 %v4298
    %v4300 = vpop.xlane.xlu0 %4299
    %v4301 = vsel %vm1038, %v4265, -inf
    %4302 = vmax.xlane.f32.xlu0 %v4301
    %v4303 = vpop.xlane.xlu0 %4302
    %v4304 = vsel %vm1038, %v4266, -inf
    %4305 = vmax.xlane.f32.xlu0 %v4304
    %v4306 = vpop.xlane.xlu0 %4305
    %v4307 = vsel %vm1038, %v4267, -inf
    %4308 = vmax.xlane.f32.xlu0 %v4307
    %v4309 = vpop.xlane.xlu0 %4308
    %v4310 = vsel %vm1038, %v4268, -inf
    %4311 = vmax.xlane.f32.xlu0 %v4310
    %v4312 = vpop.xlane.xlu0 %4311
    %v4313 = vsel %vm1038, %v4269, -inf
    %4314 = vmax.xlane.f32.xlu0 %v4313
    %v4315 = vpop.xlane.xlu0 %4314
    %v4316 = vsel %vm1038, %v4270, -inf
    %4317 = vmax.xlane.f32.xlu0 %v4316
    %v4318 = vpop.xlane.xlu0 %4317
    %v4319 = vsub.f32 %v4255, %v4273
    %v4320 = vsub.f32 %v4256, %v4276
    %v4321 = vsub.f32 %v4257, %v4279
    %v4322 = vsub.f32 %v4258, %v4282
    %v4323 = vsub.f32 %v4259, %v4285
    %v4324 = vsub.f32 %v4260, %v4288
    %v4325 = vsub.f32 %v4261, %v4291
    %v4326 = vsub.f32 %v4262, %v4294
    %v4327 = vsub.f32 %v4263, %v4297
    %v4328 = vsub.f32 %v4264, %v4300
    %v4329 = vsub.f32 %v4265, %v4303
    %v4330 = vsub.f32 %v4266, %v4306
    %v4331 = vsub.f32 %v4267, %v4309
    %v4332 = vsub.f32 %v4268, %v4312
    %v4333 = vsub.f32 %v4269, %v4315
    %v4334 = vsub.f32 %v4270, %v4318
    %v4335 = vmul.f32 %v4319, 1.442695
    %v4336 = vpow.pop %v4335
    %v4337 = vmul.f32 %v4320, 1.442695
    %v4338 = vpow.pop %v4337
    %v4339 = vmul.f32 %v4321, 1.442695
    %v4340 = vpow.pop %v4339
    %v4341 = vmul.f32 %v4322, 1.442695
    %v4342 = vpow.pop %v4341
    %v4343 = vmul.f32 %v4323, 1.442695
    %v4344 = vpow.pop %v4343
    %v4345 = vmul.f32 %v4324, 1.442695
    %v4346 = vpow.pop %v4345
    %v4347 = vmul.f32 %v4325, 1.442695
    %v4348 = vpow.pop %v4347
    %v4349 = vmul.f32 %v4326, 1.442695
    %v4350 = vpow.pop %v4349
    %v4351 = vmul.f32 %v4327, 1.442695
    %v4352 = vpow.pop %v4351
    %v4353 = vmul.f32 %v4328, 1.442695
    %v4354 = vpow.pop %v4353
    %v4355 = vmul.f32 %v4329, 1.442695
    %v4356 = vpow.pop %v4355
    %v4357 = vmul.f32 %v4330, 1.442695
    %v4358 = vpow.pop %v4357
    %v4359 = vmul.f32 %v4331, 1.442695
    %v4360 = vpow.pop %v4359
    %v4361 = vmul.f32 %v4332, 1.442695
    %v4362 = vpow.pop %v4361
    %v4363 = vmul.f32 %v4333, 1.442695
    %v4364 = vpow.pop %v4363
    %v4365 = vmul.f32 %v4334, 1.442695
    %v4366 = vpow.pop %v4365
    %v4367 = vsel %vm1038, %v4336, 0.0
    %4368 = vadd.xlane.f32.xlu0 %v4367
    %v4369 = vpop.xlane.xlu0 %4368
    %v4370 = vsel %vm1038, %v4338, 0.0
    %4371 = vadd.xlane.f32.xlu0 %v4370
    %v4372 = vpop.xlane.xlu0 %4371
    %v4373 = vsel %vm1038, %v4340, 0.0
    %4374 = vadd.xlane.f32.xlu0 %v4373
    %v4375 = vpop.xlane.xlu0 %4374
    %v4376 = vsel %vm1038, %v4342, 0.0
    %4377 = vadd.xlane.f32.xlu0 %v4376
    %v4378 = vpop.xlane.xlu0 %4377
    %v4379 = vsel %vm1038, %v4344, 0.0
    %4380 = vadd.xlane.f32.xlu0 %v4379
    %v4381 = vpop.xlane.xlu0 %4380
    %v4382 = vsel %vm1038, %v4346, 0.0
    %4383 = vadd.xlane.f32.xlu0 %v4382
    %v4384 = vpop.xlane.xlu0 %4383
    %v4385 = vsel %vm1038, %v4348, 0.0
    %4386 = vadd.xlane.f32.xlu0 %v4385
    %v4387 = vpop.xlane.xlu0 %4386
    %v4388 = vsel %vm1038, %v4350, 0.0
    %4389 = vadd.xlane.f32.xlu0 %v4388
    %v4390 = vpop.xlane.xlu0 %4389
    %v4391 = vsel %vm1038, %v4352, 0.0
    %4392 = vadd.xlane.f32.xlu0 %v4391
    %v4393 = vpop.xlane.xlu0 %4392
    %v4394 = vsel %vm1038, %v4354, 0.0
    %4395 = vadd.xlane.f32.xlu0 %v4394
    %v4396 = vpop.xlane.xlu0 %4395
    %v4397 = vsel %vm1038, %v4356, 0.0
    %4398 = vadd.xlane.f32.xlu0 %v4397
    %v4399 = vpop.xlane.xlu0 %4398
    %v4400 = vsel %vm1038, %v4358, 0.0
    %4401 = vadd.xlane.f32.xlu0 %v4400
    %v4402 = vpop.xlane.xlu0 %4401
    %v4403 = vsel %vm1038, %v4360, 0.0
    %4404 = vadd.xlane.f32.xlu0 %v4403
    %v4405 = vpop.xlane.xlu0 %4404
    %v4406 = vsel %vm1038, %v4362, 0.0
    %4407 = vadd.xlane.f32.xlu0 %v4406
    %v4408 = vpop.xlane.xlu0 %4407
    %v4409 = vsel %vm1038, %v4364, 0.0
    %4410 = vadd.xlane.f32.xlu0 %v4409
    %v4411 = vpop.xlane.xlu0 %4410
    %v4412 = vsel %vm1038, %v4366, 0.0
    %4413 = vadd.xlane.f32.xlu0 %v4412
    %v4414 = vpop.xlane.xlu0 %4413
    %v4415 = vrcp.pop %v4369
    %v4416 = vrcp.pop %v4372
    %v4417 = vrcp.pop %v4375
    %v4418 = vrcp.pop %v4378
    %v4419 = vrcp.pop %v4381
    %v4420 = vrcp.pop %v4384
    %v4421 = vrcp.pop %v4387
    %v4422 = vrcp.pop %v4390
    %v4423 = vrcp.pop %v4393
    %v4424 = vrcp.pop %v4396
    %v4425 = vrcp.pop %v4399
    %v4426 = vrcp.pop %v4402
    %v4427 = vrcp.pop %v4405
    %v4428 = vrcp.pop %v4408
    %v4429 = vrcp.pop %v4411
    %v4430 = vrcp.pop %v4414
    %v4431 = vmul.f32 %v4336, %v4415
    %v4432 = vmul.f32 %v4338, %v4416
    %v4433 = vmul.f32 %v4340, %v4417
    %v4434 = vmul.f32 %v4342, %v4418
    %v4435 = vmul.f32 %v4344, %v4419
    %v4436 = vmul.f32 %v4346, %v4420
    %v4437 = vmul.f32 %v4348, %v4421
    %v4438 = vmul.f32 %v4350, %v4422
    %v4439 = vmul.f32 %v4352, %v4423
    %v4440 = vmul.f32 %v4354, %v4424
    %v4441 = vmul.f32 %v4356, %v4425
    %v4442 = vmul.f32 %v4358, %v4426
    %v4443 = vmul.f32 %v4360, %v4427
    %v4444 = vmul.f32 %v4362, %v4428
    %v4445 = vmul.f32 %v4364, %v4429
    %v4446 = vmul.f32 %v4366, %v4430
    %4447 = vrot.lane.b32.xlu0 %v183, 48
    %v4448 = vpop.permute.xlu0 %4447
    %4449 = vrot.lane.b32.xlu0 %v188, 48
    %v4450 = vpop.permute.xlu0 %4449
    %v4454 = vsel %vm1038, %v4431, 0
    %v4457 = vsel %vm1038, %v4432, 0
    %4459 = vmatprep.subr.mxu0 0.0
    %4460 = vmatpush1.msra.mxu0 0.0
    %4461 = vmatprep.subr.mxu0 0.0
    %4462 = vmatpush1.msra.mxu0 0.0
    %4463 = vmatprep.subr.mxu0 0.0
    %4464 = vmatpush1.msra.mxu0 0.0
    %4465 = vmatprep.subr.mxu0 0.0
    %4466 = vmatpush1.msra.mxu0 0.0
    %4467 = vmatprep.subr.mxu0 0.0
    %4468 = vmatpush1.msra.mxu0 0.0
    %4469 = vmatprep.subr.mxu0 0.0
    %4470 = vmatpush1.msra.mxu0 0.0
    %4471 = vmatprep.subr.mxu0 0.0
    %4472 = vmatpush1.msra.mxu0 0.0
    %4473 = vmatprep.subr.mxu0 0.0
    %4474 = vmatpush1.msra.mxu0 0.0
    %4475 = vmatprep.subr.mxu0 0.0
    %4476 = vmatpush1.msra.mxu0 0.0
    %4477 = vmatprep.subr.mxu0 0.0
    %4478 = vmatpush1.msra.mxu0 0.0
    %4479 = vmatprep.subr.mxu0 0.0
    %4480 = vmatpush1.msra.mxu0 0.0
    %4481 = vmatprep.subr.mxu0 0.0
    %4482 = vmatpush1.msra.mxu0 0.0
    %4483 = vmatprep.subr.mxu0 0.0
    %4484 = vmatpush1.msra.mxu0 0.0
    %4485 = vmatprep.subr.mxu0 0.0
    %4486 = vmatpush1.msra.mxu0 0.0
    %4487 = vmatprep.subr.mxu0 0.0
    %4488 = vmatpush1.msra.mxu0 %v4450
    %4489 = vmatprep.subr.mxu0 0.0
    %4490 = vmatpush1.msra.mxu0 %v4448
    %4491 = vmatprep.subr.mxu0 0.0
    %4492 = vmatpush2.msra.mxu0 0.0
    %4493 = vmatprep.subr.mxu0 0.0
    %4494 = vmatpush2.msra.mxu0 0.0
    %4495 = vmatprep.subr.mxu0 0.0
    %4496 = vmatpush2.msra.mxu0 0.0
    %4497 = vmatprep.subr.mxu0 0.0
    %4498 = vmatpush2.msra.mxu0 0.0
    %4499 = vmatprep.subr.mxu0 0.0
    %4500 = vmatpush2.msra.mxu0 0.0
    %4501 = vmatprep.subr.mxu0 0.0
    %4502 = vmatpush2.msra.mxu0 0.0
    %4503 = vmatprep.subr.mxu0 0.0
    %4504 = vmatpush2.msra.mxu0 0.0
    %4505 = vmatprep.subr.mxu0 0.0
    %4506 = vmatpush2.msra.mxu0 0.0
    %4507 = vmatprep.subr.mxu0 0.0
    %4508 = vmatpush2.msra.mxu0 0.0
    %4509 = vmatprep.subr.mxu0 0.0
    %4510 = vmatpush2.msra.mxu0 0.0
    %4511 = vmatprep.subr.mxu0 0.0
    %4512 = vmatpush2.msra.mxu0 0.0
    %4513 = vmatprep.subr.mxu0 0.0
    %4514 = vmatpush2.msra.mxu0 0.0
    %4515 = vmatprep.subr.mxu0 0.0
    %4516 = vmatpush2.msra.mxu0 0.0
    %4517 = vmatprep.subr.mxu0 0.0
    %4518 = vmatpush2.msra.mxu0 0.0
    %4519 = vmatprep.subr.mxu0 0.0
    %4520 = vmatpush2.msra.mxu0 0.0
    %4521 = vmatprep.subr.mxu0 0.0
    %4522 = vmatpush2.msra.mxu0 0.0
    %4523 = vmatprep.mubr.f32.mxu0 0.0
    %4524 = vmatmul.mubr.f32.gmra.mxu0 %v4454
    %v4525 = vpop.f32.mrf.mxu0
    %v4526 = vadd.f32 0.0, %v4525
    %v4527 = vpop.f32.mrf.mxu0
    %4528 = vmatprep.mubr.f32.mxu0 0.0
    %4529 = vmatmul.mubr.f32.gmra.mxu0 %v4457
    %v4530 = vpop.f32.mrf.mxu0
    %v4531 = vadd.f32 0.0, %v4530
    %v4532 = vpop.f32.mrf.mxu0
    %4533 = vdwg.mxu0
    %4534 = vrot.lane.b32.xlu0 %v193, 48
    %v4535 = vpop.permute.xlu0 %4534
    %4536 = vrot.lane.b32.xlu0 %v198, 48
    %v4537 = vpop.permute.xlu0 %4536
    %v4541 = vsel %vm1038, %v4433, 0
    %v4544 = vsel %vm1038, %v4434, 0
    %4546 = vmatprep.subr.mxu0 0.0
    %4547 = vmatpush1.msra.mxu0 0.0
    %4548 = vmatprep.subr.mxu0 0.0
    %4549 = vmatpush1.msra.mxu0 0.0
    %4550 = vmatprep.subr.mxu0 0.0
    %4551 = vmatpush1.msra.mxu0 0.0
    %4552 = vmatprep.subr.mxu0 0.0
    %4553 = vmatpush1.msra.mxu0 0.0
    %4554 = vmatprep.subr.mxu0 0.0
    %4555 = vmatpush1.msra.mxu0 0.0
    %4556 = vmatprep.subr.mxu0 0.0
    %4557 = vmatpush1.msra.mxu0 0.0
    %4558 = vmatprep.subr.mxu0 0.0
    %4559 = vmatpush1.msra.mxu0 0.0
    %4560 = vmatprep.subr.mxu0 0.0
    %4561 = vmatpush1.msra.mxu0 0.0
    %4562 = vmatprep.subr.mxu0 0.0
    %4563 = vmatpush1.msra.mxu0 0.0
    %4564 = vmatprep.subr.mxu0 0.0
    %4565 = vmatpush1.msra.mxu0 0.0
    %4566 = vmatprep.subr.mxu0 0.0
    %4567 = vmatpush1.msra.mxu0 0.0
    %4568 = vmatprep.subr.mxu0 0.0
    %4569 = vmatpush1.msra.mxu0 0.0
    %4570 = vmatprep.subr.mxu0 0.0
    %4571 = vmatpush1.msra.mxu0 0.0
    %4572 = vmatprep.subr.mxu0 0.0
    %4573 = vmatpush1.msra.mxu0 0.0
    %4574 = vmatprep.subr.mxu0 0.0
    %4575 = vmatpush1.msra.mxu0 %v4537
    %4576 = vmatprep.subr.mxu0 0.0
    %4577 = vmatpush1.msra.mxu0 %v4535
    %4578 = vmatprep.subr.mxu0 0.0
    %4579 = vmatpush2.msra.mxu0 0.0
    %4580 = vmatprep.subr.mxu0 0.0
    %4581 = vmatpush2.msra.mxu0 0.0
    %4582 = vmatprep.subr.mxu0 0.0
    %4583 = vmatpush2.msra.mxu0 0.0
    %4584 = vmatprep.subr.mxu0 0.0
    %4585 = vmatpush2.msra.mxu0 0.0
    %4586 = vmatprep.subr.mxu0 0.0
    %4587 = vmatpush2.msra.mxu0 0.0
    %4588 = vmatprep.subr.mxu0 0.0
    %4589 = vmatpush2.msra.mxu0 0.0
    %4590 = vmatprep.subr.mxu0 0.0
    %4591 = vmatpush2.msra.mxu0 0.0
    %4592 = vmatprep.subr.mxu0 0.0
    %4593 = vmatpush2.msra.mxu0 0.0
    %4594 = vmatprep.subr.mxu0 0.0
    %4595 = vmatpush2.msra.mxu0 0.0
    %4596 = vmatprep.subr.mxu0 0.0
    %4597 = vmatpush2.msra.mxu0 0.0
    %4598 = vmatprep.subr.mxu0 0.0
    %4599 = vmatpush2.msra.mxu0 0.0
    %4600 = vmatprep.subr.mxu0 0.0
    %4601 = vmatpush2.msra.mxu0 0.0
    %4602 = vmatprep.subr.mxu0 0.0
    %4603 = vmatpush2.msra.mxu0 0.0
    %4604 = vmatprep.subr.mxu0 0.0
    %4605 = vmatpush2.msra.mxu0 0.0
    %4606 = vmatprep.subr.mxu0 0.0
    %4607 = vmatpush2.msra.mxu0 0.0
    %4608 = vmatprep.subr.mxu0 0.0
    %4609 = vmatpush2.msra.mxu0 0.0
    %4610 = vmatprep.mubr.f32.mxu0 0.0
    %4611 = vmatmul.mubr.f32.gmra.mxu0 %v4541
    %v4612 = vpop.f32.mrf.mxu0
    %v4613 = vadd.f32 0.0, %v4612
    %v4614 = vpop.f32.mrf.mxu0
    %4615 = vmatprep.mubr.f32.mxu0 0.0
    %4616 = vmatmul.mubr.f32.gmra.mxu0 %v4544
    %v4617 = vpop.f32.mrf.mxu0
    %v4618 = vadd.f32 0.0, %v4617
    %v4619 = vpop.f32.mrf.mxu0
    %4620 = vdwg.mxu0
    %4621 = vrot.lane.b32.xlu0 %v203, 48
    %v4622 = vpop.permute.xlu0 %4621
    %4623 = vrot.lane.b32.xlu0 %v208, 48
    %v4624 = vpop.permute.xlu0 %4623
    %v4628 = vsel %vm1038, %v4435, 0
    %v4631 = vsel %vm1038, %v4436, 0
    %4633 = vmatprep.subr.mxu0 0.0
    %4634 = vmatpush1.msra.mxu0 0.0
    %4635 = vmatprep.subr.mxu0 0.0
    %4636 = vmatpush1.msra.mxu0 0.0
    %4637 = vmatprep.subr.mxu0 0.0
    %4638 = vmatpush1.msra.mxu0 0.0
    %4639 = vmatprep.subr.mxu0 0.0
    %4640 = vmatpush1.msra.mxu0 0.0
    %4641 = vmatprep.subr.mxu0 0.0
    %4642 = vmatpush1.msra.mxu0 0.0
    %4643 = vmatprep.subr.mxu0 0.0
    %4644 = vmatpush1.msra.mxu0 0.0
    %4645 = vmatprep.subr.mxu0 0.0
    %4646 = vmatpush1.msra.mxu0 0.0
    %4647 = vmatprep.subr.mxu0 0.0
    %4648 = vmatpush1.msra.mxu0 0.0
    %4649 = vmatprep.subr.mxu0 0.0
    %4650 = vmatpush1.msra.mxu0 0.0
    %4651 = vmatprep.subr.mxu0 0.0
    %4652 = vmatpush1.msra.mxu0 0.0
    %4653 = vmatprep.subr.mxu0 0.0
    %4654 = vmatpush1.msra.mxu0 0.0
    %4655 = vmatprep.subr.mxu0 0.0
    %4656 = vmatpush1.msra.mxu0 0.0
    %4657 = vmatprep.subr.mxu0 0.0
    %4658 = vmatpush1.msra.mxu0 0.0
    %4659 = vmatprep.subr.mxu0 0.0
    %4660 = vmatpush1.msra.mxu0 0.0
    %4661 = vmatprep.subr.mxu0 0.0
    %4662 = vmatpush1.msra.mxu0 %v4624
    %4663 = vmatprep.subr.mxu0 0.0
    %4664 = vmatpush1.msra.mxu0 %v4622
    %4665 = vmatprep.subr.mxu0 0.0
    %4666 = vmatpush2.msra.mxu0 0.0
    %4667 = vmatprep.subr.mxu0 0.0
    %4668 = vmatpush2.msra.mxu0 0.0
    %4669 = vmatprep.subr.mxu0 0.0
    %4670 = vmatpush2.msra.mxu0 0.0
    %4671 = vmatprep.subr.mxu0 0.0
    %4672 = vmatpush2.msra.mxu0 0.0
    %4673 = vmatprep.subr.mxu0 0.0
    %4674 = vmatpush2.msra.mxu0 0.0
    %4675 = vmatprep.subr.mxu0 0.0
    %4676 = vmatpush2.msra.mxu0 0.0
    %4677 = vmatprep.subr.mxu0 0.0
    %4678 = vmatpush2.msra.mxu0 0.0
    %4679 = vmatprep.subr.mxu0 0.0
    %4680 = vmatpush2.msra.mxu0 0.0
    %4681 = vmatprep.subr.mxu0 0.0
    %4682 = vmatpush2.msra.mxu0 0.0
    %4683 = vmatprep.subr.mxu0 0.0
    %4684 = vmatpush2.msra.mxu0 0.0
    %4685 = vmatprep.subr.mxu0 0.0
    %4686 = vmatpush2.msra.mxu0 0.0
    %4687 = vmatprep.subr.mxu0 0.0
    %4688 = vmatpush2.msra.mxu0 0.0
    %4689 = vmatprep.subr.mxu0 0.0
    %4690 = vmatpush2.msra.mxu0 0.0
    %4691 = vmatprep.subr.mxu0 0.0
    %4692 = vmatpush2.msra.mxu0 0.0
    %4693 = vmatprep.subr.mxu0 0.0
    %4694 = vmatpush2.msra.mxu0 0.0
    %4695 = vmatprep.subr.mxu0 0.0
    %4696 = vmatpush2.msra.mxu0 0.0
    %4697 = vmatprep.mubr.f32.mxu0 0.0
    %4698 = vmatmul.mubr.f32.gmra.mxu0 %v4628
    %v4699 = vpop.f32.mrf.mxu0
    %v4700 = vadd.f32 0.0, %v4699
    %v4701 = vpop.f32.mrf.mxu0
    %4702 = vmatprep.mubr.f32.mxu0 0.0
    %4703 = vmatmul.mubr.f32.gmra.mxu0 %v4631
    %v4704 = vpop.f32.mrf.mxu0
    %v4705 = vadd.f32 0.0, %v4704
    %v4706 = vpop.f32.mrf.mxu0
    %4707 = vdwg.mxu0
    %4708 = vrot.lane.b32.xlu0 %v213, 48
    %v4709 = vpop.permute.xlu0 %4708
    %4710 = vrot.lane.b32.xlu0 %v218, 48
    %v4711 = vpop.permute.xlu0 %4710
    %v4715 = vsel %vm1038, %v4437, 0
    %v4718 = vsel %vm1038, %v4438, 0
    %4720 = vmatprep.subr.mxu0 0.0
    %4721 = vmatpush1.msra.mxu0 0.0
    %4722 = vmatprep.subr.mxu0 0.0
    %4723 = vmatpush1.msra.mxu0 0.0
    %4724 = vmatprep.subr.mxu0 0.0
    %4725 = vmatpush1.msra.mxu0 0.0
    %4726 = vmatprep.subr.mxu0 0.0
    %4727 = vmatpush1.msra.mxu0 0.0
    %4728 = vmatprep.subr.mxu0 0.0
    %4729 = vmatpush1.msra.mxu0 0.0
    %4730 = vmatprep.subr.mxu0 0.0
    %4731 = vmatpush1.msra.mxu0 0.0
    %4732 = vmatprep.subr.mxu0 0.0
    %4733 = vmatpush1.msra.mxu0 0.0
    %4734 = vmatprep.subr.mxu0 0.0
    %4735 = vmatpush1.msra.mxu0 0.0
    %4736 = vmatprep.subr.mxu0 0.0
    %4737 = vmatpush1.msra.mxu0 0.0
    %4738 = vmatprep.subr.mxu0 0.0
    %4739 = vmatpush1.msra.mxu0 0.0
    %4740 = vmatprep.subr.mxu0 0.0
    %4741 = vmatpush1.msra.mxu0 0.0
    %4742 = vmatprep.subr.mxu0 0.0
    %4743 = vmatpush1.msra.mxu0 0.0
    %4744 = vmatprep.subr.mxu0 0.0
    %4745 = vmatpush1.msra.mxu0 0.0
    %4746 = vmatprep.subr.mxu0 0.0
    %4747 = vmatpush1.msra.mxu0 0.0
    %4748 = vmatprep.subr.mxu0 0.0
    %4749 = vmatpush1.msra.mxu0 %v4711
    %4750 = vmatprep.subr.mxu0 0.0
    %4751 = vmatpush1.msra.mxu0 %v4709
    %4752 = vmatprep.subr.mxu0 0.0
    %4753 = vmatpush2.msra.mxu0 0.0
    %4754 = vmatprep.subr.mxu0 0.0
    %4755 = vmatpush2.msra.mxu0 0.0
    %4756 = vmatprep.subr.mxu0 0.0
    %4757 = vmatpush2.msra.mxu0 0.0
    %4758 = vmatprep.subr.mxu0 0.0
    %4759 = vmatpush2.msra.mxu0 0.0
    %4760 = vmatprep.subr.mxu0 0.0
    %4761 = vmatpush2.msra.mxu0 0.0
    %4762 = vmatprep.subr.mxu0 0.0
    %4763 = vmatpush2.msra.mxu0 0.0
    %4764 = vmatprep.subr.mxu0 0.0
    %4765 = vmatpush2.msra.mxu0 0.0
    %4766 = vmatprep.subr.mxu0 0.0
    %4767 = vmatpush2.msra.mxu0 0.0
    %4768 = vmatprep.subr.mxu0 0.0
    %4769 = vmatpush2.msra.mxu0 0.0
    %4770 = vmatprep.subr.mxu0 0.0
    %4771 = vmatpush2.msra.mxu0 0.0
    %4772 = vmatprep.subr.mxu0 0.0
    %4773 = vmatpush2.msra.mxu0 0.0
    %4774 = vmatprep.subr.mxu0 0.0
    %4775 = vmatpush2.msra.mxu0 0.0
    %4776 = vmatprep.subr.mxu0 0.0
    %4777 = vmatpush2.msra.mxu0 0.0
    %4778 = vmatprep.subr.mxu0 0.0
    %4779 = vmatpush2.msra.mxu0 0.0
    %4780 = vmatprep.subr.mxu0 0.0
    %4781 = vmatpush2.msra.mxu0 0.0
    %4782 = vmatprep.subr.mxu0 0.0
    %4783 = vmatpush2.msra.mxu0 0.0
    %4784 = vmatprep.mubr.f32.mxu0 0.0
    %4785 = vmatmul.mubr.f32.gmra.mxu0 %v4715
    %v4786 = vpop.f32.mrf.mxu0
    %v4787 = vadd.f32 0.0, %v4786
    %v4788 = vpop.f32.mrf.mxu0
    %4789 = vmatprep.mubr.f32.mxu0 0.0
    %4790 = vmatmul.mubr.f32.gmra.mxu0 %v4718
    %v4791 = vpop.f32.mrf.mxu0
    %v4792 = vadd.f32 0.0, %v4791
    %v4793 = vpop.f32.mrf.mxu0
    %4794 = vdwg.mxu0
    %4795 = vrot.lane.b32.xlu0 %v223, 48
    %v4796 = vpop.permute.xlu0 %4795
    %4797 = vrot.lane.b32.xlu0 %v228, 48
    %v4798 = vpop.permute.xlu0 %4797
    %v4802 = vsel %vm1038, %v4439, 0
    %v4805 = vsel %vm1038, %v4440, 0
    %4807 = vmatprep.subr.mxu0 0.0
    %4808 = vmatpush1.msra.mxu0 0.0
    %4809 = vmatprep.subr.mxu0 0.0
    %4810 = vmatpush1.msra.mxu0 0.0
    %4811 = vmatprep.subr.mxu0 0.0
    %4812 = vmatpush1.msra.mxu0 0.0
    %4813 = vmatprep.subr.mxu0 0.0
    %4814 = vmatpush1.msra.mxu0 0.0
    %4815 = vmatprep.subr.mxu0 0.0
    %4816 = vmatpush1.msra.mxu0 0.0
    %4817 = vmatprep.subr.mxu0 0.0
    %4818 = vmatpush1.msra.mxu0 0.0
    %4819 = vmatprep.subr.mxu0 0.0
    %4820 = vmatpush1.msra.mxu0 0.0
    %4821 = vmatprep.subr.mxu0 0.0
    %4822 = vmatpush1.msra.mxu0 0.0
    %4823 = vmatprep.subr.mxu0 0.0
    %4824 = vmatpush1.msra.mxu0 0.0
    %4825 = vmatprep.subr.mxu0 0.0
    %4826 = vmatpush1.msra.mxu0 0.0
    %4827 = vmatprep.subr.mxu0 0.0
    %4828 = vmatpush1.msra.mxu0 0.0
    %4829 = vmatprep.subr.mxu0 0.0
    %4830 = vmatpush1.msra.mxu0 0.0
    %4831 = vmatprep.subr.mxu0 0.0
    %4832 = vmatpush1.msra.mxu0 0.0
    %4833 = vmatprep.subr.mxu0 0.0
    %4834 = vmatpush1.msra.mxu0 0.0
    %4835 = vmatprep.subr.mxu0 0.0
    %4836 = vmatpush1.msra.mxu0 %v4798
    %4837 = vmatprep.subr.mxu0 0.0
    %4838 = vmatpush1.msra.mxu0 %v4796
    %4839 = vmatprep.subr.mxu0 0.0
    %4840 = vmatpush2.msra.mxu0 0.0
    %4841 = vmatprep.subr.mxu0 0.0
    %4842 = vmatpush2.msra.mxu0 0.0
    %4843 = vmatprep.subr.mxu0 0.0
    %4844 = vmatpush2.msra.mxu0 0.0
    %4845 = vmatprep.subr.mxu0 0.0
    %4846 = vmatpush2.msra.mxu0 0.0
    %4847 = vmatprep.subr.mxu0 0.0
    %4848 = vmatpush2.msra.mxu0 0.0
    %4849 = vmatprep.subr.mxu0 0.0
    %4850 = vmatpush2.msra.mxu0 0.0
    %4851 = vmatprep.subr.mxu0 0.0
    %4852 = vmatpush2.msra.mxu0 0.0
    %4853 = vmatprep.subr.mxu0 0.0
    %4854 = vmatpush2.msra.mxu0 0.0
    %4855 = vmatprep.subr.mxu0 0.0
    %4856 = vmatpush2.msra.mxu0 0.0
    %4857 = vmatprep.subr.mxu0 0.0
    %4858 = vmatpush2.msra.mxu0 0.0
    %4859 = vmatprep.subr.mxu0 0.0
    %4860 = vmatpush2.msra.mxu0 0.0
    %4861 = vmatprep.subr.mxu0 0.0
    %4862 = vmatpush2.msra.mxu0 0.0
    %4863 = vmatprep.subr.mxu0 0.0
    %4864 = vmatpush2.msra.mxu0 0.0
    %4865 = vmatprep.subr.mxu0 0.0
    %4866 = vmatpush2.msra.mxu0 0.0
    %4867 = vmatprep.subr.mxu0 0.0
    %4868 = vmatpush2.msra.mxu0 0.0
    %4869 = vmatprep.subr.mxu0 0.0
    %4870 = vmatpush2.msra.mxu0 0.0
    %4871 = vmatprep.mubr.f32.mxu0 0.0
    %4872 = vmatmul.mubr.f32.gmra.mxu0 %v4802
    %v4873 = vpop.f32.mrf.mxu0
    %v4874 = vadd.f32 0.0, %v4873
    %v4875 = vpop.f32.mrf.mxu0
    %4876 = vmatprep.mubr.f32.mxu0 0.0
    %4877 = vmatmul.mubr.f32.gmra.mxu0 %v4805
    %v4878 = vpop.f32.mrf.mxu0
    %v4879 = vadd.f32 0.0, %v4878
    %v4880 = vpop.f32.mrf.mxu0
    %4881 = vdwg.mxu0
    %4882 = vrot.lane.b32.xlu0 %v233, 48
    %v4883 = vpop.permute.xlu0 %4882
    %4884 = vrot.lane.b32.xlu0 %v238, 48
    %v4885 = vpop.permute.xlu0 %4884
    %v4889 = vsel %vm1038, %v4441, 0
    %v4892 = vsel %vm1038, %v4442, 0
    %4894 = vmatprep.subr.mxu0 0.0
    %4895 = vmatpush1.msra.mxu0 0.0
    %4896 = vmatprep.subr.mxu0 0.0
    %4897 = vmatpush1.msra.mxu0 0.0
    %4898 = vmatprep.subr.mxu0 0.0
    %4899 = vmatpush1.msra.mxu0 0.0
    %4900 = vmatprep.subr.mxu0 0.0
    %4901 = vmatpush1.msra.mxu0 0.0
    %4902 = vmatprep.subr.mxu0 0.0
    %4903 = vmatpush1.msra.mxu0 0.0
    %4904 = vmatprep.subr.mxu0 0.0
    %4905 = vmatpush1.msra.mxu0 0.0
    %4906 = vmatprep.subr.mxu0 0.0
    %4907 = vmatpush1.msra.mxu0 0.0
    %4908 = vmatprep.subr.mxu0 0.0
    %4909 = vmatpush1.msra.mxu0 0.0
    %4910 = vmatprep.subr.mxu0 0.0
    %4911 = vmatpush1.msra.mxu0 0.0
    %4912 = vmatprep.subr.mxu0 0.0
    %4913 = vmatpush1.msra.mxu0 0.0
    %4914 = vmatprep.subr.mxu0 0.0
    %4915 = vmatpush1.msra.mxu0 0.0
    %4916 = vmatprep.subr.mxu0 0.0
    %4917 = vmatpush1.msra.mxu0 0.0
    %4918 = vmatprep.subr.mxu0 0.0
    %4919 = vmatpush1.msra.mxu0 0.0
    %4920 = vmatprep.subr.mxu0 0.0
    %4921 = vmatpush1.msra.mxu0 0.0
    %4922 = vmatprep.subr.mxu0 0.0
    %4923 = vmatpush1.msra.mxu0 %v4885
    %4924 = vmatprep.subr.mxu0 0.0
    %4925 = vmatpush1.msra.mxu0 %v4883
    %4926 = vmatprep.subr.mxu0 0.0
    %4927 = vmatpush2.msra.mxu0 0.0
    %4928 = vmatprep.subr.mxu0 0.0
    %4929 = vmatpush2.msra.mxu0 0.0
    %4930 = vmatprep.subr.mxu0 0.0
    %4931 = vmatpush2.msra.mxu0 0.0
    %4932 = vmatprep.subr.mxu0 0.0
    %4933 = vmatpush2.msra.mxu0 0.0
    %4934 = vmatprep.subr.mxu0 0.0
    %4935 = vmatpush2.msra.mxu0 0.0
    %4936 = vmatprep.subr.mxu0 0.0
    %4937 = vmatpush2.msra.mxu0 0.0
    %4938 = vmatprep.subr.mxu0 0.0
    %4939 = vmatpush2.msra.mxu0 0.0
    %4940 = vmatprep.subr.mxu0 0.0
    %4941 = vmatpush2.msra.mxu0 0.0
    %4942 = vmatprep.subr.mxu0 0.0
    %4943 = vmatpush2.msra.mxu0 0.0
    %4944 = vmatprep.subr.mxu0 0.0
    %4945 = vmatpush2.msra.mxu0 0.0
    %4946 = vmatprep.subr.mxu0 0.0
    %4947 = vmatpush2.msra.mxu0 0.0
    %4948 = vmatprep.subr.mxu0 0.0
    %4949 = vmatpush2.msra.mxu0 0.0
    %4950 = vmatprep.subr.mxu0 0.0
    %4951 = vmatpush2.msra.mxu0 0.0
    %4952 = vmatprep.subr.mxu0 0.0
    %4953 = vmatpush2.msra.mxu0 0.0
    %4954 = vmatprep.subr.mxu0 0.0
    %4955 = vmatpush2.msra.mxu0 0.0
    %4956 = vmatprep.subr.mxu0 0.0
    %4957 = vmatpush2.msra.mxu0 0.0
    %4958 = vmatprep.mubr.f32.mxu0 0.0
    %4959 = vmatmul.mubr.f32.gmra.mxu0 %v4889
    %v4960 = vpop.f32.mrf.mxu0
    %v4961 = vadd.f32 0.0, %v4960
    %v4962 = vpop.f32.mrf.mxu0
    %4963 = vmatprep.mubr.f32.mxu0 0.0
    %4964 = vmatmul.mubr.f32.gmra.mxu0 %v4892
    %v4965 = vpop.f32.mrf.mxu0
    %v4966 = vadd.f32 0.0, %v4965
    %v4967 = vpop.f32.mrf.mxu0
    %4968 = vdwg.mxu0
    %4969 = vrot.lane.b32.xlu0 %v243, 48
    %v4970 = vpop.permute.xlu0 %4969
    %4971 = vrot.lane.b32.xlu0 %v248, 48
    %v4972 = vpop.permute.xlu0 %4971
    %v4976 = vsel %vm1038, %v4443, 0
    %v4979 = vsel %vm1038, %v4444, 0
    %4981 = vmatprep.subr.mxu0 0.0
    %4982 = vmatpush1.msra.mxu0 0.0
    %4983 = vmatprep.subr.mxu0 0.0
    %4984 = vmatpush1.msra.mxu0 0.0
    %4985 = vmatprep.subr.mxu0 0.0
    %4986 = vmatpush1.msra.mxu0 0.0
    %4987 = vmatprep.subr.mxu0 0.0
    %4988 = vmatpush1.msra.mxu0 0.0
    %4989 = vmatprep.subr.mxu0 0.0
    %4990 = vmatpush1.msra.mxu0 0.0
    %4991 = vmatprep.subr.mxu0 0.0
    %4992 = vmatpush1.msra.mxu0 0.0
    %4993 = vmatprep.subr.mxu0 0.0
    %4994 = vmatpush1.msra.mxu0 0.0
    %4995 = vmatprep.subr.mxu0 0.0
    %4996 = vmatpush1.msra.mxu0 0.0
    %4997 = vmatprep.subr.mxu0 0.0
    %4998 = vmatpush1.msra.mxu0 0.0
    %4999 = vmatprep.subr.mxu0 0.0
    %5000 = vmatpush1.msra.mxu0 0.0
    %5001 = vmatprep.subr.mxu0 0.0
    %5002 = vmatpush1.msra.mxu0 0.0
    %5003 = vmatprep.subr.mxu0 0.0
    %5004 = vmatpush1.msra.mxu0 0.0
    %5005 = vmatprep.subr.mxu0 0.0
    %5006 = vmatpush1.msra.mxu0 0.0
    %5007 = vmatprep.subr.mxu0 0.0
    %5008 = vmatpush1.msra.mxu0 0.0
    %5009 = vmatprep.subr.mxu0 0.0
    %5010 = vmatpush1.msra.mxu0 %v4972
    %5011 = vmatprep.subr.mxu0 0.0
    %5012 = vmatpush1.msra.mxu0 %v4970
    %5013 = vmatprep.subr.mxu0 0.0
    %5014 = vmatpush2.msra.mxu0 0.0
    %5015 = vmatprep.subr.mxu0 0.0
    %5016 = vmatpush2.msra.mxu0 0.0
    %5017 = vmatprep.subr.mxu0 0.0
    %5018 = vmatpush2.msra.mxu0 0.0
    %5019 = vmatprep.subr.mxu0 0.0
    %5020 = vmatpush2.msra.mxu0 0.0
    %5021 = vmatprep.subr.mxu0 0.0
    %5022 = vmatpush2.msra.mxu0 0.0
    %5023 = vmatprep.subr.mxu0 0.0
    %5024 = vmatpush2.msra.mxu0 0.0
    %5025 = vmatprep.subr.mxu0 0.0
    %5026 = vmatpush2.msra.mxu0 0.0
    %5027 = vmatprep.subr.mxu0 0.0
    %5028 = vmatpush2.msra.mxu0 0.0
    %5029 = vmatprep.subr.mxu0 0.0
    %5030 = vmatpush2.msra.mxu0 0.0
    %5031 = vmatprep.subr.mxu0 0.0
    %5032 = vmatpush2.msra.mxu0 0.0
    %5033 = vmatprep.subr.mxu0 0.0
    %5034 = vmatpush2.msra.mxu0 0.0
    %5035 = vmatprep.subr.mxu0 0.0
    %5036 = vmatpush2.msra.mxu0 0.0
    %5037 = vmatprep.subr.mxu0 0.0
    %5038 = vmatpush2.msra.mxu0 0.0
    %5039 = vmatprep.subr.mxu0 0.0
    %5040 = vmatpush2.msra.mxu0 0.0
    %5041 = vmatprep.subr.mxu0 0.0
    %5042 = vmatpush2.msra.mxu0 0.0
    %5043 = vmatprep.subr.mxu0 0.0
    %5044 = vmatpush2.msra.mxu0 0.0
    %5045 = vmatprep.mubr.f32.mxu0 0.0
    %5046 = vmatmul.mubr.f32.gmra.mxu0 %v4976
    %v5047 = vpop.f32.mrf.mxu0
    %v5048 = vadd.f32 0.0, %v5047
    %v5049 = vpop.f32.mrf.mxu0
    %5050 = vmatprep.mubr.f32.mxu0 0.0
    %5051 = vmatmul.mubr.f32.gmra.mxu0 %v4979
    %v5052 = vpop.f32.mrf.mxu0
    %v5053 = vadd.f32 0.0, %v5052
    %v5054 = vpop.f32.mrf.mxu0
    %5055 = vdwg.mxu0
    %5056 = vrot.lane.b32.xlu0 %v253, 48
    %v5057 = vpop.permute.xlu0 %5056
    %5058 = vrot.lane.b32.xlu0 %v258, 48
    %v5059 = vpop.permute.xlu0 %5058
    %v5063 = vsel %vm1038, %v4445, 0
    %v5066 = vsel %vm1038, %v4446, 0
    %5068 = vmatprep.subr.mxu0 0.0
    %5069 = vmatpush1.msra.mxu0 0.0
    %5070 = vmatprep.subr.mxu0 0.0
    %5071 = vmatpush1.msra.mxu0 0.0
    %5072 = vmatprep.subr.mxu0 0.0
    %5073 = vmatpush1.msra.mxu0 0.0
    %5074 = vmatprep.subr.mxu0 0.0
    %5075 = vmatpush1.msra.mxu0 0.0
    %5076 = vmatprep.subr.mxu0 0.0
    %5077 = vmatpush1.msra.mxu0 0.0
    %5078 = vmatprep.subr.mxu0 0.0
    %5079 = vmatpush1.msra.mxu0 0.0
    %5080 = vmatprep.subr.mxu0 0.0
    %5081 = vmatpush1.msra.mxu0 0.0
    %5082 = vmatprep.subr.mxu0 0.0
    %5083 = vmatpush1.msra.mxu0 0.0
    %5084 = vmatprep.subr.mxu0 0.0
    %5085 = vmatpush1.msra.mxu0 0.0
    %5086 = vmatprep.subr.mxu0 0.0
    %5087 = vmatpush1.msra.mxu0 0.0
    %5088 = vmatprep.subr.mxu0 0.0
    %5089 = vmatpush1.msra.mxu0 0.0
    %5090 = vmatprep.subr.mxu0 0.0
    %5091 = vmatpush1.msra.mxu0 0.0
    %5092 = vmatprep.subr.mxu0 0.0
    %5093 = vmatpush1.msra.mxu0 0.0
    %5094 = vmatprep.subr.mxu0 0.0
    %5095 = vmatpush1.msra.mxu0 0.0
    %5096 = vmatprep.subr.mxu0 0.0
    %5097 = vmatpush1.msra.mxu0 %v5059
    %5098 = vmatprep.subr.mxu0 0.0
    %5099 = vmatpush1.msra.mxu0 %v5057
    %5100 = vmatprep.subr.mxu0 0.0
    %5101 = vmatpush2.msra.mxu0 0.0
    %5102 = vmatprep.subr.mxu0 0.0
    %5103 = vmatpush2.msra.mxu0 0.0
    %5104 = vmatprep.subr.mxu0 0.0
    %5105 = vmatpush2.msra.mxu0 0.0
    %5106 = vmatprep.subr.mxu0 0.0
    %5107 = vmatpush2.msra.mxu0 0.0
    %5108 = vmatprep.subr.mxu0 0.0
    %5109 = vmatpush2.msra.mxu0 0.0
    %5110 = vmatprep.subr.mxu0 0.0
    %5111 = vmatpush2.msra.mxu0 0.0
    %5112 = vmatprep.subr.mxu0 0.0
    %5113 = vmatpush2.msra.mxu0 0.0
    %5114 = vmatprep.subr.mxu0 0.0
    %5115 = vmatpush2.msra.mxu0 0.0
    %5116 = vmatprep.subr.mxu0 0.0
    %5117 = vmatpush2.msra.mxu0 0.0
    %5118 = vmatprep.subr.mxu0 0.0
    %5119 = vmatpush2.msra.mxu0 0.0
    %5120 = vmatprep.subr.mxu0 0.0
    %5121 = vmatpush2.msra.mxu0 0.0
    %5122 = vmatprep.subr.mxu0 0.0
    %5123 = vmatpush2.msra.mxu0 0.0
    %5124 = vmatprep.subr.mxu0 0.0
    %5125 = vmatpush2.msra.mxu0 0.0
    %5126 = vmatprep.subr.mxu0 0.0
    %5127 = vmatpush2.msra.mxu0 0.0
    %5128 = vmatprep.subr.mxu0 0.0
    %5129 = vmatpush2.msra.mxu0 0.0
    %5130 = vmatprep.subr.mxu0 0.0
    %5131 = vmatpush2.msra.mxu0 0.0
    %5132 = vmatprep.mubr.f32.mxu0 0.0
    %5133 = vmatmul.mubr.f32.gmra.mxu0 %v5063
    %v5134 = vpop.f32.mrf.mxu0
    %v5135 = vadd.f32 0.0, %v5134
    %v5136 = vpop.f32.mrf.mxu0
    %5137 = vmatprep.mubr.f32.mxu0 0.0
    %5138 = vmatmul.mubr.f32.gmra.mxu0 %v5066
    %v5139 = vpop.f32.mrf.mxu0
    %v5140 = vadd.f32 0.0, %v5139
    %v5141 = vpop.f32.mrf.mxu0
    %5142 = vdwg.mxu0
    %5143 = vrot.lane.b32.xlu0 %v277, 104
    %v5144 = vpop.permute.xlu0 %5143
    %5145 = vrot.lane.b32.xlu0 %v278, 104
    %v5146 = vpop.permute.xlu0 %5145
    %5147 = vrot.lane.b32.xlu0 %v183, 72
    %v5148 = vpop.permute.xlu0 %5147
    %5149 = vrot.lane.b32.xlu0 %v188, 72
    %v5150 = vpop.permute.xlu0 %5149
    %v5151 = vsel %vm299, %v5144, 0
    %v5153 = vsel %vm299, %v5146, 0
    %v5155 = vsel %vm299, %v5148, 0
    %v5157 = vsel %vm299, %v5150, 0
    %5159 = vmatprep.subr.mxu0 0.0
    %5160 = vmatpush1.xpose.msra.mxu0 0.0
    %5161 = vmatprep.subr.mxu0 0.0
    %5162 = vmatpush1.xpose.msra.mxu0 0.0
    %5163 = vmatprep.subr.mxu0 0.0
    %5164 = vmatpush1.xpose.msra.mxu0 0.0
    %5165 = vmatprep.subr.mxu0 0.0
    %5166 = vmatpush1.xpose.msra.mxu0 0.0
    %5167 = vmatprep.subr.mxu0 0.0
    %5168 = vmatpush1.xpose.msra.mxu0 0.0
    %5169 = vmatprep.subr.mxu0 0.0
    %5170 = vmatpush1.xpose.msra.mxu0 0.0
    %5171 = vmatprep.subr.mxu0 0.0
    %5172 = vmatpush1.xpose.msra.mxu0 0.0
    %5173 = vmatprep.subr.mxu0 0.0
    %5174 = vmatpush1.xpose.msra.mxu0 0.0
    %5175 = vmatprep.subr.mxu0 0.0
    %5176 = vmatpush1.xpose.msra.mxu0 0.0
    %5177 = vmatprep.subr.mxu0 0.0
    %5178 = vmatpush1.xpose.msra.mxu0 0.0
    %5179 = vmatprep.subr.mxu0 0.0
    %5180 = vmatpush1.xpose.msra.mxu0 0.0
    %5181 = vmatprep.subr.mxu0 0.0
    %5182 = vmatpush1.xpose.msra.mxu0 0.0
    %5183 = vmatprep.subr.mxu0 0.0
    %5184 = vmatpush1.xpose.msra.mxu0 0.0
    %5185 = vmatprep.subr.mxu0 0.0
    %5186 = vmatpush1.xpose.msra.mxu0 0.0
    %5187 = vmatprep.subr.mxu0 0.0
    %5188 = vmatpush1.xpose.msra.mxu0 %v5157
    %5189 = vmatprep.subr.mxu0 0.0
    %5190 = vmatpush1.xpose.msra.mxu0 %v5155
    %5191 = vmatprep.subr.mxu0 0.0
    %5192 = vmatpush2.xpose.msra.mxu0 0.0
    %5193 = vmatprep.subr.mxu0 0.0
    %5194 = vmatpush2.xpose.msra.mxu0 0.0
    %5195 = vmatprep.subr.mxu0 0.0
    %5196 = vmatpush2.xpose.msra.mxu0 0.0
    %5197 = vmatprep.subr.mxu0 0.0
    %5198 = vmatpush2.xpose.msra.mxu0 0.0
    %5199 = vmatprep.subr.mxu0 0.0
    %5200 = vmatpush2.xpose.msra.mxu0 0.0
    %5201 = vmatprep.subr.mxu0 0.0
    %5202 = vmatpush2.xpose.msra.mxu0 0.0
    %5203 = vmatprep.subr.mxu0 0.0
    %5204 = vmatpush2.xpose.msra.mxu0 0.0
    %5205 = vmatprep.subr.mxu0 0.0
    %5206 = vmatpush2.xpose.msra.mxu0 0.0
    %5207 = vmatprep.subr.mxu0 0.0
    %5208 = vmatpush2.xpose.msra.mxu0 0.0
    %5209 = vmatprep.subr.mxu0 0.0
    %5210 = vmatpush2.xpose.msra.mxu0 0.0
    %5211 = vmatprep.subr.mxu0 0.0
    %5212 = vmatpush2.xpose.msra.mxu0 0.0
    %5213 = vmatprep.subr.mxu0 0.0
    %5214 = vmatpush2.xpose.msra.mxu0 0.0
    %5215 = vmatprep.subr.mxu0 0.0
    %5216 = vmatpush2.xpose.msra.mxu0 0.0
    %5217 = vmatprep.subr.mxu0 0.0
    %5218 = vmatpush2.xpose.msra.mxu0 0.0
    %5219 = vmatprep.subr.mxu0 0.0
    %5220 = vmatpush2.xpose.msra.mxu0 0.0
    %5221 = vmatprep.subr.mxu0 0.0
    %5222 = vmatpush2.xpose.msra.mxu0 0.0
    %5223 = vmatprep.mubr.f32.mxu0 0.0
    %5224 = vmatmul.mubr.f32.gmra.mxu0 %v5151
    %v5225 = vpop.f32.mrf.mxu0
    %v5226 = vadd.f32 %v267, %v5225
    %v5227 = vpop.f32.mrf.mxu0
    %5228 = vmatprep.mubr.f32.mxu0 0.0
    %5229 = vmatmul.mubr.f32.gmra.mxu0 %v5153
    %v5230 = vpop.f32.mrf.mxu0
    %v5231 = vadd.f32 %v268, %v5230
    %v5232 = vpop.f32.mrf.mxu0
    %5233 = vdwg.mxu0
    %5234 = vrot.lane.b32.xlu0 %v279, 104
    %v5235 = vpop.permute.xlu0 %5234
    %5236 = vrot.lane.b32.xlu0 %v280, 104
    %v5237 = vpop.permute.xlu0 %5236
    %5238 = vrot.lane.b32.xlu0 %v193, 72
    %v5239 = vpop.permute.xlu0 %5238
    %5240 = vrot.lane.b32.xlu0 %v198, 72
    %v5241 = vpop.permute.xlu0 %5240
    %v5242 = vsel %vm299, %v5235, 0
    %v5244 = vsel %vm299, %v5237, 0
    %v5246 = vsel %vm299, %v5239, 0
    %v5248 = vsel %vm299, %v5241, 0
    %5250 = vmatprep.subr.mxu0 0.0
    %5251 = vmatpush1.xpose.msra.mxu0 0.0
    %5252 = vmatprep.subr.mxu0 0.0
    %5253 = vmatpush1.xpose.msra.mxu0 0.0
    %5254 = vmatprep.subr.mxu0 0.0
    %5255 = vmatpush1.xpose.msra.mxu0 0.0
    %5256 = vmatprep.subr.mxu0 0.0
    %5257 = vmatpush1.xpose.msra.mxu0 0.0
    %5258 = vmatprep.subr.mxu0 0.0
    %5259 = vmatpush1.xpose.msra.mxu0 0.0
    %5260 = vmatprep.subr.mxu0 0.0
    %5261 = vmatpush1.xpose.msra.mxu0 0.0
    %5262 = vmatprep.subr.mxu0 0.0
    %5263 = vmatpush1.xpose.msra.mxu0 0.0
    %5264 = vmatprep.subr.mxu0 0.0
    %5265 = vmatpush1.xpose.msra.mxu0 0.0
    %5266 = vmatprep.subr.mxu0 0.0
    %5267 = vmatpush1.xpose.msra.mxu0 0.0
    %5268 = vmatprep.subr.mxu0 0.0
    %5269 = vmatpush1.xpose.msra.mxu0 0.0
    %5270 = vmatprep.subr.mxu0 0.0
    %5271 = vmatpush1.xpose.msra.mxu0 0.0
    %5272 = vmatprep.subr.mxu0 0.0
    %5273 = vmatpush1.xpose.msra.mxu0 0.0
    %5274 = vmatprep.subr.mxu0 0.0
    %5275 = vmatpush1.xpose.msra.mxu0 0.0
    %5276 = vmatprep.subr.mxu0 0.0
    %5277 = vmatpush1.xpose.msra.mxu0 0.0
    %5278 = vmatprep.subr.mxu0 0.0
    %5279 = vmatpush1.xpose.msra.mxu0 %v5248
    %5280 = vmatprep.subr.mxu0 0.0
    %5281 = vmatpush1.xpose.msra.mxu0 %v5246
    %5282 = vmatprep.subr.mxu0 0.0
    %5283 = vmatpush2.xpose.msra.mxu0 0.0
    %5284 = vmatprep.subr.mxu0 0.0
    %5285 = vmatpush2.xpose.msra.mxu0 0.0
    %5286 = vmatprep.subr.mxu0 0.0
    %5287 = vmatpush2.xpose.msra.mxu0 0.0
    %5288 = vmatprep.subr.mxu0 0.0
    %5289 = vmatpush2.xpose.msra.mxu0 0.0
    %5290 = vmatprep.subr.mxu0 0.0
    %5291 = vmatpush2.xpose.msra.mxu0 0.0
    %5292 = vmatprep.subr.mxu0 0.0
    %5293 = vmatpush2.xpose.msra.mxu0 0.0
    %5294 = vmatprep.subr.mxu0 0.0
    %5295 = vmatpush2.xpose.msra.mxu0 0.0
    %5296 = vmatprep.subr.mxu0 0.0
    %5297 = vmatpush2.xpose.msra.mxu0 0.0
    %5298 = vmatprep.subr.mxu0 0.0
    %5299 = vmatpush2.xpose.msra.mxu0 0.0
    %5300 = vmatprep.subr.mxu0 0.0
    %5301 = vmatpush2.xpose.msra.mxu0 0.0
    %5302 = vmatprep.subr.mxu0 0.0
    %5303 = vmatpush2.xpose.msra.mxu0 0.0
    %5304 = vmatprep.subr.mxu0 0.0
    %5305 = vmatpush2.xpose.msra.mxu0 0.0
    %5306 = vmatprep.subr.mxu0 0.0
    %5307 = vmatpush2.xpose.msra.mxu0 0.0
    %5308 = vmatprep.subr.mxu0 0.0
    %5309 = vmatpush2.xpose.msra.mxu0 0.0
    %5310 = vmatprep.subr.mxu0 0.0
    %5311 = vmatpush2.xpose.msra.mxu0 0.0
    %5312 = vmatprep.subr.mxu0 0.0
    %5313 = vmatpush2.xpose.msra.mxu0 0.0
    %5314 = vmatprep.mubr.f32.mxu0 0.0
    %5315 = vmatmul.mubr.f32.gmra.mxu0 %v5242
    %v5316 = vpop.f32.mrf.mxu0
    %v5317 = vadd.f32 %v267, %v5316
    %v5318 = vpop.f32.mrf.mxu0
    %5319 = vmatprep.mubr.f32.mxu0 0.0
    %5320 = vmatmul.mubr.f32.gmra.mxu0 %v5244
    %v5321 = vpop.f32.mrf.mxu0
    %v5322 = vadd.f32 %v268, %v5321
    %v5323 = vpop.f32.mrf.mxu0
    %5324 = vdwg.mxu0
    %5325 = vrot.lane.b32.xlu0 %v281, 104
    %v5326 = vpop.permute.xlu0 %5325
    %5327 = vrot.lane.b32.xlu0 %v282, 104
    %v5328 = vpop.permute.xlu0 %5327
    %5329 = vrot.lane.b32.xlu0 %v203, 72
    %v5330 = vpop.permute.xlu0 %5329
    %5331 = vrot.lane.b32.xlu0 %v208, 72
    %v5332 = vpop.permute.xlu0 %5331
    %v5333 = vsel %vm299, %v5326, 0
    %v5335 = vsel %vm299, %v5328, 0
    %v5337 = vsel %vm299, %v5330, 0
    %v5339 = vsel %vm299, %v5332, 0
    %5341 = vmatprep.subr.mxu0 0.0
    %5342 = vmatpush1.xpose.msra.mxu0 0.0
    %5343 = vmatprep.subr.mxu0 0.0
    %5344 = vmatpush1.xpose.msra.mxu0 0.0
    %5345 = vmatprep.subr.mxu0 0.0
    %5346 = vmatpush1.xpose.msra.mxu0 0.0
    %5347 = vmatprep.subr.mxu0 0.0
    %5348 = vmatpush1.xpose.msra.mxu0 0.0
    %5349 = vmatprep.subr.mxu0 0.0
    %5350 = vmatpush1.xpose.msra.mxu0 0.0
    %5351 = vmatprep.subr.mxu0 0.0
    %5352 = vmatpush1.xpose.msra.mxu0 0.0
    %5353 = vmatprep.subr.mxu0 0.0
    %5354 = vmatpush1.xpose.msra.mxu0 0.0
    %5355 = vmatprep.subr.mxu0 0.0
    %5356 = vmatpush1.xpose.msra.mxu0 0.0
    %5357 = vmatprep.subr.mxu0 0.0
    %5358 = vmatpush1.xpose.msra.mxu0 0.0
    %5359 = vmatprep.subr.mxu0 0.0
    %5360 = vmatpush1.xpose.msra.mxu0 0.0
    %5361 = vmatprep.subr.mxu0 0.0
    %5362 = vmatpush1.xpose.msra.mxu0 0.0
    %5363 = vmatprep.subr.mxu0 0.0
    %5364 = vmatpush1.xpose.msra.mxu0 0.0
    %5365 = vmatprep.subr.mxu0 0.0
    %5366 = vmatpush1.xpose.msra.mxu0 0.0
    %5367 = vmatprep.subr.mxu0 0.0
    %5368 = vmatpush1.xpose.msra.mxu0 0.0
    %5369 = vmatprep.subr.mxu0 0.0
    %5370 = vmatpush1.xpose.msra.mxu0 %v5339
    %5371 = vmatprep.subr.mxu0 0.0
    %5372 = vmatpush1.xpose.msra.mxu0 %v5337
    %5373 = vmatprep.subr.mxu0 0.0
    %5374 = vmatpush2.xpose.msra.mxu0 0.0
    %5375 = vmatprep.subr.mxu0 0.0
    %5376 = vmatpush2.xpose.msra.mxu0 0.0
    %5377 = vmatprep.subr.mxu0 0.0
    %5378 = vmatpush2.xpose.msra.mxu0 0.0
    %5379 = vmatprep.subr.mxu0 0.0
    %5380 = vmatpush2.xpose.msra.mxu0 0.0
    %5381 = vmatprep.subr.mxu0 0.0
    %5382 = vmatpush2.xpose.msra.mxu0 0.0
    %5383 = vmatprep.subr.mxu0 0.0
    %5384 = vmatpush2.xpose.msra.mxu0 0.0
    %5385 = vmatprep.subr.mxu0 0.0
    %5386 = vmatpush2.xpose.msra.mxu0 0.0
    %5387 = vmatprep.subr.mxu0 0.0
    %5388 = vmatpush2.xpose.msra.mxu0 0.0
    %5389 = vmatprep.subr.mxu0 0.0
    %5390 = vmatpush2.xpose.msra.mxu0 0.0
    %5391 = vmatprep.subr.mxu0 0.0
    %5392 = vmatpush2.xpose.msra.mxu0 0.0
    %5393 = vmatprep.subr.mxu0 0.0
    %5394 = vmatpush2.xpose.msra.mxu0 0.0
    %5395 = vmatprep.subr.mxu0 0.0
    %5396 = vmatpush2.xpose.msra.mxu0 0.0
    %5397 = vmatprep.subr.mxu0 0.0
    %5398 = vmatpush2.xpose.msra.mxu0 0.0
    %5399 = vmatprep.subr.mxu0 0.0
    %5400 = vmatpush2.xpose.msra.mxu0 0.0
    %5401 = vmatprep.subr.mxu0 0.0
    %5402 = vmatpush2.xpose.msra.mxu0 0.0
    %5403 = vmatprep.subr.mxu0 0.0
    %5404 = vmatpush2.xpose.msra.mxu0 0.0
    %5405 = vmatprep.mubr.f32.mxu0 0.0
    %5406 = vmatmul.mubr.f32.gmra.mxu0 %v5333
    %v5407 = vpop.f32.mrf.mxu0
    %v5408 = vadd.f32 %v267, %v5407
    %v5409 = vpop.f32.mrf.mxu0
    %5410 = vmatprep.mubr.f32.mxu0 0.0
    %5411 = vmatmul.mubr.f32.gmra.mxu0 %v5335
    %v5412 = vpop.f32.mrf.mxu0
    %v5413 = vadd.f32 %v268, %v5412
    %v5414 = vpop.f32.mrf.mxu0
    %5415 = vdwg.mxu0
    %5416 = vrot.lane.b32.xlu0 %v283, 104
    %v5417 = vpop.permute.xlu0 %5416
    %5418 = vrot.lane.b32.xlu0 %v284, 104
    %v5419 = vpop.permute.xlu0 %5418
    %5420 = vrot.lane.b32.xlu0 %v213, 72
    %v5421 = vpop.permute.xlu0 %5420
    %5422 = vrot.lane.b32.xlu0 %v218, 72
    %v5423 = vpop.permute.xlu0 %5422
    %v5424 = vsel %vm299, %v5417, 0
    %v5426 = vsel %vm299, %v5419, 0
    %v5428 = vsel %vm299, %v5421, 0
    %v5430 = vsel %vm299, %v5423, 0
    %5432 = vmatprep.subr.mxu0 0.0
    %5433 = vmatpush1.xpose.msra.mxu0 0.0
    %5434 = vmatprep.subr.mxu0 0.0
    %5435 = vmatpush1.xpose.msra.mxu0 0.0
    %5436 = vmatprep.subr.mxu0 0.0
    %5437 = vmatpush1.xpose.msra.mxu0 0.0
    %5438 = vmatprep.subr.mxu0 0.0
    %5439 = vmatpush1.xpose.msra.mxu0 0.0
    %5440 = vmatprep.subr.mxu0 0.0
    %5441 = vmatpush1.xpose.msra.mxu0 0.0
    %5442 = vmatprep.subr.mxu0 0.0
    %5443 = vmatpush1.xpose.msra.mxu0 0.0
    %5444 = vmatprep.subr.mxu0 0.0
    %5445 = vmatpush1.xpose.msra.mxu0 0.0
    %5446 = vmatprep.subr.mxu0 0.0
    %5447 = vmatpush1.xpose.msra.mxu0 0.0
    %5448 = vmatprep.subr.mxu0 0.0
    %5449 = vmatpush1.xpose.msra.mxu0 0.0
    %5450 = vmatprep.subr.mxu0 0.0
    %5451 = vmatpush1.xpose.msra.mxu0 0.0
    %5452 = vmatprep.subr.mxu0 0.0
    %5453 = vmatpush1.xpose.msra.mxu0 0.0
    %5454 = vmatprep.subr.mxu0 0.0
    %5455 = vmatpush1.xpose.msra.mxu0 0.0
    %5456 = vmatprep.subr.mxu0 0.0
    %5457 = vmatpush1.xpose.msra.mxu0 0.0
    %5458 = vmatprep.subr.mxu0 0.0
    %5459 = vmatpush1.xpose.msra.mxu0 0.0
    %5460 = vmatprep.subr.mxu0 0.0
    %5461 = vmatpush1.xpose.msra.mxu0 %v5430
    %5462 = vmatprep.subr.mxu0 0.0
    %5463 = vmatpush1.xpose.msra.mxu0 %v5428
    %5464 = vmatprep.subr.mxu0 0.0
    %5465 = vmatpush2.xpose.msra.mxu0 0.0
    %5466 = vmatprep.subr.mxu0 0.0
    %5467 = vmatpush2.xpose.msra.mxu0 0.0
    %5468 = vmatprep.subr.mxu0 0.0
    %5469 = vmatpush2.xpose.msra.mxu0 0.0
    %5470 = vmatprep.subr.mxu0 0.0
    %5471 = vmatpush2.xpose.msra.mxu0 0.0
    %5472 = vmatprep.subr.mxu0 0.0
    %5473 = vmatpush2.xpose.msra.mxu0 0.0
    %5474 = vmatprep.subr.mxu0 0.0
    %5475 = vmatpush2.xpose.msra.mxu0 0.0
    %5476 = vmatprep.subr.mxu0 0.0
    %5477 = vmatpush2.xpose.msra.mxu0 0.0
    %5478 = vmatprep.subr.mxu0 0.0
    %5479 = vmatpush2.xpose.msra.mxu0 0.0
    %5480 = vmatprep.subr.mxu0 0.0
    %5481 = vmatpush2.xpose.msra.mxu0 0.0
    %5482 = vmatprep.subr.mxu0 0.0
    %5483 = vmatpush2.xpose.msra.mxu0 0.0
    %5484 = vmatprep.subr.mxu0 0.0
    %5485 = vmatpush2.xpose.msra.mxu0 0.0
    %5486 = vmatprep.subr.mxu0 0.0
    %5487 = vmatpush2.xpose.msra.mxu0 0.0
    %5488 = vmatprep.subr.mxu0 0.0
    %5489 = vmatpush2.xpose.msra.mxu0 0.0
    %5490 = vmatprep.subr.mxu0 0.0
    %5491 = vmatpush2.xpose.msra.mxu0 0.0
    %5492 = vmatprep.subr.mxu0 0.0
    %5493 = vmatpush2.xpose.msra.mxu0 0.0
    %5494 = vmatprep.subr.mxu0 0.0
    %5495 = vmatpush2.xpose.msra.mxu0 0.0
    %5496 = vmatprep.mubr.f32.mxu0 0.0
    %5497 = vmatmul.mubr.f32.gmra.mxu0 %v5424
    %v5498 = vpop.f32.mrf.mxu0
    %v5499 = vadd.f32 %v267, %v5498
    %v5500 = vpop.f32.mrf.mxu0
    %5501 = vmatprep.mubr.f32.mxu0 0.0
    %5502 = vmatmul.mubr.f32.gmra.mxu0 %v5426
    %v5503 = vpop.f32.mrf.mxu0
    %v5504 = vadd.f32 %v268, %v5503
    %v5505 = vpop.f32.mrf.mxu0
    %5506 = vdwg.mxu0
    %5507 = vrot.lane.b32.xlu0 %v285, 104
    %v5508 = vpop.permute.xlu0 %5507
    %5509 = vrot.lane.b32.xlu0 %v286, 104
    %v5510 = vpop.permute.xlu0 %5509
    %5511 = vrot.lane.b32.xlu0 %v223, 72
    %v5512 = vpop.permute.xlu0 %5511
    %5513 = vrot.lane.b32.xlu0 %v228, 72
    %v5514 = vpop.permute.xlu0 %5513
    %v5515 = vsel %vm299, %v5508, 0
    %v5517 = vsel %vm299, %v5510, 0
    %v5519 = vsel %vm299, %v5512, 0
    %v5521 = vsel %vm299, %v5514, 0
    %5523 = vmatprep.subr.mxu0 0.0
    %5524 = vmatpush1.xpose.msra.mxu0 0.0
    %5525 = vmatprep.subr.mxu0 0.0
    %5526 = vmatpush1.xpose.msra.mxu0 0.0
    %5527 = vmatprep.subr.mxu0 0.0
    %5528 = vmatpush1.xpose.msra.mxu0 0.0
    %5529 = vmatprep.subr.mxu0 0.0
    %5530 = vmatpush1.xpose.msra.mxu0 0.0
    %5531 = vmatprep.subr.mxu0 0.0
    %5532 = vmatpush1.xpose.msra.mxu0 0.0
    %5533 = vmatprep.subr.mxu0 0.0
    %5534 = vmatpush1.xpose.msra.mxu0 0.0
    %5535 = vmatprep.subr.mxu0 0.0
    %5536 = vmatpush1.xpose.msra.mxu0 0.0
    %5537 = vmatprep.subr.mxu0 0.0
    %5538 = vmatpush1.xpose.msra.mxu0 0.0
    %5539 = vmatprep.subr.mxu0 0.0
    %5540 = vmatpush1.xpose.msra.mxu0 0.0
    %5541 = vmatprep.subr.mxu0 0.0
    %5542 = vmatpush1.xpose.msra.mxu0 0.0
    %5543 = vmatprep.subr.mxu0 0.0
    %5544 = vmatpush1.xpose.msra.mxu0 0.0
    %5545 = vmatprep.subr.mxu0 0.0
    %5546 = vmatpush1.xpose.msra.mxu0 0.0
    %5547 = vmatprep.subr.mxu0 0.0
    %5548 = vmatpush1.xpose.msra.mxu0 0.0
    %5549 = vmatprep.subr.mxu0 0.0
    %5550 = vmatpush1.xpose.msra.mxu0 0.0
    %5551 = vmatprep.subr.mxu0 0.0
    %5552 = vmatpush1.xpose.msra.mxu0 %v5521
    %5553 = vmatprep.subr.mxu0 0.0
    %5554 = vmatpush1.xpose.msra.mxu0 %v5519
    %5555 = vmatprep.subr.mxu0 0.0
    %5556 = vmatpush2.xpose.msra.mxu0 0.0
    %5557 = vmatprep.subr.mxu0 0.0
    %5558 = vmatpush2.xpose.msra.mxu0 0.0
    %5559 = vmatprep.subr.mxu0 0.0
    %5560 = vmatpush2.xpose.msra.mxu0 0.0
    %5561 = vmatprep.subr.mxu0 0.0
    %5562 = vmatpush2.xpose.msra.mxu0 0.0
    %5563 = vmatprep.subr.mxu0 0.0
    %5564 = vmatpush2.xpose.msra.mxu0 0.0
    %5565 = vmatprep.subr.mxu0 0.0
    %5566 = vmatpush2.xpose.msra.mxu0 0.0
    %5567 = vmatprep.subr.mxu0 0.0
    %5568 = vmatpush2.xpose.msra.mxu0 0.0
    %5569 = vmatprep.subr.mxu0 0.0
    %5570 = vmatpush2.xpose.msra.mxu0 0.0
    %5571 = vmatprep.subr.mxu0 0.0
    %5572 = vmatpush2.xpose.msra.mxu0 0.0
    %5573 = vmatprep.subr.mxu0 0.0
    %5574 = vmatpush2.xpose.msra.mxu0 0.0
    %5575 = vmatprep.subr.mxu0 0.0
    %5576 = vmatpush2.xpose.msra.mxu0 0.0
    %5577 = vmatprep.subr.mxu0 0.0
    %5578 = vmatpush2.xpose.msra.mxu0 0.0
    %5579 = vmatprep.subr.mxu0 0.0
    %5580 = vmatpush2.xpose.msra.mxu0 0.0
    %5581 = vmatprep.subr.mxu0 0.0
    %5582 = vmatpush2.xpose.msra.mxu0 0.0
    %5583 = vmatprep.subr.mxu0 0.0
    %5584 = vmatpush2.xpose.msra.mxu0 0.0
    %5585 = vmatprep.subr.mxu0 0.0
    %5586 = vmatpush2.xpose.msra.mxu0 0.0
    %5587 = vmatprep.mubr.f32.mxu0 0.0
    %5588 = vmatmul.mubr.f32.gmra.mxu0 %v5515
    %v5589 = vpop.f32.mrf.mxu0
    %v5590 = vadd.f32 %v267, %v5589
    %v5591 = vpop.f32.mrf.mxu0
    %5592 = vmatprep.mubr.f32.mxu0 0.0
    %5593 = vmatmul.mubr.f32.gmra.mxu0 %v5517
    %v5594 = vpop.f32.mrf.mxu0
    %v5595 = vadd.f32 %v268, %v5594
    %v5596 = vpop.f32.mrf.mxu0
    %5597 = vdwg.mxu0
    %5598 = vrot.lane.b32.xlu0 %v287, 104
    %v5599 = vpop.permute.xlu0 %5598
    %5600 = vrot.lane.b32.xlu0 %v288, 104
    %v5601 = vpop.permute.xlu0 %5600
    %5602 = vrot.lane.b32.xlu0 %v233, 72
    %v5603 = vpop.permute.xlu0 %5602
    %5604 = vrot.lane.b32.xlu0 %v238, 72
    %v5605 = vpop.permute.xlu0 %5604
    %v5606 = vsel %vm299, %v5599, 0
    %v5608 = vsel %vm299, %v5601, 0
    %v5610 = vsel %vm299, %v5603, 0
    %v5612 = vsel %vm299, %v5605, 0
    %5614 = vmatprep.subr.mxu0 0.0
    %5615 = vmatpush1.xpose.msra.mxu0 0.0
    %5616 = vmatprep.subr.mxu0 0.0
    %5617 = vmatpush1.xpose.msra.mxu0 0.0
    %5618 = vmatprep.subr.mxu0 0.0
    %5619 = vmatpush1.xpose.msra.mxu0 0.0
    %5620 = vmatprep.subr.mxu0 0.0
    %5621 = vmatpush1.xpose.msra.mxu0 0.0
    %5622 = vmatprep.subr.mxu0 0.0
    %5623 = vmatpush1.xpose.msra.mxu0 0.0
    %5624 = vmatprep.subr.mxu0 0.0
    %5625 = vmatpush1.xpose.msra.mxu0 0.0
    %5626 = vmatprep.subr.mxu0 0.0
    %5627 = vmatpush1.xpose.msra.mxu0 0.0
    %5628 = vmatprep.subr.mxu0 0.0
    %5629 = vmatpush1.xpose.msra.mxu0 0.0
    %5630 = vmatprep.subr.mxu0 0.0
    %5631 = vmatpush1.xpose.msra.mxu0 0.0
    %5632 = vmatprep.subr.mxu0 0.0
    %5633 = vmatpush1.xpose.msra.mxu0 0.0
    %5634 = vmatprep.subr.mxu0 0.0
    %5635 = vmatpush1.xpose.msra.mxu0 0.0
    %5636 = vmatprep.subr.mxu0 0.0
    %5637 = vmatpush1.xpose.msra.mxu0 0.0
    %5638 = vmatprep.subr.mxu0 0.0
    %5639 = vmatpush1.xpose.msra.mxu0 0.0
    %5640 = vmatprep.subr.mxu0 0.0
    %5641 = vmatpush1.xpose.msra.mxu0 0.0
    %5642 = vmatprep.subr.mxu0 0.0
    %5643 = vmatpush1.xpose.msra.mxu0 %v5612
    %5644 = vmatprep.subr.mxu0 0.0
    %5645 = vmatpush1.xpose.msra.mxu0 %v5610
    %5646 = vmatprep.subr.mxu0 0.0
    %5647 = vmatpush2.xpose.msra.mxu0 0.0
    %5648 = vmatprep.subr.mxu0 0.0
    %5649 = vmatpush2.xpose.msra.mxu0 0.0
    %5650 = vmatprep.subr.mxu0 0.0
    %5651 = vmatpush2.xpose.msra.mxu0 0.0
    %5652 = vmatprep.subr.mxu0 0.0
    %5653 = vmatpush2.xpose.msra.mxu0 0.0
    %5654 = vmatprep.subr.mxu0 0.0
    %5655 = vmatpush2.xpose.msra.mxu0 0.0
    %5656 = vmatprep.subr.mxu0 0.0
    %5657 = vmatpush2.xpose.msra.mxu0 0.0
    %5658 = vmatprep.subr.mxu0 0.0
    %5659 = vmatpush2.xpose.msra.mxu0 0.0
    %5660 = vmatprep.subr.mxu0 0.0
    %5661 = vmatpush2.xpose.msra.mxu0 0.0
    %5662 = vmatprep.subr.mxu0 0.0
    %5663 = vmatpush2.xpose.msra.mxu0 0.0
    %5664 = vmatprep.subr.mxu0 0.0
    %5665 = vmatpush2.xpose.msra.mxu0 0.0
    %5666 = vmatprep.subr.mxu0 0.0
    %5667 = vmatpush2.xpose.msra.mxu0 0.0
    %5668 = vmatprep.subr.mxu0 0.0
    %5669 = vmatpush2.xpose.msra.mxu0 0.0
    %5670 = vmatprep.subr.mxu0 0.0
    %5671 = vmatpush2.xpose.msra.mxu0 0.0
    %5672 = vmatprep.subr.mxu0 0.0
    %5673 = vmatpush2.xpose.msra.mxu0 0.0
    %5674 = vmatprep.subr.mxu0 0.0
    %5675 = vmatpush2.xpose.msra.mxu0 0.0
    %5676 = vmatprep.subr.mxu0 0.0
    %5677 = vmatpush2.xpose.msra.mxu0 0.0
    %5678 = vmatprep.mubr.f32.mxu0 0.0
    %5679 = vmatmul.mubr.f32.gmra.mxu0 %v5606
    %v5680 = vpop.f32.mrf.mxu0
    %v5681 = vadd.f32 %v267, %v5680
    %v5682 = vpop.f32.mrf.mxu0
    %5683 = vmatprep.mubr.f32.mxu0 0.0
    %5684 = vmatmul.mubr.f32.gmra.mxu0 %v5608
    %v5685 = vpop.f32.mrf.mxu0
    %v5686 = vadd.f32 %v268, %v5685
    %v5687 = vpop.f32.mrf.mxu0
    %5688 = vdwg.mxu0
    %5689 = vrot.lane.b32.xlu0 %v289, 104
    %v5690 = vpop.permute.xlu0 %5689
    %5691 = vrot.lane.b32.xlu0 %v290, 104
    %v5692 = vpop.permute.xlu0 %5691
    %5693 = vrot.lane.b32.xlu0 %v243, 72
    %v5694 = vpop.permute.xlu0 %5693
    %5695 = vrot.lane.b32.xlu0 %v248, 72
    %v5696 = vpop.permute.xlu0 %5695
    %v5697 = vsel %vm299, %v5690, 0
    %v5699 = vsel %vm299, %v5692, 0
    %v5701 = vsel %vm299, %v5694, 0
    %v5703 = vsel %vm299, %v5696, 0
    %5705 = vmatprep.subr.mxu0 0.0
    %5706 = vmatpush1.xpose.msra.mxu0 0.0
    %5707 = vmatprep.subr.mxu0 0.0
    %5708 = vmatpush1.xpose.msra.mxu0 0.0
    %5709 = vmatprep.subr.mxu0 0.0
    %5710 = vmatpush1.xpose.msra.mxu0 0.0
    %5711 = vmatprep.subr.mxu0 0.0
    %5712 = vmatpush1.xpose.msra.mxu0 0.0
    %5713 = vmatprep.subr.mxu0 0.0
    %5714 = vmatpush1.xpose.msra.mxu0 0.0
    %5715 = vmatprep.subr.mxu0 0.0
    %5716 = vmatpush1.xpose.msra.mxu0 0.0
    %5717 = vmatprep.subr.mxu0 0.0
    %5718 = vmatpush1.xpose.msra.mxu0 0.0
    %5719 = vmatprep.subr.mxu0 0.0
    %5720 = vmatpush1.xpose.msra.mxu0 0.0
    %5721 = vmatprep.subr.mxu0 0.0
    %5722 = vmatpush1.xpose.msra.mxu0 0.0
    %5723 = vmatprep.subr.mxu0 0.0
    %5724 = vmatpush1.xpose.msra.mxu0 0.0
    %5725 = vmatprep.subr.mxu0 0.0
    %5726 = vmatpush1.xpose.msra.mxu0 0.0
    %5727 = vmatprep.subr.mxu0 0.0
    %5728 = vmatpush1.xpose.msra.mxu0 0.0
    %5729 = vmatprep.subr.mxu0 0.0
    %5730 = vmatpush1.xpose.msra.mxu0 0.0
    %5731 = vmatprep.subr.mxu0 0.0
    %5732 = vmatpush1.xpose.msra.mxu0 0.0
    %5733 = vmatprep.subr.mxu0 0.0
    %5734 = vmatpush1.xpose.msra.mxu0 %v5703
    %5735 = vmatprep.subr.mxu0 0.0
    %5736 = vmatpush1.xpose.msra.mxu0 %v5701
    %5737 = vmatprep.subr.mxu0 0.0
    %5738 = vmatpush2.xpose.msra.mxu0 0.0
    %5739 = vmatprep.subr.mxu0 0.0
    %5740 = vmatpush2.xpose.msra.mxu0 0.0
    %5741 = vmatprep.subr.mxu0 0.0
    %5742 = vmatpush2.xpose.msra.mxu0 0.0
    %5743 = vmatprep.subr.mxu0 0.0
    %5744 = vmatpush2.xpose.msra.mxu0 0.0
    %5745 = vmatprep.subr.mxu0 0.0
    %5746 = vmatpush2.xpose.msra.mxu0 0.0
    %5747 = vmatprep.subr.mxu0 0.0
    %5748 = vmatpush2.xpose.msra.mxu0 0.0
    %5749 = vmatprep.subr.mxu0 0.0
    %5750 = vmatpush2.xpose.msra.mxu0 0.0
    %5751 = vmatprep.subr.mxu0 0.0
    %5752 = vmatpush2.xpose.msra.mxu0 0.0
    %5753 = vmatprep.subr.mxu0 0.0
    %5754 = vmatpush2.xpose.msra.mxu0 0.0
    %5755 = vmatprep.subr.mxu0 0.0
    %5756 = vmatpush2.xpose.msra.mxu0 0.0
    %5757 = vmatprep.subr.mxu0 0.0
    %5758 = vmatpush2.xpose.msra.mxu0 0.0
    %5759 = vmatprep.subr.mxu0 0.0
    %5760 = vmatpush2.xpose.msra.mxu0 0.0
    %5761 = vmatprep.subr.mxu0 0.0
    %5762 = vmatpush2.xpose.msra.mxu0 0.0
    %5763 = vmatprep.subr.mxu0 0.0
    %5764 = vmatpush2.xpose.msra.mxu0 0.0
    %5765 = vmatprep.subr.mxu0 0.0
    %5766 = vmatpush2.xpose.msra.mxu0 0.0
    %5767 = vmatprep.subr.mxu0 0.0
    %5768 = vmatpush2.xpose.msra.mxu0 0.0
    %5769 = vmatprep.mubr.f32.mxu0 0.0
    %5770 = vmatmul.mubr.f32.gmra.mxu0 %v5697
    %v5771 = vpop.f32.mrf.mxu0
    %v5772 = vadd.f32 %v267, %v5771
    %v5773 = vpop.f32.mrf.mxu0
    %5774 = vmatprep.mubr.f32.mxu0 0.0
    %5775 = vmatmul.mubr.f32.gmra.mxu0 %v5699
    %v5776 = vpop.f32.mrf.mxu0
    %v5777 = vadd.f32 %v268, %v5776
    %v5778 = vpop.f32.mrf.mxu0
    %5779 = vdwg.mxu0
    %5780 = vrot.lane.b32.xlu0 %v291, 104
    %v5781 = vpop.permute.xlu0 %5780
    %5782 = vrot.lane.b32.xlu0 %v292, 104
    %v5783 = vpop.permute.xlu0 %5782
    %5784 = vrot.lane.b32.xlu0 %v253, 72
    %v5785 = vpop.permute.xlu0 %5784
    %5786 = vrot.lane.b32.xlu0 %v258, 72
    %v5787 = vpop.permute.xlu0 %5786
    %v5788 = vsel %vm299, %v5781, 0
    %v5790 = vsel %vm299, %v5783, 0
    %v5792 = vsel %vm299, %v5785, 0
    %v5794 = vsel %vm299, %v5787, 0
    %5796 = vmatprep.subr.mxu0 0.0
    %5797 = vmatpush1.xpose.msra.mxu0 0.0
    %5798 = vmatprep.subr.mxu0 0.0
    %5799 = vmatpush1.xpose.msra.mxu0 0.0
    %5800 = vmatprep.subr.mxu0 0.0
    %5801 = vmatpush1.xpose.msra.mxu0 0.0
    %5802 = vmatprep.subr.mxu0 0.0
    %5803 = vmatpush1.xpose.msra.mxu0 0.0
    %5804 = vmatprep.subr.mxu0 0.0
    %5805 = vmatpush1.xpose.msra.mxu0 0.0
    %5806 = vmatprep.subr.mxu0 0.0
    %5807 = vmatpush1.xpose.msra.mxu0 0.0
    %5808 = vmatprep.subr.mxu0 0.0
    %5809 = vmatpush1.xpose.msra.mxu0 0.0
    %5810 = vmatprep.subr.mxu0 0.0
    %5811 = vmatpush1.xpose.msra.mxu0 0.0
    %5812 = vmatprep.subr.mxu0 0.0
    %5813 = vmatpush1.xpose.msra.mxu0 0.0
    %5814 = vmatprep.subr.mxu0 0.0
    %5815 = vmatpush1.xpose.msra.mxu0 0.0
    %5816 = vmatprep.subr.mxu0 0.0
    %5817 = vmatpush1.xpose.msra.mxu0 0.0
    %5818 = vmatprep.subr.mxu0 0.0
    %5819 = vmatpush1.xpose.msra.mxu0 0.0
    %5820 = vmatprep.subr.mxu0 0.0
    %5821 = vmatpush1.xpose.msra.mxu0 0.0
    %5822 = vmatprep.subr.mxu0 0.0
    %5823 = vmatpush1.xpose.msra.mxu0 0.0
    %5824 = vmatprep.subr.mxu0 0.0
    %5825 = vmatpush1.xpose.msra.mxu0 %v5794
    %5826 = vmatprep.subr.mxu0 0.0
    %5827 = vmatpush1.xpose.msra.mxu0 %v5792
    %5828 = vmatprep.subr.mxu0 0.0
    %5829 = vmatpush2.xpose.msra.mxu0 0.0
    %5830 = vmatprep.subr.mxu0 0.0
    %5831 = vmatpush2.xpose.msra.mxu0 0.0
    %5832 = vmatprep.subr.mxu0 0.0
    %5833 = vmatpush2.xpose.msra.mxu0 0.0
    %5834 = vmatprep.subr.mxu0 0.0
    %5835 = vmatpush2.xpose.msra.mxu0 0.0
    %5836 = vmatprep.subr.mxu0 0.0
    %5837 = vmatpush2.xpose.msra.mxu0 0.0
    %5838 = vmatprep.subr.mxu0 0.0
    %5839 = vmatpush2.xpose.msra.mxu0 0.0
    %5840 = vmatprep.subr.mxu0 0.0
    %5841 = vmatpush2.xpose.msra.mxu0 0.0
    %5842 = vmatprep.subr.mxu0 0.0
    %5843 = vmatpush2.xpose.msra.mxu0 0.0
    %5844 = vmatprep.subr.mxu0 0.0
    %5845 = vmatpush2.xpose.msra.mxu0 0.0
    %5846 = vmatprep.subr.mxu0 0.0
    %5847 = vmatpush2.xpose.msra.mxu0 0.0
    %5848 = vmatprep.subr.mxu0 0.0
    %5849 = vmatpush2.xpose.msra.mxu0 0.0
    %5850 = vmatprep.subr.mxu0 0.0
    %5851 = vmatpush2.xpose.msra.mxu0 0.0
    %5852 = vmatprep.subr.mxu0 0.0
    %5853 = vmatpush2.xpose.msra.mxu0 0.0
    %5854 = vmatprep.subr.mxu0 0.0
    %5855 = vmatpush2.xpose.msra.mxu0 0.0
    %5856 = vmatprep.subr.mxu0 0.0
    %5857 = vmatpush2.xpose.msra.mxu0 0.0
    %5858 = vmatprep.subr.mxu0 0.0
    %5859 = vmatpush2.xpose.msra.mxu0 0.0
    %5860 = vmatprep.mubr.f32.mxu0 0.0
    %5861 = vmatmul.mubr.f32.gmra.mxu0 %v5788
    %v5862 = vpop.f32.mrf.mxu0
    %v5863 = vadd.f32 %v267, %v5862
    %v5864 = vpop.f32.mrf.mxu0
    %5865 = vmatprep.mubr.f32.mxu0 0.0
    %5866 = vmatmul.mubr.f32.gmra.mxu0 %v5790
    %v5867 = vpop.f32.mrf.mxu0
    %v5868 = vadd.f32 %v268, %v5867
    %v5869 = vpop.f32.mrf.mxu0
    %5870 = vdwg.mxu0
    %v5871 = vadd.f32 %v5226, %v269
    %v5872 = vadd.f32 %v5231, %v270
    %v5873 = vadd.f32 %v5317, %v271
    %v5874 = vadd.f32 %v5322, %v272
    %v5875 = vadd.f32 %v5408, %v273
    %v5876 = vadd.f32 %v5413, %v274
    %v5877 = vadd.f32 %v5499, %v275
    %v5878 = vadd.f32 %v5504, %v276
    %v5879 = vadd.f32 %v5590, %v269
    %v5880 = vadd.f32 %v5595, %v270
    %v5881 = vadd.f32 %v5681, %v271
    %v5882 = vadd.f32 %v5686, %v272
    %v5883 = vadd.f32 %v5772, %v273
    %v5884 = vadd.f32 %v5777, %v274
    %v5885 = vadd.f32 %v5863, %v275
    %v5886 = vadd.f32 %v5868, %v276
    %v5887 = vsel %vm1038, %v5871, -inf
    %5888 = vmax.xlane.f32.xlu0 %v5887
    %v5889 = vpop.xlane.xlu0 %5888
    %v5890 = vsel %vm1038, %v5872, -inf
    %5891 = vmax.xlane.f32.xlu0 %v5890
    %v5892 = vpop.xlane.xlu0 %5891
    %v5893 = vsel %vm1038, %v5873, -inf
    %5894 = vmax.xlane.f32.xlu0 %v5893
    %v5895 = vpop.xlane.xlu0 %5894
    %v5896 = vsel %vm1038, %v5874, -inf
    %5897 = vmax.xlane.f32.xlu0 %v5896
    %v5898 = vpop.xlane.xlu0 %5897
    %v5899 = vsel %vm1038, %v5875, -inf
    %5900 = vmax.xlane.f32.xlu0 %v5899
    %v5901 = vpop.xlane.xlu0 %5900
    %v5902 = vsel %vm1038, %v5876, -inf
    %5903 = vmax.xlane.f32.xlu0 %v5902
    %v5904 = vpop.xlane.xlu0 %5903
    %v5905 = vsel %vm1038, %v5877, -inf
    %5906 = vmax.xlane.f32.xlu0 %v5905
    %v5907 = vpop.xlane.xlu0 %5906
    %v5908 = vsel %vm1038, %v5878, -inf
    %5909 = vmax.xlane.f32.xlu0 %v5908
    %v5910 = vpop.xlane.xlu0 %5909
    %v5911 = vsel %vm1038, %v5879, -inf
    %5912 = vmax.xlane.f32.xlu0 %v5911
    %v5913 = vpop.xlane.xlu0 %5912
    %v5914 = vsel %vm1038, %v5880, -inf
    %5915 = vmax.xlane.f32.xlu0 %v5914
    %v5916 = vpop.xlane.xlu0 %5915
    %v5917 = vsel %vm1038, %v5881, -inf
    %5918 = vmax.xlane.f32.xlu0 %v5917
    %v5919 = vpop.xlane.xlu0 %5918
    %v5920 = vsel %vm1038, %v5882, -inf
    %5921 = vmax.xlane.f32.xlu0 %v5920
    %v5922 = vpop.xlane.xlu0 %5921
    %v5923 = vsel %vm1038, %v5883, -inf
    %5924 = vmax.xlane.f32.xlu0 %v5923
    %v5925 = vpop.xlane.xlu0 %5924
    %v5926 = vsel %vm1038, %v5884, -inf
    %5927 = vmax.xlane.f32.xlu0 %v5926
    %v5928 = vpop.xlane.xlu0 %5927
    %v5929 = vsel %vm1038, %v5885, -inf
    %5930 = vmax.xlane.f32.xlu0 %v5929
    %v5931 = vpop.xlane.xlu0 %5930
    %v5932 = vsel %vm1038, %v5886, -inf
    %5933 = vmax.xlane.f32.xlu0 %v5932
    %v5934 = vpop.xlane.xlu0 %5933
    %v5935 = vsub.f32 %v5871, %v5889
    %v5936 = vsub.f32 %v5872, %v5892
    %v5937 = vsub.f32 %v5873, %v5895
    %v5938 = vsub.f32 %v5874, %v5898
    %v5939 = vsub.f32 %v5875, %v5901
    %v5940 = vsub.f32 %v5876, %v5904
    %v5941 = vsub.f32 %v5877, %v5907
    %v5942 = vsub.f32 %v5878, %v5910
    %v5943 = vsub.f32 %v5879, %v5913
    %v5944 = vsub.f32 %v5880, %v5916
    %v5945 = vsub.f32 %v5881, %v5919
    %v5946 = vsub.f32 %v5882, %v5922
    %v5947 = vsub.f32 %v5883, %v5925
    %v5948 = vsub.f32 %v5884, %v5928
    %v5949 = vsub.f32 %v5885, %v5931
    %v5950 = vsub.f32 %v5886, %v5934
    %v5951 = vmul.f32 %v5935, 1.442695
    %v5952 = vpow.pop %v5951
    %v5953 = vmul.f32 %v5936, 1.442695
    %v5954 = vpow.pop %v5953
    %v5955 = vmul.f32 %v5937, 1.442695
    %v5956 = vpow.pop %v5955
    %v5957 = vmul.f32 %v5938, 1.442695
    %v5958 = vpow.pop %v5957
    %v5959 = vmul.f32 %v5939, 1.442695
    %v5960 = vpow.pop %v5959
    %v5961 = vmul.f32 %v5940, 1.442695
    %v5962 = vpow.pop %v5961
    %v5963 = vmul.f32 %v5941, 1.442695
    %v5964 = vpow.pop %v5963
    %v5965 = vmul.f32 %v5942, 1.442695
    %v5966 = vpow.pop %v5965
    %v5967 = vmul.f32 %v5943, 1.442695
    %v5968 = vpow.pop %v5967
    %v5969 = vmul.f32 %v5944, 1.442695
    %v5970 = vpow.pop %v5969
    %v5971 = vmul.f32 %v5945, 1.442695
    %v5972 = vpow.pop %v5971
    %v5973 = vmul.f32 %v5946, 1.442695
    %v5974 = vpow.pop %v5973
    %v5975 = vmul.f32 %v5947, 1.442695
    %v5976 = vpow.pop %v5975
    %v5977 = vmul.f32 %v5948, 1.442695
    %v5978 = vpow.pop %v5977
    %v5979 = vmul.f32 %v5949, 1.442695
    %v5980 = vpow.pop %v5979
    %v5981 = vmul.f32 %v5950, 1.442695
    %v5982 = vpow.pop %v5981
    %v5983 = vsel %vm1038, %v5952, 0.0
    %5984 = vadd.xlane.f32.xlu0 %v5983
    %v5985 = vpop.xlane.xlu0 %5984
    %v5986 = vsel %vm1038, %v5954, 0.0
    %5987 = vadd.xlane.f32.xlu0 %v5986
    %v5988 = vpop.xlane.xlu0 %5987
    %v5989 = vsel %vm1038, %v5956, 0.0
    %5990 = vadd.xlane.f32.xlu0 %v5989
    %v5991 = vpop.xlane.xlu0 %5990
    %v5992 = vsel %vm1038, %v5958, 0.0
    %5993 = vadd.xlane.f32.xlu0 %v5992
    %v5994 = vpop.xlane.xlu0 %5993
    %v5995 = vsel %vm1038, %v5960, 0.0
    %5996 = vadd.xlane.f32.xlu0 %v5995
    %v5997 = vpop.xlane.xlu0 %5996
    %v5998 = vsel %vm1038, %v5962, 0.0
    %5999 = vadd.xlane.f32.xlu0 %v5998
    %v6000 = vpop.xlane.xlu0 %5999
    %v6001 = vsel %vm1038, %v5964, 0.0
    %6002 = vadd.xlane.f32.xlu0 %v6001
    %v6003 = vpop.xlane.xlu0 %6002
    %v6004 = vsel %vm1038, %v5966, 0.0
    %6005 = vadd.xlane.f32.xlu0 %v6004
    %v6006 = vpop.xlane.xlu0 %6005
    %v6007 = vsel %vm1038, %v5968, 0.0
    %6008 = vadd.xlane.f32.xlu0 %v6007
    %v6009 = vpop.xlane.xlu0 %6008
    %v6010 = vsel %vm1038, %v5970, 0.0
    %6011 = vadd.xlane.f32.xlu0 %v6010
    %v6012 = vpop.xlane.xlu0 %6011
    %v6013 = vsel %vm1038, %v5972, 0.0
    %6014 = vadd.xlane.f32.xlu0 %v6013
    %v6015 = vpop.xlane.xlu0 %6014
    %v6016 = vsel %vm1038, %v5974, 0.0
    %6017 = vadd.xlane.f32.xlu0 %v6016
    %v6018 = vpop.xlane.xlu0 %6017
    %v6019 = vsel %vm1038, %v5976, 0.0
    %6020 = vadd.xlane.f32.xlu0 %v6019
    %v6021 = vpop.xlane.xlu0 %6020
    %v6022 = vsel %vm1038, %v5978, 0.0
    %6023 = vadd.xlane.f32.xlu0 %v6022
    %v6024 = vpop.xlane.xlu0 %6023
    %v6025 = vsel %vm1038, %v5980, 0.0
    %6026 = vadd.xlane.f32.xlu0 %v6025
    %v6027 = vpop.xlane.xlu0 %6026
    %v6028 = vsel %vm1038, %v5982, 0.0
    %6029 = vadd.xlane.f32.xlu0 %v6028
    %v6030 = vpop.xlane.xlu0 %6029
    %v6031 = vrcp.pop %v5985
    %v6032 = vrcp.pop %v5988
    %v6033 = vrcp.pop %v5991
    %v6034 = vrcp.pop %v5994
    %v6035 = vrcp.pop %v5997
    %v6036 = vrcp.pop %v6000
    %v6037 = vrcp.pop %v6003
    %v6038 = vrcp.pop %v6006
    %v6039 = vrcp.pop %v6009
    %v6040 = vrcp.pop %v6012
    %v6041 = vrcp.pop %v6015
    %v6042 = vrcp.pop %v6018
    %v6043 = vrcp.pop %v6021
    %v6044 = vrcp.pop %v6024
    %v6045 = vrcp.pop %v6027
    %v6046 = vrcp.pop %v6030
    %v6047 = vmul.f32 %v5952, %v6031
    %v6048 = vmul.f32 %v5954, %v6032
    %v6049 = vmul.f32 %v5956, %v6033
    %v6050 = vmul.f32 %v5958, %v6034
    %v6051 = vmul.f32 %v5960, %v6035
    %v6052 = vmul.f32 %v5962, %v6036
    %v6053 = vmul.f32 %v5964, %v6037
    %v6054 = vmul.f32 %v5966, %v6038
    %v6055 = vmul.f32 %v5968, %v6039
    %v6056 = vmul.f32 %v5970, %v6040
    %v6057 = vmul.f32 %v5972, %v6041
    %v6058 = vmul.f32 %v5974, %v6042
    %v6059 = vmul.f32 %v5976, %v6043
    %v6060 = vmul.f32 %v5978, %v6044
    %v6061 = vmul.f32 %v5980, %v6045
    %v6062 = vmul.f32 %v5982, %v6046
    %6063 = vrot.lane.b32.xlu0 %v183, 40
    %v6064 = vpop.permute.xlu0 %6063
    %6065 = vrot.lane.b32.xlu0 %v188, 40
    %v6066 = vpop.permute.xlu0 %6065
    %v6070 = vsel %vm1038, %v6047, 0
    %v6073 = vsel %vm1038, %v6048, 0
    %6075 = vmatprep.subr.mxu0 0.0
    %6076 = vmatpush1.msra.mxu0 0.0
    %6077 = vmatprep.subr.mxu0 0.0
    %6078 = vmatpush1.msra.mxu0 0.0
    %6079 = vmatprep.subr.mxu0 0.0
    %6080 = vmatpush1.msra.mxu0 0.0
    %6081 = vmatprep.subr.mxu0 0.0
    %6082 = vmatpush1.msra.mxu0 0.0
    %6083 = vmatprep.subr.mxu0 0.0
    %6084 = vmatpush1.msra.mxu0 0.0
    %6085 = vmatprep.subr.mxu0 0.0
    %6086 = vmatpush1.msra.mxu0 0.0
    %6087 = vmatprep.subr.mxu0 0.0
    %6088 = vmatpush1.msra.mxu0 0.0
    %6089 = vmatprep.subr.mxu0 0.0
    %6090 = vmatpush1.msra.mxu0 0.0
    %6091 = vmatprep.subr.mxu0 0.0
    %6092 = vmatpush1.msra.mxu0 0.0
    %6093 = vmatprep.subr.mxu0 0.0
    %6094 = vmatpush1.msra.mxu0 0.0
    %6095 = vmatprep.subr.mxu0 0.0
    %6096 = vmatpush1.msra.mxu0 0.0
    %6097 = vmatprep.subr.mxu0 0.0
    %6098 = vmatpush1.msra.mxu0 0.0
    %6099 = vmatprep.subr.mxu0 0.0
    %6100 = vmatpush1.msra.mxu0 0.0
    %6101 = vmatprep.subr.mxu0 0.0
    %6102 = vmatpush1.msra.mxu0 0.0
    %6103 = vmatprep.subr.mxu0 0.0
    %6104 = vmatpush1.msra.mxu0 %v6066
    %6105 = vmatprep.subr.mxu0 0.0
    %6106 = vmatpush1.msra.mxu0 %v6064
    %6107 = vmatprep.subr.mxu0 0.0
    %6108 = vmatpush2.msra.mxu0 0.0
    %6109 = vmatprep.subr.mxu0 0.0
    %6110 = vmatpush2.msra.mxu0 0.0
    %6111 = vmatprep.subr.mxu0 0.0
    %6112 = vmatpush2.msra.mxu0 0.0
    %6113 = vmatprep.subr.mxu0 0.0
    %6114 = vmatpush2.msra.mxu0 0.0
    %6115 = vmatprep.subr.mxu0 0.0
    %6116 = vmatpush2.msra.mxu0 0.0
    %6117 = vmatprep.subr.mxu0 0.0
    %6118 = vmatpush2.msra.mxu0 0.0
    %6119 = vmatprep.subr.mxu0 0.0
    %6120 = vmatpush2.msra.mxu0 0.0
    %6121 = vmatprep.subr.mxu0 0.0
    %6122 = vmatpush2.msra.mxu0 0.0
    %6123 = vmatprep.subr.mxu0 0.0
    %6124 = vmatpush2.msra.mxu0 0.0
    %6125 = vmatprep.subr.mxu0 0.0
    %6126 = vmatpush2.msra.mxu0 0.0
    %6127 = vmatprep.subr.mxu0 0.0
    %6128 = vmatpush2.msra.mxu0 0.0
    %6129 = vmatprep.subr.mxu0 0.0
    %6130 = vmatpush2.msra.mxu0 0.0
    %6131 = vmatprep.subr.mxu0 0.0
    %6132 = vmatpush2.msra.mxu0 0.0
    %6133 = vmatprep.subr.mxu0 0.0
    %6134 = vmatpush2.msra.mxu0 0.0
    %6135 = vmatprep.subr.mxu0 0.0
    %6136 = vmatpush2.msra.mxu0 0.0
    %6137 = vmatprep.subr.mxu0 0.0
    %6138 = vmatpush2.msra.mxu0 0.0
    %6139 = vmatprep.mubr.f32.mxu0 0.0
    %6140 = vmatmul.mubr.f32.gmra.mxu0 %v6070
    %v6141 = vpop.f32.mrf.mxu0
    %v6142 = vadd.f32 0.0, %v6141
    %v6143 = vpop.f32.mrf.mxu0
    %6144 = vmatprep.mubr.f32.mxu0 0.0
    %6145 = vmatmul.mubr.f32.gmra.mxu0 %v6073
    %v6146 = vpop.f32.mrf.mxu0
    %v6147 = vadd.f32 0.0, %v6146
    %v6148 = vpop.f32.mrf.mxu0
    %6149 = vdwg.mxu0
    %6150 = vrot.lane.b32.xlu0 %v193, 40
    %v6151 = vpop.permute.xlu0 %6150
    %6152 = vrot.lane.b32.xlu0 %v198, 40
    %v6153 = vpop.permute.xlu0 %6152
    %v6157 = vsel %vm1038, %v6049, 0
    %v6160 = vsel %vm1038, %v6050, 0
    %6162 = vmatprep.subr.mxu0 0.0
    %6163 = vmatpush1.msra.mxu0 0.0
    %6164 = vmatprep.subr.mxu0 0.0
    %6165 = vmatpush1.msra.mxu0 0.0
    %6166 = vmatprep.subr.mxu0 0.0
    %6167 = vmatpush1.msra.mxu0 0.0
    %6168 = vmatprep.subr.mxu0 0.0
    %6169 = vmatpush1.msra.mxu0 0.0
    %6170 = vmatprep.subr.mxu0 0.0
    %6171 = vmatpush1.msra.mxu0 0.0
    %6172 = vmatprep.subr.mxu0 0.0
    %6173 = vmatpush1.msra.mxu0 0.0
    %6174 = vmatprep.subr.mxu0 0.0
    %6175 = vmatpush1.msra.mxu0 0.0
    %6176 = vmatprep.subr.mxu0 0.0
    %6177 = vmatpush1.msra.mxu0 0.0
    %6178 = vmatprep.subr.mxu0 0.0
    %6179 = vmatpush1.msra.mxu0 0.0
    %6180 = vmatprep.subr.mxu0 0.0
    %6181 = vmatpush1.msra.mxu0 0.0
    %6182 = vmatprep.subr.mxu0 0.0
    %6183 = vmatpush1.msra.mxu0 0.0
    %6184 = vmatprep.subr.mxu0 0.0
    %6185 = vmatpush1.msra.mxu0 0.0
    %6186 = vmatprep.subr.mxu0 0.0
    %6187 = vmatpush1.msra.mxu0 0.0
    %6188 = vmatprep.subr.mxu0 0.0
    %6189 = vmatpush1.msra.mxu0 0.0
    %6190 = vmatprep.subr.mxu0 0.0
    %6191 = vmatpush1.msra.mxu0 %v6153
    %6192 = vmatprep.subr.mxu0 0.0
    %6193 = vmatpush1.msra.mxu0 %v6151
    %6194 = vmatprep.subr.mxu0 0.0
    %6195 = vmatpush2.msra.mxu0 0.0
    %6196 = vmatprep.subr.mxu0 0.0
    %6197 = vmatpush2.msra.mxu0 0.0
    %6198 = vmatprep.subr.mxu0 0.0
    %6199 = vmatpush2.msra.mxu0 0.0
    %6200 = vmatprep.subr.mxu0 0.0
    %6201 = vmatpush2.msra.mxu0 0.0
    %6202 = vmatprep.subr.mxu0 0.0
    %6203 = vmatpush2.msra.mxu0 0.0
    %6204 = vmatprep.subr.mxu0 0.0
    %6205 = vmatpush2.msra.mxu0 0.0
    %6206 = vmatprep.subr.mxu0 0.0
    %6207 = vmatpush2.msra.mxu0 0.0
    %6208 = vmatprep.subr.mxu0 0.0
    %6209 = vmatpush2.msra.mxu0 0.0
    %6210 = vmatprep.subr.mxu0 0.0
    %6211 = vmatpush2.msra.mxu0 0.0
    %6212 = vmatprep.subr.mxu0 0.0
    %6213 = vmatpush2.msra.mxu0 0.0
    %6214 = vmatprep.subr.mxu0 0.0
    %6215 = vmatpush2.msra.mxu0 0.0
    %6216 = vmatprep.subr.mxu0 0.0
    %6217 = vmatpush2.msra.mxu0 0.0
    %6218 = vmatprep.subr.mxu0 0.0
    %6219 = vmatpush2.msra.mxu0 0.0
    %6220 = vmatprep.subr.mxu0 0.0
    %6221 = vmatpush2.msra.mxu0 0.0
    %6222 = vmatprep.subr.mxu0 0.0
    %6223 = vmatpush2.msra.mxu0 0.0
    %6224 = vmatprep.subr.mxu0 0.0
    %6225 = vmatpush2.msra.mxu0 0.0
    %6226 = vmatprep.mubr.f32.mxu0 0.0
    %6227 = vmatmul.mubr.f32.gmra.mxu0 %v6157
    %v6228 = vpop.f32.mrf.mxu0
    %v6229 = vadd.f32 0.0, %v6228
    %v6230 = vpop.f32.mrf.mxu0
    %6231 = vmatprep.mubr.f32.mxu0 0.0
    %6232 = vmatmul.mubr.f32.gmra.mxu0 %v6160
    %v6233 = vpop.f32.mrf.mxu0
    %v6234 = vadd.f32 0.0, %v6233
    %v6235 = vpop.f32.mrf.mxu0
    %6236 = vdwg.mxu0
    %6237 = vrot.lane.b32.xlu0 %v203, 40
    %v6238 = vpop.permute.xlu0 %6237
    %6239 = vrot.lane.b32.xlu0 %v208, 40
    %v6240 = vpop.permute.xlu0 %6239
    %v6244 = vsel %vm1038, %v6051, 0
    %v6247 = vsel %vm1038, %v6052, 0
    %6249 = vmatprep.subr.mxu0 0.0
    %6250 = vmatpush1.msra.mxu0 0.0
    %6251 = vmatprep.subr.mxu0 0.0
    %6252 = vmatpush1.msra.mxu0 0.0
    %6253 = vmatprep.subr.mxu0 0.0
    %6254 = vmatpush1.msra.mxu0 0.0
    %6255 = vmatprep.subr.mxu0 0.0
    %6256 = vmatpush1.msra.mxu0 0.0
    %6257 = vmatprep.subr.mxu0 0.0
    %6258 = vmatpush1.msra.mxu0 0.0
    %6259 = vmatprep.subr.mxu0 0.0
    %6260 = vmatpush1.msra.mxu0 0.0
    %6261 = vmatprep.subr.mxu0 0.0
    %6262 = vmatpush1.msra.mxu0 0.0
    %6263 = vmatprep.subr.mxu0 0.0
    %6264 = vmatpush1.msra.mxu0 0.0
    %6265 = vmatprep.subr.mxu0 0.0
    %6266 = vmatpush1.msra.mxu0 0.0
    %6267 = vmatprep.subr.mxu0 0.0
    %6268 = vmatpush1.msra.mxu0 0.0
    %6269 = vmatprep.subr.mxu0 0.0
    %6270 = vmatpush1.msra.mxu0 0.0
    %6271 = vmatprep.subr.mxu0 0.0
    %6272 = vmatpush1.msra.mxu0 0.0
    %6273 = vmatprep.subr.mxu0 0.0
    %6274 = vmatpush1.msra.mxu0 0.0
    %6275 = vmatprep.subr.mxu0 0.0
    %6276 = vmatpush1.msra.mxu0 0.0
    %6277 = vmatprep.subr.mxu0 0.0
    %6278 = vmatpush1.msra.mxu0 %v6240
    %6279 = vmatprep.subr.mxu0 0.0
    %6280 = vmatpush1.msra.mxu0 %v6238
    %6281 = vmatprep.subr.mxu0 0.0
    %6282 = vmatpush2.msra.mxu0 0.0
    %6283 = vmatprep.subr.mxu0 0.0
    %6284 = vmatpush2.msra.mxu0 0.0
    %6285 = vmatprep.subr.mxu0 0.0
    %6286 = vmatpush2.msra.mxu0 0.0
    %6287 = vmatprep.subr.mxu0 0.0
    %6288 = vmatpush2.msra.mxu0 0.0
    %6289 = vmatprep.subr.mxu0 0.0
    %6290 = vmatpush2.msra.mxu0 0.0
    %6291 = vmatprep.subr.mxu0 0.0
    %6292 = vmatpush2.msra.mxu0 0.0
    %6293 = vmatprep.subr.mxu0 0.0
    %6294 = vmatpush2.msra.mxu0 0.0
    %6295 = vmatprep.subr.mxu0 0.0
    %6296 = vmatpush2.msra.mxu0 0.0
    %6297 = vmatprep.subr.mxu0 0.0
    %6298 = vmatpush2.msra.mxu0 0.0
    %6299 = vmatprep.subr.mxu0 0.0
    %6300 = vmatpush2.msra.mxu0 0.0
    %6301 = vmatprep.subr.mxu0 0.0
    %6302 = vmatpush2.msra.mxu0 0.0
    %6303 = vmatprep.subr.mxu0 0.0
    %6304 = vmatpush2.msra.mxu0 0.0
    %6305 = vmatprep.subr.mxu0 0.0
    %6306 = vmatpush2.msra.mxu0 0.0
    %6307 = vmatprep.subr.mxu0 0.0
    %6308 = vmatpush2.msra.mxu0 0.0
    %6309 = vmatprep.subr.mxu0 0.0
    %6310 = vmatpush2.msra.mxu0 0.0
    %6311 = vmatprep.subr.mxu0 0.0
    %6312 = vmatpush2.msra.mxu0 0.0
    %6313 = vmatprep.mubr.f32.mxu0 0.0
    %6314 = vmatmul.mubr.f32.gmra.mxu0 %v6244
    %v6315 = vpop.f32.mrf.mxu0
    %v6316 = vadd.f32 0.0, %v6315
    %v6317 = vpop.f32.mrf.mxu0
    %6318 = vmatprep.mubr.f32.mxu0 0.0
    %6319 = vmatmul.mubr.f32.gmra.mxu0 %v6247
    %v6320 = vpop.f32.mrf.mxu0
    %v6321 = vadd.f32 0.0, %v6320
    %v6322 = vpop.f32.mrf.mxu0
    %6323 = vdwg.mxu0
    %6324 = vrot.lane.b32.xlu0 %v213, 40
    %v6325 = vpop.permute.xlu0 %6324
    %6326 = vrot.lane.b32.xlu0 %v218, 40
    %v6327 = vpop.permute.xlu0 %6326
    %v6331 = vsel %vm1038, %v6053, 0
    %v6334 = vsel %vm1038, %v6054, 0
    %6336 = vmatprep.subr.mxu0 0.0
    %6337 = vmatpush1.msra.mxu0 0.0
    %6338 = vmatprep.subr.mxu0 0.0
    %6339 = vmatpush1.msra.mxu0 0.0
    %6340 = vmatprep.subr.mxu0 0.0
    %6341 = vmatpush1.msra.mxu0 0.0
    %6342 = vmatprep.subr.mxu0 0.0
    %6343 = vmatpush1.msra.mxu0 0.0
    %6344 = vmatprep.subr.mxu0 0.0
    %6345 = vmatpush1.msra.mxu0 0.0
    %6346 = vmatprep.subr.mxu0 0.0
    %6347 = vmatpush1.msra.mxu0 0.0
    %6348 = vmatprep.subr.mxu0 0.0
    %6349 = vmatpush1.msra.mxu0 0.0
    %6350 = vmatprep.subr.mxu0 0.0
    %6351 = vmatpush1.msra.mxu0 0.0
    %6352 = vmatprep.subr.mxu0 0.0
    %6353 = vmatpush1.msra.mxu0 0.0
    %6354 = vmatprep.subr.mxu0 0.0
    %6355 = vmatpush1.msra.mxu0 0.0
    %6356 = vmatprep.subr.mxu0 0.0
    %6357 = vmatpush1.msra.mxu0 0.0
    %6358 = vmatprep.subr.mxu0 0.0
    %6359 = vmatpush1.msra.mxu0 0.0
    %6360 = vmatprep.subr.mxu0 0.0
    %6361 = vmatpush1.msra.mxu0 0.0
    %6362 = vmatprep.subr.mxu0 0.0
    %6363 = vmatpush1.msra.mxu0 0.0
    %6364 = vmatprep.subr.mxu0 0.0
    %6365 = vmatpush1.msra.mxu0 %v6327
    %6366 = vmatprep.subr.mxu0 0.0
    %6367 = vmatpush1.msra.mxu0 %v6325
    %6368 = vmatprep.subr.mxu0 0.0
    %6369 = vmatpush2.msra.mxu0 0.0
    %6370 = vmatprep.subr.mxu0 0.0
    %6371 = vmatpush2.msra.mxu0 0.0
    %6372 = vmatprep.subr.mxu0 0.0
    %6373 = vmatpush2.msra.mxu0 0.0
    %6374 = vmatprep.subr.mxu0 0.0
    %6375 = vmatpush2.msra.mxu0 0.0
    %6376 = vmatprep.subr.mxu0 0.0
    %6377 = vmatpush2.msra.mxu0 0.0
    %6378 = vmatprep.subr.mxu0 0.0
    %6379 = vmatpush2.msra.mxu0 0.0
    %6380 = vmatprep.subr.mxu0 0.0
    %6381 = vmatpush2.msra.mxu0 0.0
    %6382 = vmatprep.subr.mxu0 0.0
    %6383 = vmatpush2.msra.mxu0 0.0
    %6384 = vmatprep.subr.mxu0 0.0
    %6385 = vmatpush2.msra.mxu0 0.0
    %6386 = vmatprep.subr.mxu0 0.0
    %6387 = vmatpush2.msra.mxu0 0.0
    %6388 = vmatprep.subr.mxu0 0.0
    %6389 = vmatpush2.msra.mxu0 0.0
    %6390 = vmatprep.subr.mxu0 0.0
    %6391 = vmatpush2.msra.mxu0 0.0
    %6392 = vmatprep.subr.mxu0 0.0
    %6393 = vmatpush2.msra.mxu0 0.0
    %6394 = vmatprep.subr.mxu0 0.0
    %6395 = vmatpush2.msra.mxu0 0.0
    %6396 = vmatprep.subr.mxu0 0.0
    %6397 = vmatpush2.msra.mxu0 0.0
    %6398 = vmatprep.subr.mxu0 0.0
    %6399 = vmatpush2.msra.mxu0 0.0
    %6400 = vmatprep.mubr.f32.mxu0 0.0
    %6401 = vmatmul.mubr.f32.gmra.mxu0 %v6331
    %v6402 = vpop.f32.mrf.mxu0
    %v6403 = vadd.f32 0.0, %v6402
    %v6404 = vpop.f32.mrf.mxu0
    %6405 = vmatprep.mubr.f32.mxu0 0.0
    %6406 = vmatmul.mubr.f32.gmra.mxu0 %v6334
    %v6407 = vpop.f32.mrf.mxu0
    %v6408 = vadd.f32 0.0, %v6407
    %v6409 = vpop.f32.mrf.mxu0
    %6410 = vdwg.mxu0
    %6411 = vrot.lane.b32.xlu0 %v223, 40
    %v6412 = vpop.permute.xlu0 %6411
    %6413 = vrot.lane.b32.xlu0 %v228, 40
    %v6414 = vpop.permute.xlu0 %6413
    %v6418 = vsel %vm1038, %v6055, 0
    %v6421 = vsel %vm1038, %v6056, 0
    %6423 = vmatprep.subr.mxu0 0.0
    %6424 = vmatpush1.msra.mxu0 0.0
    %6425 = vmatprep.subr.mxu0 0.0
    %6426 = vmatpush1.msra.mxu0 0.0
    %6427 = vmatprep.subr.mxu0 0.0
    %6428 = vmatpush1.msra.mxu0 0.0
    %6429 = vmatprep.subr.mxu0 0.0
    %6430 = vmatpush1.msra.mxu0 0.0
    %6431 = vmatprep.subr.mxu0 0.0
    %6432 = vmatpush1.msra.mxu0 0.0
    %6433 = vmatprep.subr.mxu0 0.0
    %6434 = vmatpush1.msra.mxu0 0.0
    %6435 = vmatprep.subr.mxu0 0.0
    %6436 = vmatpush1.msra.mxu0 0.0
    %6437 = vmatprep.subr.mxu0 0.0
    %6438 = vmatpush1.msra.mxu0 0.0
    %6439 = vmatprep.subr.mxu0 0.0
    %6440 = vmatpush1.msra.mxu0 0.0
    %6441 = vmatprep.subr.mxu0 0.0
    %6442 = vmatpush1.msra.mxu0 0.0
    %6443 = vmatprep.subr.mxu0 0.0
    %6444 = vmatpush1.msra.mxu0 0.0
    %6445 = vmatprep.subr.mxu0 0.0
    %6446 = vmatpush1.msra.mxu0 0.0
    %6447 = vmatprep.subr.mxu0 0.0
    %6448 = vmatpush1.msra.mxu0 0.0
    %6449 = vmatprep.subr.mxu0 0.0
    %6450 = vmatpush1.msra.mxu0 0.0
    %6451 = vmatprep.subr.mxu0 0.0
    %6452 = vmatpush1.msra.mxu0 %v6414
    %6453 = vmatprep.subr.mxu0 0.0
    %6454 = vmatpush1.msra.mxu0 %v6412
    %6455 = vmatprep.subr.mxu0 0.0
    %6456 = vmatpush2.msra.mxu0 0.0
    %6457 = vmatprep.subr.mxu0 0.0
    %6458 = vmatpush2.msra.mxu0 0.0
    %6459 = vmatprep.subr.mxu0 0.0
    %6460 = vmatpush2.msra.mxu0 0.0
    %6461 = vmatprep.subr.mxu0 0.0
    %6462 = vmatpush2.msra.mxu0 0.0
    %6463 = vmatprep.subr.mxu0 0.0
    %6464 = vmatpush2.msra.mxu0 0.0
    %6465 = vmatprep.subr.mxu0 0.0
    %6466 = vmatpush2.msra.mxu0 0.0
    %6467 = vmatprep.subr.mxu0 0.0
    %6468 = vmatpush2.msra.mxu0 0.0
    %6469 = vmatprep.subr.mxu0 0.0
    %6470 = vmatpush2.msra.mxu0 0.0
    %6471 = vmatprep.subr.mxu0 0.0
    %6472 = vmatpush2.msra.mxu0 0.0
    %6473 = vmatprep.subr.mxu0 0.0
    %6474 = vmatpush2.msra.mxu0 0.0
    %6475 = vmatprep.subr.mxu0 0.0
    %6476 = vmatpush2.msra.mxu0 0.0
    %6477 = vmatprep.subr.mxu0 0.0
    %6478 = vmatpush2.msra.mxu0 0.0
    %6479 = vmatprep.subr.mxu0 0.0
    %6480 = vmatpush2.msra.mxu0 0.0
    %6481 = vmatprep.subr.mxu0 0.0
    %6482 = vmatpush2.msra.mxu0 0.0
    %6483 = vmatprep.subr.mxu0 0.0
    %6484 = vmatpush2.msra.mxu0 0.0
    %6485 = vmatprep.subr.mxu0 0.0
    %6486 = vmatpush2.msra.mxu0 0.0
    %6487 = vmatprep.mubr.f32.mxu0 0.0
    %6488 = vmatmul.mubr.f32.gmra.mxu0 %v6418
    %v6489 = vpop.f32.mrf.mxu0
    %v6490 = vadd.f32 0.0, %v6489
    %v6491 = vpop.f32.mrf.mxu0
    %6492 = vmatprep.mubr.f32.mxu0 0.0
    %6493 = vmatmul.mubr.f32.gmra.mxu0 %v6421
    %v6494 = vpop.f32.mrf.mxu0
    %v6495 = vadd.f32 0.0, %v6494
    %v6496 = vpop.f32.mrf.mxu0
    %6497 = vdwg.mxu0
    %6498 = vrot.lane.b32.xlu0 %v233, 40
    %v6499 = vpop.permute.xlu0 %6498
    %6500 = vrot.lane.b32.xlu0 %v238, 40
    %v6501 = vpop.permute.xlu0 %6500
    %v6505 = vsel %vm1038, %v6057, 0
    %v6508 = vsel %vm1038, %v6058, 0
    %6510 = vmatprep.subr.mxu0 0.0
    %6511 = vmatpush1.msra.mxu0 0.0
    %6512 = vmatprep.subr.mxu0 0.0
    %6513 = vmatpush1.msra.mxu0 0.0
    %6514 = vmatprep.subr.mxu0 0.0
    %6515 = vmatpush1.msra.mxu0 0.0
    %6516 = vmatprep.subr.mxu0 0.0
    %6517 = vmatpush1.msra.mxu0 0.0
    %6518 = vmatprep.subr.mxu0 0.0
    %6519 = vmatpush1.msra.mxu0 0.0
    %6520 = vmatprep.subr.mxu0 0.0
    %6521 = vmatpush1.msra.mxu0 0.0
    %6522 = vmatprep.subr.mxu0 0.0
    %6523 = vmatpush1.msra.mxu0 0.0
    %6524 = vmatprep.subr.mxu0 0.0
    %6525 = vmatpush1.msra.mxu0 0.0
    %6526 = vmatprep.subr.mxu0 0.0
    %6527 = vmatpush1.msra.mxu0 0.0
    %6528 = vmatprep.subr.mxu0 0.0
    %6529 = vmatpush1.msra.mxu0 0.0
    %6530 = vmatprep.subr.mxu0 0.0
    %6531 = vmatpush1.msra.mxu0 0.0
    %6532 = vmatprep.subr.mxu0 0.0
    %6533 = vmatpush1.msra.mxu0 0.0
    %6534 = vmatprep.subr.mxu0 0.0
    %6535 = vmatpush1.msra.mxu0 0.0
    %6536 = vmatprep.subr.mxu0 0.0
    %6537 = vmatpush1.msra.mxu0 0.0
    %6538 = vmatprep.subr.mxu0 0.0
    %6539 = vmatpush1.msra.mxu0 %v6501
    %6540 = vmatprep.subr.mxu0 0.0
    %6541 = vmatpush1.msra.mxu0 %v6499
    %6542 = vmatprep.subr.mxu0 0.0
    %6543 = vmatpush2.msra.mxu0 0.0
    %6544 = vmatprep.subr.mxu0 0.0
    %6545 = vmatpush2.msra.mxu0 0.0
    %6546 = vmatprep.subr.mxu0 0.0
    %6547 = vmatpush2.msra.mxu0 0.0
    %6548 = vmatprep.subr.mxu0 0.0
    %6549 = vmatpush2.msra.mxu0 0.0
    %6550 = vmatprep.subr.mxu0 0.0
    %6551 = vmatpush2.msra.mxu0 0.0
    %6552 = vmatprep.subr.mxu0 0.0
    %6553 = vmatpush2.msra.mxu0 0.0
    %6554 = vmatprep.subr.mxu0 0.0
    %6555 = vmatpush2.msra.mxu0 0.0
    %6556 = vmatprep.subr.mxu0 0.0
    %6557 = vmatpush2.msra.mxu0 0.0
    %6558 = vmatprep.subr.mxu0 0.0
    %6559 = vmatpush2.msra.mxu0 0.0
    %6560 = vmatprep.subr.mxu0 0.0
    %6561 = vmatpush2.msra.mxu0 0.0
    %6562 = vmatprep.subr.mxu0 0.0
    %6563 = vmatpush2.msra.mxu0 0.0
    %6564 = vmatprep.subr.mxu0 0.0
    %6565 = vmatpush2.msra.mxu0 0.0
    %6566 = vmatprep.subr.mxu0 0.0
    %6567 = vmatpush2.msra.mxu0 0.0
    %6568 = vmatprep.subr.mxu0 0.0
    %6569 = vmatpush2.msra.mxu0 0.0
    %6570 = vmatprep.subr.mxu0 0.0
    %6571 = vmatpush2.msra.mxu0 0.0
    %6572 = vmatprep.subr.mxu0 0.0
    %6573 = vmatpush2.msra.mxu0 0.0
    %6574 = vmatprep.mubr.f32.mxu0 0.0
    %6575 = vmatmul.mubr.f32.gmra.mxu0 %v6505
    %v6576 = vpop.f32.mrf.mxu0
    %v6577 = vadd.f32 0.0, %v6576
    %v6578 = vpop.f32.mrf.mxu0
    %6579 = vmatprep.mubr.f32.mxu0 0.0
    %6580 = vmatmul.mubr.f32.gmra.mxu0 %v6508
    %v6581 = vpop.f32.mrf.mxu0
    %v6582 = vadd.f32 0.0, %v6581
    %v6583 = vpop.f32.mrf.mxu0
    %6584 = vdwg.mxu0
    %6585 = vrot.lane.b32.xlu0 %v243, 40
    %v6586 = vpop.permute.xlu0 %6585
    %6587 = vrot.lane.b32.xlu0 %v248, 40
    %v6588 = vpop.permute.xlu0 %6587
    %v6592 = vsel %vm1038, %v6059, 0
    %v6595 = vsel %vm1038, %v6060, 0
    %6597 = vmatprep.subr.mxu0 0.0
    %6598 = vmatpush1.msra.mxu0 0.0
    %6599 = vmatprep.subr.mxu0 0.0
    %6600 = vmatpush1.msra.mxu0 0.0
    %6601 = vmatprep.subr.mxu0 0.0
    %6602 = vmatpush1.msra.mxu0 0.0
    %6603 = vmatprep.subr.mxu0 0.0
    %6604 = vmatpush1.msra.mxu0 0.0
    %6605 = vmatprep.subr.mxu0 0.0
    %6606 = vmatpush1.msra.mxu0 0.0
    %6607 = vmatprep.subr.mxu0 0.0
    %6608 = vmatpush1.msra.mxu0 0.0
    %6609 = vmatprep.subr.mxu0 0.0
    %6610 = vmatpush1.msra.mxu0 0.0
    %6611 = vmatprep.subr.mxu0 0.0
    %6612 = vmatpush1.msra.mxu0 0.0
    %6613 = vmatprep.subr.mxu0 0.0
    %6614 = vmatpush1.msra.mxu0 0.0
    %6615 = vmatprep.subr.mxu0 0.0
    %6616 = vmatpush1.msra.mxu0 0.0
    %6617 = vmatprep.subr.mxu0 0.0
    %6618 = vmatpush1.msra.mxu0 0.0
    %6619 = vmatprep.subr.mxu0 0.0
    %6620 = vmatpush1.msra.mxu0 0.0
    %6621 = vmatprep.subr.mxu0 0.0
    %6622 = vmatpush1.msra.mxu0 0.0
    %6623 = vmatprep.subr.mxu0 0.0
    %6624 = vmatpush1.msra.mxu0 0.0
    %6625 = vmatprep.subr.mxu0 0.0
    %6626 = vmatpush1.msra.mxu0 %v6588
    %6627 = vmatprep.subr.mxu0 0.0
    %6628 = vmatpush1.msra.mxu0 %v6586
    %6629 = vmatprep.subr.mxu0 0.0
    %6630 = vmatpush2.msra.mxu0 0.0
    %6631 = vmatprep.subr.mxu0 0.0
    %6632 = vmatpush2.msra.mxu0 0.0
    %6633 = vmatprep.subr.mxu0 0.0
    %6634 = vmatpush2.msra.mxu0 0.0
    %6635 = vmatprep.subr.mxu0 0.0
    %6636 = vmatpush2.msra.mxu0 0.0
    %6637 = vmatprep.subr.mxu0 0.0
    %6638 = vmatpush2.msra.mxu0 0.0
    %6639 = vmatprep.subr.mxu0 0.0
    %6640 = vmatpush2.msra.mxu0 0.0
    %6641 = vmatprep.subr.mxu0 0.0
    %6642 = vmatpush2.msra.mxu0 0.0
    %6643 = vmatprep.subr.mxu0 0.0
    %6644 = vmatpush2.msra.mxu0 0.0
    %6645 = vmatprep.subr.mxu0 0.0
    %6646 = vmatpush2.msra.mxu0 0.0
    %6647 = vmatprep.subr.mxu0 0.0
    %6648 = vmatpush2.msra.mxu0 0.0
    %6649 = vmatprep.subr.mxu0 0.0
    %6650 = vmatpush2.msra.mxu0 0.0
    %6651 = vmatprep.subr.mxu0 0.0
    %6652 = vmatpush2.msra.mxu0 0.0
    %6653 = vmatprep.subr.mxu0 0.0
    %6654 = vmatpush2.msra.mxu0 0.0
    %6655 = vmatprep.subr.mxu0 0.0
    %6656 = vmatpush2.msra.mxu0 0.0
    %6657 = vmatprep.subr.mxu0 0.0
    %6658 = vmatpush2.msra.mxu0 0.0
    %6659 = vmatprep.subr.mxu0 0.0
    %6660 = vmatpush2.msra.mxu0 0.0
    %6661 = vmatprep.mubr.f32.mxu0 0.0
    %6662 = vmatmul.mubr.f32.gmra.mxu0 %v6592
    %v6663 = vpop.f32.mrf.mxu0
    %v6664 = vadd.f32 0.0, %v6663
    %v6665 = vpop.f32.mrf.mxu0
    %6666 = vmatprep.mubr.f32.mxu0 0.0
    %6667 = vmatmul.mubr.f32.gmra.mxu0 %v6595
    %v6668 = vpop.f32.mrf.mxu0
    %v6669 = vadd.f32 0.0, %v6668
    %v6670 = vpop.f32.mrf.mxu0
    %6671 = vdwg.mxu0
    %6672 = vrot.lane.b32.xlu0 %v253, 40
    %v6673 = vpop.permute.xlu0 %6672
    %6674 = vrot.lane.b32.xlu0 %v258, 40
    %v6675 = vpop.permute.xlu0 %6674
    %v6679 = vsel %vm1038, %v6061, 0
    %v6682 = vsel %vm1038, %v6062, 0
    %6684 = vmatprep.subr.mxu0 0.0
    %6685 = vmatpush1.msra.mxu0 0.0
    %6686 = vmatprep.subr.mxu0 0.0
    %6687 = vmatpush1.msra.mxu0 0.0
    %6688 = vmatprep.subr.mxu0 0.0
    %6689 = vmatpush1.msra.mxu0 0.0
    %6690 = vmatprep.subr.mxu0 0.0
    %6691 = vmatpush1.msra.mxu0 0.0
    %6692 = vmatprep.subr.mxu0 0.0
    %6693 = vmatpush1.msra.mxu0 0.0
    %6694 = vmatprep.subr.mxu0 0.0
    %6695 = vmatpush1.msra.mxu0 0.0
    %6696 = vmatprep.subr.mxu0 0.0
    %6697 = vmatpush1.msra.mxu0 0.0
    %6698 = vmatprep.subr.mxu0 0.0
    %6699 = vmatpush1.msra.mxu0 0.0
    %6700 = vmatprep.subr.mxu0 0.0
    %6701 = vmatpush1.msra.mxu0 0.0
    %6702 = vmatprep.subr.mxu0 0.0
    %6703 = vmatpush1.msra.mxu0 0.0
    %6704 = vmatprep.subr.mxu0 0.0
    %6705 = vmatpush1.msra.mxu0 0.0
    %6706 = vmatprep.subr.mxu0 0.0
    %6707 = vmatpush1.msra.mxu0 0.0
    %6708 = vmatprep.subr.mxu0 0.0
    %6709 = vmatpush1.msra.mxu0 0.0
    %6710 = vmatprep.subr.mxu0 0.0
    %6711 = vmatpush1.msra.mxu0 0.0
    %6712 = vmatprep.subr.mxu0 0.0
    %6713 = vmatpush1.msra.mxu0 %v6675
    %6714 = vmatprep.subr.mxu0 0.0
    %6715 = vmatpush1.msra.mxu0 %v6673
    %6716 = vmatprep.subr.mxu0 0.0
    %6717 = vmatpush2.msra.mxu0 0.0
    %6718 = vmatprep.subr.mxu0 0.0
    %6719 = vmatpush2.msra.mxu0 0.0
    %6720 = vmatprep.subr.mxu0 0.0
    %6721 = vmatpush2.msra.mxu0 0.0
    %6722 = vmatprep.subr.mxu0 0.0
    %6723 = vmatpush2.msra.mxu0 0.0
    %6724 = vmatprep.subr.mxu0 0.0
    %6725 = vmatpush2.msra.mxu0 0.0
    %6726 = vmatprep.subr.mxu0 0.0
    %6727 = vmatpush2.msra.mxu0 0.0
    %6728 = vmatprep.subr.mxu0 0.0
    %6729 = vmatpush2.msra.mxu0 0.0
    %6730 = vmatprep.subr.mxu0 0.0
    %6731 = vmatpush2.msra.mxu0 0.0
    %6732 = vmatprep.subr.mxu0 0.0
    %6733 = vmatpush2.msra.mxu0 0.0
    %6734 = vmatprep.subr.mxu0 0.0
    %6735 = vmatpush2.msra.mxu0 0.0
    %6736 = vmatprep.subr.mxu0 0.0
    %6737 = vmatpush2.msra.mxu0 0.0
    %6738 = vmatprep.subr.mxu0 0.0
    %6739 = vmatpush2.msra.mxu0 0.0
    %6740 = vmatprep.subr.mxu0 0.0
    %6741 = vmatpush2.msra.mxu0 0.0
    %6742 = vmatprep.subr.mxu0 0.0
    %6743 = vmatpush2.msra.mxu0 0.0
    %6744 = vmatprep.subr.mxu0 0.0
    %6745 = vmatpush2.msra.mxu0 0.0
    %6746 = vmatprep.subr.mxu0 0.0
    %6747 = vmatpush2.msra.mxu0 0.0
    %6748 = vmatprep.mubr.f32.mxu0 0.0
    %6749 = vmatmul.mubr.f32.gmra.mxu0 %v6679
    %v6750 = vpop.f32.mrf.mxu0
    %v6751 = vadd.f32 0.0, %v6750
    %v6752 = vpop.f32.mrf.mxu0
    %6753 = vmatprep.mubr.f32.mxu0 0.0
    %6754 = vmatmul.mubr.f32.gmra.mxu0 %v6682
    %v6755 = vpop.f32.mrf.mxu0
    %v6756 = vadd.f32 0.0, %v6755
    %v6757 = vpop.f32.mrf.mxu0
    %6758 = vdwg.mxu0
    %6775 = vrot.lane.b32.xlu0 %v2910, 8
    %v6776 = vpop.permute.xlu0 %6775
    %6777 = vrot.lane.b32.xlu0 %v2915, 8
    %v6778 = vpop.permute.xlu0 %6777
    %6779 = vrot.lane.b32.xlu0 %v2997, 8
    %v6780 = vpop.permute.xlu0 %6779
    %6781 = vrot.lane.b32.xlu0 %v3002, 8
    %v6782 = vpop.permute.xlu0 %6781
    %6783 = vrot.lane.b32.xlu0 %v3084, 8
    %v6784 = vpop.permute.xlu0 %6783
    %6785 = vrot.lane.b32.xlu0 %v3089, 8
    %v6786 = vpop.permute.xlu0 %6785
    %6787 = vrot.lane.b32.xlu0 %v3171, 8
    %v6788 = vpop.permute.xlu0 %6787
    %6789 = vrot.lane.b32.xlu0 %v3176, 8
    %v6790 = vpop.permute.xlu0 %6789
    %6791 = vrot.lane.b32.xlu0 %v3258, 8
    %v6792 = vpop.permute.xlu0 %6791
    %6793 = vrot.lane.b32.xlu0 %v3263, 8
    %v6794 = vpop.permute.xlu0 %6793
    %6795 = vrot.lane.b32.xlu0 %v3345, 8
    %v6796 = vpop.permute.xlu0 %6795
    %6797 = vrot.lane.b32.xlu0 %v3350, 8
    %v6798 = vpop.permute.xlu0 %6797
    %6799 = vrot.lane.b32.xlu0 %v3432, 8
    %v6800 = vpop.permute.xlu0 %6799
    %6801 = vrot.lane.b32.xlu0 %v3437, 8
    %v6802 = vpop.permute.xlu0 %6801
    %6803 = vrot.lane.b32.xlu0 %v3519, 8
    %v6804 = vpop.permute.xlu0 %6803
    %6805 = vrot.lane.b32.xlu0 %v3524, 8
    %v6806 = vpop.permute.xlu0 %6805
    %6839 = vrot.lane.b32.xlu0 %v4526, 16
    %v6840 = vpop.permute.xlu0 %6839
    %6841 = vrot.lane.b32.xlu0 %v4531, 16
    %v6842 = vpop.permute.xlu0 %6841
    %6843 = vrot.lane.b32.xlu0 %v4613, 16
    %v6844 = vpop.permute.xlu0 %6843
    %6845 = vrot.lane.b32.xlu0 %v4618, 16
    %v6846 = vpop.permute.xlu0 %6845
    %6847 = vrot.lane.b32.xlu0 %v4700, 16
    %v6848 = vpop.permute.xlu0 %6847
    %6849 = vrot.lane.b32.xlu0 %v4705, 16
    %v6850 = vpop.permute.xlu0 %6849
    %6851 = vrot.lane.b32.xlu0 %v4787, 16
    %v6852 = vpop.permute.xlu0 %6851
    %6853 = vrot.lane.b32.xlu0 %v4792, 16
    %v6854 = vpop.permute.xlu0 %6853
    %6855 = vrot.lane.b32.xlu0 %v4874, 16
    %v6856 = vpop.permute.xlu0 %6855
    %6857 = vrot.lane.b32.xlu0 %v4879, 16
    %v6858 = vpop.permute.xlu0 %6857
    %6859 = vrot.lane.b32.xlu0 %v4961, 16
    %v6860 = vpop.permute.xlu0 %6859
    %6861 = vrot.lane.b32.xlu0 %v4966, 16
    %v6862 = vpop.permute.xlu0 %6861
    %6863 = vrot.lane.b32.xlu0 %v5048, 16
    %v6864 = vpop.permute.xlu0 %6863
    %6865 = vrot.lane.b32.xlu0 %v5053, 16
    %v6866 = vpop.permute.xlu0 %6865
    %6867 = vrot.lane.b32.xlu0 %v5135, 16
    %v6868 = vpop.permute.xlu0 %6867
    %6869 = vrot.lane.b32.xlu0 %v5140, 16
    %v6870 = vpop.permute.xlu0 %6869
    %6903 = vrot.lane.b32.xlu0 %v6142, 24
    %v6904 = vpop.permute.xlu0 %6903
    %6905 = vrot.lane.b32.xlu0 %v6147, 24
    %v6906 = vpop.permute.xlu0 %6905
    %6907 = vrot.lane.b32.xlu0 %v6229, 24
    %v6908 = vpop.permute.xlu0 %6907
    %6909 = vrot.lane.b32.xlu0 %v6234, 24
    %v6910 = vpop.permute.xlu0 %6909
    %6911 = vrot.lane.b32.xlu0 %v6316, 24
    %v6912 = vpop.permute.xlu0 %6911
    %6913 = vrot.lane.b32.xlu0 %v6321, 24
    %v6914 = vpop.permute.xlu0 %6913
    %6915 = vrot.lane.b32.xlu0 %v6403, 24
    %v6916 = vpop.permute.xlu0 %6915
    %6917 = vrot.lane.b32.xlu0 %v6408, 24
    %v6918 = vpop.permute.xlu0 %6917
    %6919 = vrot.lane.b32.xlu0 %v6490, 24
    %v6920 = vpop.permute.xlu0 %6919
    %6921 = vrot.lane.b32.xlu0 %v6495, 24
    %v6922 = vpop.permute.xlu0 %6921
    %6923 = vrot.lane.b32.xlu0 %v6577, 24
    %v6924 = vpop.permute.xlu0 %6923
    %6925 = vrot.lane.b32.xlu0 %v6582, 24
    %v6926 = vpop.permute.xlu0 %6925
    %6927 = vrot.lane.b32.xlu0 %v6664, 24
    %v6928 = vpop.permute.xlu0 %6927
    %6929 = vrot.lane.b32.xlu0 %v6669, 24
    %v6930 = vpop.permute.xlu0 %6929
    %6931 = vrot.lane.b32.xlu0 %v6751, 24
    %v6932 = vpop.permute.xlu0 %6931
    %6933 = vrot.lane.b32.xlu0 %v6756, 24
    %v6934 = vpop.permute.xlu0 %6933
    %v6951 = vsel %vm299, %v1294, %v6776
    %v6952 = vsel %vm299, %v1299, %v6778
    %v6953 = vsel %vm299, %v1381, %v6780
    %v6954 = vsel %vm299, %v1386, %v6782
    %v6955 = vsel %vm299, %v1468, %v6784
    %v6956 = vsel %vm299, %v1473, %v6786
    %v6957 = vsel %vm299, %v1555, %v6788
    %v6958 = vsel %vm299, %v1560, %v6790
    %v6959 = vsel %vm299, %v1642, %v6792
    %v6960 = vsel %vm299, %v1647, %v6794
    %v6961 = vsel %vm299, %v1729, %v6796
    %v6962 = vsel %vm299, %v1734, %v6798
    %v6963 = vsel %vm299, %v1816, %v6800
    %v6964 = vsel %vm299, %v1821, %v6802
    %v6965 = vsel %vm299, %v1903, %v6804
    %v6966 = vsel %vm299, %v1908, %v6806
    %v6967 = vsel %vm1038, %v6951, %v6840
    %v6968 = vsel %vm1038, %v6952, %v6842
    %v6969 = vsel %vm1038, %v6953, %v6844
    %v6970 = vsel %vm1038, %v6954, %v6846
    %v6971 = vsel %vm1038, %v6955, %v6848
    %v6972 = vsel %vm1038, %v6956, %v6850
    %v6973 = vsel %vm1038, %v6957, %v6852
    %v6974 = vsel %vm1038, %v6958, %v6854
    %v6975 = vsel %vm1038, %v6959, %v6856
    %v6976 = vsel %vm1038, %v6960, %v6858
    %v6977 = vsel %vm1038, %v6961, %v6860
    %v6978 = vsel %vm1038, %v6962, %v6862
    %v6979 = vsel %vm1038, %v6963, %v6864
    %v6980 = vsel %vm1038, %v6964, %v6866
    %v6981 = vsel %vm1038, %v6965, %v6868
    %v6982 = vsel %vm1038, %v6966, %v6870
    %vm6983 = vcmask 195584
    %v6984 = vsel %vm6983, %v6967, %v6904
    %v6985 = vsel %vm6983, %v6968, %v6906
    %v6986 = vsel %vm6983, %v6969, %v6908
    %v6987 = vsel %vm6983, %v6970, %v6910
    %v6988 = vsel %vm6983, %v6971, %v6912
    %v6989 = vsel %vm6983, %v6972, %v6914
    %v6990 = vsel %vm6983, %v6973, %v6916
    %v6991 = vsel %vm6983, %v6974, %v6918
    %v6992 = vsel %vm6983, %v6975, %v6920
    %v6993 = vsel %vm6983, %v6976, %v6922
    %v6994 = vsel %vm6983, %v6977, %v6924
    %v6995 = vsel %vm6983, %v6978, %v6926
    %v6996 = vsel %vm6983, %v6979, %v6928
    %v6997 = vsel %vm6983, %v6980, %v6930
    %v6998 = vsel %vm6983, %v6981, %v6932
    %v6999 = vsel %vm6983, %v6982, %v6934
    %v7000 = vld [vmem:[#allocation2] sm:$0xff]
    %v7001 = vld [vmem:[#allocation2 + $0x8] sm:$0xff]
    %v7002 = vld [vmem:[#allocation2 + $0x10] sm:$0xff]
    %v7003 = vld [vmem:[#allocation2 + $0x18] sm:$0xff]
    %v7004 = vld [vmem:[%s6] sm:$0x1]
    %v7006 = vlaneseq
    %v7007 = vshrl.u32 %v7006, 7
    %v7008 = vsub.s32 0, %v7007
    %v7009 = vrot.slane %v7004, %v7008
    %v7012 = vsel %vm67, %v6984, 0
    %v7015 = vsel %vm67, %v6985, 0
    %v7018 = vsel %vm67, %v6986, 0
    %v7021 = vsel %vm67, %v6987, 0
    %v7024 = vsel %vm67, %v6988, 0
    %v7027 = vsel %vm67, %v6989, 0
    %v7030 = vsel %vm67, %v6990, 0
    %v7033 = vsel %vm67, %v6991, 0
    %v7036 = vsel %vm67, %v6992, 0
    %v7039 = vsel %vm67, %v6993, 0
    %v7042 = vsel %vm67, %v6994, 0
    %v7045 = vsel %vm67, %v6995, 0
    %v7048 = vsel %vm67, %v6996, 0
    %v7051 = vsel %vm67, %v6997, 0
    %v7054 = vsel %vm67, %v6998, 0
    %v7057 = vsel %vm67, %v6999, 0
    %7059 = vmatprep.subr.mxu0 0.0
    %7060 = vmatpush1.msra.mxu0 0.0
    %7061 = vmatprep.subr.mxu0 0.0
    %7062 = vmatpush1.msra.mxu0 0.0
    %7063 = vmatprep.subr.mxu0 0.0
    %7064 = vmatpush1.msra.mxu0 0.0
    %7065 = vmatprep.subr.mxu0 0.0
    %7066 = vmatpush1.msra.mxu0 0.0
    %7067 = vmatprep.subr.mxu0 0.0
    %7068 = vmatpush1.msra.mxu0 0.0
    %7069 = vmatprep.subr.mxu0 0.0
    %7070 = vmatpush1.msra.mxu0 0.0
    %7071 = vmatprep.subr.mxu0 0.0
    %7072 = vmatpush1.msra.mxu0 0.0
    %7073 = vmatprep.subr.mxu0 0.0
    %7074 = vmatpush1.msra.mxu0 0.0
    %7075 = vmatprep.subr.mxu0 0.0
    %7076 = vmatpush1.msra.mxu0 0.0
    %7077 = vmatprep.subr.mxu0 0.0
    %7078 = vmatpush1.msra.mxu0 0.0
    %7079 = vmatprep.subr.mxu0 0.0
    %7080 = vmatpush1.msra.mxu0 0.0
    %7081 = vmatprep.subr.mxu0 0.0
    %7082 = vmatpush1.msra.mxu0 0.0
    %7083 = vmatprep.subr.mxu0 0.0
    %7084 = vmatpush1.msra.mxu0 %v7003
    %7085 = vmatprep.subr.mxu0 0.0
    %7086 = vmatpush1.msra.mxu0 %v7002
    %7087 = vmatprep.subr.mxu0 0.0
    %7088 = vmatpush1.msra.mxu0 %v7001
    %7089 = vmatprep.subr.mxu0 0.0
    %7090 = vmatpush1.msra.mxu0 %v7000
    %7091 = vmatprep.subr.mxu0 0.0
    %7092 = vmatpush2.msra.mxu0 0.0
    %7093 = vmatprep.subr.mxu0 0.0
    %7094 = vmatpush2.msra.mxu0 0.0
    %7095 = vmatprep.subr.mxu0 0.0
    %7096 = vmatpush2.msra.mxu0 0.0
    %7097 = vmatprep.subr.mxu0 0.0
    %7098 = vmatpush2.msra.mxu0 0.0
    %7099 = vmatprep.subr.mxu0 0.0
    %7100 = vmatpush2.msra.mxu0 0.0
    %7101 = vmatprep.subr.mxu0 0.0
    %7102 = vmatpush2.msra.mxu0 0.0
    %7103 = vmatprep.subr.mxu0 0.0
    %7104 = vmatpush2.msra.mxu0 0.0
    %7105 = vmatprep.subr.mxu0 0.0
    %7106 = vmatpush2.msra.mxu0 0.0
    %7107 = vmatprep.subr.mxu0 0.0
    %7108 = vmatpush2.msra.mxu0 0.0
    %7109 = vmatprep.subr.mxu0 0.0
    %7110 = vmatpush2.msra.mxu0 0.0
    %7111 = vmatprep.subr.mxu0 0.0
    %7112 = vmatpush2.msra.mxu0 0.0
    %7113 = vmatprep.subr.mxu0 0.0
    %7114 = vmatpush2.msra.mxu0 0.0
    %7115 = vmatprep.subr.mxu0 0.0
    %7116 = vmatpush2.msra.mxu0 0.0
    %7117 = vmatprep.subr.mxu0 0.0
    %7118 = vmatpush2.msra.mxu0 0.0
    %7119 = vmatprep.subr.mxu0 0.0
    %7120 = vmatpush2.msra.mxu0 0.0
    %7121 = vmatprep.subr.mxu0 0.0
    %7122 = vmatpush2.msra.mxu0 0.0
    %7123 = vmatprep.mubr.f32.mxu0 0.0
    %7124 = vmatmul.mubr.f32.gmra.mxu0 %v7012
    %v7125 = vpop.f32.mrf.mxu0
    %v7126 = vadd.f32 %v7009, %v7125
    %v7127 = vpop.f32.mrf.mxu0
    %7128 = vmatprep.mubr.f32.mxu0 0.0
    %7129 = vmatmul.mubr.f32.gmra.mxu0 %v7015
    %v7130 = vpop.f32.mrf.mxu0
    %v7131 = vadd.f32 %v7009, %v7130
    %v7132 = vpop.f32.mrf.mxu0
    %7133 = vmatprep.mubr.f32.mxu0 0.0
    %7134 = vmatmul.mubr.f32.gmra.mxu0 %v7018
    %v7135 = vpop.f32.mrf.mxu0
    %v7136 = vadd.f32 %v7009, %v7135
    %v7137 = vpop.f32.mrf.mxu0
    %7138 = vmatprep.mubr.f32.mxu0 0.0
    %7139 = vmatmul.mubr.f32.gmra.mxu0 %v7021
    %v7140 = vpop.f32.mrf.mxu0
    %v7141 = vadd.f32 %v7009, %v7140
    %v7142 = vpop.f32.mrf.mxu0
    %7143 = vmatprep.mubr.f32.mxu0 0.0
    %7144 = vmatmul.mubr.f32.gmra.mxu0 %v7024
    %v7145 = vpop.f32.mrf.mxu0
    %v7146 = vadd.f32 %v7009, %v7145
    %v7147 = vpop.f32.mrf.mxu0
    %7148 = vmatprep.mubr.f32.mxu0 0.0
    %7149 = vmatmul.mubr.f32.gmra.mxu0 %v7027
    %v7150 = vpop.f32.mrf.mxu0
    %v7151 = vadd.f32 %v7009, %v7150
    %v7152 = vpop.f32.mrf.mxu0
    %7153 = vmatprep.mubr.f32.mxu0 0.0
    %7154 = vmatmul.mubr.f32.gmra.mxu0 %v7030
    %v7155 = vpop.f32.mrf.mxu0
    %v7156 = vadd.f32 %v7009, %v7155
    %v7157 = vpop.f32.mrf.mxu0
    %7158 = vmatprep.mubr.f32.mxu0 0.0
    %7159 = vmatmul.mubr.f32.gmra.mxu0 %v7033
    %v7160 = vpop.f32.mrf.mxu0
    %v7161 = vadd.f32 %v7009, %v7160
    %v7162 = vpop.f32.mrf.mxu0
    %7163 = vmatprep.mubr.f32.mxu0 0.0
    %7164 = vmatmul.mubr.f32.gmra.mxu0 %v7036
    %v7165 = vpop.f32.mrf.mxu0
    %v7166 = vadd.f32 %v7009, %v7165
    %v7167 = vpop.f32.mrf.mxu0
    %7168 = vmatprep.mubr.f32.mxu0 0.0
    %7169 = vmatmul.mubr.f32.gmra.mxu0 %v7039
    %v7170 = vpop.f32.mrf.mxu0
    %v7171 = vadd.f32 %v7009, %v7170
    %v7172 = vpop.f32.mrf.mxu0
    %7173 = vmatprep.mubr.f32.mxu0 0.0
    %7174 = vmatmul.mubr.f32.gmra.mxu0 %v7042
    %v7175 = vpop.f32.mrf.mxu0
    %v7176 = vadd.f32 %v7009, %v7175
    %v7177 = vpop.f32.mrf.mxu0
    %7178 = vmatprep.mubr.f32.mxu0 0.0
    %7179 = vmatmul.mubr.f32.gmra.mxu0 %v7045
    %v7180 = vpop.f32.mrf.mxu0
    %v7181 = vadd.f32 %v7009, %v7180
    %v7182 = vpop.f32.mrf.mxu0
    %7183 = vmatprep.mubr.f32.mxu0 0.0
    %7184 = vmatmul.mubr.f32.gmra.mxu0 %v7048
    %v7185 = vpop.f32.mrf.mxu0
    %v7186 = vadd.f32 %v7009, %v7185
    %v7187 = vpop.f32.mrf.mxu0
    %7188 = vmatprep.mubr.f32.mxu0 0.0
    %7189 = vmatmul.mubr.f32.gmra.mxu0 %v7051
    %v7190 = vpop.f32.mrf.mxu0
    %v7191 = vadd.f32 %v7009, %v7190
    %v7192 = vpop.f32.mrf.mxu0
    %7193 = vmatprep.mubr.f32.mxu0 0.0
    %7194 = vmatmul.mubr.f32.gmra.mxu0 %v7054
    %v7195 = vpop.f32.mrf.mxu0
    %v7196 = vadd.f32 %v7009, %v7195
    %v7197 = vpop.f32.mrf.mxu0
    %7198 = vmatprep.mubr.f32.mxu0 0.0
    %7199 = vmatmul.mubr.f32.gmra.mxu0 %v7057
    %v7200 = vpop.f32.mrf.mxu0
    %v7201 = vadd.f32 %v7009, %v7200
    %v7202 = vpop.f32.mrf.mxu0
    %7203 = vdwg.mxu0
    %7204 = vst.msk [vmem:[%s7] sm:$0xff] %vm67, %v7126
    %7205 = vst.msk [vmem:[%s7 + $0x8] sm:$0xff] %vm67, %v7131
    %7206 = vst.msk [vmem:[%s7 + $0x10] sm:$0xff] %vm67, %v7136
    %7207 = vst.msk [vmem:[%s7 + $0x18] sm:$0xff] %vm67, %v7141
    %7208 = vst.msk [vmem:[%s7 + $0x20] sm:$0xff] %vm67, %v7146
    %7209 = vst.msk [vmem:[%s7 + $0x28] sm:$0xff] %vm67, %v7151
    %7210 = vst.msk [vmem:[%s7 + $0x30] sm:$0xff] %vm67, %v7156
    %7211 = vst.msk [vmem:[%s7 + $0x38] sm:$0xff] %vm67, %v7161
    %7212 = vst.msk [vmem:[%s7 + $0x40] sm:$0xff] %vm67, %v7166
    %7213 = vst.msk [vmem:[%s7 + $0x48] sm:$0xff] %vm67, %v7171
    %7214 = vst.msk [vmem:[%s7 + $0x50] sm:$0xff] %vm67, %v7176
    %7215 = vst.msk [vmem:[%s7 + $0x58] sm:$0xff] %vm67, %v7181
    %7216 = vst.msk [vmem:[%s7 + $0x60] sm:$0xff] %vm67, %v7186
    %7217 = vst.msk [vmem:[%s7 + $0x68] sm:$0xff] %vm67, %v7191
    %7218 = vst.msk [vmem:[%s7 + $0x70] sm:$0xff] %vm67, %v7196
    %7219 = vst.msk [vmem:[%s7 + $0x78] sm:$0xff] %vm67, %v7201
    // Predicated region
    $region34: #{tpu_custom_call.1} parent=1 // pred_check
      _
    $region35: #{tpu_custom_call.1} parent=1 // pred_check_branch
      %7221 = sbr.rel (0) target = $region37
    $region36: #{tpu_custom_call.1} parent=1 // pred_region
      _
    $region37: #{tpu_custom_call.1} parent=1 // pred_fallthru
      _
    // Predicated region
    $region38: #{tpu_custom_call.1} parent=1 // pred_check
      _
    $region39: #{tpu_custom_call.1} parent=1 // pred_check_branch
      %7223 = sbr.rel (0) target = $region41
    $region40: #{tpu_custom_call.1} parent=1 // pred_region
      _
    $region41: #{tpu_custom_call.1} parent=1 // pred_fallthru
      _
    %7224 = vsyncpa [#allocation3], 1

</llo_original>
